<compile_context>
chip_gen: v6e
topology: v6e:2x2x1
jax: 0.10.0
libtpu: 0.0.40
codegen_flags: <defaults>
</compile_context>

<pallas_src>
import functools
import math

import jax
import jax.numpy as jnp
from jax.experimental import pallas as pl
from jax.experimental.pallas import tpu as pltpu


def _round_up(x, m):
    return ((x + m - 1) // m) * m


# ----------------------- fused LSTM + FC + sigmoid kernel -----------------------
def _make_fused_kernel(num_layers, T, Bp, Hp):
    """Kernel refs (all whole arrays resident in VMEM):
         x_ref                      : (T*Bp, Dp)   time-major, padded, flattened input
         [w_ih_ref, w_hh_ref, b_ref]: per layer -> (Din_p,4Hp), (Hp,4Hp), (1,4Hp)
         fcw_ref, fcb_ref           : (Hp, Op), (1, Op)
         out_ref                    : (Bp, Op)
         gseq_scr                   : VMEM (T*Bp, 4Hp)  batched input-projection gates
         hseq_scr                   : VMEM (T*Bp, Hp)   inter-layer hidden sequence
    """

    def kernel(*refs):
        x_ref = refs[0]
        layer_refs = [(refs[1 + 3 * l], refs[2 + 3 * l], refs[3 + 3 * l])
                      for l in range(num_layers)]
        fcw_ref = refs[1 + 3 * num_layers]
        fcb_ref = refs[2 + 3 * num_layers]
        out_ref = refs[3 + 3 * num_layers]
        gseq_scr = refs[4 + 3 * num_layers]
        hseq_scr = refs[5 + 3 * num_layers]

        zeros_bh = jnp.zeros((Bp, Hp), jnp.float32)   # h0 = c0 = 0 (hoisted)
        inp = x_ref[...]                              # (T*Bp, Din_p) time-major
        h_last = None
        for l, (w_ref, u_ref, b_ref) in enumerate(layer_refs):
            # One big MXU matmul: input projection for all timesteps at once,
            # fused bias folded in outside the serial time loop.
            gseq_scr[...] = (
                jnp.dot(inp, w_ref[...], preferred_element_type=jnp.float32)
                + b_ref[...])
            u = u_ref[...]                     # (Hp, 4Hp) recurrent weights
            store_seq = l < num_layers - 1     # last layer only needs h_T

            def step(t, carry, u=u, store_seq=store_seq):
                h_prev, c_prev = carry
                row = pl.multiple_of(t * Bp, Bp)
                gates = gseq_scr[pl.ds(row, Bp), :] + jnp.dot(
                    h_prev, u, preferred_element_type=jnp.float32)  # (Bp, 4Hp)
                # PyTorch gate order i, f, g, o; each slice is 128-lane aligned
                # because H is padded to Hp.
                i_g = jax.nn.sigmoid(gates[:, 0 * Hp:1 * Hp])
                f_g = jax.nn.sigmoid(gates[:, 1 * Hp:2 * Hp])
                g_g = jnp.tanh(gates[:, 2 * Hp:3 * Hp])
                o_g = jax.nn.sigmoid(gates[:, 3 * Hp:4 * Hp])
                c_new = f_g * c_prev + i_g * g_g
                h_new = o_g * jnp.tanh(c_new)
                if store_seq:
                    # Inter-layer activations stay in VMEM (never touch HBM).
                    hseq_scr[pl.ds(row, Bp), :] = h_new
                return h_new, c_new

            h_last, _ = jax.lax.fori_loop(0, T, step, (zeros_bh, zeros_bh),
                                          unroll=True)
            if store_seq:
                inp = hseq_scr[...]            # (T*Bp, Hp) -> next layer input

        # FC + sigmoid head on out[:, -1, :] (last timestep of the final layer).
        logits = (jnp.dot(h_last, fcw_ref[...], preferred_element_type=jnp.float32)
                  + fcb_ref[...])
        out_ref[...] = jax.nn.sigmoid(logits).astype(out_ref.dtype)

    return kernel


# --------------------------- parameter / input padding ---------------------------
def _pad_gate_cols(w, h, hp):
    """(rows, 4h) -> (rows, 4hp): gate block k is placed at cols [k*hp, k*hp+h)."""
    rows = w.shape[0]
    out = jnp.zeros((rows, 4 * hp), w.dtype)
    for k in range(4):
        out = out.at[:, k * hp:k * hp + h].set(w[:, k * h:(k + 1) * h])
    return out


def _pad_rows(w, rows_p):
    return jnp.pad(w, ((0, rows_p - w.shape[0]), (0, 0)))


# ------------------------------- full forward -----------------------------------
@functools.partial(jax.jit, static_argnums=(4, 5))
def lstm_model_forward(x_btd, layer_params, fc_w_t, fc_b, hidden_dim, output_dim):
    """x_btd: (B, T, D) batch-first, like the PyTorch module.  Returns (B, output_dim)."""
    B, T, D = x_btd.shape
    H = hidden_dim
    num_layers = len(layer_params)
    Bp = _round_up(max(B, 8), 8)               # sublane padding
    Hp = _round_up(max(H, 128), 128)           # lane padding for hidden/gates
    Dp = _round_up(max(D, 128), 128)           # lane padding for input features
    Op = _round_up(max(output_dim, 128), 128)  # lane-dense output store

    # --- pad parameters to MXU / vreg friendly shapes (zero padding is exact) ---
    flat_params = []
    for l, (w_ih_t, w_hh_t, bias) in enumerate(layer_params):
        d_in_p = Dp if l == 0 else Hp
        w_p = _pad_rows(_pad_gate_cols(w_ih_t, H, Hp), d_in_p)   # (Din_p, 4Hp)
        u_p = _pad_rows(_pad_gate_cols(w_hh_t, H, Hp), Hp)       # (Hp, 4Hp)
        b_p = _pad_gate_cols(bias, H, Hp)                        # (1, 4Hp)
        flat_params += [w_p, u_p, b_p]
    fcw_p = jnp.zeros((Hp, Op), jnp.float32).at[:H, :output_dim].set(fc_w_t)
    fcb_p = jnp.zeros((1, Op), jnp.float32).at[:, :output_dim].set(fc_b)
    flat_params += [fcw_p, fcb_p]

    # --- time-major, batch/feature padded, flattened input: (T*Bp, Dp) ---
    x_tm = jnp.transpose(x_btd, (1, 0, 2)).astype(jnp.float32)   # (T, B, D)
    x_p = jnp.zeros((T, Bp, Dp), jnp.float32).at[:, :B, :D].set(x_tm)
    x_flat = x_p.reshape(T * Bp, Dp)

    kernel = _make_fused_kernel(num_layers, T, Bp, Hp)
    n_inputs = 1 + len(flat_params)
    out_p = pl.pallas_call(
        kernel,
        out_shape=jax.ShapeDtypeStruct((Bp, Op), jnp.float32),
        in_specs=[pl.BlockSpec(memory_space=pltpu.MemorySpace.VMEM)] * n_inputs,
        out_specs=pl.BlockSpec(memory_space=pltpu.MemorySpace.VMEM),
        scratch_shapes=[
            pltpu.VMEM((T * Bp, 4 * Hp), jnp.float32),   # batched input-proj gates
            pltpu.VMEM((T * Bp, Hp), jnp.float32),       # inter-layer h sequence
        ],
    )(x_flat, *flat_params)
    return out_p[:B, :output_dim]


# ------------------------------ pure-JAX reference -------------------------------
def lstm_model_ref(x_btd, layer_params, fc_w_t, fc_b):
    x_tm = jnp.transpose(x_btd, (1, 0, 2))
    h_seq = x_tm
    for (w_ih_t, w_hh_t, bias) in layer_params:
        H = w_hh_t.shape[0]
        B = h_seq.shape[1]

        def step(carry, x_t, w_ih_t=w_ih_t, w_hh_t=w_hh_t, bias=bias):
            h, c = carry
            gates = x_t @ w_ih_t + h @ w_hh_t + bias
            i, f, g, o = jnp.split(gates, 4, axis=-1)
            c = jax.nn.sigmoid(f) * c + jax.nn.sigmoid(i) * jnp.tanh(g)
            h = jax.nn.sigmoid(o) * jnp.tanh(c)
            return (h, c), h

        init = (jnp.zeros((B, H), jnp.float32), jnp.zeros((B, H), jnp.float32))
        _, h_seq = jax.lax.scan(step, init, h_seq)
    return jax.nn.sigmoid(h_seq[-1] @ fc_w_t + fc_b)


# ----------------------------------- main ----------------------------------------
if __name__ == "__main__":
    # Small demo shapes consistent with the module (input_dim shrunk for the demo).
    batch, seq = 2, 8
    input_dim, hidden_dim, num_layers, output_dim = 128, 64, 4, 1

    key = jax.random.PRNGKey(0)
    bound = 1.0 / math.sqrt(hidden_dim)   # PyTorch nn.LSTM init range

    layer_params = []
    for layer in range(num_layers):
        d_in = input_dim if layer == 0 else hidden_dim
        key, k1, k2, k3, k4 = jax.random.split(key, 5)
        w_ih_t = jax.random.uniform(k1, (d_in, 4 * hidden_dim),
                                    jnp.float32, -bound, bound)
        w_hh_t = jax.random.uniform(k2, (hidden_dim, 4 * hidden_dim),
                                    jnp.float32, -bound, bound)
        b_ih = jax.random.uniform(k3, (4 * hidden_dim,), jnp.float32, -bound, bound)
        b_hh = jax.random.uniform(k4, (4 * hidden_dim,), jnp.float32, -bound, bound)
        layer_params.append((w_ih_t, w_hh_t, (b_ih + b_hh)[None, :]))

    key, kw, kb, kx = jax.random.split(key, 4)
    fc_w_t = jax.random.uniform(kw, (hidden_dim, output_dim),
                                jnp.float32, -bound, bound)
    fc_b = jax.random.uniform(kb, (1, output_dim), jnp.float32, -bound, bound)

    x = jax.random.normal(kx, (batch, seq, input_dim), jnp.float32)

    out = lstm_model_forward(x, layer_params, fc_w_t, fc_b, hidden_dim, output_dim)
    out = jax.block_until_ready(out)

    ref = lstm_model_ref(x, layer_params, fc_w_t, fc_b)
    assert out.shape == (batch, output_dim)
    assert jnp.allclose(out, ref, atol=1e-4, rtol=1e-4), (out, ref)

    print("KERNEL_OK")
</pallas_src>

<mosaic_0001>
module attributes {stable_mosaic.version = 11 : i64} {
  func.func @kernel(%arg0: memref<64x128xf32, #tpu.memory_space<vmem>>, %arg1: memref<128x512xf32, #tpu.memory_space<vmem>>, %arg2: memref<128x512xf32, #tpu.memory_space<vmem>>, %arg3: memref<1x512xf32, #tpu.memory_space<vmem>>, %arg4: memref<128x512xf32, #tpu.memory_space<vmem>>, %arg5: memref<128x512xf32, #tpu.memory_space<vmem>>, %arg6: memref<1x512xf32, #tpu.memory_space<vmem>>, %arg7: memref<128x512xf32, #tpu.memory_space<vmem>>, %arg8: memref<128x512xf32, #tpu.memory_space<vmem>>, %arg9: memref<1x512xf32, #tpu.memory_space<vmem>>, %arg10: memref<128x512xf32, #tpu.memory_space<vmem>>, %arg11: memref<128x512xf32, #tpu.memory_space<vmem>>, %arg12: memref<1x512xf32, #tpu.memory_space<vmem>>, %arg13: memref<128x128xf32, #tpu.memory_space<vmem>>, %arg14: memref<1x128xf32, #tpu.memory_space<vmem>>, %arg15: memref<8x128xf32, #tpu.memory_space<vmem>>, %arg16: memref<64x512xf32, #tpu.memory_space<vmem>>, %arg17: memref<64x128xf32, #tpu.memory_space<vmem>>) attributes {dimension_semantics = [], scalar_prefetch = 0 : i64, scratch_operands = 2 : i64, tpu.core_type = #tpu.core_type<tc>} {
    %cst = arith.constant 0.000000e+00 : f32
    %0 = vector.broadcast %cst : f32 to vector<8x128xf32>
    %c0 = arith.constant 0 : index
    %c0_0 = arith.constant 0 : index
    %1 = vector.load %arg0[%c0, %c0_0] : memref<64x128xf32, #tpu.memory_space<vmem>>, vector<64x128xf32>
    %c0_1 = arith.constant 0 : index
    %c0_2 = arith.constant 0 : index
    %2 = vector.load %arg1[%c0_1, %c0_2] : memref<128x512xf32, #tpu.memory_space<vmem>>, vector<128x512xf32>
    %cst_3 = arith.constant dense<0.000000e+00> : vector<64x512xf32>
    %3 = tpu.matmul %1, %2, %cst_3 {dimension_numbers = #tpu.dot_dimension_numbers<[1], [0], [0], [1], [0, 0, 1, 1], [], []>} : vector<64x128xf32>, vector<128x512xf32>, vector<64x512xf32> -> vector<64x512xf32>
    %c0_4 = arith.constant 0 : index
    %c0_5 = arith.constant 0 : index
    %4 = vector.load %arg3[%c0_4, %c0_5] : memref<1x512xf32, #tpu.memory_space<vmem>>, vector<1x512xf32>
    %5 = vector.broadcast %4 : vector<1x512xf32> to vector<64x512xf32>
    %6 = arith.addf %3, %5 : vector<64x512xf32>
    %c0_6 = arith.constant 0 : index
    %c0_7 = arith.constant 0 : index
    %7 = vector.load %arg16[%c0_6, %c0_7] : memref<64x512xf32, #tpu.memory_space<vmem>>, vector<64x512xf32>
    tpu.vector_store %arg16[%c0_6, %c0_7], %6 {strides = array<i32>} : memref<64x512xf32, #tpu.memory_space<vmem>>, vector<64x512xf32>,
    %c0_8 = arith.constant 0 : index
    %c0_9 = arith.constant 0 : index
    %8 = vector.load %arg2[%c0_8, %c0_9] : memref<128x512xf32, #tpu.memory_space<vmem>>, vector<128x512xf32>
    %c0_i32 = arith.constant 0 : i32
    %c8_i32 = arith.constant 8 : i32
    %9 = arith.muli %c0_i32, %c8_i32 : i32
    %10 = tpu.assume_multiple %9, 8 : i32
    %11 = arith.index_cast %10 : i32 to index
    %c0_10 = arith.constant 0 : index
    %12 = vector.load %arg16[%11, %c0_10] : memref<64x512xf32, #tpu.memory_space<vmem>>, vector<8x512xf32>
    %cst_11 = arith.constant dense<0.000000e+00> : vector<8x512xf32>
    %13 = tpu.matmul %0, %8, %cst_11 {dimension_numbers = #tpu.dot_dimension_numbers<[1], [0], [0], [1], [0, 0, 1, 1], [], []>} : vector<8x128xf32>, vector<128x512xf32>, vector<8x512xf32> -> vector<8x512xf32>
    %14 = arith.addf %12, %13 : vector<8x512xf32>
    %15 = vector.extract_strided_slice %14 {offsets = [0, 0], sizes = [8, 128], strides = [1, 1]} : vector<8x512xf32> to vector<8x128xf32>
    %16 = arith.negf %15 : vector<8x128xf32>
    %17 = math.exp %16 : vector<8x128xf32>
    %cst_12 = arith.constant 1.000000e+00 : f32
    %18 = vector.broadcast %cst_12 : f32 to vector<8x128xf32>
    %19 = arith.addf %18, %17 : vector<8x128xf32>
    %20 = arith.divf %18, %19 : vector<8x128xf32>
    %21 = vector.extract_strided_slice %14 {offsets = [0, 128], sizes = [8, 128], strides = [1, 1]} : vector<8x512xf32> to vector<8x128xf32>
    %22 = arith.negf %21 : vector<8x128xf32>
    %23 = math.exp %22 : vector<8x128xf32>
    %cst_13 = arith.constant 1.000000e+00 : f32
    %24 = vector.broadcast %cst_13 : f32 to vector<8x128xf32>
    %25 = arith.addf %24, %23 : vector<8x128xf32>
    %26 = arith.divf %24, %25 : vector<8x128xf32>
    %27 = vector.extract_strided_slice %14 {offsets = [0, 256], sizes = [8, 128], strides = [1, 1]} : vector<8x512xf32> to vector<8x128xf32>
    %28 = math.tanh %27 : vector<8x128xf32>
    %29 = vector.extract_strided_slice %14 {offsets = [0, 384], sizes = [8, 128], strides = [1, 1]} : vector<8x512xf32> to vector<8x128xf32>
    %30 = arith.negf %29 : vector<8x128xf32>
    %31 = math.exp %30 : vector<8x128xf32>
    %cst_14 = arith.constant 1.000000e+00 : f32
    %32 = vector.broadcast %cst_14 : f32 to vector<8x128xf32>
    %33 = arith.addf %32, %31 : vector<8x128xf32>
    %34 = arith.divf %32, %33 : vector<8x128xf32>
    %35 = arith.mulf %26, %0 : vector<8x128xf32>
    %36 = arith.mulf %20, %28 : vector<8x128xf32>
    %37 = arith.addf %35, %36 : vector<8x128xf32>
    %38 = math.tanh %37 : vector<8x128xf32>
    %39 = arith.mulf %34, %38 : vector<8x128xf32>
    %40 = arith.index_cast %10 : i32 to index
    %c0_15 = arith.constant 0 : index
    %41 = vector.load %arg17[%40, %c0_15] : memref<64x128xf32, #tpu.memory_space<vmem>>, vector<8x128xf32>
    tpu.vector_store %arg17[%40, %c0_15], %39 {strides = array<i32>} : memref<64x128xf32, #tpu.memory_space<vmem>>, vector<8x128xf32>,
    %c1_i32 = arith.constant 1 : i32
    %c8_i32_16 = arith.constant 8 : i32
    %42 = arith.muli %c1_i32, %c8_i32_16 : i32
    %43 = tpu.assume_multiple %42, 8 : i32
    %44 = arith.index_cast %43 : i32 to index
    %c0_17 = arith.constant 0 : index
    %45 = vector.load %arg16[%44, %c0_17] : memref<64x512xf32, #tpu.memory_space<vmem>>, vector<8x512xf32>
    %cst_18 = arith.constant dense<0.000000e+00> : vector<8x512xf32>
    %46 = tpu.matmul %39, %8, %cst_18 {dimension_numbers = #tpu.dot_dimension_numbers<[1], [0], [0], [1], [0, 0, 1, 1], [], []>} : vector<8x128xf32>, vector<128x512xf32>, vector<8x512xf32> -> vector<8x512xf32>
    %47 = arith.addf %45, %46 : vector<8x512xf32>
    %48 = vector.extract_strided_slice %47 {offsets = [0, 0], sizes = [8, 128], strides = [1, 1]} : vector<8x512xf32> to vector<8x128xf32>
    %49 = arith.negf %48 : vector<8x128xf32>
    %50 = math.exp %49 : vector<8x128xf32>
    %cst_19 = arith.constant 1.000000e+00 : f32
    %51 = vector.broadcast %cst_19 : f32 to vector<8x128xf32>
    %52 = arith.addf %51, %50 : vector<8x128xf32>
    %53 = arith.divf %51, %52 : vector<8x128xf32>
    %54 = vector.extract_strided_slice %47 {offsets = [0, 128], sizes = [8, 128], strides = [1, 1]} : vector<8x512xf32> to vector<8x128xf32>
    %55 = arith.negf %54 : vector<8x128xf32>
    %56 = math.exp %55 : vector<8x128xf32>
    %cst_20 = arith.constant 1.000000e+00 : f32
    %57 = vector.broadcast %cst_20 : f32 to vector<8x128xf32>
    %58 = arith.addf %57, %56 : vector<8x128xf32>
    %59 = arith.divf %57, %58 : vector<8x128xf32>
    %60 = vector.extract_strided_slice %47 {offsets = [0, 256], sizes = [8, 128], strides = [1, 1]} : vector<8x512xf32> to vector<8x128xf32>
    %61 = math.tanh %60 : vector<8x128xf32>
    %62 = vector.extract_strided_slice %47 {offsets = [0, 384], sizes = [8, 128], strides = [1, 1]} : vector<8x512xf32> to vector<8x128xf32>
    %63 = arith.negf %62 : vector<8x128xf32>
    %64 = math.exp %63 : vector<8x128xf32>
    %cst_21 = arith.constant 1.000000e+00 : f32
    %65 = vector.broadcast %cst_21 : f32 to vector<8x128xf32>
    %66 = arith.addf %65, %64 : vector<8x128xf32>
    %67 = arith.divf %65, %66 : vector<8x128xf32>
    %68 = arith.mulf %59, %37 : vector<8x128xf32>
    %69 = arith.mulf %53, %61 : vector<8x128xf32>
    %70 = arith.addf %68, %69 : vector<8x128xf32>
    %71 = math.tanh %70 : vector<8x128xf32>
    %72 = arith.mulf %67, %71 : vector<8x128xf32>
    %73 = arith.index_cast %43 : i32 to index
    %c0_22 = arith.constant 0 : index
    %74 = vector.load %arg17[%73, %c0_22] : memref<64x128xf32, #tpu.memory_space<vmem>>, vector<8x128xf32>
    tpu.vector_store %arg17[%73, %c0_22], %72 {strides = array<i32>} : memref<64x128xf32, #tpu.memory_space<vmem>>, vector<8x128xf32>,
    %c2_i32 = arith.constant 2 : i32
    %c8_i32_23 = arith.constant 8 : i32
    %75 = arith.muli %c2_i32, %c8_i32_23 : i32
    %76 = tpu.assume_multiple %75, 8 : i32
    %77 = arith.index_cast %76 : i32 to index
    %c0_24 = arith.constant 0 : index
    %78 = vector.load %arg16[%77, %c0_24] : memref<64x512xf32, #tpu.memory_space<vmem>>, vector<8x512xf32>
    %cst_25 = arith.constant dense<0.000000e+00> : vector<8x512xf32>
    %79 = tpu.matmul %72, %8, %cst_25 {dimension_numbers = #tpu.dot_dimension_numbers<[1], [0], [0], [1], [0, 0, 1, 1], [], []>} : vector<8x128xf32>, vector<128x512xf32>, vector<8x512xf32> -> vector<8x512xf32>
    %80 = arith.addf %78, %79 : vector<8x512xf32>
    %81 = vector.extract_strided_slice %80 {offsets = [0, 0], sizes = [8, 128], strides = [1, 1]} : vector<8x512xf32> to vector<8x128xf32>
    %82 = arith.negf %81 : vector<8x128xf32>
    %83 = math.exp %82 : vector<8x128xf32>
    %cst_26 = arith.constant 1.000000e+00 : f32
    %84 = vector.broadcast %cst_26 : f32 to vector<8x128xf32>
    %85 = arith.addf %84, %83 : vector<8x128xf32>
    %86 = arith.divf %84, %85 : vector<8x128xf32>
    %87 = vector.extract_strided_slice %80 {offsets = [0, 128], sizes = [8, 128], strides = [1, 1]} : vector<8x512xf32> to vector<8x128xf32>
    %88 = arith.negf %87 : vector<8x128xf32>
    %89 = math.exp %88 : vector<8x128xf32>
    %cst_27 = arith.constant 1.000000e+00 : f32
    %90 = vector.broadcast %cst_27 : f32 to vector<8x128xf32>
    %91 = arith.addf %90, %89 : vector<8x128xf32>
    %92 = arith.divf %90, %91 : vector<8x128xf32>
    %93 = vector.extract_strided_slice %80 {offsets = [0, 256], sizes = [8, 128], strides = [1, 1]} : vector<8x512xf32> to vector<8x128xf32>
    %94 = math.tanh %93 : vector<8x128xf32>
    %95 = vector.extract_strided_slice %80 {offsets = [0, 384], sizes = [8, 128], strides = [1, 1]} : vector<8x512xf32> to vector<8x128xf32>
    %96 = arith.negf %95 : vector<8x128xf32>
    %97 = math.exp %96 : vector<8x128xf32>
    %cst_28 = arith.constant 1.000000e+00 : f32
    %98 = vector.broadcast %cst_28 : f32 to vector<8x128xf32>
    %99 = arith.addf %98, %97 : vector<8x128xf32>
    %100 = arith.divf %98, %99 : vector<8x128xf32>
    %101 = arith.mulf %92, %70 : vector<8x128xf32>
    %102 = arith.mulf %86, %94 : vector<8x128xf32>
    %103 = arith.addf %101, %102 : vector<8x128xf32>
    %104 = math.tanh %103 : vector<8x128xf32>
    %105 = arith.mulf %100, %104 : vector<8x128xf32>
    %106 = arith.index_cast %76 : i32 to index
    %c0_29 = arith.constant 0 : index
    %107 = vector.load %arg17[%106, %c0_29] : memref<64x128xf32, #tpu.memory_space<vmem>>, vector<8x128xf32>
    tpu.vector_store %arg17[%106, %c0_29], %105 {strides = array<i32>} : memref<64x128xf32, #tpu.memory_space<vmem>>, vector<8x128xf32>,
    %c3_i32 = arith.constant 3 : i32
    %c8_i32_30 = arith.constant 8 : i32
    %108 = arith.muli %c3_i32, %c8_i32_30 : i32
    %109 = tpu.assume_multiple %108, 8 : i32
    %110 = arith.index_cast %109 : i32 to index
    %c0_31 = arith.constant 0 : index
    %111 = vector.load %arg16[%110, %c0_31] : memref<64x512xf32, #tpu.memory_space<vmem>>, vector<8x512xf32>
    %cst_32 = arith.constant dense<0.000000e+00> : vector<8x512xf32>
    %112 = tpu.matmul %105, %8, %cst_32 {dimension_numbers = #tpu.dot_dimension_numbers<[1], [0], [0], [1], [0, 0, 1, 1], [], []>} : vector<8x128xf32>, vector<128x512xf32>, vector<8x512xf32> -> vector<8x512xf32>
    %113 = arith.addf %111, %112 : vector<8x512xf32>
    %114 = vector.extract_strided_slice %113 {offsets = [0, 0], sizes = [8, 128], strides = [1, 1]} : vector<8x512xf32> to vector<8x128xf32>
    %115 = arith.negf %114 : vector<8x128xf32>
    %116 = math.exp %115 : vector<8x128xf32>
    %cst_33 = arith.constant 1.000000e+00 : f32
    %117 = vector.broadcast %cst_33 : f32 to vector<8x128xf32>
    %118 = arith.addf %117, %116 : vector<8x128xf32>
    %119 = arith.divf %117, %118 : vector<8x128xf32>
    %120 = vector.extract_strided_slice %113 {offsets = [0, 128], sizes = [8, 128], strides = [1, 1]} : vector<8x512xf32> to vector<8x128xf32>
    %121 = arith.negf %120 : vector<8x128xf32>
    %122 = math.exp %121 : vector<8x128xf32>
    %cst_34 = arith.constant 1.000000e+00 : f32
    %123 = vector.broadcast %cst_34 : f32 to vector<8x128xf32>
    %124 = arith.addf %123, %122 : vector<8x128xf32>
    %125 = arith.divf %123, %124 : vector<8x128xf32>
    %126 = vector.extract_strided_slice %113 {offsets = [0, 256], sizes = [8, 128], strides = [1, 1]} : vector<8x512xf32> to vector<8x128xf32>
    %127 = math.tanh %126 : vector<8x128xf32>
    %128 = vector.extract_strided_slice %113 {offsets = [0, 384], sizes = [8, 128], strides = [1, 1]} : vector<8x512xf32> to vector<8x128xf32>
    %129 = arith.negf %128 : vector<8x128xf32>
    %130 = math.exp %129 : vector<8x128xf32>
    %cst_35 = arith.constant 1.000000e+00 : f32
    %131 = vector.broadcast %cst_35 : f32 to vector<8x128xf32>
    %132 = arith.addf %131, %130 : vector<8x128xf32>
    %133 = arith.divf %131, %132 : vector<8x128xf32>
    %134 = arith.mulf %125, %103 : vector<8x128xf32>
    %135 = arith.mulf %119, %127 : vector<8x128xf32>
    %136 = arith.addf %134, %135 : vector<8x128xf32>
    %137 = math.tanh %136 : vector<8x128xf32>
    %138 = arith.mulf %133, %137 : vector<8x128xf32>
    %139 = arith.index_cast %109 : i32 to index
    %c0_36 = arith.constant 0 : index
    %140 = vector.load %arg17[%139, %c0_36] : memref<64x128xf32, #tpu.memory_space<vmem>>, vector<8x128xf32>
    tpu.vector_store %arg17[%139, %c0_36], %138 {strides = array<i32>} : memref<64x128xf32, #tpu.memory_space<vmem>>, vector<8x128xf32>,
    %c4_i32 = arith.constant 4 : i32
    %c8_i32_37 = arith.constant 8 : i32
    %141 = arith.muli %c4_i32, %c8_i32_37 : i32
    %142 = tpu.assume_multiple %141, 8 : i32
    %143 = arith.index_cast %142 : i32 to index
    %c0_38 = arith.constant 0 : index
    %144 = vector.load %arg16[%143, %c0_38] : memref<64x512xf32, #tpu.memory_space<vmem>>, vector<8x512xf32>
    %cst_39 = arith.constant dense<0.000000e+00> : vector<8x512xf32>
    %145 = tpu.matmul %138, %8, %cst_39 {dimension_numbers = #tpu.dot_dimension_numbers<[1], [0], [0], [1], [0, 0, 1, 1], [], []>} : vector<8x128xf32>, vector<128x512xf32>, vector<8x512xf32> -> vector<8x512xf32>
    %146 = arith.addf %144, %145 : vector<8x512xf32>
    %147 = vector.extract_strided_slice %146 {offsets = [0, 0], sizes = [8, 128], strides = [1, 1]} : vector<8x512xf32> to vector<8x128xf32>
    %148 = arith.negf %147 : vector<8x128xf32>
    %149 = math.exp %148 : vector<8x128xf32>
    %cst_40 = arith.constant 1.000000e+00 : f32
    %150 = vector.broadcast %cst_40 : f32 to vector<8x128xf32>
    %151 = arith.addf %150, %149 : vector<8x128xf32>
    %152 = arith.divf %150, %151 : vector<8x128xf32>
    %153 = vector.extract_strided_slice %146 {offsets = [0, 128], sizes = [8, 128], strides = [1, 1]} : vector<8x512xf32> to vector<8x128xf32>
    %154 = arith.negf %153 : vector<8x128xf32>
    %155 = math.exp %154 : vector<8x128xf32>
    %cst_41 = arith.constant 1.000000e+00 : f32
    %156 = vector.broadcast %cst_41 : f32 to vector<8x128xf32>
    %157 = arith.addf %156, %155 : vector<8x128xf32>
    %158 = arith.divf %156, %157 : vector<8x128xf32>
    %159 = vector.extract_strided_slice %146 {offsets = [0, 256], sizes = [8, 128], strides = [1, 1]} : vector<8x512xf32> to vector<8x128xf32>
    %160 = math.tanh %159 : vector<8x128xf32>
    %161 = vector.extract_strided_slice %146 {offsets = [0, 384], sizes = [8, 128], strides = [1, 1]} : vector<8x512xf32> to vector<8x128xf32>
    %162 = arith.negf %161 : vector<8x128xf32>
    %163 = math.exp %162 : vector<8x128xf32>
    %cst_42 = arith.constant 1.000000e+00 : f32
    %164 = vector.broadcast %cst_42 : f32 to vector<8x128xf32>
    %165 = arith.addf %164, %163 : vector<8x128xf32>
    %166 = arith.divf %164, %165 : vector<8x128xf32>
    %167 = arith.mulf %158, %136 : vector<8x128xf32>
    %168 = arith.mulf %152, %160 : vector<8x128xf32>
    %169 = arith.addf %167, %168 : vector<8x128xf32>
    %170 = math.tanh %169 : vector<8x128xf32>
    %171 = arith.mulf %166, %170 : vector<8x128xf32>
    %172 = arith.index_cast %142 : i32 to index
    %c0_43 = arith.constant 0 : index
    %173 = vector.load %arg17[%172, %c0_43] : memref<64x128xf32, #tpu.memory_space<vmem>>, vector<8x128xf32>
    tpu.vector_store %arg17[%172, %c0_43], %171 {strides = array<i32>} : memref<64x128xf32, #tpu.memory_space<vmem>>, vector<8x128xf32>,
    %c5_i32 = arith.constant 5 : i32
    %c8_i32_44 = arith.constant 8 : i32
    %174 = arith.muli %c5_i32, %c8_i32_44 : i32
    %175 = tpu.assume_multiple %174, 8 : i32
    %176 = arith.index_cast %175 : i32 to index
    %c0_45 = arith.constant 0 : index
    %177 = vector.load %arg16[%176, %c0_45] : memref<64x512xf32, #tpu.memory_space<vmem>>, vector<8x512xf32>
    %cst_46 = arith.constant dense<0.000000e+00> : vector<8x512xf32>
    %178 = tpu.matmul %171, %8, %cst_46 {dimension_numbers = #tpu.dot_dimension_numbers<[1], [0], [0], [1], [0, 0, 1, 1], [], []>} : vector<8x128xf32>, vector<128x512xf32>, vector<8x512xf32> -> vector<8x512xf32>
    %179 = arith.addf %177, %178 : vector<8x512xf32>
    %180 = vector.extract_strided_slice %179 {offsets = [0, 0], sizes = [8, 128], strides = [1, 1]} : vector<8x512xf32> to vector<8x128xf32>
    %181 = arith.negf %180 : vector<8x128xf32>
    %182 = math.exp %181 : vector<8x128xf32>
    %cst_47 = arith.constant 1.000000e+00 : f32
    %183 = vector.broadcast %cst_47 : f32 to vector<8x128xf32>
    %184 = arith.addf %183, %182 : vector<8x128xf32>
    %185 = arith.divf %183, %184 : vector<8x128xf32>
    %186 = vector.extract_strided_slice %179 {offsets = [0, 128], sizes = [8, 128], strides = [1, 1]} : vector<8x512xf32> to vector<8x128xf32>
    %187 = arith.negf %186 : vector<8x128xf32>
    %188 = math.exp %187 : vector<8x128xf32>
    %cst_48 = arith.constant 1.000000e+00 : f32
    %189 = vector.broadcast %cst_48 : f32 to vector<8x128xf32>
    %190 = arith.addf %189, %188 : vector<8x128xf32>
    %191 = arith.divf %189, %190 : vector<8x128xf32>
    %192 = vector.extract_strided_slice %179 {offsets = [0, 256], sizes = [8, 128], strides = [1, 1]} : vector<8x512xf32> to vector<8x128xf32>
    %193 = math.tanh %192 : vector<8x128xf32>
    %194 = vector.extract_strided_slice %179 {offsets = [0, 384], sizes = [8, 128], strides = [1, 1]} : vector<8x512xf32> to vector<8x128xf32>
    %195 = arith.negf %194 : vector<8x128xf32>
    %196 = math.exp %195 : vector<8x128xf32>
    %cst_49 = arith.constant 1.000000e+00 : f32
    %197 = vector.broadcast %cst_49 : f32 to vector<8x128xf32>
    %198 = arith.addf %197, %196 : vector<8x128xf32>
    %199 = arith.divf %197, %198 : vector<8x128xf32>
    %200 = arith.mulf %191, %169 : vector<8x128xf32>
    %201 = arith.mulf %185, %193 : vector<8x128xf32>
    %202 = arith.addf %200, %201 : vector<8x128xf32>
    %203 = math.tanh %202 : vector<8x128xf32>
    %204 = arith.mulf %199, %203 : vector<8x128xf32>
    %205 = arith.index_cast %175 : i32 to index
    %c0_50 = arith.constant 0 : index
    %206 = vector.load %arg17[%205, %c0_50] : memref<64x128xf32, #tpu.memory_space<vmem>>, vector<8x128xf32>
    tpu.vector_store %arg17[%205, %c0_50], %204 {strides = array<i32>} : memref<64x128xf32, #tpu.memory_space<vmem>>, vector<8x128xf32>,
    %c6_i32 = arith.constant 6 : i32
    %c8_i32_51 = arith.constant 8 : i32
    %207 = arith.muli %c6_i32, %c8_i32_51 : i32
    %208 = tpu.assume_multiple %207, 8 : i32
    %209 = arith.index_cast %208 : i32 to index
    %c0_52 = arith.constant 0 : index
    %210 = vector.load %arg16[%209, %c0_52] : memref<64x512xf32, #tpu.memory_space<vmem>>, vector<8x512xf32>
    %cst_53 = arith.constant dense<0.000000e+00> : vector<8x512xf32>
    %211 = tpu.matmul %204, %8, %cst_53 {dimension_numbers = #tpu.dot_dimension_numbers<[1], [0], [0], [1], [0, 0, 1, 1], [], []>} : vector<8x128xf32>, vector<128x512xf32>, vector<8x512xf32> -> vector<8x512xf32>
    %212 = arith.addf %210, %211 : vector<8x512xf32>
    %213 = vector.extract_strided_slice %212 {offsets = [0, 0], sizes = [8, 128], strides = [1, 1]} : vector<8x512xf32> to vector<8x128xf32>
    %214 = arith.negf %213 : vector<8x128xf32>
    %215 = math.exp %214 : vector<8x128xf32>
    %cst_54 = arith.constant 1.000000e+00 : f32
    %216 = vector.broadcast %cst_54 : f32 to vector<8x128xf32>
    %217 = arith.addf %216, %215 : vector<8x128xf32>
    %218 = arith.divf %216, %217 : vector<8x128xf32>
    %219 = vector.extract_strided_slice %212 {offsets = [0, 128], sizes = [8, 128], strides = [1, 1]} : vector<8x512xf32> to vector<8x128xf32>
    %220 = arith.negf %219 : vector<8x128xf32>
    %221 = math.exp %220 : vector<8x128xf32>
    %cst_55 = arith.constant 1.000000e+00 : f32
    %222 = vector.broadcast %cst_55 : f32 to vector<8x128xf32>
    %223 = arith.addf %222, %221 : vector<8x128xf32>
    %224 = arith.divf %222, %223 : vector<8x128xf32>
    %225 = vector.extract_strided_slice %212 {offsets = [0, 256], sizes = [8, 128], strides = [1, 1]} : vector<8x512xf32> to vector<8x128xf32>
    %226 = math.tanh %225 : vector<8x128xf32>
    %227 = vector.extract_strided_slice %212 {offsets = [0, 384], sizes = [8, 128], strides = [1, 1]} : vector<8x512xf32> to vector<8x128xf32>
    %228 = arith.negf %227 : vector<8x128xf32>
    %229 = math.exp %228 : vector<8x128xf32>
    %cst_56 = arith.constant 1.000000e+00 : f32
    %230 = vector.broadcast %cst_56 : f32 to vector<8x128xf32>
    %231 = arith.addf %230, %229 : vector<8x128xf32>
    %232 = arith.divf %230, %231 : vector<8x128xf32>
    %233 = arith.mulf %224, %202 : vector<8x128xf32>
    %234 = arith.mulf %218, %226 : vector<8x128xf32>
    %235 = arith.addf %233, %234 : vector<8x128xf32>
    %236 = math.tanh %235 : vector<8x128xf32>
    %237 = arith.mulf %232, %236 : vector<8x128xf32>
    %238 = arith.index_cast %208 : i32 to index
    %c0_57 = arith.constant 0 : index
    %239 = vector.load %arg17[%238, %c0_57] : memref<64x128xf32, #tpu.memory_space<vmem>>, vector<8x128xf32>
    tpu.vector_store %arg17[%238, %c0_57], %237 {strides = array<i32>} : memref<64x128xf32, #tpu.memory_space<vmem>>, vector<8x128xf32>,
    %c7_i32 = arith.constant 7 : i32
    %c8_i32_58 = arith.constant 8 : i32
    %240 = arith.muli %c7_i32, %c8_i32_58 : i32
    %241 = tpu.assume_multiple %240, 8 : i32
    %242 = arith.index_cast %241 : i32 to index
    %c0_59 = arith.constant 0 : index
    %243 = vector.load %arg16[%242, %c0_59] : memref<64x512xf32, #tpu.memory_space<vmem>>, vector<8x512xf32>
    %cst_60 = arith.constant dense<0.000000e+00> : vector<8x512xf32>
    %244 = tpu.matmul %237, %8, %cst_60 {dimension_numbers = #tpu.dot_dimension_numbers<[1], [0], [0], [1], [0, 0, 1, 1], [], []>} : vector<8x128xf32>, vector<128x512xf32>, vector<8x512xf32> -> vector<8x512xf32>
    %245 = arith.addf %243, %244 : vector<8x512xf32>
    %246 = vector.extract_strided_slice %245 {offsets = [0, 0], sizes = [8, 128], strides = [1, 1]} : vector<8x512xf32> to vector<8x128xf32>
    %247 = arith.negf %246 : vector<8x128xf32>
    %248 = math.exp %247 : vector<8x128xf32>
    %cst_61 = arith.constant 1.000000e+00 : f32
    %249 = vector.broadcast %cst_61 : f32 to vector<8x128xf32>
    %250 = arith.addf %249, %248 : vector<8x128xf32>
    %251 = arith.divf %249, %250 : vector<8x128xf32>
    %252 = vector.extract_strided_slice %245 {offsets = [0, 128], sizes = [8, 128], strides = [1, 1]} : vector<8x512xf32> to vector<8x128xf32>
    %253 = arith.negf %252 : vector<8x128xf32>
    %254 = math.exp %253 : vector<8x128xf32>
    %cst_62 = arith.constant 1.000000e+00 : f32
    %255 = vector.broadcast %cst_62 : f32 to vector<8x128xf32>
    %256 = arith.addf %255, %254 : vector<8x128xf32>
    %257 = arith.divf %255, %256 : vector<8x128xf32>
    %258 = vector.extract_strided_slice %245 {offsets = [0, 256], sizes = [8, 128], strides = [1, 1]} : vector<8x512xf32> to vector<8x128xf32>
    %259 = math.tanh %258 : vector<8x128xf32>
    %260 = vector.extract_strided_slice %245 {offsets = [0, 384], sizes = [8, 128], strides = [1, 1]} : vector<8x512xf32> to vector<8x128xf32>
    %261 = arith.negf %260 : vector<8x128xf32>
    %262 = math.exp %261 : vector<8x128xf32>
    %cst_63 = arith.constant 1.000000e+00 : f32
    %263 = vector.broadcast %cst_63 : f32 to vector<8x128xf32>
    %264 = arith.addf %263, %262 : vector<8x128xf32>
    %265 = arith.divf %263, %264 : vector<8x128xf32>
    %266 = arith.mulf %257, %235 : vector<8x128xf32>
    %267 = arith.mulf %251, %259 : vector<8x128xf32>
    %268 = arith.addf %266, %267 : vector<8x128xf32>
    %269 = math.tanh %268 : vector<8x128xf32>
    %270 = arith.mulf %265, %269 : vector<8x128xf32>
    %271 = arith.index_cast %241 : i32 to index
    %c0_64 = arith.constant 0 : index
    %272 = vector.load %arg17[%271, %c0_64] : memref<64x128xf32, #tpu.memory_space<vmem>>, vector<8x128xf32>
    tpu.vector_store %arg17[%271, %c0_64], %270 {strides = array<i32>} : memref<64x128xf32, #tpu.memory_space<vmem>>, vector<8x128xf32>,
    %c8_i32_65 = arith.constant 8 : i32
    %c0_66 = arith.constant 0 : index
    %c0_67 = arith.constant 0 : index
    %273 = vector.load %arg17[%c0_66, %c0_67] : memref<64x128xf32, #tpu.memory_space<vmem>>, vector<64x128xf32>
    %c0_68 = arith.constant 0 : index
    %c0_69 = arith.constant 0 : index
    %274 = vector.load %arg4[%c0_68, %c0_69] : memref<128x512xf32, #tpu.memory_space<vmem>>, vector<128x512xf32>
    %cst_70 = arith.constant dense<0.000000e+00> : vector<64x512xf32>
    %275 = tpu.matmul %273, %274, %cst_70 {dimension_numbers = #tpu.dot_dimension_numbers<[1], [0], [0], [1], [0, 0, 1, 1], [], []>} : vector<64x128xf32>, vector<128x512xf32>, vector<64x512xf32> -> vector<64x512xf32>
    %c0_71 = arith.constant 0 : index
    %c0_72 = arith.constant 0 : index
    %276 = vector.load %arg6[%c0_71, %c0_72] : memref<1x512xf32, #tpu.memory_space<vmem>>, vector<1x512xf32>
    %277 = vector.broadcast %276 : vector<1x512xf32> to vector<64x512xf32>
    %278 = arith.addf %275, %277 : vector<64x512xf32>
    %c0_73 = arith.constant 0 : index
    %c0_74 = arith.constant 0 : index
    %279 = vector.load %arg16[%c0_73, %c0_74] : memref<64x512xf32, #tpu.memory_space<vmem>>, vector<64x512xf32>
    tpu.vector_store %arg16[%c0_73, %c0_74], %278 {strides = array<i32>} : memref<64x512xf32, #tpu.memory_space<vmem>>, vector<64x512xf32>,
    %c0_75 = arith.constant 0 : index
    %c0_76 = arith.constant 0 : index
    %280 = vector.load %arg5[%c0_75, %c0_76] : memref<128x512xf32, #tpu.memory_space<vmem>>, vector<128x512xf32>
    %c0_i32_77 = arith.constant 0 : i32
    %c8_i32_78 = arith.constant 8 : i32
    %281 = arith.muli %c0_i32_77, %c8_i32_78 : i32
    %282 = tpu.assume_multiple %281, 8 : i32
    %283 = arith.index_cast %282 : i32 to index
    %c0_79 = arith.constant 0 : index
    %284 = vector.load %arg16[%283, %c0_79] : memref<64x512xf32, #tpu.memory_space<vmem>>, vector<8x512xf32>
    %cst_80 = arith.constant dense<0.000000e+00> : vector<8x512xf32>
    %285 = tpu.matmul %0, %280, %cst_80 {dimension_numbers = #tpu.dot_dimension_numbers<[1], [0], [0], [1], [0, 0, 1, 1], [], []>} : vector<8x128xf32>, vector<128x512xf32>, vector<8x512xf32> -> vector<8x512xf32>
    %286 = arith.addf %284, %285 : vector<8x512xf32>
    %287 = vector.extract_strided_slice %286 {offsets = [0, 0], sizes = [8, 128], strides = [1, 1]} : vector<8x512xf32> to vector<8x128xf32>
    %288 = arith.negf %287 : vector<8x128xf32>
    %289 = math.exp %288 : vector<8x128xf32>
    %cst_81 = arith.constant 1.000000e+00 : f32
    %290 = vector.broadcast %cst_81 : f32 to vector<8x128xf32>
    %291 = arith.addf %290, %289 : vector<8x128xf32>
    %292 = arith.divf %290, %291 : vector<8x128xf32>
    %293 = vector.extract_strided_slice %286 {offsets = [0, 128], sizes = [8, 128], strides = [1, 1]} : vector<8x512xf32> to vector<8x128xf32>
    %294 = arith.negf %293 : vector<8x128xf32>
    %295 = math.exp %294 : vector<8x128xf32>
    %cst_82 = arith.constant 1.000000e+00 : f32
    %296 = vector.broadcast %cst_82 : f32 to vector<8x128xf32>
    %297 = arith.addf %296, %295 : vector<8x128xf32>
    %298 = arith.divf %296, %297 : vector<8x128xf32>
    %299 = vector.extract_strided_slice %286 {offsets = [0, 256], sizes = [8, 128], strides = [1, 1]} : vector<8x512xf32> to vector<8x128xf32>
    %300 = math.tanh %299 : vector<8x128xf32>
    %301 = vector.extract_strided_slice %286 {offsets = [0, 384], sizes = [8, 128], strides = [1, 1]} : vector<8x512xf32> to vector<8x128xf32>
    %302 = arith.negf %301 : vector<8x128xf32>
    %303 = math.exp %302 : vector<8x128xf32>
    %cst_83 = arith.constant 1.000000e+00 : f32
    %304 = vector.broadcast %cst_83 : f32 to vector<8x128xf32>
    %305 = arith.addf %304, %303 : vector<8x128xf32>
    %306 = arith.divf %304, %305 : vector<8x128xf32>
    %307 = arith.mulf %298, %0 : vector<8x128xf32>
    %308 = arith.mulf %292, %300 : vector<8x128xf32>
    %309 = arith.addf %307, %308 : vector<8x128xf32>
    %310 = math.tanh %309 : vector<8x128xf32>
    %311 = arith.mulf %306, %310 : vector<8x128xf32>
    %312 = arith.index_cast %282 : i32 to index
    %c0_84 = arith.constant 0 : index
    %313 = vector.load %arg17[%312, %c0_84] : memref<64x128xf32, #tpu.memory_space<vmem>>, vector<8x128xf32>
    tpu.vector_store %arg17[%312, %c0_84], %311 {strides = array<i32>} : memref<64x128xf32, #tpu.memory_space<vmem>>, vector<8x128xf32>,
    %c1_i32_85 = arith.constant 1 : i32
    %c8_i32_86 = arith.constant 8 : i32
    %314 = arith.muli %c1_i32_85, %c8_i32_86 : i32
    %315 = tpu.assume_multiple %314, 8 : i32
    %316 = arith.index_cast %315 : i32 to index
    %c0_87 = arith.constant 0 : index
    %317 = vector.load %arg16[%316, %c0_87] : memref<64x512xf32, #tpu.memory_space<vmem>>, vector<8x512xf32>
    %cst_88 = arith.constant dense<0.000000e+00> : vector<8x512xf32>
    %318 = tpu.matmul %311, %280, %cst_88 {dimension_numbers = #tpu.dot_dimension_numbers<[1], [0], [0], [1], [0, 0, 1, 1], [], []>} : vector<8x128xf32>, vector<128x512xf32>, vector<8x512xf32> -> vector<8x512xf32>
    %319 = arith.addf %317, %318 : vector<8x512xf32>
    %320 = vector.extract_strided_slice %319 {offsets = [0, 0], sizes = [8, 128], strides = [1, 1]} : vector<8x512xf32> to vector<8x128xf32>
    %321 = arith.negf %320 : vector<8x128xf32>
    %322 = math.exp %321 : vector<8x128xf32>
    %cst_89 = arith.constant 1.000000e+00 : f32
    %323 = vector.broadcast %cst_89 : f32 to vector<8x128xf32>
    %324 = arith.addf %323, %322 : vector<8x128xf32>
    %325 = arith.divf %323, %324 : vector<8x128xf32>
    %326 = vector.extract_strided_slice %319 {offsets = [0, 128], sizes = [8, 128], strides = [1, 1]} : vector<8x512xf32> to vector<8x128xf32>
    %327 = arith.negf %326 : vector<8x128xf32>
    %328 = math.exp %327 : vector<8x128xf32>
    %cst_90 = arith.constant 1.000000e+00 : f32
    %329 = vector.broadcast %cst_90 : f32 to vector<8x128xf32>
    %330 = arith.addf %329, %328 : vector<8x128xf32>
    %331 = arith.divf %329, %330 : vector<8x128xf32>
    %332 = vector.extract_strided_slice %319 {offsets = [0, 256], sizes = [8, 128], strides = [1, 1]} : vector<8x512xf32> to vector<8x128xf32>
    %333 = math.tanh %332 : vector<8x128xf32>
    %334 = vector.extract_strided_slice %319 {offsets = [0, 384], sizes = [8, 128], strides = [1, 1]} : vector<8x512xf32> to vector<8x128xf32>
    %335 = arith.negf %334 : vector<8x128xf32>
    %336 = math.exp %335 : vector<8x128xf32>
    %cst_91 = arith.constant 1.000000e+00 : f32
    %337 = vector.broadcast %cst_91 : f32 to vector<8x128xf32>
    %338 = arith.addf %337, %336 : vector<8x128xf32>
    %339 = arith.divf %337, %338 : vector<8x128xf32>
    %340 = arith.mulf %331, %309 : vector<8x128xf32>
    %341 = arith.mulf %325, %333 : vector<8x128xf32>
    %342 = arith.addf %340, %341 : vector<8x128xf32>
    %343 = math.tanh %342 : vector<8x128xf32>
    %344 = arith.mulf %339, %343 : vector<8x128xf32>
    %345 = arith.index_cast %315 : i32 to index
    %c0_92 = arith.constant 0 : index
    %346 = vector.load %arg17[%345, %c0_92] : memref<64x128xf32, #tpu.memory_space<vmem>>, vector<8x128xf32>
    tpu.vector_store %arg17[%345, %c0_92], %344 {strides = array<i32>} : memref<64x128xf32, #tpu.memory_space<vmem>>, vector<8x128xf32>,
    %c2_i32_93 = arith.constant 2 : i32
    %c8_i32_94 = arith.constant 8 : i32
    %347 = arith.muli %c2_i32_93, %c8_i32_94 : i32
    %348 = tpu.assume_multiple %347, 8 : i32
    %349 = arith.index_cast %348 : i32 to index
    %c0_95 = arith.constant 0 : index
    %350 = vector.load %arg16[%349, %c0_95] : memref<64x512xf32, #tpu.memory_space<vmem>>, vector<8x512xf32>
    %cst_96 = arith.constant dense<0.000000e+00> : vector<8x512xf32>
    %351 = tpu.matmul %344, %280, %cst_96 {dimension_numbers = #tpu.dot_dimension_numbers<[1], [0], [0], [1], [0, 0, 1, 1], [], []>} : vector<8x128xf32>, vector<128x512xf32>, vector<8x512xf32> -> vector<8x512xf32>
    %352 = arith.addf %350, %351 : vector<8x512xf32>
    %353 = vector.extract_strided_slice %352 {offsets = [0, 0], sizes = [8, 128], strides = [1, 1]} : vector<8x512xf32> to vector<8x128xf32>
    %354 = arith.negf %353 : vector<8x128xf32>
    %355 = math.exp %354 : vector<8x128xf32>
    %cst_97 = arith.constant 1.000000e+00 : f32
    %356 = vector.broadcast %cst_97 : f32 to vector<8x128xf32>
    %357 = arith.addf %356, %355 : vector<8x128xf32>
    %358 = arith.divf %356, %357 : vector<8x128xf32>
    %359 = vector.extract_strided_slice %352 {offsets = [0, 128], sizes = [8, 128], strides = [1, 1]} : vector<8x512xf32> to vector<8x128xf32>
    %360 = arith.negf %359 : vector<8x128xf32>
    %361 = math.exp %360 : vector<8x128xf32>
    %cst_98 = arith.constant 1.000000e+00 : f32
    %362 = vector.broadcast %cst_98 : f32 to vector<8x128xf32>
    %363 = arith.addf %362, %361 : vector<8x128xf32>
    %364 = arith.divf %362, %363 : vector<8x128xf32>
    %365 = vector.extract_strided_slice %352 {offsets = [0, 256], sizes = [8, 128], strides = [1, 1]} : vector<8x512xf32> to vector<8x128xf32>
    %366 = math.tanh %365 : vector<8x128xf32>
    %367 = vector.extract_strided_slice %352 {offsets = [0, 384], sizes = [8, 128], strides = [1, 1]} : vector<8x512xf32> to vector<8x128xf32>
    %368 = arith.negf %367 : vector<8x128xf32>
    %369 = math.exp %368 : vector<8x128xf32>
    %cst_99 = arith.constant 1.000000e+00 : f32
    %370 = vector.broadcast %cst_99 : f32 to vector<8x128xf32>
    %371 = arith.addf %370, %369 : vector<8x128xf32>
    %372 = arith.divf %370, %371 : vector<8x128xf32>
    %373 = arith.mulf %364, %342 : vector<8x128xf32>
    %374 = arith.mulf %358, %366 : vector<8x128xf32>
    %375 = arith.addf %373, %374 : vector<8x128xf32>
    %376 = math.tanh %375 : vector<8x128xf32>
    %377 = arith.mulf %372, %376 : vector<8x128xf32>
    %378 = arith.index_cast %348 : i32 to index
    %c0_100 = arith.constant 0 : index
    %379 = vector.load %arg17[%378, %c0_100] : memref<64x128xf32, #tpu.memory_space<vmem>>, vector<8x128xf32>
    tpu.vector_store %arg17[%378, %c0_100], %377 {strides = array<i32>} : memref<64x128xf32, #tpu.memory_space<vmem>>, vector<8x128xf32>,
    %c3_i32_101 = arith.constant 3 : i32
    %c8_i32_102 = arith.constant 8 : i32
    %380 = arith.muli %c3_i32_101, %c8_i32_102 : i32
    %381 = tpu.assume_multiple %380, 8 : i32
    %382 = arith.index_cast %381 : i32 to index
    %c0_103 = arith.constant 0 : index
    %383 = vector.load %arg16[%382, %c0_103] : memref<64x512xf32, #tpu.memory_space<vmem>>, vector<8x512xf32>
    %cst_104 = arith.constant dense<0.000000e+00> : vector<8x512xf32>
    %384 = tpu.matmul %377, %280, %cst_104 {dimension_numbers = #tpu.dot_dimension_numbers<[1], [0], [0], [1], [0, 0, 1, 1], [], []>} : vector<8x128xf32>, vector<128x512xf32>, vector<8x512xf32> -> vector<8x512xf32>
    %385 = arith.addf %383, %384 : vector<8x512xf32>
    %386 = vector.extract_strided_slice %385 {offsets = [0, 0], sizes = [8, 128], strides = [1, 1]} : vector<8x512xf32> to vector<8x128xf32>
    %387 = arith.negf %386 : vector<8x128xf32>
    %388 = math.exp %387 : vector<8x128xf32>
    %cst_105 = arith.constant 1.000000e+00 : f32
    %389 = vector.broadcast %cst_105 : f32 to vector<8x128xf32>
    %390 = arith.addf %389, %388 : vector<8x128xf32>
    %391 = arith.divf %389, %390 : vector<8x128xf32>
    %392 = vector.extract_strided_slice %385 {offsets = [0, 128], sizes = [8, 128], strides = [1, 1]} : vector<8x512xf32> to vector<8x128xf32>
    %393 = arith.negf %392 : vector<8x128xf32>
    %394 = math.exp %393 : vector<8x128xf32>
    %cst_106 = arith.constant 1.000000e+00 : f32
    %395 = vector.broadcast %cst_106 : f32 to vector<8x128xf32>
    %396 = arith.addf %395, %394 : vector<8x128xf32>
    %397 = arith.divf %395, %396 : vector<8x128xf32>
    %398 = vector.extract_strided_slice %385 {offsets = [0, 256], sizes = [8, 128], strides = [1, 1]} : vector<8x512xf32> to vector<8x128xf32>
    %399 = math.tanh %398 : vector<8x128xf32>
    %400 = vector.extract_strided_slice %385 {offsets = [0, 384], sizes = [8, 128], strides = [1, 1]} : vector<8x512xf32> to vector<8x128xf32>
    %401 = arith.negf %400 : vector<8x128xf32>
    %402 = math.exp %401 : vector<8x128xf32>
    %cst_107 = arith.constant 1.000000e+00 : f32
    %403 = vector.broadcast %cst_107 : f32 to vector<8x128xf32>
    %404 = arith.addf %403, %402 : vector<8x128xf32>
    %405 = arith.divf %403, %404 : vector<8x128xf32>
    %406 = arith.mulf %397, %375 : vector<8x128xf32>
    %407 = arith.mulf %391, %399 : vector<8x128xf32>
    %408 = arith.addf %406, %407 : vector<8x128xf32>
    %409 = math.tanh %408 : vector<8x128xf32>
    %410 = arith.mulf %405, %409 : vector<8x128xf32>
    %411 = arith.index_cast %381 : i32 to index
    %c0_108 = arith.constant 0 : index
    %412 = vector.load %arg17[%411, %c0_108] : memref<64x128xf32, #tpu.memory_space<vmem>>, vector<8x128xf32>
    tpu.vector_store %arg17[%411, %c0_108], %410 {strides = array<i32>} : memref<64x128xf32, #tpu.memory_space<vmem>>, vector<8x128xf32>,
    %c4_i32_109 = arith.constant 4 : i32
    %c8_i32_110 = arith.constant 8 : i32
    %413 = arith.muli %c4_i32_109, %c8_i32_110 : i32
    %414 = tpu.assume_multiple %413, 8 : i32
    %415 = arith.index_cast %414 : i32 to index
    %c0_111 = arith.constant 0 : index
    %416 = vector.load %arg16[%415, %c0_111] : memref<64x512xf32, #tpu.memory_space<vmem>>, vector<8x512xf32>
    %cst_112 = arith.constant dense<0.000000e+00> : vector<8x512xf32>
    %417 = tpu.matmul %410, %280, %cst_112 {dimension_numbers = #tpu.dot_dimension_numbers<[1], [0], [0], [1], [0, 0, 1, 1], [], []>} : vector<8x128xf32>, vector<128x512xf32>, vector<8x512xf32> -> vector<8x512xf32>
    %418 = arith.addf %416, %417 : vector<8x512xf32>
    %419 = vector.extract_strided_slice %418 {offsets = [0, 0], sizes = [8, 128], strides = [1, 1]} : vector<8x512xf32> to vector<8x128xf32>
    %420 = arith.negf %419 : vector<8x128xf32>
    %421 = math.exp %420 : vector<8x128xf32>
    %cst_113 = arith.constant 1.000000e+00 : f32
    %422 = vector.broadcast %cst_113 : f32 to vector<8x128xf32>
    %423 = arith.addf %422, %421 : vector<8x128xf32>
    %424 = arith.divf %422, %423 : vector<8x128xf32>
    %425 = vector.extract_strided_slice %418 {offsets = [0, 128], sizes = [8, 128], strides = [1, 1]} : vector<8x512xf32> to vector<8x128xf32>
    %426 = arith.negf %425 : vector<8x128xf32>
    %427 = math.exp %426 : vector<8x128xf32>
    %cst_114 = arith.constant 1.000000e+00 : f32
    %428 = vector.broadcast %cst_114 : f32 to vector<8x128xf32>
    %429 = arith.addf %428, %427 : vector<8x128xf32>
    %430 = arith.divf %428, %429 : vector<8x128xf32>
    %431 = vector.extract_strided_slice %418 {offsets = [0, 256], sizes = [8, 128], strides = [1, 1]} : vector<8x512xf32> to vector<8x128xf32>
    %432 = math.tanh %431 : vector<8x128xf32>
    %433 = vector.extract_strided_slice %418 {offsets = [0, 384], sizes = [8, 128], strides = [1, 1]} : vector<8x512xf32> to vector<8x128xf32>
    %434 = arith.negf %433 : vector<8x128xf32>
    %435 = math.exp %434 : vector<8x128xf32>
    %cst_115 = arith.constant 1.000000e+00 : f32
    %436 = vector.broadcast %cst_115 : f32 to vector<8x128xf32>
    %437 = arith.addf %436, %435 : vector<8x128xf32>
    %438 = arith.divf %436, %437 : vector<8x128xf32>
    %439 = arith.mulf %430, %408 : vector<8x128xf32>
    %440 = arith.mulf %424, %432 : vector<8x128xf32>
    %441 = arith.addf %439, %440 : vector<8x128xf32>
    %442 = math.tanh %441 : vector<8x128xf32>
    %443 = arith.mulf %438, %442 : vector<8x128xf32>
    %444 = arith.index_cast %414 : i32 to index
    %c0_116 = arith.constant 0 : index
    %445 = vector.load %arg17[%444, %c0_116] : memref<64x128xf32, #tpu.memory_space<vmem>>, vector<8x128xf32>
    tpu.vector_store %arg17[%444, %c0_116], %443 {strides = array<i32>} : memref<64x128xf32, #tpu.memory_space<vmem>>, vector<8x128xf32>,
    %c5_i32_117 = arith.constant 5 : i32
    %c8_i32_118 = arith.constant 8 : i32
    %446 = arith.muli %c5_i32_117, %c8_i32_118 : i32
    %447 = tpu.assume_multiple %446, 8 : i32
    %448 = arith.index_cast %447 : i32 to index
    %c0_119 = arith.constant 0 : index
    %449 = vector.load %arg16[%448, %c0_119] : memref<64x512xf32, #tpu.memory_space<vmem>>, vector<8x512xf32>
    %cst_120 = arith.constant dense<0.000000e+00> : vector<8x512xf32>
    %450 = tpu.matmul %443, %280, %cst_120 {dimension_numbers = #tpu.dot_dimension_numbers<[1], [0], [0], [1], [0, 0, 1, 1], [], []>} : vector<8x128xf32>, vector<128x512xf32>, vector<8x512xf32> -> vector<8x512xf32>
    %451 = arith.addf %449, %450 : vector<8x512xf32>
    %452 = vector.extract_strided_slice %451 {offsets = [0, 0], sizes = [8, 128], strides = [1, 1]} : vector<8x512xf32> to vector<8x128xf32>
    %453 = arith.negf %452 : vector<8x128xf32>
    %454 = math.exp %453 : vector<8x128xf32>
    %cst_121 = arith.constant 1.000000e+00 : f32
    %455 = vector.broadcast %cst_121 : f32 to vector<8x128xf32>
    %456 = arith.addf %455, %454 : vector<8x128xf32>
    %457 = arith.divf %455, %456 : vector<8x128xf32>
    %458 = vector.extract_strided_slice %451 {offsets = [0, 128], sizes = [8, 128], strides = [1, 1]} : vector<8x512xf32> to vector<8x128xf32>
    %459 = arith.negf %458 : vector<8x128xf32>
    %460 = math.exp %459 : vector<8x128xf32>
    %cst_122 = arith.constant 1.000000e+00 : f32
    %461 = vector.broadcast %cst_122 : f32 to vector<8x128xf32>
    %462 = arith.addf %461, %460 : vector<8x128xf32>
    %463 = arith.divf %461, %462 : vector<8x128xf32>
    %464 = vector.extract_strided_slice %451 {offsets = [0, 256], sizes = [8, 128], strides = [1, 1]} : vector<8x512xf32> to vector<8x128xf32>
    %465 = math.tanh %464 : vector<8x128xf32>
    %466 = vector.extract_strided_slice %451 {offsets = [0, 384], sizes = [8, 128], strides = [1, 1]} : vector<8x512xf32> to vector<8x128xf32>
    %467 = arith.negf %466 : vector<8x128xf32>
    %468 = math.exp %467 : vector<8x128xf32>
    %cst_123 = arith.constant 1.000000e+00 : f32
    %469 = vector.broadcast %cst_123 : f32 to vector<8x128xf32>
    %470 = arith.addf %469, %468 : vector<8x128xf32>
    %471 = arith.divf %469, %470 : vector<8x128xf32>
    %472 = arith.mulf %463, %441 : vector<8x128xf32>
    %473 = arith.mulf %457, %465 : vector<8x128xf32>
    %474 = arith.addf %472, %473 : vector<8x128xf32>
    %475 = math.tanh %474 : vector<8x128xf32>
    %476 = arith.mulf %471, %475 : vector<8x128xf32>
    %477 = arith.index_cast %447 : i32 to index
    %c0_124 = arith.constant 0 : index
    %478 = vector.load %arg17[%477, %c0_124] : memref<64x128xf32, #tpu.memory_space<vmem>>, vector<8x128xf32>
    tpu.vector_store %arg17[%477, %c0_124], %476 {strides = array<i32>} : memref<64x128xf32, #tpu.memory_space<vmem>>, vector<8x128xf32>,
    %c6_i32_125 = arith.constant 6 : i32
    %c8_i32_126 = arith.constant 8 : i32
    %479 = arith.muli %c6_i32_125, %c8_i32_126 : i32
    %480 = tpu.assume_multiple %479, 8 : i32
    %481 = arith.index_cast %480 : i32 to index
    %c0_127 = arith.constant 0 : index
    %482 = vector.load %arg16[%481, %c0_127] : memref<64x512xf32, #tpu.memory_space<vmem>>, vector<8x512xf32>
    %cst_128 = arith.constant dense<0.000000e+00> : vector<8x512xf32>
    %483 = tpu.matmul %476, %280, %cst_128 {dimension_numbers = #tpu.dot_dimension_numbers<[1], [0], [0], [1], [0, 0, 1, 1], [], []>} : vector<8x128xf32>, vector<128x512xf32>, vector<8x512xf32> -> vector<8x512xf32>
    %484 = arith.addf %482, %483 : vector<8x512xf32>
    %485 = vector.extract_strided_slice %484 {offsets = [0, 0], sizes = [8, 128], strides = [1, 1]} : vector<8x512xf32> to vector<8x128xf32>
    %486 = arith.negf %485 : vector<8x128xf32>
    %487 = math.exp %486 : vector<8x128xf32>
    %cst_129 = arith.constant 1.000000e+00 : f32
    %488 = vector.broadcast %cst_129 : f32 to vector<8x128xf32>
    %489 = arith.addf %488, %487 : vector<8x128xf32>
    %490 = arith.divf %488, %489 : vector<8x128xf32>
    %491 = vector.extract_strided_slice %484 {offsets = [0, 128], sizes = [8, 128], strides = [1, 1]} : vector<8x512xf32> to vector<8x128xf32>
    %492 = arith.negf %491 : vector<8x128xf32>
    %493 = math.exp %492 : vector<8x128xf32>
    %cst_130 = arith.constant 1.000000e+00 : f32
    %494 = vector.broadcast %cst_130 : f32 to vector<8x128xf32>
    %495 = arith.addf %494, %493 : vector<8x128xf32>
    %496 = arith.divf %494, %495 : vector<8x128xf32>
    %497 = vector.extract_strided_slice %484 {offsets = [0, 256], sizes = [8, 128], strides = [1, 1]} : vector<8x512xf32> to vector<8x128xf32>
    %498 = math.tanh %497 : vector<8x128xf32>
    %499 = vector.extract_strided_slice %484 {offsets = [0, 384], sizes = [8, 128], strides = [1, 1]} : vector<8x512xf32> to vector<8x128xf32>
    %500 = arith.negf %499 : vector<8x128xf32>
    %501 = math.exp %500 : vector<8x128xf32>
    %cst_131 = arith.constant 1.000000e+00 : f32
    %502 = vector.broadcast %cst_131 : f32 to vector<8x128xf32>
    %503 = arith.addf %502, %501 : vector<8x128xf32>
    %504 = arith.divf %502, %503 : vector<8x128xf32>
    %505 = arith.mulf %496, %474 : vector<8x128xf32>
    %506 = arith.mulf %490, %498 : vector<8x128xf32>
    %507 = arith.addf %505, %506 : vector<8x128xf32>
    %508 = math.tanh %507 : vector<8x128xf32>
    %509 = arith.mulf %504, %508 : vector<8x128xf32>
    %510 = arith.index_cast %480 : i32 to index
    %c0_132 = arith.constant 0 : index
    %511 = vector.load %arg17[%510, %c0_132] : memref<64x128xf32, #tpu.memory_space<vmem>>, vector<8x128xf32>
    tpu.vector_store %arg17[%510, %c0_132], %509 {strides = array<i32>} : memref<64x128xf32, #tpu.memory_space<vmem>>, vector<8x128xf32>,
    %c7_i32_133 = arith.constant 7 : i32
    %c8_i32_134 = arith.constant 8 : i32
    %512 = arith.muli %c7_i32_133, %c8_i32_134 : i32
    %513 = tpu.assume_multiple %512, 8 : i32
    %514 = arith.index_cast %513 : i32 to index
    %c0_135 = arith.constant 0 : index
    %515 = vector.load %arg16[%514, %c0_135] : memref<64x512xf32, #tpu.memory_space<vmem>>, vector<8x512xf32>
    %cst_136 = arith.constant dense<0.000000e+00> : vector<8x512xf32>
    %516 = tpu.matmul %509, %280, %cst_136 {dimension_numbers = #tpu.dot_dimension_numbers<[1], [0], [0], [1], [0, 0, 1, 1], [], []>} : vector<8x128xf32>, vector<128x512xf32>, vector<8x512xf32> -> vector<8x512xf32>
    %517 = arith.addf %515, %516 : vector<8x512xf32>
    %518 = vector.extract_strided_slice %517 {offsets = [0, 0], sizes = [8, 128], strides = [1, 1]} : vector<8x512xf32> to vector<8x128xf32>
    %519 = arith.negf %518 : vector<8x128xf32>
    %520 = math.exp %519 : vector<8x128xf32>
    %cst_137 = arith.constant 1.000000e+00 : f32
    %521 = vector.broadcast %cst_137 : f32 to vector<8x128xf32>
    %522 = arith.addf %521, %520 : vector<8x128xf32>
    %523 = arith.divf %521, %522 : vector<8x128xf32>
    %524 = vector.extract_strided_slice %517 {offsets = [0, 128], sizes = [8, 128], strides = [1, 1]} : vector<8x512xf32> to vector<8x128xf32>
    %525 = arith.negf %524 : vector<8x128xf32>
    %526 = math.exp %525 : vector<8x128xf32>
    %cst_138 = arith.constant 1.000000e+00 : f32
    %527 = vector.broadcast %cst_138 : f32 to vector<8x128xf32>
    %528 = arith.addf %527, %526 : vector<8x128xf32>
    %529 = arith.divf %527, %528 : vector<8x128xf32>
    %530 = vector.extract_strided_slice %517 {offsets = [0, 256], sizes = [8, 128], strides = [1, 1]} : vector<8x512xf32> to vector<8x128xf32>
    %531 = math.tanh %530 : vector<8x128xf32>
    %532 = vector.extract_strided_slice %517 {offsets = [0, 384], sizes = [8, 128], strides = [1, 1]} : vector<8x512xf32> to vector<8x128xf32>
    %533 = arith.negf %532 : vector<8x128xf32>
    %534 = math.exp %533 : vector<8x128xf32>
    %cst_139 = arith.constant 1.000000e+00 : f32
    %535 = vector.broadcast %cst_139 : f32 to vector<8x128xf32>
    %536 = arith.addf %535, %534 : vector<8x128xf32>
    %537 = arith.divf %535, %536 : vector<8x128xf32>
    %538 = arith.mulf %529, %507 : vector<8x128xf32>
    %539 = arith.mulf %523, %531 : vector<8x128xf32>
    %540 = arith.addf %538, %539 : vector<8x128xf32>
    %541 = math.tanh %540 : vector<8x128xf32>
    %542 = arith.mulf %537, %541 : vector<8x128xf32>
    %543 = arith.index_cast %513 : i32 to index
    %c0_140 = arith.constant 0 : index
    %544 = vector.load %arg17[%543, %c0_140] : memref<64x128xf32, #tpu.memory_space<vmem>>, vector<8x128xf32>
    tpu.vector_store %arg17[%543, %c0_140], %542 {strides = array<i32>} : memref<64x128xf32, #tpu.memory_space<vmem>>, vector<8x128xf32>,
    %c8_i32_141 = arith.constant 8 : i32
    %c0_142 = arith.constant 0 : index
    %c0_143 = arith.constant 0 : index
    %545 = vector.load %arg17[%c0_142, %c0_143] : memref<64x128xf32, #tpu.memory_space<vmem>>, vector<64x128xf32>
    %c0_144 = arith.constant 0 : index
    %c0_145 = arith.constant 0 : index
    %546 = vector.load %arg7[%c0_144, %c0_145] : memref<128x512xf32, #tpu.memory_space<vmem>>, vector<128x512xf32>
    %cst_146 = arith.constant dense<0.000000e+00> : vector<64x512xf32>
    %547 = tpu.matmul %545, %546, %cst_146 {dimension_numbers = #tpu.dot_dimension_numbers<[1], [0], [0], [1], [0, 0, 1, 1], [], []>} : vector<64x128xf32>, vector<128x512xf32>, vector<64x512xf32> -> vector<64x512xf32>
    %c0_147 = arith.constant 0 : index
    %c0_148 = arith.constant 0 : index
    %548 = vector.load %arg9[%c0_147, %c0_148] : memref<1x512xf32, #tpu.memory_space<vmem>>, vector<1x512xf32>
    %549 = vector.broadcast %548 : vector<1x512xf32> to vector<64x512xf32>
    %550 = arith.addf %547, %549 : vector<64x512xf32>
    %c0_149 = arith.constant 0 : index
    %c0_150 = arith.constant 0 : index
    %551 = vector.load %arg16[%c0_149, %c0_150] : memref<64x512xf32, #tpu.memory_space<vmem>>, vector<64x512xf32>
    tpu.vector_store %arg16[%c0_149, %c0_150], %550 {strides = array<i32>} : memref<64x512xf32, #tpu.memory_space<vmem>>, vector<64x512xf32>,
    %c0_151 = arith.constant 0 : index
    %c0_152 = arith.constant 0 : index
    %552 = vector.load %arg8[%c0_151, %c0_152] : memref<128x512xf32, #tpu.memory_space<vmem>>, vector<128x512xf32>
    %c0_i32_153 = arith.constant 0 : i32
    %c8_i32_154 = arith.constant 8 : i32
    %553 = arith.muli %c0_i32_153, %c8_i32_154 : i32
    %554 = tpu.assume_multiple %553, 8 : i32
    %555 = arith.index_cast %554 : i32 to index
    %c0_155 = arith.constant 0 : index
    %556 = vector.load %arg16[%555, %c0_155] : memref<64x512xf32, #tpu.memory_space<vmem>>, vector<8x512xf32>
    %cst_156 = arith.constant dense<0.000000e+00> : vector<8x512xf32>
    %557 = tpu.matmul %0, %552, %cst_156 {dimension_numbers = #tpu.dot_dimension_numbers<[1], [0], [0], [1], [0, 0, 1, 1], [], []>} : vector<8x128xf32>, vector<128x512xf32>, vector<8x512xf32> -> vector<8x512xf32>
    %558 = arith.addf %556, %557 : vector<8x512xf32>
    %559 = vector.extract_strided_slice %558 {offsets = [0, 0], sizes = [8, 128], strides = [1, 1]} : vector<8x512xf32> to vector<8x128xf32>
    %560 = arith.negf %559 : vector<8x128xf32>
    %561 = math.exp %560 : vector<8x128xf32>
    %cst_157 = arith.constant 1.000000e+00 : f32
    %562 = vector.broadcast %cst_157 : f32 to vector<8x128xf32>
    %563 = arith.addf %562, %561 : vector<8x128xf32>
    %564 = arith.divf %562, %563 : vector<8x128xf32>
    %565 = vector.extract_strided_slice %558 {offsets = [0, 128], sizes = [8, 128], strides = [1, 1]} : vector<8x512xf32> to vector<8x128xf32>
    %566 = arith.negf %565 : vector<8x128xf32>
    %567 = math.exp %566 : vector<8x128xf32>
    %cst_158 = arith.constant 1.000000e+00 : f32
    %568 = vector.broadcast %cst_158 : f32 to vector<8x128xf32>
    %569 = arith.addf %568, %567 : vector<8x128xf32>
    %570 = arith.divf %568, %569 : vector<8x128xf32>
    %571 = vector.extract_strided_slice %558 {offsets = [0, 256], sizes = [8, 128], strides = [1, 1]} : vector<8x512xf32> to vector<8x128xf32>
    %572 = math.tanh %571 : vector<8x128xf32>
    %573 = vector.extract_strided_slice %558 {offsets = [0, 384], sizes = [8, 128], strides = [1, 1]} : vector<8x512xf32> to vector<8x128xf32>
    %574 = arith.negf %573 : vector<8x128xf32>
    %575 = math.exp %574 : vector<8x128xf32>
    %cst_159 = arith.constant 1.000000e+00 : f32
    %576 = vector.broadcast %cst_159 : f32 to vector<8x128xf32>
    %577 = arith.addf %576, %575 : vector<8x128xf32>
    %578 = arith.divf %576, %577 : vector<8x128xf32>
    %579 = arith.mulf %570, %0 : vector<8x128xf32>
    %580 = arith.mulf %564, %572 : vector<8x128xf32>
    %581 = arith.addf %579, %580 : vector<8x128xf32>
    %582 = math.tanh %581 : vector<8x128xf32>
    %583 = arith.mulf %578, %582 : vector<8x128xf32>
    %584 = arith.index_cast %554 : i32 to index
    %c0_160 = arith.constant 0 : index
    %585 = vector.load %arg17[%584, %c0_160] : memref<64x128xf32, #tpu.memory_space<vmem>>, vector<8x128xf32>
    tpu.vector_store %arg17[%584, %c0_160], %583 {strides = array<i32>} : memref<64x128xf32, #tpu.memory_space<vmem>>, vector<8x128xf32>,
    %c1_i32_161 = arith.constant 1 : i32
    %c8_i32_162 = arith.constant 8 : i32
    %586 = arith.muli %c1_i32_161, %c8_i32_162 : i32
    %587 = tpu.assume_multiple %586, 8 : i32
    %588 = arith.index_cast %587 : i32 to index
    %c0_163 = arith.constant 0 : index
    %589 = vector.load %arg16[%588, %c0_163] : memref<64x512xf32, #tpu.memory_space<vmem>>, vector<8x512xf32>
    %cst_164 = arith.constant dense<0.000000e+00> : vector<8x512xf32>
    %590 = tpu.matmul %583, %552, %cst_164 {dimension_numbers = #tpu.dot_dimension_numbers<[1], [0], [0], [1], [0, 0, 1, 1], [], []>} : vector<8x128xf32>, vector<128x512xf32>, vector<8x512xf32> -> vector<8x512xf32>
    %591 = arith.addf %589, %590 : vector<8x512xf32>
    %592 = vector.extract_strided_slice %591 {offsets = [0, 0], sizes = [8, 128], strides = [1, 1]} : vector<8x512xf32> to vector<8x128xf32>
    %593 = arith.negf %592 : vector<8x128xf32>
    %594 = math.exp %593 : vector<8x128xf32>
    %cst_165 = arith.constant 1.000000e+00 : f32
    %595 = vector.broadcast %cst_165 : f32 to vector<8x128xf32>
    %596 = arith.addf %595, %594 : vector<8x128xf32>
    %597 = arith.divf %595, %596 : vector<8x128xf32>
    %598 = vector.extract_strided_slice %591 {offsets = [0, 128], sizes = [8, 128], strides = [1, 1]} : vector<8x512xf32> to vector<8x128xf32>
    %599 = arith.negf %598 : vector<8x128xf32>
    %600 = math.exp %599 : vector<8x128xf32>
    %cst_166 = arith.constant 1.000000e+00 : f32
    %601 = vector.broadcast %cst_166 : f32 to vector<8x128xf32>
    %602 = arith.addf %601, %600 : vector<8x128xf32>
    %603 = arith.divf %601, %602 : vector<8x128xf32>
    %604 = vector.extract_strided_slice %591 {offsets = [0, 256], sizes = [8, 128], strides = [1, 1]} : vector<8x512xf32> to vector<8x128xf32>
    %605 = math.tanh %604 : vector<8x128xf32>
    %606 = vector.extract_strided_slice %591 {offsets = [0, 384], sizes = [8, 128], strides = [1, 1]} : vector<8x512xf32> to vector<8x128xf32>
    %607 = arith.negf %606 : vector<8x128xf32>
    %608 = math.exp %607 : vector<8x128xf32>
    %cst_167 = arith.constant 1.000000e+00 : f32
    %609 = vector.broadcast %cst_167 : f32 to vector<8x128xf32>
    %610 = arith.addf %609, %608 : vector<8x128xf32>
    %611 = arith.divf %609, %610 : vector<8x128xf32>
    %612 = arith.mulf %603, %581 : vector<8x128xf32>
    %613 = arith.mulf %597, %605 : vector<8x128xf32>
    %614 = arith.addf %612, %613 : vector<8x128xf32>
    %615 = math.tanh %614 : vector<8x128xf32>
    %616 = arith.mulf %611, %615 : vector<8x128xf32>
    %617 = arith.index_cast %587 : i32 to index
    %c0_168 = arith.constant 0 : index
    %618 = vector.load %arg17[%617, %c0_168] : memref<64x128xf32, #tpu.memory_space<vmem>>, vector<8x128xf32>
    tpu.vector_store %arg17[%617, %c0_168], %616 {strides = array<i32>} : memref<64x128xf32, #tpu.memory_space<vmem>>, vector<8x128xf32>,
    %c2_i32_169 = arith.constant 2 : i32
    %c8_i32_170 = arith.constant 8 : i32
    %619 = arith.muli %c2_i32_169, %c8_i32_170 : i32
    %620 = tpu.assume_multiple %619, 8 : i32
    %621 = arith.index_cast %620 : i32 to index
    %c0_171 = arith.constant 0 : index
    %622 = vector.load %arg16[%621, %c0_171] : memref<64x512xf32, #tpu.memory_space<vmem>>, vector<8x512xf32>
    %cst_172 = arith.constant dense<0.000000e+00> : vector<8x512xf32>
    %623 = tpu.matmul %616, %552, %cst_172 {dimension_numbers = #tpu.dot_dimension_numbers<[1], [0], [0], [1], [0, 0, 1, 1], [], []>} : vector<8x128xf32>, vector<128x512xf32>, vector<8x512xf32> -> vector<8x512xf32>
    %624 = arith.addf %622, %623 : vector<8x512xf32>
    %625 = vector.extract_strided_slice %624 {offsets = [0, 0], sizes = [8, 128], strides = [1, 1]} : vector<8x512xf32> to vector<8x128xf32>
    %626 = arith.negf %625 : vector<8x128xf32>
    %627 = math.exp %626 : vector<8x128xf32>
    %cst_173 = arith.constant 1.000000e+00 : f32
    %628 = vector.broadcast %cst_173 : f32 to vector<8x128xf32>
    %629 = arith.addf %628, %627 : vector<8x128xf32>
    %630 = arith.divf %628, %629 : vector<8x128xf32>
    %631 = vector.extract_strided_slice %624 {offsets = [0, 128], sizes = [8, 128], strides = [1, 1]} : vector<8x512xf32> to vector<8x128xf32>
    %632 = arith.negf %631 : vector<8x128xf32>
    %633 = math.exp %632 : vector<8x128xf32>
    %cst_174 = arith.constant 1.000000e+00 : f32
    %634 = vector.broadcast %cst_174 : f32 to vector<8x128xf32>
    %635 = arith.addf %634, %633 : vector<8x128xf32>
    %636 = arith.divf %634, %635 : vector<8x128xf32>
    %637 = vector.extract_strided_slice %624 {offsets = [0, 256], sizes = [8, 128], strides = [1, 1]} : vector<8x512xf32> to vector<8x128xf32>
    %638 = math.tanh %637 : vector<8x128xf32>
    %639 = vector.extract_strided_slice %624 {offsets = [0, 384], sizes = [8, 128], strides = [1, 1]} : vector<8x512xf32> to vector<8x128xf32>
    %640 = arith.negf %639 : vector<8x128xf32>
    %641 = math.exp %640 : vector<8x128xf32>
    %cst_175 = arith.constant 1.000000e+00 : f32
    %642 = vector.broadcast %cst_175 : f32 to vector<8x128xf32>
    %643 = arith.addf %642, %641 : vector<8x128xf32>
    %644 = arith.divf %642, %643 : vector<8x128xf32>
    %645 = arith.mulf %636, %614 : vector<8x128xf32>
    %646 = arith.mulf %630, %638 : vector<8x128xf32>
    %647 = arith.addf %645, %646 : vector<8x128xf32>
    %648 = math.tanh %647 : vector<8x128xf32>
    %649 = arith.mulf %644, %648 : vector<8x128xf32>
    %650 = arith.index_cast %620 : i32 to index
    %c0_176 = arith.constant 0 : index
    %651 = vector.load %arg17[%650, %c0_176] : memref<64x128xf32, #tpu.memory_space<vmem>>, vector<8x128xf32>
    tpu.vector_store %arg17[%650, %c0_176], %649 {strides = array<i32>} : memref<64x128xf32, #tpu.memory_space<vmem>>, vector<8x128xf32>,
    %c3_i32_177 = arith.constant 3 : i32
    %c8_i32_178 = arith.constant 8 : i32
    %652 = arith.muli %c3_i32_177, %c8_i32_178 : i32
    %653 = tpu.assume_multiple %652, 8 : i32
    %654 = arith.index_cast %653 : i32 to index
    %c0_179 = arith.constant 0 : index
    %655 = vector.load %arg16[%654, %c0_179] : memref<64x512xf32, #tpu.memory_space<vmem>>, vector<8x512xf32>
    %cst_180 = arith.constant dense<0.000000e+00> : vector<8x512xf32>
    %656 = tpu.matmul %649, %552, %cst_180 {dimension_numbers = #tpu.dot_dimension_numbers<[1], [0], [0], [1], [0, 0, 1, 1], [], []>} : vector<8x128xf32>, vector<128x512xf32>, vector<8x512xf32> -> vector<8x512xf32>
    %657 = arith.addf %655, %656 : vector<8x512xf32>
    %658 = vector.extract_strided_slice %657 {offsets = [0, 0], sizes = [8, 128], strides = [1, 1]} : vector<8x512xf32> to vector<8x128xf32>
    %659 = arith.negf %658 : vector<8x128xf32>
    %660 = math.exp %659 : vector<8x128xf32>
    %cst_181 = arith.constant 1.000000e+00 : f32
    %661 = vector.broadcast %cst_181 : f32 to vector<8x128xf32>
    %662 = arith.addf %661, %660 : vector<8x128xf32>
    %663 = arith.divf %661, %662 : vector<8x128xf32>
    %664 = vector.extract_strided_slice %657 {offsets = [0, 128], sizes = [8, 128], strides = [1, 1]} : vector<8x512xf32> to vector<8x128xf32>
    %665 = arith.negf %664 : vector<8x128xf32>
    %666 = math.exp %665 : vector<8x128xf32>
    %cst_182 = arith.constant 1.000000e+00 : f32
    %667 = vector.broadcast %cst_182 : f32 to vector<8x128xf32>
    %668 = arith.addf %667, %666 : vector<8x128xf32>
    %669 = arith.divf %667, %668 : vector<8x128xf32>
    %670 = vector.extract_strided_slice %657 {offsets = [0, 256], sizes = [8, 128], strides = [1, 1]} : vector<8x512xf32> to vector<8x128xf32>
    %671 = math.tanh %670 : vector<8x128xf32>
    %672 = vector.extract_strided_slice %657 {offsets = [0, 384], sizes = [8, 128], strides = [1, 1]} : vector<8x512xf32> to vector<8x128xf32>
    %673 = arith.negf %672 : vector<8x128xf32>
    %674 = math.exp %673 : vector<8x128xf32>
    %cst_183 = arith.constant 1.000000e+00 : f32
    %675 = vector.broadcast %cst_183 : f32 to vector<8x128xf32>
    %676 = arith.addf %675, %674 : vector<8x128xf32>
    %677 = arith.divf %675, %676 : vector<8x128xf32>
    %678 = arith.mulf %669, %647 : vector<8x128xf32>
    %679 = arith.mulf %663, %671 : vector<8x128xf32>
    %680 = arith.addf %678, %679 : vector<8x128xf32>
    %681 = math.tanh %680 : vector<8x128xf32>
    %682 = arith.mulf %677, %681 : vector<8x128xf32>
    %683 = arith.index_cast %653 : i32 to index
    %c0_184 = arith.constant 0 : index
    %684 = vector.load %arg17[%683, %c0_184] : memref<64x128xf32, #tpu.memory_space<vmem>>, vector<8x128xf32>
    tpu.vector_store %arg17[%683, %c0_184], %682 {strides = array<i32>} : memref<64x128xf32, #tpu.memory_space<vmem>>, vector<8x128xf32>,
    %c4_i32_185 = arith.constant 4 : i32
    %c8_i32_186 = arith.constant 8 : i32
    %685 = arith.muli %c4_i32_185, %c8_i32_186 : i32
    %686 = tpu.assume_multiple %685, 8 : i32
    %687 = arith.index_cast %686 : i32 to index
    %c0_187 = arith.constant 0 : index
    %688 = vector.load %arg16[%687, %c0_187] : memref<64x512xf32, #tpu.memory_space<vmem>>, vector<8x512xf32>
    %cst_188 = arith.constant dense<0.000000e+00> : vector<8x512xf32>
    %689 = tpu.matmul %682, %552, %cst_188 {dimension_numbers = #tpu.dot_dimension_numbers<[1], [0], [0], [1], [0, 0, 1, 1], [], []>} : vector<8x128xf32>, vector<128x512xf32>, vector<8x512xf32> -> vector<8x512xf32>
    %690 = arith.addf %688, %689 : vector<8x512xf32>
    %691 = vector.extract_strided_slice %690 {offsets = [0, 0], sizes = [8, 128], strides = [1, 1]} : vector<8x512xf32> to vector<8x128xf32>
    %692 = arith.negf %691 : vector<8x128xf32>
    %693 = math.exp %692 : vector<8x128xf32>
    %cst_189 = arith.constant 1.000000e+00 : f32
    %694 = vector.broadcast %cst_189 : f32 to vector<8x128xf32>
    %695 = arith.addf %694, %693 : vector<8x128xf32>
    %696 = arith.divf %694, %695 : vector<8x128xf32>
    %697 = vector.extract_strided_slice %690 {offsets = [0, 128], sizes = [8, 128], strides = [1, 1]} : vector<8x512xf32> to vector<8x128xf32>
    %698 = arith.negf %697 : vector<8x128xf32>
    %699 = math.exp %698 : vector<8x128xf32>
    %cst_190 = arith.constant 1.000000e+00 : f32
    %700 = vector.broadcast %cst_190 : f32 to vector<8x128xf32>
    %701 = arith.addf %700, %699 : vector<8x128xf32>
    %702 = arith.divf %700, %701 : vector<8x128xf32>
    %703 = vector.extract_strided_slice %690 {offsets = [0, 256], sizes = [8, 128], strides = [1, 1]} : vector<8x512xf32> to vector<8x128xf32>
    %704 = math.tanh %703 : vector<8x128xf32>
    %705 = vector.extract_strided_slice %690 {offsets = [0, 384], sizes = [8, 128], strides = [1, 1]} : vector<8x512xf32> to vector<8x128xf32>
    %706 = arith.negf %705 : vector<8x128xf32>
    %707 = math.exp %706 : vector<8x128xf32>
    %cst_191 = arith.constant 1.000000e+00 : f32
    %708 = vector.broadcast %cst_191 : f32 to vector<8x128xf32>
    %709 = arith.addf %708, %707 : vector<8x128xf32>
    %710 = arith.divf %708, %709 : vector<8x128xf32>
    %711 = arith.mulf %702, %680 : vector<8x128xf32>
    %712 = arith.mulf %696, %704 : vector<8x128xf32>
    %713 = arith.addf %711, %712 : vector<8x128xf32>
    %714 = math.tanh %713 : vector<8x128xf32>
    %715 = arith.mulf %710, %714 : vector<8x128xf32>
    %716 = arith.index_cast %686 : i32 to index
    %c0_192 = arith.constant 0 : index
    %717 = vector.load %arg17[%716, %c0_192] : memref<64x128xf32, #tpu.memory_space<vmem>>, vector<8x128xf32>
    tpu.vector_store %arg17[%716, %c0_192], %715 {strides = array<i32>} : memref<64x128xf32, #tpu.memory_space<vmem>>, vector<8x128xf32>,
    %c5_i32_193 = arith.constant 5 : i32
    %c8_i32_194 = arith.constant 8 : i32
    %718 = arith.muli %c5_i32_193, %c8_i32_194 : i32
    %719 = tpu.assume_multiple %718, 8 : i32
    %720 = arith.index_cast %719 : i32 to index
    %c0_195 = arith.constant 0 : index
    %721 = vector.load %arg16[%720, %c0_195] : memref<64x512xf32, #tpu.memory_space<vmem>>, vector<8x512xf32>
    %cst_196 = arith.constant dense<0.000000e+00> : vector<8x512xf32>
    %722 = tpu.matmul %715, %552, %cst_196 {dimension_numbers = #tpu.dot_dimension_numbers<[1], [0], [0], [1], [0, 0, 1, 1], [], []>} : vector<8x128xf32>, vector<128x512xf32>, vector<8x512xf32> -> vector<8x512xf32>
    %723 = arith.addf %721, %722 : vector<8x512xf32>
    %724 = vector.extract_strided_slice %723 {offsets = [0, 0], sizes = [8, 128], strides = [1, 1]} : vector<8x512xf32> to vector<8x128xf32>
    %725 = arith.negf %724 : vector<8x128xf32>
    %726 = math.exp %725 : vector<8x128xf32>
    %cst_197 = arith.constant 1.000000e+00 : f32
    %727 = vector.broadcast %cst_197 : f32 to vector<8x128xf32>
    %728 = arith.addf %727, %726 : vector<8x128xf32>
    %729 = arith.divf %727, %728 : vector<8x128xf32>
    %730 = vector.extract_strided_slice %723 {offsets = [0, 128], sizes = [8, 128], strides = [1, 1]} : vector<8x512xf32> to vector<8x128xf32>
    %731 = arith.negf %730 : vector<8x128xf32>
    %732 = math.exp %731 : vector<8x128xf32>
    %cst_198 = arith.constant 1.000000e+00 : f32
    %733 = vector.broadcast %cst_198 : f32 to vector<8x128xf32>
    %734 = arith.addf %733, %732 : vector<8x128xf32>
    %735 = arith.divf %733, %734 : vector<8x128xf32>
    %736 = vector.extract_strided_slice %723 {offsets = [0, 256], sizes = [8, 128], strides = [1, 1]} : vector<8x512xf32> to vector<8x128xf32>
    %737 = math.tanh %736 : vector<8x128xf32>
    %738 = vector.extract_strided_slice %723 {offsets = [0, 384], sizes = [8, 128], strides = [1, 1]} : vector<8x512xf32> to vector<8x128xf32>
    %739 = arith.negf %738 : vector<8x128xf32>
    %740 = math.exp %739 : vector<8x128xf32>
    %cst_199 = arith.constant 1.000000e+00 : f32
    %741 = vector.broadcast %cst_199 : f32 to vector<8x128xf32>
    %742 = arith.addf %741, %740 : vector<8x128xf32>
    %743 = arith.divf %741, %742 : vector<8x128xf32>
    %744 = arith.mulf %735, %713 : vector<8x128xf32>
    %745 = arith.mulf %729, %737 : vector<8x128xf32>
    %746 = arith.addf %744, %745 : vector<8x128xf32>
    %747 = math.tanh %746 : vector<8x128xf32>
    %748 = arith.mulf %743, %747 : vector<8x128xf32>
    %749 = arith.index_cast %719 : i32 to index
    %c0_200 = arith.constant 0 : index
    %750 = vector.load %arg17[%749, %c0_200] : memref<64x128xf32, #tpu.memory_space<vmem>>, vector<8x128xf32>
    tpu.vector_store %arg17[%749, %c0_200], %748 {strides = array<i32>} : memref<64x128xf32, #tpu.memory_space<vmem>>, vector<8x128xf32>,
    %c6_i32_201 = arith.constant 6 : i32
    %c8_i32_202 = arith.constant 8 : i32
    %751 = arith.muli %c6_i32_201, %c8_i32_202 : i32
    %752 = tpu.assume_multiple %751, 8 : i32
    %753 = arith.index_cast %752 : i32 to index
    %c0_203 = arith.constant 0 : index
    %754 = vector.load %arg16[%753, %c0_203] : memref<64x512xf32, #tpu.memory_space<vmem>>, vector<8x512xf32>
    %cst_204 = arith.constant dense<0.000000e+00> : vector<8x512xf32>
    %755 = tpu.matmul %748, %552, %cst_204 {dimension_numbers = #tpu.dot_dimension_numbers<[1], [0], [0], [1], [0, 0, 1, 1], [], []>} : vector<8x128xf32>, vector<128x512xf32>, vector<8x512xf32> -> vector<8x512xf32>
    %756 = arith.addf %754, %755 : vector<8x512xf32>
    %757 = vector.extract_strided_slice %756 {offsets = [0, 0], sizes = [8, 128], strides = [1, 1]} : vector<8x512xf32> to vector<8x128xf32>
    %758 = arith.negf %757 : vector<8x128xf32>
    %759 = math.exp %758 : vector<8x128xf32>
    %cst_205 = arith.constant 1.000000e+00 : f32
    %760 = vector.broadcast %cst_205 : f32 to vector<8x128xf32>
    %761 = arith.addf %760, %759 : vector<8x128xf32>
    %762 = arith.divf %760, %761 : vector<8x128xf32>
    %763 = vector.extract_strided_slice %756 {offsets = [0, 128], sizes = [8, 128], strides = [1, 1]} : vector<8x512xf32> to vector<8x128xf32>
    %764 = arith.negf %763 : vector<8x128xf32>
    %765 = math.exp %764 : vector<8x128xf32>
    %cst_206 = arith.constant 1.000000e+00 : f32
    %766 = vector.broadcast %cst_206 : f32 to vector<8x128xf32>
    %767 = arith.addf %766, %765 : vector<8x128xf32>
    %768 = arith.divf %766, %767 : vector<8x128xf32>
    %769 = vector.extract_strided_slice %756 {offsets = [0, 256], sizes = [8, 128], strides = [1, 1]} : vector<8x512xf32> to vector<8x128xf32>
    %770 = math.tanh %769 : vector<8x128xf32>
    %771 = vector.extract_strided_slice %756 {offsets = [0, 384], sizes = [8, 128], strides = [1, 1]} : vector<8x512xf32> to vector<8x128xf32>
    %772 = arith.negf %771 : vector<8x128xf32>
    %773 = math.exp %772 : vector<8x128xf32>
    %cst_207 = arith.constant 1.000000e+00 : f32
    %774 = vector.broadcast %cst_207 : f32 to vector<8x128xf32>
    %775 = arith.addf %774, %773 : vector<8x128xf32>
    %776 = arith.divf %774, %775 : vector<8x128xf32>
    %777 = arith.mulf %768, %746 : vector<8x128xf32>
    %778 = arith.mulf %762, %770 : vector<8x128xf32>
    %779 = arith.addf %777, %778 : vector<8x128xf32>
    %780 = math.tanh %779 : vector<8x128xf32>
    %781 = arith.mulf %776, %780 : vector<8x128xf32>
    %782 = arith.index_cast %752 : i32 to index
    %c0_208 = arith.constant 0 : index
    %783 = vector.load %arg17[%782, %c0_208] : memref<64x128xf32, #tpu.memory_space<vmem>>, vector<8x128xf32>
    tpu.vector_store %arg17[%782, %c0_208], %781 {strides = array<i32>} : memref<64x128xf32, #tpu.memory_space<vmem>>, vector<8x128xf32>,
    %c7_i32_209 = arith.constant 7 : i32
    %c8_i32_210 = arith.constant 8 : i32
    %784 = arith.muli %c7_i32_209, %c8_i32_210 : i32
    %785 = tpu.assume_multiple %784, 8 : i32
    %786 = arith.index_cast %785 : i32 to index
    %c0_211 = arith.constant 0 : index
    %787 = vector.load %arg16[%786, %c0_211] : memref<64x512xf32, #tpu.memory_space<vmem>>, vector<8x512xf32>
    %cst_212 = arith.constant dense<0.000000e+00> : vector<8x512xf32>
    %788 = tpu.matmul %781, %552, %cst_212 {dimension_numbers = #tpu.dot_dimension_numbers<[1], [0], [0], [1], [0, 0, 1, 1], [], []>} : vector<8x128xf32>, vector<128x512xf32>, vector<8x512xf32> -> vector<8x512xf32>
    %789 = arith.addf %787, %788 : vector<8x512xf32>
    %790 = vector.extract_strided_slice %789 {offsets = [0, 0], sizes = [8, 128], strides = [1, 1]} : vector<8x512xf32> to vector<8x128xf32>
    %791 = arith.negf %790 : vector<8x128xf32>
    %792 = math.exp %791 : vector<8x128xf32>
    %cst_213 = arith.constant 1.000000e+00 : f32
    %793 = vector.broadcast %cst_213 : f32 to vector<8x128xf32>
    %794 = arith.addf %793, %792 : vector<8x128xf32>
    %795 = arith.divf %793, %794 : vector<8x128xf32>
    %796 = vector.extract_strided_slice %789 {offsets = [0, 128], sizes = [8, 128], strides = [1, 1]} : vector<8x512xf32> to vector<8x128xf32>
    %797 = arith.negf %796 : vector<8x128xf32>
    %798 = math.exp %797 : vector<8x128xf32>
    %cst_214 = arith.constant 1.000000e+00 : f32
    %799 = vector.broadcast %cst_214 : f32 to vector<8x128xf32>
    %800 = arith.addf %799, %798 : vector<8x128xf32>
    %801 = arith.divf %799, %800 : vector<8x128xf32>
    %802 = vector.extract_strided_slice %789 {offsets = [0, 256], sizes = [8, 128], strides = [1, 1]} : vector<8x512xf32> to vector<8x128xf32>
    %803 = math.tanh %802 : vector<8x128xf32>
    %804 = vector.extract_strided_slice %789 {offsets = [0, 384], sizes = [8, 128], strides = [1, 1]} : vector<8x512xf32> to vector<8x128xf32>
    %805 = arith.negf %804 : vector<8x128xf32>
    %806 = math.exp %805 : vector<8x128xf32>
    %cst_215 = arith.constant 1.000000e+00 : f32
    %807 = vector.broadcast %cst_215 : f32 to vector<8x128xf32>
    %808 = arith.addf %807, %806 : vector<8x128xf32>
    %809 = arith.divf %807, %808 : vector<8x128xf32>
    %810 = arith.mulf %801, %779 : vector<8x128xf32>
    %811 = arith.mulf %795, %803 : vector<8x128xf32>
    %812 = arith.addf %810, %811 : vector<8x128xf32>
    %813 = math.tanh %812 : vector<8x128xf32>
    %814 = arith.mulf %809, %813 : vector<8x128xf32>
    %815 = arith.index_cast %785 : i32 to index
    %c0_216 = arith.constant 0 : index
    %816 = vector.load %arg17[%815, %c0_216] : memref<64x128xf32, #tpu.memory_space<vmem>>, vector<8x128xf32>
    tpu.vector_store %arg17[%815, %c0_216], %814 {strides = array<i32>} : memref<64x128xf32, #tpu.memory_space<vmem>>, vector<8x128xf32>,
    %c8_i32_217 = arith.constant 8 : i32
    %c0_218 = arith.constant 0 : index
    %c0_219 = arith.constant 0 : index
    %817 = vector.load %arg17[%c0_218, %c0_219] : memref<64x128xf32, #tpu.memory_space<vmem>>, vector<64x128xf32>
    %c0_220 = arith.constant 0 : index
    %c0_221 = arith.constant 0 : index
    %818 = vector.load %arg10[%c0_220, %c0_221] : memref<128x512xf32, #tpu.memory_space<vmem>>, vector<128x512xf32>
    %cst_222 = arith.constant dense<0.000000e+00> : vector<64x512xf32>
    %819 = tpu.matmul %817, %818, %cst_222 {dimension_numbers = #tpu.dot_dimension_numbers<[1], [0], [0], [1], [0, 0, 1, 1], [], []>} : vector<64x128xf32>, vector<128x512xf32>, vector<64x512xf32> -> vector<64x512xf32>
    %c0_223 = arith.constant 0 : index
    %c0_224 = arith.constant 0 : index
    %820 = vector.load %arg12[%c0_223, %c0_224] : memref<1x512xf32, #tpu.memory_space<vmem>>, vector<1x512xf32>
    %821 = vector.broadcast %820 : vector<1x512xf32> to vector<64x512xf32>
    %822 = arith.addf %819, %821 : vector<64x512xf32>
    %c0_225 = arith.constant 0 : index
    %c0_226 = arith.constant 0 : index
    %823 = vector.load %arg16[%c0_225, %c0_226] : memref<64x512xf32, #tpu.memory_space<vmem>>, vector<64x512xf32>
    tpu.vector_store %arg16[%c0_225, %c0_226], %822 {strides = array<i32>} : memref<64x512xf32, #tpu.memory_space<vmem>>, vector<64x512xf32>,
    %c0_227 = arith.constant 0 : index
    %c0_228 = arith.constant 0 : index
    %824 = vector.load %arg11[%c0_227, %c0_228] : memref<128x512xf32, #tpu.memory_space<vmem>>, vector<128x512xf32>
    %c0_i32_229 = arith.constant 0 : i32
    %c8_i32_230 = arith.constant 8 : i32
    %825 = arith.muli %c0_i32_229, %c8_i32_230 : i32
    %826 = tpu.assume_multiple %825, 8 : i32
    %827 = arith.index_cast %826 : i32 to index
    %c0_231 = arith.constant 0 : index
    %828 = vector.load %arg16[%827, %c0_231] : memref<64x512xf32, #tpu.memory_space<vmem>>, vector<8x512xf32>
    %cst_232 = arith.constant dense<0.000000e+00> : vector<8x512xf32>
    %829 = tpu.matmul %0, %824, %cst_232 {dimension_numbers = #tpu.dot_dimension_numbers<[1], [0], [0], [1], [0, 0, 1, 1], [], []>} : vector<8x128xf32>, vector<128x512xf32>, vector<8x512xf32> -> vector<8x512xf32>
    %830 = arith.addf %828, %829 : vector<8x512xf32>
    %831 = vector.extract_strided_slice %830 {offsets = [0, 0], sizes = [8, 128], strides = [1, 1]} : vector<8x512xf32> to vector<8x128xf32>
    %832 = arith.negf %831 : vector<8x128xf32>
    %833 = math.exp %832 : vector<8x128xf32>
    %cst_233 = arith.constant 1.000000e+00 : f32
    %834 = vector.broadcast %cst_233 : f32 to vector<8x128xf32>
    %835 = arith.addf %834, %833 : vector<8x128xf32>
    %836 = arith.divf %834, %835 : vector<8x128xf32>
    %837 = vector.extract_strided_slice %830 {offsets = [0, 128], sizes = [8, 128], strides = [1, 1]} : vector<8x512xf32> to vector<8x128xf32>
    %838 = arith.negf %837 : vector<8x128xf32>
    %839 = math.exp %838 : vector<8x128xf32>
    %cst_234 = arith.constant 1.000000e+00 : f32
    %840 = vector.broadcast %cst_234 : f32 to vector<8x128xf32>
    %841 = arith.addf %840, %839 : vector<8x128xf32>
    %842 = arith.divf %840, %841 : vector<8x128xf32>
    %843 = vector.extract_strided_slice %830 {offsets = [0, 256], sizes = [8, 128], strides = [1, 1]} : vector<8x512xf32> to vector<8x128xf32>
    %844 = math.tanh %843 : vector<8x128xf32>
    %845 = vector.extract_strided_slice %830 {offsets = [0, 384], sizes = [8, 128], strides = [1, 1]} : vector<8x512xf32> to vector<8x128xf32>
    %846 = arith.negf %845 : vector<8x128xf32>
    %847 = math.exp %846 : vector<8x128xf32>
    %cst_235 = arith.constant 1.000000e+00 : f32
    %848 = vector.broadcast %cst_235 : f32 to vector<8x128xf32>
    %849 = arith.addf %848, %847 : vector<8x128xf32>
    %850 = arith.divf %848, %849 : vector<8x128xf32>
    %851 = arith.mulf %842, %0 : vector<8x128xf32>
    %852 = arith.mulf %836, %844 : vector<8x128xf32>
    %853 = arith.addf %851, %852 : vector<8x128xf32>
    %854 = math.tanh %853 : vector<8x128xf32>
    %855 = arith.mulf %850, %854 : vector<8x128xf32>
    %c1_i32_236 = arith.constant 1 : i32
    %c8_i32_237 = arith.constant 8 : i32
    %856 = arith.muli %c1_i32_236, %c8_i32_237 : i32
    %857 = tpu.assume_multiple %856, 8 : i32
    %858 = arith.index_cast %857 : i32 to index
    %c0_238 = arith.constant 0 : index
    %859 = vector.load %arg16[%858, %c0_238] : memref<64x512xf32, #tpu.memory_space<vmem>>, vector<8x512xf32>
    %cst_239 = arith.constant dense<0.000000e+00> : vector<8x512xf32>
    %860 = tpu.matmul %855, %824, %cst_239 {dimension_numbers = #tpu.dot_dimension_numbers<[1], [0], [0], [1], [0, 0, 1, 1], [], []>} : vector<8x128xf32>, vector<128x512xf32>, vector<8x512xf32> -> vector<8x512xf32>
    %861 = arith.addf %859, %860 : vector<8x512xf32>
    %862 = vector.extract_strided_slice %861 {offsets = [0, 0], sizes = [8, 128], strides = [1, 1]} : vector<8x512xf32> to vector<8x128xf32>
    %863 = arith.negf %862 : vector<8x128xf32>
    %864 = math.exp %863 : vector<8x128xf32>
    %cst_240 = arith.constant 1.000000e+00 : f32
    %865 = vector.broadcast %cst_240 : f32 to vector<8x128xf32>
    %866 = arith.addf %865, %864 : vector<8x128xf32>
    %867 = arith.divf %865, %866 : vector<8x128xf32>
    %868 = vector.extract_strided_slice %861 {offsets = [0, 128], sizes = [8, 128], strides = [1, 1]} : vector<8x512xf32> to vector<8x128xf32>
    %869 = arith.negf %868 : vector<8x128xf32>
    %870 = math.exp %869 : vector<8x128xf32>
    %cst_241 = arith.constant 1.000000e+00 : f32
    %871 = vector.broadcast %cst_241 : f32 to vector<8x128xf32>
    %872 = arith.addf %871, %870 : vector<8x128xf32>
    %873 = arith.divf %871, %872 : vector<8x128xf32>
    %874 = vector.extract_strided_slice %861 {offsets = [0, 256], sizes = [8, 128], strides = [1, 1]} : vector<8x512xf32> to vector<8x128xf32>
    %875 = math.tanh %874 : vector<8x128xf32>
    %876 = vector.extract_strided_slice %861 {offsets = [0, 384], sizes = [8, 128], strides = [1, 1]} : vector<8x512xf32> to vector<8x128xf32>
    %877 = arith.negf %876 : vector<8x128xf32>
    %878 = math.exp %877 : vector<8x128xf32>
    %cst_242 = arith.constant 1.000000e+00 : f32
    %879 = vector.broadcast %cst_242 : f32 to vector<8x128xf32>
    %880 = arith.addf %879, %878 : vector<8x128xf32>
    %881 = arith.divf %879, %880 : vector<8x128xf32>
    %882 = arith.mulf %873, %853 : vector<8x128xf32>
    %883 = arith.mulf %867, %875 : vector<8x128xf32>
    %884 = arith.addf %882, %883 : vector<8x128xf32>
    %885 = math.tanh %884 : vector<8x128xf32>
    %886 = arith.mulf %881, %885 : vector<8x128xf32>
    %c2_i32_243 = arith.constant 2 : i32
    %c8_i32_244 = arith.constant 8 : i32
    %887 = arith.muli %c2_i32_243, %c8_i32_244 : i32
    %888 = tpu.assume_multiple %887, 8 : i32
    %889 = arith.index_cast %888 : i32 to index
    %c0_245 = arith.constant 0 : index
    %890 = vector.load %arg16[%889, %c0_245] : memref<64x512xf32, #tpu.memory_space<vmem>>, vector<8x512xf32>
    %cst_246 = arith.constant dense<0.000000e+00> : vector<8x512xf32>
    %891 = tpu.matmul %886, %824, %cst_246 {dimension_numbers = #tpu.dot_dimension_numbers<[1], [0], [0], [1], [0, 0, 1, 1], [], []>} : vector<8x128xf32>, vector<128x512xf32>, vector<8x512xf32> -> vector<8x512xf32>
    %892 = arith.addf %890, %891 : vector<8x512xf32>
    %893 = vector.extract_strided_slice %892 {offsets = [0, 0], sizes = [8, 128], strides = [1, 1]} : vector<8x512xf32> to vector<8x128xf32>
    %894 = arith.negf %893 : vector<8x128xf32>
    %895 = math.exp %894 : vector<8x128xf32>
    %cst_247 = arith.constant 1.000000e+00 : f32
    %896 = vector.broadcast %cst_247 : f32 to vector<8x128xf32>
    %897 = arith.addf %896, %895 : vector<8x128xf32>
    %898 = arith.divf %896, %897 : vector<8x128xf32>
    %899 = vector.extract_strided_slice %892 {offsets = [0, 128], sizes = [8, 128], strides = [1, 1]} : vector<8x512xf32> to vector<8x128xf32>
    %900 = arith.negf %899 : vector<8x128xf32>
    %901 = math.exp %900 : vector<8x128xf32>
    %cst_248 = arith.constant 1.000000e+00 : f32
    %902 = vector.broadcast %cst_248 : f32 to vector<8x128xf32>
    %903 = arith.addf %902, %901 : vector<8x128xf32>
    %904 = arith.divf %902, %903 : vector<8x128xf32>
    %905 = vector.extract_strided_slice %892 {offsets = [0, 256], sizes = [8, 128], strides = [1, 1]} : vector<8x512xf32> to vector<8x128xf32>
    %906 = math.tanh %905 : vector<8x128xf32>
    %907 = vector.extract_strided_slice %892 {offsets = [0, 384], sizes = [8, 128], strides = [1, 1]} : vector<8x512xf32> to vector<8x128xf32>
    %908 = arith.negf %907 : vector<8x128xf32>
    %909 = math.exp %908 : vector<8x128xf32>
    %cst_249 = arith.constant 1.000000e+00 : f32
    %910 = vector.broadcast %cst_249 : f32 to vector<8x128xf32>
    %911 = arith.addf %910, %909 : vector<8x128xf32>
    %912 = arith.divf %910, %911 : vector<8x128xf32>
    %913 = arith.mulf %904, %884 : vector<8x128xf32>
    %914 = arith.mulf %898, %906 : vector<8x128xf32>
    %915 = arith.addf %913, %914 : vector<8x128xf32>
    %916 = math.tanh %915 : vector<8x128xf32>
    %917 = arith.mulf %912, %916 : vector<8x128xf32>
    %c3_i32_250 = arith.constant 3 : i32
    %c8_i32_251 = arith.constant 8 : i32
    %918 = arith.muli %c3_i32_250, %c8_i32_251 : i32
    %919 = tpu.assume_multiple %918, 8 : i32
    %920 = arith.index_cast %919 : i32 to index
    %c0_252 = arith.constant 0 : index
    %921 = vector.load %arg16[%920, %c0_252] : memref<64x512xf32, #tpu.memory_space<vmem>>, vector<8x512xf32>
    %cst_253 = arith.constant dense<0.000000e+00> : vector<8x512xf32>
    %922 = tpu.matmul %917, %824, %cst_253 {dimension_numbers = #tpu.dot_dimension_numbers<[1], [0], [0], [1], [0, 0, 1, 1], [], []>} : vector<8x128xf32>, vector<128x512xf32>, vector<8x512xf32> -> vector<8x512xf32>
    %923 = arith.addf %921, %922 : vector<8x512xf32>
    %924 = vector.extract_strided_slice %923 {offsets = [0, 0], sizes = [8, 128], strides = [1, 1]} : vector<8x512xf32> to vector<8x128xf32>
    %925 = arith.negf %924 : vector<8x128xf32>
    %926 = math.exp %925 : vector<8x128xf32>
    %cst_254 = arith.constant 1.000000e+00 : f32
    %927 = vector.broadcast %cst_254 : f32 to vector<8x128xf32>
    %928 = arith.addf %927, %926 : vector<8x128xf32>
    %929 = arith.divf %927, %928 : vector<8x128xf32>
    %930 = vector.extract_strided_slice %923 {offsets = [0, 128], sizes = [8, 128], strides = [1, 1]} : vector<8x512xf32> to vector<8x128xf32>
    %931 = arith.negf %930 : vector<8x128xf32>
    %932 = math.exp %931 : vector<8x128xf32>
    %cst_255 = arith.constant 1.000000e+00 : f32
    %933 = vector.broadcast %cst_255 : f32 to vector<8x128xf32>
    %934 = arith.addf %933, %932 : vector<8x128xf32>
    %935 = arith.divf %933, %934 : vector<8x128xf32>
    %936 = vector.extract_strided_slice %923 {offsets = [0, 256], sizes = [8, 128], strides = [1, 1]} : vector<8x512xf32> to vector<8x128xf32>
    %937 = math.tanh %936 : vector<8x128xf32>
    %938 = vector.extract_strided_slice %923 {offsets = [0, 384], sizes = [8, 128], strides = [1, 1]} : vector<8x512xf32> to vector<8x128xf32>
    %939 = arith.negf %938 : vector<8x128xf32>
    %940 = math.exp %939 : vector<8x128xf32>
    %cst_256 = arith.constant 1.000000e+00 : f32
    %941 = vector.broadcast %cst_256 : f32 to vector<8x128xf32>
    %942 = arith.addf %941, %940 : vector<8x128xf32>
    %943 = arith.divf %941, %942 : vector<8x128xf32>
    %944 = arith.mulf %935, %915 : vector<8x128xf32>
    %945 = arith.mulf %929, %937 : vector<8x128xf32>
    %946 = arith.addf %944, %945 : vector<8x128xf32>
    %947 = math.tanh %946 : vector<8x128xf32>
    %948 = arith.mulf %943, %947 : vector<8x128xf32>
    %c4_i32_257 = arith.constant 4 : i32
    %c8_i32_258 = arith.constant 8 : i32
    %949 = arith.muli %c4_i32_257, %c8_i32_258 : i32
    %950 = tpu.assume_multiple %949, 8 : i32
    %951 = arith.index_cast %950 : i32 to index
    %c0_259 = arith.constant 0 : index
    %952 = vector.load %arg16[%951, %c0_259] : memref<64x512xf32, #tpu.memory_space<vmem>>, vector<8x512xf32>
    %cst_260 = arith.constant dense<0.000000e+00> : vector<8x512xf32>
    %953 = tpu.matmul %948, %824, %cst_260 {dimension_numbers = #tpu.dot_dimension_numbers<[1], [0], [0], [1], [0, 0, 1, 1], [], []>} : vector<8x128xf32>, vector<128x512xf32>, vector<8x512xf32> -> vector<8x512xf32>
    %954 = arith.addf %952, %953 : vector<8x512xf32>
    %955 = vector.extract_strided_slice %954 {offsets = [0, 0], sizes = [8, 128], strides = [1, 1]} : vector<8x512xf32> to vector<8x128xf32>
    %956 = arith.negf %955 : vector<8x128xf32>
    %957 = math.exp %956 : vector<8x128xf32>
    %cst_261 = arith.constant 1.000000e+00 : f32
    %958 = vector.broadcast %cst_261 : f32 to vector<8x128xf32>
    %959 = arith.addf %958, %957 : vector<8x128xf32>
    %960 = arith.divf %958, %959 : vector<8x128xf32>
    %961 = vector.extract_strided_slice %954 {offsets = [0, 128], sizes = [8, 128], strides = [1, 1]} : vector<8x512xf32> to vector<8x128xf32>
    %962 = arith.negf %961 : vector<8x128xf32>
    %963 = math.exp %962 : vector<8x128xf32>
    %cst_262 = arith.constant 1.000000e+00 : f32
    %964 = vector.broadcast %cst_262 : f32 to vector<8x128xf32>
    %965 = arith.addf %964, %963 : vector<8x128xf32>
    %966 = arith.divf %964, %965 : vector<8x128xf32>
    %967 = vector.extract_strided_slice %954 {offsets = [0, 256], sizes = [8, 128], strides = [1, 1]} : vector<8x512xf32> to vector<8x128xf32>
    %968 = math.tanh %967 : vector<8x128xf32>
    %969 = vector.extract_strided_slice %954 {offsets = [0, 384], sizes = [8, 128], strides = [1, 1]} : vector<8x512xf32> to vector<8x128xf32>
    %970 = arith.negf %969 : vector<8x128xf32>
    %971 = math.exp %970 : vector<8x128xf32>
    %cst_263 = arith.constant 1.000000e+00 : f32
    %972 = vector.broadcast %cst_263 : f32 to vector<8x128xf32>
    %973 = arith.addf %972, %971 : vector<8x128xf32>
    %974 = arith.divf %972, %973 : vector<8x128xf32>
    %975 = arith.mulf %966, %946 : vector<8x128xf32>
    %976 = arith.mulf %960, %968 : vector<8x128xf32>
    %977 = arith.addf %975, %976 : vector<8x128xf32>
    %978 = math.tanh %977 : vector<8x128xf32>
    %979 = arith.mulf %974, %978 : vector<8x128xf32>
    %c5_i32_264 = arith.constant 5 : i32
    %c8_i32_265 = arith.constant 8 : i32
    %980 = arith.muli %c5_i32_264, %c8_i32_265 : i32
    %981 = tpu.assume_multiple %980, 8 : i32
    %982 = arith.index_cast %981 : i32 to index
    %c0_266 = arith.constant 0 : index
    %983 = vector.load %arg16[%982, %c0_266] : memref<64x512xf32, #tpu.memory_space<vmem>>, vector<8x512xf32>
    %cst_267 = arith.constant dense<0.000000e+00> : vector<8x512xf32>
    %984 = tpu.matmul %979, %824, %cst_267 {dimension_numbers = #tpu.dot_dimension_numbers<[1], [0], [0], [1], [0, 0, 1, 1], [], []>} : vector<8x128xf32>, vector<128x512xf32>, vector<8x512xf32> -> vector<8x512xf32>
    %985 = arith.addf %983, %984 : vector<8x512xf32>
    %986 = vector.extract_strided_slice %985 {offsets = [0, 0], sizes = [8, 128], strides = [1, 1]} : vector<8x512xf32> to vector<8x128xf32>
    %987 = arith.negf %986 : vector<8x128xf32>
    %988 = math.exp %987 : vector<8x128xf32>
    %cst_268 = arith.constant 1.000000e+00 : f32
    %989 = vector.broadcast %cst_268 : f32 to vector<8x128xf32>
    %990 = arith.addf %989, %988 : vector<8x128xf32>
    %991 = arith.divf %989, %990 : vector<8x128xf32>
    %992 = vector.extract_strided_slice %985 {offsets = [0, 128], sizes = [8, 128], strides = [1, 1]} : vector<8x512xf32> to vector<8x128xf32>
    %993 = arith.negf %992 : vector<8x128xf32>
    %994 = math.exp %993 : vector<8x128xf32>
    %cst_269 = arith.constant 1.000000e+00 : f32
    %995 = vector.broadcast %cst_269 : f32 to vector<8x128xf32>
    %996 = arith.addf %995, %994 : vector<8x128xf32>
    %997 = arith.divf %995, %996 : vector<8x128xf32>
    %998 = vector.extract_strided_slice %985 {offsets = [0, 256], sizes = [8, 128], strides = [1, 1]} : vector<8x512xf32> to vector<8x128xf32>
    %999 = math.tanh %998 : vector<8x128xf32>
    %1000 = vector.extract_strided_slice %985 {offsets = [0, 384], sizes = [8, 128], strides = [1, 1]} : vector<8x512xf32> to vector<8x128xf32>
    %1001 = arith.negf %1000 : vector<8x128xf32>
    %1002 = math.exp %1001 : vector<8x128xf32>
    %cst_270 = arith.constant 1.000000e+00 : f32
    %1003 = vector.broadcast %cst_270 : f32 to vector<8x128xf32>
    %1004 = arith.addf %1003, %1002 : vector<8x128xf32>
    %1005 = arith.divf %1003, %1004 : vector<8x128xf32>
    %1006 = arith.mulf %997, %977 : vector<8x128xf32>
    %1007 = arith.mulf %991, %999 : vector<8x128xf32>
    %1008 = arith.addf %1006, %1007 : vector<8x128xf32>
    %1009 = math.tanh %1008 : vector<8x128xf32>
    %1010 = arith.mulf %1005, %1009 : vector<8x128xf32>
    %c6_i32_271 = arith.constant 6 : i32
    %c8_i32_272 = arith.constant 8 : i32
    %1011 = arith.muli %c6_i32_271, %c8_i32_272 : i32
    %1012 = tpu.assume_multiple %1011, 8 : i32
    %1013 = arith.index_cast %1012 : i32 to index
    %c0_273 = arith.constant 0 : index
    %1014 = vector.load %arg16[%1013, %c0_273] : memref<64x512xf32, #tpu.memory_space<vmem>>, vector<8x512xf32>
    %cst_274 = arith.constant dense<0.000000e+00> : vector<8x512xf32>
    %1015 = tpu.matmul %1010, %824, %cst_274 {dimension_numbers = #tpu.dot_dimension_numbers<[1], [0], [0], [1], [0, 0, 1, 1], [], []>} : vector<8x128xf32>, vector<128x512xf32>, vector<8x512xf32> -> vector<8x512xf32>
    %1016 = arith.addf %1014, %1015 : vector<8x512xf32>
    %1017 = vector.extract_strided_slice %1016 {offsets = [0, 0], sizes = [8, 128], strides = [1, 1]} : vector<8x512xf32> to vector<8x128xf32>
    %1018 = arith.negf %1017 : vector<8x128xf32>
    %1019 = math.exp %1018 : vector<8x128xf32>
    %cst_275 = arith.constant 1.000000e+00 : f32
    %1020 = vector.broadcast %cst_275 : f32 to vector<8x128xf32>
    %1021 = arith.addf %1020, %1019 : vector<8x128xf32>
    %1022 = arith.divf %1020, %1021 : vector<8x128xf32>
    %1023 = vector.extract_strided_slice %1016 {offsets = [0, 128], sizes = [8, 128], strides = [1, 1]} : vector<8x512xf32> to vector<8x128xf32>
    %1024 = arith.negf %1023 : vector<8x128xf32>
    %1025 = math.exp %1024 : vector<8x128xf32>
    %cst_276 = arith.constant 1.000000e+00 : f32
    %1026 = vector.broadcast %cst_276 : f32 to vector<8x128xf32>
    %1027 = arith.addf %1026, %1025 : vector<8x128xf32>
    %1028 = arith.divf %1026, %1027 : vector<8x128xf32>
    %1029 = vector.extract_strided_slice %1016 {offsets = [0, 256], sizes = [8, 128], strides = [1, 1]} : vector<8x512xf32> to vector<8x128xf32>
    %1030 = math.tanh %1029 : vector<8x128xf32>
    %1031 = vector.extract_strided_slice %1016 {offsets = [0, 384], sizes = [8, 128], strides = [1, 1]} : vector<8x512xf32> to vector<8x128xf32>
    %1032 = arith.negf %1031 : vector<8x128xf32>
    %1033 = math.exp %1032 : vector<8x128xf32>
    %cst_277 = arith.constant 1.000000e+00 : f32
    %1034 = vector.broadcast %cst_277 : f32 to vector<8x128xf32>
    %1035 = arith.addf %1034, %1033 : vector<8x128xf32>
    %1036 = arith.divf %1034, %1035 : vector<8x128xf32>
    %1037 = arith.mulf %1028, %1008 : vector<8x128xf32>
    %1038 = arith.mulf %1022, %1030 : vector<8x128xf32>
    %1039 = arith.addf %1037, %1038 : vector<8x128xf32>
    %1040 = math.tanh %1039 : vector<8x128xf32>
    %1041 = arith.mulf %1036, %1040 : vector<8x128xf32>
    %c7_i32_278 = arith.constant 7 : i32
    %c8_i32_279 = arith.constant 8 : i32
    %1042 = arith.muli %c7_i32_278, %c8_i32_279 : i32
    %1043 = tpu.assume_multiple %1042, 8 : i32
    %1044 = arith.index_cast %1043 : i32 to index
    %c0_280 = arith.constant 0 : index
    %1045 = vector.load %arg16[%1044, %c0_280] : memref<64x512xf32, #tpu.memory_space<vmem>>, vector<8x512xf32>
    %cst_281 = arith.constant dense<0.000000e+00> : vector<8x512xf32>
    %1046 = tpu.matmul %1041, %824, %cst_281 {dimension_numbers = #tpu.dot_dimension_numbers<[1], [0], [0], [1], [0, 0, 1, 1], [], []>} : vector<8x128xf32>, vector<128x512xf32>, vector<8x512xf32> -> vector<8x512xf32>
    %1047 = arith.addf %1045, %1046 : vector<8x512xf32>
    %1048 = vector.extract_strided_slice %1047 {offsets = [0, 0], sizes = [8, 128], strides = [1, 1]} : vector<8x512xf32> to vector<8x128xf32>
    %1049 = arith.negf %1048 : vector<8x128xf32>
    %1050 = math.exp %1049 : vector<8x128xf32>
    %cst_282 = arith.constant 1.000000e+00 : f32
    %1051 = vector.broadcast %cst_282 : f32 to vector<8x128xf32>
    %1052 = arith.addf %1051, %1050 : vector<8x128xf32>
    %1053 = arith.divf %1051, %1052 : vector<8x128xf32>
    %1054 = vector.extract_strided_slice %1047 {offsets = [0, 128], sizes = [8, 128], strides = [1, 1]} : vector<8x512xf32> to vector<8x128xf32>
    %1055 = arith.negf %1054 : vector<8x128xf32>
    %1056 = math.exp %1055 : vector<8x128xf32>
    %cst_283 = arith.constant 1.000000e+00 : f32
    %1057 = vector.broadcast %cst_283 : f32 to vector<8x128xf32>
    %1058 = arith.addf %1057, %1056 : vector<8x128xf32>
    %1059 = arith.divf %1057, %1058 : vector<8x128xf32>
    %1060 = vector.extract_strided_slice %1047 {offsets = [0, 256], sizes = [8, 128], strides = [1, 1]} : vector<8x512xf32> to vector<8x128xf32>
    %1061 = math.tanh %1060 : vector<8x128xf32>
    %1062 = vector.extract_strided_slice %1047 {offsets = [0, 384], sizes = [8, 128], strides = [1, 1]} : vector<8x512xf32> to vector<8x128xf32>
    %1063 = arith.negf %1062 : vector<8x128xf32>
    %1064 = math.exp %1063 : vector<8x128xf32>
    %cst_284 = arith.constant 1.000000e+00 : f32
    %1065 = vector.broadcast %cst_284 : f32 to vector<8x128xf32>
    %1066 = arith.addf %1065, %1064 : vector<8x128xf32>
    %1067 = arith.divf %1065, %1066 : vector<8x128xf32>
    %1068 = arith.mulf %1059, %1039 : vector<8x128xf32>
    %1069 = arith.mulf %1053, %1061 : vector<8x128xf32>
    %1070 = arith.addf %1068, %1069 : vector<8x128xf32>
    %1071 = math.tanh %1070 : vector<8x128xf32>
    %1072 = arith.mulf %1067, %1071 : vector<8x128xf32>
    %c8_i32_285 = arith.constant 8 : i32
    %c0_286 = arith.constant 0 : index
    %c0_287 = arith.constant 0 : index
    %1073 = vector.load %arg13[%c0_286, %c0_287] : memref<128x128xf32, #tpu.memory_space<vmem>>, vector<128x128xf32>
    %cst_288 = arith.constant dense<0.000000e+00> : vector<8x128xf32>
    %1074 = tpu.matmul %1072, %1073, %cst_288 {dimension_numbers = #tpu.dot_dimension_numbers<[1], [0], [0], [1], [0, 0, 1, 1], [], []>} : vector<8x128xf32>, vector<128x128xf32>, vector<8x128xf32> -> vector<8x128xf32>
    %c0_289 = arith.constant 0 : index
    %c0_290 = arith.constant 0 : index
    %1075 = vector.load %arg14[%c0_289, %c0_290] : memref<1x128xf32, #tpu.memory_space<vmem>>, vector<1x128xf32>
    %1076 = vector.broadcast %1075 : vector<1x128xf32> to vector<8x128xf32>
    %1077 = arith.addf %1074, %1076 : vector<8x128xf32>
    %1078 = arith.negf %1077 : vector<8x128xf32>
    %1079 = math.exp %1078 : vector<8x128xf32>
    %cst_291 = arith.constant 1.000000e+00 : f32
    %1080 = vector.broadcast %cst_291 : f32 to vector<8x128xf32>
    %1081 = arith.addf %1080, %1079 : vector<8x128xf32>
    %1082 = arith.divf %1080, %1081 : vector<8x128xf32>
    %c0_292 = arith.constant 0 : index
    %c0_293 = arith.constant 0 : index
    %1083 = vector.load %arg15[%c0_292, %c0_293] : memref<8x128xf32, #tpu.memory_space<vmem>>, vector<8x128xf32>
    tpu.vector_store %arg15[%c0_292, %c0_293], %1082 {strides = array<i32>} : memref<8x128xf32, #tpu.memory_space<vmem>>, vector<8x128xf32>,
    return
  }
}

</mosaic_0001>

<llo_original>
// kernel: lstm_model_forward.1
$region0: #{lstm_model_forward.1}
  #allocation0 [shape = 'u32[]', space=smem, size = 0x4, offset = 0x4, fixed_abs, tag = 'smem constant byte address 0x4 - core index']
  #allocation1 [shape = 'u32[144,128]{1,0:T(1,128)}', space=vmem, size = 0x12000, scoped, tag = 'internal scratch']
  #allocation2 [shape = 'f32[64,512]{1,0:T(8,128)}', space=vmem, size = 0x20000, scoped, tag = 'scratch operand']
  #allocation3 [shape = 'f32[64,128]{1,0:T(8,128)}', space=vmem, size = 0x8000, scoped, tag = 'scratch operand']
  %s0 = inlined_call_operand.vmem [shape: f32[64,128], index: 0, kind: input, shape index: {}]
  %s1 = inlined_call_operand.vmem [shape: f32[128,512], index: 1, kind: input, shape index: {}]
  %s2 = inlined_call_operand.vmem [shape: f32[128,512], index: 2, kind: input, shape index: {}]
  %s3 = inlined_call_operand.vmem [shape: f32[1,512], index: 3, kind: input, shape index: {}]
  %s4 = inlined_call_operand.vmem [shape: f32[128,512], index: 4, kind: input, shape index: {}]
  %s5 = inlined_call_operand.vmem [shape: f32[128,512], index: 5, kind: input, shape index: {}]
  %s6 = inlined_call_operand.vmem [shape: f32[1,512], index: 6, kind: input, shape index: {}]
  %s7 = inlined_call_operand.vmem [shape: f32[128,512], index: 7, kind: input, shape index: {}]
  %s8 = inlined_call_operand.vmem [shape: f32[128,512], index: 8, kind: input, shape index: {}]
  %s9 = inlined_call_operand.vmem [shape: f32[1,512], index: 9, kind: input, shape index: {}]
  %s10 = inlined_call_operand.vmem [shape: f32[128,512], index: 10, kind: input, shape index: {}]
  %s11 = inlined_call_operand.vmem [shape: f32[128,512], index: 11, kind: input, shape index: {}]
  %s12 = inlined_call_operand.vmem [shape: f32[1,512], index: 12, kind: input, shape index: {}]
  %s13 = inlined_call_operand.vmem [shape: f32[128,128], index: 13, kind: input, shape index: {}]
  %s14 = inlined_call_operand.vmem [shape: f32[1,128], index: 14, kind: input, shape index: {}]
  %s15 = inlined_call_operand.vmem [shape: f32[8,128], index: 15, kind: output, shape index: {}]
  %s16 = sld [smem:[#allocation0]]
  $region70: #{lstm_model_forward.1} parent=0
    _
  %s18 = ssub.s32 1, %s16
  %s19 = scalar_select 0, %s18, %s16
  // Predicated region
  $region2: #{lstm_model_forward.1} parent=0 // pred_check
    _
  $region3: #{lstm_model_forward.1} parent=0 // pred_check_branch
    %21 = sbr.rel (0) target = $region5
  $region4: #{lstm_model_forward.1} parent=0 // pred_region
    _
  $region5: #{lstm_model_forward.1} parent=0 // pred_fallthru
    _
  // Predicated region
  $region6: #{lstm_model_forward.1} parent=0 // pred_check
    _
  $region7: #{lstm_model_forward.1} parent=0 // pred_check_branch
    %23 = sbr.rel (0) target = $region9
  $region8: #{lstm_model_forward.1} parent=0 // pred_region
    _
  $region9: #{lstm_model_forward.1} parent=0 // pred_fallthru
    _
  // Predicated region
  $region10: #{lstm_model_forward.1} parent=0 // pred_check
    _
  $region11: #{lstm_model_forward.1} parent=0 // pred_check_branch
    %25 = sbr.rel (0) target = $region13
  $region12: #{lstm_model_forward.1} parent=0 // pred_region
    _
  $region13: #{lstm_model_forward.1} parent=0 // pred_fallthru
    _
  // Predicated region
  $region14: #{lstm_model_forward.1} parent=0 // pred_check
    _
  $region15: #{lstm_model_forward.1} parent=0 // pred_check_branch
    %27 = sbr.rel (0) target = $region17
  $region16: #{lstm_model_forward.1} parent=0 // pred_region
    _
  $region17: #{lstm_model_forward.1} parent=0 // pred_fallthru
    _
  // Predicated region
  $region18: #{lstm_model_forward.1} parent=0 // pred_check
    _
  $region19: #{lstm_model_forward.1} parent=0 // pred_check_branch
    %29 = sbr.rel (0) target = $region21
  $region20: #{lstm_model_forward.1} parent=0 // pred_region
    _
  $region21: #{lstm_model_forward.1} parent=0 // pred_fallthru
    _
  // Predicated region
  $region22: #{lstm_model_forward.1} parent=0 // pred_check
    _
  $region23: #{lstm_model_forward.1} parent=0 // pred_check_branch
    %31 = sbr.rel (0) target = $region25
  $region24: #{lstm_model_forward.1} parent=0 // pred_region
    _
  $region25: #{lstm_model_forward.1} parent=0 // pred_fallthru
    _
  // Predicated region
  $region26: #{lstm_model_forward.1} parent=0 // pred_check
    _
  $region27: #{lstm_model_forward.1} parent=0 // pred_check_branch
    %33 = sbr.rel (0) target = $region29
  $region28: #{lstm_model_forward.1} parent=0 // pred_region
    _
  $region29: #{lstm_model_forward.1} parent=0 // pred_fallthru
    _
  // Predicated region
  $region30: #{lstm_model_forward.1} parent=0 // pred_check
    _
  $region31: #{lstm_model_forward.1} parent=0 // pred_check_branch
    %35 = sbr.rel (0) target = $region33
  $region32: #{lstm_model_forward.1} parent=0 // pred_region
    _
  $region33: #{lstm_model_forward.1} parent=0 // pred_fallthru
    _
  // Predicated region
  $region34: #{lstm_model_forward.1} parent=0 // pred_check
    _
  $region35: #{lstm_model_forward.1} parent=0 // pred_check_branch
    %37 = sbr.rel (0) target = $region37
  $region36: #{lstm_model_forward.1} parent=0 // pred_region
    _
  $region37: #{lstm_model_forward.1} parent=0 // pred_fallthru
    _
  // Predicated region
  $region38: #{lstm_model_forward.1} parent=0 // pred_check
    _
  $region39: #{lstm_model_forward.1} parent=0 // pred_check_branch
    %39 = sbr.rel (0) target = $region41
  $region40: #{lstm_model_forward.1} parent=0 // pred_region
    _
  $region41: #{lstm_model_forward.1} parent=0 // pred_fallthru
    _
  // Predicated region
  $region42: #{lstm_model_forward.1} parent=0 // pred_check
    _
  $region43: #{lstm_model_forward.1} parent=0 // pred_check_branch
    %41 = sbr.rel (0) target = $region45
  $region44: #{lstm_model_forward.1} parent=0 // pred_region
    _
  $region45: #{lstm_model_forward.1} parent=0 // pred_fallthru
    _
  // Predicated region
  $region46: #{lstm_model_forward.1} parent=0 // pred_check
    _
  $region47: #{lstm_model_forward.1} parent=0 // pred_check_branch
    %43 = sbr.rel (0) target = $region49
  $region48: #{lstm_model_forward.1} parent=0 // pred_region
    _
  $region49: #{lstm_model_forward.1} parent=0 // pred_fallthru
    _
  // Predicated region
  $region50: #{lstm_model_forward.1} parent=0 // pred_check
    _
  $region51: #{lstm_model_forward.1} parent=0 // pred_check_branch
    %45 = sbr.rel (0) target = $region53
  $region52: #{lstm_model_forward.1} parent=0 // pred_region
    _
  $region53: #{lstm_model_forward.1} parent=0 // pred_fallthru
    _
  // Predicated region
  $region54: #{lstm_model_forward.1} parent=0 // pred_check
    _
  $region55: #{lstm_model_forward.1} parent=0 // pred_check_branch
    %47 = sbr.rel (0) target = $region57
  $region56: #{lstm_model_forward.1} parent=0 // pred_region
    _
  $region57: #{lstm_model_forward.1} parent=0 // pred_fallthru
    _
  // Predicated region
  $region58: #{lstm_model_forward.1} parent=0 // pred_check
    _
  $region59: #{lstm_model_forward.1} parent=0 // pred_check_branch
    %49 = sbr.rel (0) target = $region61
  $region60: #{lstm_model_forward.1} parent=0 // pred_region
    _
  $region61: #{lstm_model_forward.1} parent=0 // pred_fallthru
    _
  %v50 = vld [vmem:[%s0] sm:$0xff]
  %v51 = vld [vmem:[%s0 + $0x8] sm:$0xff]
  %v52 = vld [vmem:[%s0 + $0x10] sm:$0xff]
  %v53 = vld [vmem:[%s0 + $0x18] sm:$0xff]
  %v54 = vld [vmem:[%s0 + $0x20] sm:$0xff]
  %v55 = vld [vmem:[%s0 + $0x28] sm:$0xff]
  %v56 = vld [vmem:[%s0 + $0x30] sm:$0xff]
  %v57 = vld [vmem:[%s0 + $0x38] sm:$0xff]
  %v58 = vld [vmem:[%s1] sm:$0xff]
  %v59 = vld [vmem:[%s1 + $0x8] sm:$0xff]
  %v60 = vld [vmem:[%s1 + $0x10] sm:$0xff]
  %v61 = vld [vmem:[%s1 + $0x18] sm:$0xff]
  %v62 = vld [vmem:[%s1 + $0x20] sm:$0xff]
  %v63 = vld [vmem:[%s1 + $0x28] sm:$0xff]
  %v64 = vld [vmem:[%s1 + $0x30] sm:$0xff]
  %v65 = vld [vmem:[%s1 + $0x38] sm:$0xff]
  %v66 = vld [vmem:[%s1 + $0x40] sm:$0xff]
  %v67 = vld [vmem:[%s1 + $0x48] sm:$0xff]
  %v68 = vld [vmem:[%s1 + $0x50] sm:$0xff]
  %v69 = vld [vmem:[%s1 + $0x58] sm:$0xff]
  %v70 = vld [vmem:[%s1 + $0x60] sm:$0xff]
  %v71 = vld [vmem:[%s1 + $0x68] sm:$0xff]
  %v72 = vld [vmem:[%s1 + $0x70] sm:$0xff]
  %v73 = vld [vmem:[%s1 + $0x78] sm:$0xff]
  %v74 = vld [vmem:[%s1 + $0x80] sm:$0xff]
  %v75 = vld [vmem:[%s1 + $0x88] sm:$0xff]
  %v76 = vld [vmem:[%s1 + $0x90] sm:$0xff]
  %v77 = vld [vmem:[%s1 + $0x98] sm:$0xff]
  %v78 = vld [vmem:[%s1 + $0xa0] sm:$0xff]
  %v79 = vld [vmem:[%s1 + $0xa8] sm:$0xff]
  %v80 = vld [vmem:[%s1 + $0xb0] sm:$0xff]
  %v81 = vld [vmem:[%s1 + $0xb8] sm:$0xff]
  %v82 = vld [vmem:[%s1 + $0xc0] sm:$0xff]
  %v83 = vld [vmem:[%s1 + $0xc8] sm:$0xff]
  %v84 = vld [vmem:[%s1 + $0xd0] sm:$0xff]
  %v85 = vld [vmem:[%s1 + $0xd8] sm:$0xff]
  %v86 = vld [vmem:[%s1 + $0xe0] sm:$0xff]
  %v87 = vld [vmem:[%s1 + $0xe8] sm:$0xff]
  %v88 = vld [vmem:[%s1 + $0xf0] sm:$0xff]
  %v89 = vld [vmem:[%s1 + $0xf8] sm:$0xff]
  %v90 = vld [vmem:[%s1 + $0x100] sm:$0xff]
  %v91 = vld [vmem:[%s1 + $0x108] sm:$0xff]
  %v92 = vld [vmem:[%s1 + $0x110] sm:$0xff]
  %v93 = vld [vmem:[%s1 + $0x118] sm:$0xff]
  %v94 = vld [vmem:[%s1 + $0x120] sm:$0xff]
  %v95 = vld [vmem:[%s1 + $0x128] sm:$0xff]
  %v96 = vld [vmem:[%s1 + $0x130] sm:$0xff]
  %v97 = vld [vmem:[%s1 + $0x138] sm:$0xff]
  %v98 = vld [vmem:[%s1 + $0x140] sm:$0xff]
  %v99 = vld [vmem:[%s1 + $0x148] sm:$0xff]
  %v100 = vld [vmem:[%s1 + $0x150] sm:$0xff]
  %v101 = vld [vmem:[%s1 + $0x158] sm:$0xff]
  %v102 = vld [vmem:[%s1 + $0x160] sm:$0xff]
  %v103 = vld [vmem:[%s1 + $0x168] sm:$0xff]
  %v104 = vld [vmem:[%s1 + $0x170] sm:$0xff]
  %v105 = vld [vmem:[%s1 + $0x178] sm:$0xff]
  %v106 = vld [vmem:[%s1 + $0x180] sm:$0xff]
  %v107 = vld [vmem:[%s1 + $0x188] sm:$0xff]
  %v108 = vld [vmem:[%s1 + $0x190] sm:$0xff]
  %v109 = vld [vmem:[%s1 + $0x198] sm:$0xff]
  %v110 = vld [vmem:[%s1 + $0x1a0] sm:$0xff]
  %v111 = vld [vmem:[%s1 + $0x1a8] sm:$0xff]
  %v112 = vld [vmem:[%s1 + $0x1b0] sm:$0xff]
  %v113 = vld [vmem:[%s1 + $0x1b8] sm:$0xff]
  %v114 = vld [vmem:[%s1 + $0x1c0] sm:$0xff]
  %v115 = vld [vmem:[%s1 + $0x1c8] sm:$0xff]
  %v116 = vld [vmem:[%s1 + $0x1d0] sm:$0xff]
  %v117 = vld [vmem:[%s1 + $0x1d8] sm:$0xff]
  %v118 = vld [vmem:[%s1 + $0x1e0] sm:$0xff]
  %v119 = vld [vmem:[%s1 + $0x1e8] sm:$0xff]
  %v120 = vld [vmem:[%s1 + $0x1f0] sm:$0xff]
  %v121 = vld [vmem:[%s1 + $0x1f8] sm:$0xff]
  %v122 = vld [vmem:[%s3] sm:$0xf]
  %v124 = vlaneseq
  %v125 = vshrl.u32 %v124, 7
  %v126 = vsub.s32 0, %v125
  %v127 = vrot.slane %v122, %v126
  %v128 = vlaneseq
  %v129 = vshrl.u32 %v128, 7
  %v130 = vsub.s32 1, %v129
  %v131 = vrot.slane %v122, %v130
  %v132 = vlaneseq
  %v133 = vshrl.u32 %v132, 7
  %v134 = vsub.s32 2, %v133
  %v135 = vrot.slane %v122, %v134
  %v136 = vlaneseq
  %v137 = vshrl.u32 %v136, 7
  %v138 = vsub.s32 3, %v137
  %v139 = vrot.slane %v122, %v138
  %144 = vmatprep.subr.mxu0 %v119
  %145 = vmatpush1.msra.mxu0 %v118
  %146 = vmatprep.subr.mxu0 %v115
  %147 = vmatpush1.msra.mxu0 %v114
  %148 = vmatprep.subr.mxu0 %v111
  %149 = vmatpush1.msra.mxu0 %v110
  %150 = vmatprep.subr.mxu0 %v107
  %151 = vmatpush1.msra.mxu0 %v106
  %152 = vmatprep.subr.mxu0 %v103
  %153 = vmatpush1.msra.mxu0 %v102
  %154 = vmatprep.subr.mxu0 %v99
  %155 = vmatpush1.msra.mxu0 %v98
  %156 = vmatprep.subr.mxu0 %v95
  %157 = vmatpush1.msra.mxu0 %v94
  %158 = vmatprep.subr.mxu0 %v91
  %159 = vmatpush1.msra.mxu0 %v90
  %160 = vmatprep.subr.mxu0 %v87
  %161 = vmatpush1.msra.mxu0 %v86
  %162 = vmatprep.subr.mxu0 %v83
  %163 = vmatpush1.msra.mxu0 %v82
  %164 = vmatprep.subr.mxu0 %v79
  %165 = vmatpush1.msra.mxu0 %v78
  %166 = vmatprep.subr.mxu0 %v75
  %167 = vmatpush1.msra.mxu0 %v74
  %168 = vmatprep.subr.mxu0 %v71
  %169 = vmatpush1.msra.mxu0 %v70
  %170 = vmatprep.subr.mxu0 %v67
  %171 = vmatpush1.msra.mxu0 %v66
  %172 = vmatprep.subr.mxu0 %v63
  %173 = vmatpush1.msra.mxu0 %v62
  %174 = vmatprep.subr.mxu0 %v59
  %175 = vmatpush1.msra.mxu0 %v58
  %176 = vmatprep.subr.mxu0 0.0
  %177 = vmatpush2.msra.mxu0 0.0
  %178 = vmatprep.subr.mxu0 0.0
  %179 = vmatpush2.msra.mxu0 0.0
  %180 = vmatprep.subr.mxu0 0.0
  %181 = vmatpush2.msra.mxu0 0.0
  %182 = vmatprep.subr.mxu0 0.0
  %183 = vmatpush2.msra.mxu0 0.0
  %184 = vmatprep.subr.mxu0 0.0
  %185 = vmatpush2.msra.mxu0 0.0
  %186 = vmatprep.subr.mxu0 0.0
  %187 = vmatpush2.msra.mxu0 0.0
  %188 = vmatprep.subr.mxu0 0.0
  %189 = vmatpush2.msra.mxu0 0.0
  %190 = vmatprep.subr.mxu0 0.0
  %191 = vmatpush2.msra.mxu0 0.0
  %192 = vmatprep.subr.mxu0 0.0
  %193 = vmatpush2.msra.mxu0 0.0
  %194 = vmatprep.subr.mxu0 0.0
  %195 = vmatpush2.msra.mxu0 0.0
  %196 = vmatprep.subr.mxu0 0.0
  %197 = vmatpush2.msra.mxu0 0.0
  %198 = vmatprep.subr.mxu0 0.0
  %199 = vmatpush2.msra.mxu0 0.0
  %200 = vmatprep.subr.mxu0 0.0
  %201 = vmatpush2.msra.mxu0 0.0
  %202 = vmatprep.subr.mxu0 0.0
  %203 = vmatpush2.msra.mxu0 0.0
  %204 = vmatprep.subr.mxu0 0.0
  %205 = vmatpush2.msra.mxu0 0.0
  %206 = vmatprep.subr.mxu0 0.0
  %207 = vmatpush2.msra.mxu0 0.0
  %208 = vmatprep.mubr.f32.mxu0 0.0
  %209 = vmatmul.mubr.f32.gmra.mxu0 %v50
  %v210 = vpop.f32.mrf.mxu0
  %v211 = vadd.f32 %v127, %v210
  %v212 = vpop.f32.mrf.mxu0
  %v213 = vadd.f32 %v131, %v212
  %214 = vmatprep.mubr.f32.mxu0 0.0
  %215 = vmatmul.mubr.f32.gmra.mxu0 %v51
  %v216 = vpop.f32.mrf.mxu0
  %v217 = vadd.f32 %v127, %v216
  %v218 = vpop.f32.mrf.mxu0
  %v219 = vadd.f32 %v131, %v218
  %220 = vmatprep.mubr.f32.mxu0 0.0
  %221 = vmatmul.mubr.f32.gmra.mxu0 %v52
  %v222 = vpop.f32.mrf.mxu0
  %v223 = vadd.f32 %v127, %v222
  %v224 = vpop.f32.mrf.mxu0
  %v225 = vadd.f32 %v131, %v224
  %226 = vmatprep.mubr.f32.mxu0 0.0
  %227 = vmatmul.mubr.f32.gmra.mxu0 %v53
  %v228 = vpop.f32.mrf.mxu0
  %v229 = vadd.f32 %v127, %v228
  %v230 = vpop.f32.mrf.mxu0
  %v231 = vadd.f32 %v131, %v230
  %232 = vmatprep.mubr.f32.mxu0 0.0
  %233 = vmatmul.mubr.f32.gmra.mxu0 %v54
  %v234 = vpop.f32.mrf.mxu0
  %v235 = vadd.f32 %v127, %v234
  %v236 = vpop.f32.mrf.mxu0
  %v237 = vadd.f32 %v131, %v236
  %238 = vmatprep.mubr.f32.mxu0 0.0
  %239 = vmatmul.mubr.f32.gmra.mxu0 %v55
  %v240 = vpop.f32.mrf.mxu0
  %v241 = vadd.f32 %v127, %v240
  %v242 = vpop.f32.mrf.mxu0
  %v243 = vadd.f32 %v131, %v242
  %244 = vmatprep.mubr.f32.mxu0 0.0
  %245 = vmatmul.mubr.f32.gmra.mxu0 %v56
  %v246 = vpop.f32.mrf.mxu0
  %v247 = vadd.f32 %v127, %v246
  %v248 = vpop.f32.mrf.mxu0
  %v249 = vadd.f32 %v131, %v248
  %250 = vmatprep.mubr.f32.mxu0 0.0
  %251 = vmatmul.mubr.f32.gmra.mxu0 %v57
  %v252 = vpop.f32.mrf.mxu0
  %v253 = vadd.f32 %v127, %v252
  %v254 = vpop.f32.mrf.mxu0
  %v255 = vadd.f32 %v131, %v254
  %256 = vdwg.mxu0
  %257 = vmatprep.subr.mxu0 %v121
  %258 = vmatpush1.msra.mxu0 %v120
  %259 = vmatprep.subr.mxu0 %v117
  %260 = vmatpush1.msra.mxu0 %v116
  %261 = vmatprep.subr.mxu0 %v113
  %262 = vmatpush1.msra.mxu0 %v112
  %263 = vmatprep.subr.mxu0 %v109
  %264 = vmatpush1.msra.mxu0 %v108
  %265 = vmatprep.subr.mxu0 %v105
  %266 = vmatpush1.msra.mxu0 %v104
  %267 = vmatprep.subr.mxu0 %v101
  %268 = vmatpush1.msra.mxu0 %v100
  %269 = vmatprep.subr.mxu0 %v97
  %270 = vmatpush1.msra.mxu0 %v96
  %271 = vmatprep.subr.mxu0 %v93
  %272 = vmatpush1.msra.mxu0 %v92
  %273 = vmatprep.subr.mxu0 %v89
  %274 = vmatpush1.msra.mxu0 %v88
  %275 = vmatprep.subr.mxu0 %v85
  %276 = vmatpush1.msra.mxu0 %v84
  %277 = vmatprep.subr.mxu0 %v81
  %278 = vmatpush1.msra.mxu0 %v80
  %279 = vmatprep.subr.mxu0 %v77
  %280 = vmatpush1.msra.mxu0 %v76
  %281 = vmatprep.subr.mxu0 %v73
  %282 = vmatpush1.msra.mxu0 %v72
  %283 = vmatprep.subr.mxu0 %v69
  %284 = vmatpush1.msra.mxu0 %v68
  %285 = vmatprep.subr.mxu0 %v65
  %286 = vmatpush1.msra.mxu0 %v64
  %287 = vmatprep.subr.mxu0 %v61
  %288 = vmatpush1.msra.mxu0 %v60
  %289 = vmatprep.subr.mxu0 0.0
  %290 = vmatpush2.msra.mxu0 0.0
  %291 = vmatprep.subr.mxu0 0.0
  %292 = vmatpush2.msra.mxu0 0.0
  %293 = vmatprep.subr.mxu0 0.0
  %294 = vmatpush2.msra.mxu0 0.0
  %295 = vmatprep.subr.mxu0 0.0
  %296 = vmatpush2.msra.mxu0 0.0
  %297 = vmatprep.subr.mxu0 0.0
  %298 = vmatpush2.msra.mxu0 0.0
  %299 = vmatprep.subr.mxu0 0.0
  %300 = vmatpush2.msra.mxu0 0.0
  %301 = vmatprep.subr.mxu0 0.0
  %302 = vmatpush2.msra.mxu0 0.0
  %303 = vmatprep.subr.mxu0 0.0
  %304 = vmatpush2.msra.mxu0 0.0
  %305 = vmatprep.subr.mxu0 0.0
  %306 = vmatpush2.msra.mxu0 0.0
  %307 = vmatprep.subr.mxu0 0.0
  %308 = vmatpush2.msra.mxu0 0.0
  %309 = vmatprep.subr.mxu0 0.0
  %310 = vmatpush2.msra.mxu0 0.0
  %311 = vmatprep.subr.mxu0 0.0
  %312 = vmatpush2.msra.mxu0 0.0
  %313 = vmatprep.subr.mxu0 0.0
  %314 = vmatpush2.msra.mxu0 0.0
  %315 = vmatprep.subr.mxu0 0.0
  %316 = vmatpush2.msra.mxu0 0.0
  %317 = vmatprep.subr.mxu0 0.0
  %318 = vmatpush2.msra.mxu0 0.0
  %319 = vmatprep.subr.mxu0 0.0
  %320 = vmatpush2.msra.mxu0 0.0
  %321 = vmatprep.mubr.f32.mxu0 0.0
  %322 = vmatmul.mubr.f32.gmra.mxu0 %v50
  %v323 = vpop.f32.mrf.mxu0
  %v324 = vadd.f32 %v135, %v323
  %v325 = vpop.f32.mrf.mxu0
  %v326 = vadd.f32 %v139, %v325
  %327 = vmatprep.mubr.f32.mxu0 0.0
  %328 = vmatmul.mubr.f32.gmra.mxu0 %v51
  %v329 = vpop.f32.mrf.mxu0
  %v330 = vadd.f32 %v135, %v329
  %v331 = vpop.f32.mrf.mxu0
  %v332 = vadd.f32 %v139, %v331
  %333 = vmatprep.mubr.f32.mxu0 0.0
  %334 = vmatmul.mubr.f32.gmra.mxu0 %v52
  %v335 = vpop.f32.mrf.mxu0
  %v336 = vadd.f32 %v135, %v335
  %v337 = vpop.f32.mrf.mxu0
  %v338 = vadd.f32 %v139, %v337
  %339 = vmatprep.mubr.f32.mxu0 0.0
  %340 = vmatmul.mubr.f32.gmra.mxu0 %v53
  %v341 = vpop.f32.mrf.mxu0
  %v342 = vadd.f32 %v135, %v341
  %v343 = vpop.f32.mrf.mxu0
  %v344 = vadd.f32 %v139, %v343
  %345 = vmatprep.mubr.f32.mxu0 0.0
  %346 = vmatmul.mubr.f32.gmra.mxu0 %v54
  %v347 = vpop.f32.mrf.mxu0
  %v348 = vadd.f32 %v135, %v347
  %v349 = vpop.f32.mrf.mxu0
  %v350 = vadd.f32 %v139, %v349
  %351 = vmatprep.mubr.f32.mxu0 0.0
  %352 = vmatmul.mubr.f32.gmra.mxu0 %v55
  %v353 = vpop.f32.mrf.mxu0
  %v354 = vadd.f32 %v135, %v353
  %v355 = vpop.f32.mrf.mxu0
  %v356 = vadd.f32 %v139, %v355
  %357 = vmatprep.mubr.f32.mxu0 0.0
  %358 = vmatmul.mubr.f32.gmra.mxu0 %v56
  %v359 = vpop.f32.mrf.mxu0
  %v360 = vadd.f32 %v135, %v359
  %v361 = vpop.f32.mrf.mxu0
  %v362 = vadd.f32 %v139, %v361
  %363 = vmatprep.mubr.f32.mxu0 0.0
  %364 = vmatmul.mubr.f32.gmra.mxu0 %v57
  %v365 = vpop.f32.mrf.mxu0
  %v366 = vadd.f32 %v135, %v365
  %v367 = vpop.f32.mrf.mxu0
  %v368 = vadd.f32 %v139, %v367
  %369 = vdwg.mxu0
  %370 = vst [vmem:[#allocation2] sm:$0xff] %v211
  %371 = vst [vmem:[#allocation2 + $0x8] sm:$0xff] %v213
  %372 = vst [vmem:[#allocation2 + $0x10] sm:$0xff] %v324
  %373 = vst [vmem:[#allocation2 + $0x18] sm:$0xff] %v326
  %374 = vst [vmem:[#allocation2 + $0x20] sm:$0xff] %v217
  %375 = vst [vmem:[#allocation2 + $0x28] sm:$0xff] %v219
  %376 = vst [vmem:[#allocation2 + $0x30] sm:$0xff] %v330
  %377 = vst [vmem:[#allocation2 + $0x38] sm:$0xff] %v332
  %378 = vst [vmem:[#allocation2 + $0x40] sm:$0xff] %v223
  %379 = vst [vmem:[#allocation2 + $0x48] sm:$0xff] %v225
  %380 = vst [vmem:[#allocation2 + $0x50] sm:$0xff] %v336
  %381 = vst [vmem:[#allocation2 + $0x58] sm:$0xff] %v338
  %382 = vst [vmem:[#allocation2 + $0x60] sm:$0xff] %v229
  %383 = vst [vmem:[#allocation2 + $0x68] sm:$0xff] %v231
  %384 = vst [vmem:[#allocation2 + $0x70] sm:$0xff] %v342
  %385 = vst [vmem:[#allocation2 + $0x78] sm:$0xff] %v344
  %386 = vst [vmem:[#allocation2 + $0x80] sm:$0xff] %v235
  %387 = vst [vmem:[#allocation2 + $0x88] sm:$0xff] %v237
  %388 = vst [vmem:[#allocation2 + $0x90] sm:$0xff] %v348
  %389 = vst [vmem:[#allocation2 + $0x98] sm:$0xff] %v350
  %390 = vst [vmem:[#allocation2 + $0xa0] sm:$0xff] %v241
  %391 = vst [vmem:[#allocation2 + $0xa8] sm:$0xff] %v243
  %392 = vst [vmem:[#allocation2 + $0xb0] sm:$0xff] %v354
  %393 = vst [vmem:[#allocation2 + $0xb8] sm:$0xff] %v356
  %394 = vst [vmem:[#allocation2 + $0xc0] sm:$0xff] %v247
  %395 = vst [vmem:[#allocation2 + $0xc8] sm:$0xff] %v249
  %396 = vst [vmem:[#allocation2 + $0xd0] sm:$0xff] %v360
  %397 = vst [vmem:[#allocation2 + $0xd8] sm:$0xff] %v362
  %398 = vst [vmem:[#allocation2 + $0xe0] sm:$0xff] %v253
  %399 = vst [vmem:[#allocation2 + $0xe8] sm:$0xff] %v255
  %400 = vst [vmem:[#allocation2 + $0xf0] sm:$0xff] %v366
  %401 = vst [vmem:[#allocation2 + $0xf8] sm:$0xff] %v368
  %v402 = vld [vmem:[%s2] sm:$0xff]
  %v403 = vld [vmem:[%s2 + $0x8] sm:$0xff]
  %v404 = vld [vmem:[%s2 + $0x10] sm:$0xff]
  %v405 = vld [vmem:[%s2 + $0x18] sm:$0xff]
  %v406 = vld [vmem:[%s2 + $0x20] sm:$0xff]
  %v407 = vld [vmem:[%s2 + $0x28] sm:$0xff]
  %v408 = vld [vmem:[%s2 + $0x30] sm:$0xff]
  %v409 = vld [vmem:[%s2 + $0x38] sm:$0xff]
  %v410 = vld [vmem:[%s2 + $0x40] sm:$0xff]
  %v411 = vld [vmem:[%s2 + $0x48] sm:$0xff]
  %v412 = vld [vmem:[%s2 + $0x50] sm:$0xff]
  %v413 = vld [vmem:[%s2 + $0x58] sm:$0xff]
  %v414 = vld [vmem:[%s2 + $0x60] sm:$0xff]
  %v415 = vld [vmem:[%s2 + $0x68] sm:$0xff]
  %v416 = vld [vmem:[%s2 + $0x70] sm:$0xff]
  %v417 = vld [vmem:[%s2 + $0x78] sm:$0xff]
  %v418 = vld [vmem:[%s2 + $0x80] sm:$0xff]
  %v419 = vld [vmem:[%s2 + $0x88] sm:$0xff]
  %v420 = vld [vmem:[%s2 + $0x90] sm:$0xff]
  %v421 = vld [vmem:[%s2 + $0x98] sm:$0xff]
  %v422 = vld [vmem:[%s2 + $0xa0] sm:$0xff]
  %v423 = vld [vmem:[%s2 + $0xa8] sm:$0xff]
  %v424 = vld [vmem:[%s2 + $0xb0] sm:$0xff]
  %v425 = vld [vmem:[%s2 + $0xb8] sm:$0xff]
  %v426 = vld [vmem:[%s2 + $0xc0] sm:$0xff]
  %v427 = vld [vmem:[%s2 + $0xc8] sm:$0xff]
  %v428 = vld [vmem:[%s2 + $0xd0] sm:$0xff]
  %v429 = vld [vmem:[%s2 + $0xd8] sm:$0xff]
  %v430 = vld [vmem:[%s2 + $0xe0] sm:$0xff]
  %v431 = vld [vmem:[%s2 + $0xe8] sm:$0xff]
  %v432 = vld [vmem:[%s2 + $0xf0] sm:$0xff]
  %v433 = vld [vmem:[%s2 + $0xf8] sm:$0xff]
  %v434 = vld [vmem:[%s2 + $0x100] sm:$0xff]
  %v435 = vld [vmem:[%s2 + $0x108] sm:$0xff]
  %v436 = vld [vmem:[%s2 + $0x110] sm:$0xff]
  %v437 = vld [vmem:[%s2 + $0x118] sm:$0xff]
  %v438 = vld [vmem:[%s2 + $0x120] sm:$0xff]
  %v439 = vld [vmem:[%s2 + $0x128] sm:$0xff]
  %v440 = vld [vmem:[%s2 + $0x130] sm:$0xff]
  %v441 = vld [vmem:[%s2 + $0x138] sm:$0xff]
  %v442 = vld [vmem:[%s2 + $0x140] sm:$0xff]
  %v443 = vld [vmem:[%s2 + $0x148] sm:$0xff]
  %v444 = vld [vmem:[%s2 + $0x150] sm:$0xff]
  %v445 = vld [vmem:[%s2 + $0x158] sm:$0xff]
  %v446 = vld [vmem:[%s2 + $0x160] sm:$0xff]
  %v447 = vld [vmem:[%s2 + $0x168] sm:$0xff]
  %v448 = vld [vmem:[%s2 + $0x170] sm:$0xff]
  %v449 = vld [vmem:[%s2 + $0x178] sm:$0xff]
  %v450 = vld [vmem:[%s2 + $0x180] sm:$0xff]
  %v451 = vld [vmem:[%s2 + $0x188] sm:$0xff]
  %v452 = vld [vmem:[%s2 + $0x190] sm:$0xff]
  %v453 = vld [vmem:[%s2 + $0x198] sm:$0xff]
  %v454 = vld [vmem:[%s2 + $0x1a0] sm:$0xff]
  %v455 = vld [vmem:[%s2 + $0x1a8] sm:$0xff]
  %v456 = vld [vmem:[%s2 + $0x1b0] sm:$0xff]
  %v457 = vld [vmem:[%s2 + $0x1b8] sm:$0xff]
  %v458 = vld [vmem:[%s2 + $0x1c0] sm:$0xff]
  %v459 = vld [vmem:[%s2 + $0x1c8] sm:$0xff]
  %v460 = vld [vmem:[%s2 + $0x1d0] sm:$0xff]
  %v461 = vld [vmem:[%s2 + $0x1d8] sm:$0xff]
  %v462 = vld [vmem:[%s2 + $0x1e0] sm:$0xff]
  %v463 = vld [vmem:[%s2 + $0x1e8] sm:$0xff]
  %v464 = vld [vmem:[%s2 + $0x1f0] sm:$0xff]
  %v465 = vld [vmem:[%s2 + $0x1f8] sm:$0xff]
  %s466 = smul.u32 0, 4
  %s467 = smul.addr %s466, 8
  %s468 = scalar_lea.vmem [#allocation2], %s467
  %v469 = vld [vmem:[%s468] sm:$0xff]
  %v470 = vld [vmem:[%s468 + $0x8] sm:$0xff]
  %v471 = vld [vmem:[%s468 + $0x10] sm:$0xff]
  %v472 = vld [vmem:[%s468 + $0x18] sm:$0xff]
  %473 = vmatprep.subr.mxu0 %v463
  %474 = vmatpush1.msra.mxu0 %v462
  %475 = vmatprep.subr.mxu0 %v459
  %476 = vmatpush1.msra.mxu0 %v458
  %477 = vmatprep.subr.mxu0 %v455
  %478 = vmatpush1.msra.mxu0 %v454
  %479 = vmatprep.subr.mxu0 %v451
  %480 = vmatpush1.msra.mxu0 %v450
  %481 = vmatprep.subr.mxu0 %v447
  %482 = vmatpush1.msra.mxu0 %v446
  %483 = vmatprep.subr.mxu0 %v443
  %484 = vmatpush1.msra.mxu0 %v442
  %485 = vmatprep.subr.mxu0 %v439
  %486 = vmatpush1.msra.mxu0 %v438
  %487 = vmatprep.subr.mxu0 %v435
  %488 = vmatpush1.msra.mxu0 %v434
  %489 = vmatprep.subr.mxu0 %v431
  %490 = vmatpush1.msra.mxu0 %v430
  %491 = vmatprep.subr.mxu0 %v427
  %492 = vmatpush1.msra.mxu0 %v426
  %493 = vmatprep.subr.mxu0 %v423
  %494 = vmatpush1.msra.mxu0 %v422
  %495 = vmatprep.subr.mxu0 %v419
  %496 = vmatpush1.msra.mxu0 %v418
  %497 = vmatprep.subr.mxu0 %v415
  %498 = vmatpush1.msra.mxu0 %v414
  %499 = vmatprep.subr.mxu0 %v411
  %500 = vmatpush1.msra.mxu0 %v410
  %501 = vmatprep.subr.mxu0 %v407
  %502 = vmatpush1.msra.mxu0 %v406
  %503 = vmatprep.subr.mxu0 %v403
  %504 = vmatpush1.msra.mxu0 %v402
  %505 = vmatprep.subr.mxu0 0.0
  %506 = vmatpush2.msra.mxu0 0.0
  %507 = vmatprep.subr.mxu0 0.0
  %508 = vmatpush2.msra.mxu0 0.0
  %509 = vmatprep.subr.mxu0 0.0
  %510 = vmatpush2.msra.mxu0 0.0
  %511 = vmatprep.subr.mxu0 0.0
  %512 = vmatpush2.msra.mxu0 0.0
  %513 = vmatprep.subr.mxu0 0.0
  %514 = vmatpush2.msra.mxu0 0.0
  %515 = vmatprep.subr.mxu0 0.0
  %516 = vmatpush2.msra.mxu0 0.0
  %517 = vmatprep.subr.mxu0 0.0
  %518 = vmatpush2.msra.mxu0 0.0
  %519 = vmatprep.subr.mxu0 0.0
  %520 = vmatpush2.msra.mxu0 0.0
  %521 = vmatprep.subr.mxu0 0.0
  %522 = vmatpush2.msra.mxu0 0.0
  %523 = vmatprep.subr.mxu0 0.0
  %524 = vmatpush2.msra.mxu0 0.0
  %525 = vmatprep.subr.mxu0 0.0
  %526 = vmatpush2.msra.mxu0 0.0
  %527 = vmatprep.subr.mxu0 0.0
  %528 = vmatpush2.msra.mxu0 0.0
  %529 = vmatprep.subr.mxu0 0.0
  %530 = vmatpush2.msra.mxu0 0.0
  %531 = vmatprep.subr.mxu0 0.0
  %532 = vmatpush2.msra.mxu0 0.0
  %533 = vmatprep.subr.mxu0 0.0
  %534 = vmatpush2.msra.mxu0 0.0
  %535 = vmatprep.subr.mxu0 0.0
  %536 = vmatpush2.msra.mxu0 0.0
  %537 = vmatprep.mubr.f32.mxu0 0.0
  %538 = vmatmul.mubr.f32.gmra.mxu0 0.0
  %v539 = vpop.f32.mrf.mxu0
  %v540 = vadd.f32 0.0, %v539
  %v541 = vpop.f32.mrf.mxu0
  %v542 = vadd.f32 0.0, %v541
  %543 = vdwg.mxu0
  %544 = vmatprep.subr.mxu0 %v465
  %545 = vmatpush1.msra.mxu0 %v464
  %546 = vmatprep.subr.mxu0 %v461
  %547 = vmatpush1.msra.mxu0 %v460
  %548 = vmatprep.subr.mxu0 %v457
  %549 = vmatpush1.msra.mxu0 %v456
  %550 = vmatprep.subr.mxu0 %v453
  %551 = vmatpush1.msra.mxu0 %v452
  %552 = vmatprep.subr.mxu0 %v449
  %553 = vmatpush1.msra.mxu0 %v448
  %554 = vmatprep.subr.mxu0 %v445
  %555 = vmatpush1.msra.mxu0 %v444
  %556 = vmatprep.subr.mxu0 %v441
  %557 = vmatpush1.msra.mxu0 %v440
  %558 = vmatprep.subr.mxu0 %v437
  %559 = vmatpush1.msra.mxu0 %v436
  %560 = vmatprep.subr.mxu0 %v433
  %561 = vmatpush1.msra.mxu0 %v432
  %562 = vmatprep.subr.mxu0 %v429
  %563 = vmatpush1.msra.mxu0 %v428
  %564 = vmatprep.subr.mxu0 %v425
  %565 = vmatpush1.msra.mxu0 %v424
  %566 = vmatprep.subr.mxu0 %v421
  %567 = vmatpush1.msra.mxu0 %v420
  %568 = vmatprep.subr.mxu0 %v417
  %569 = vmatpush1.msra.mxu0 %v416
  %570 = vmatprep.subr.mxu0 %v413
  %571 = vmatpush1.msra.mxu0 %v412
  %572 = vmatprep.subr.mxu0 %v409
  %573 = vmatpush1.msra.mxu0 %v408
  %574 = vmatprep.subr.mxu0 %v405
  %575 = vmatpush1.msra.mxu0 %v404
  %576 = vmatprep.subr.mxu0 0.0
  %577 = vmatpush2.msra.mxu0 0.0
  %578 = vmatprep.subr.mxu0 0.0
  %579 = vmatpush2.msra.mxu0 0.0
  %580 = vmatprep.subr.mxu0 0.0
  %581 = vmatpush2.msra.mxu0 0.0
  %582 = vmatprep.subr.mxu0 0.0
  %583 = vmatpush2.msra.mxu0 0.0
  %584 = vmatprep.subr.mxu0 0.0
  %585 = vmatpush2.msra.mxu0 0.0
  %586 = vmatprep.subr.mxu0 0.0
  %587 = vmatpush2.msra.mxu0 0.0
  %588 = vmatprep.subr.mxu0 0.0
  %589 = vmatpush2.msra.mxu0 0.0
  %590 = vmatprep.subr.mxu0 0.0
  %591 = vmatpush2.msra.mxu0 0.0
  %592 = vmatprep.subr.mxu0 0.0
  %593 = vmatpush2.msra.mxu0 0.0
  %594 = vmatprep.subr.mxu0 0.0
  %595 = vmatpush2.msra.mxu0 0.0
  %596 = vmatprep.subr.mxu0 0.0
  %597 = vmatpush2.msra.mxu0 0.0
  %598 = vmatprep.subr.mxu0 0.0
  %599 = vmatpush2.msra.mxu0 0.0
  %600 = vmatprep.subr.mxu0 0.0
  %601 = vmatpush2.msra.mxu0 0.0
  %602 = vmatprep.subr.mxu0 0.0
  %603 = vmatpush2.msra.mxu0 0.0
  %604 = vmatprep.subr.mxu0 0.0
  %605 = vmatpush2.msra.mxu0 0.0
  %606 = vmatprep.subr.mxu0 0.0
  %607 = vmatpush2.msra.mxu0 0.0
  %608 = vmatprep.mubr.f32.mxu0 0.0
  %609 = vmatmul.mubr.f32.gmra.mxu0 0.0
  %v610 = vpop.f32.mrf.mxu0
  %v611 = vadd.f32 0.0, %v610
  %v612 = vpop.f32.mrf.mxu0
  %v613 = vadd.f32 0.0, %v612
  %614 = vdwg.mxu0
  %v615 = vadd.f32 %v469, %v540
  %v616 = vadd.f32 %v470, %v542
  %v617 = vadd.f32 %v471, %v611
  %v618 = vadd.f32 %v472, %v613
  %v619 = vxor.u32 %v615, 2147483648
  %v620 = vmul.f32 %v619, 1.442695
  %v621 = vpow.pop %v620
  %v622 = vadd.f32 %v621, 1.0
  %v623 = vrcp.pop %v622
  %v624 = vmul.f32 1.0, %v623
  %v625 = vxor.u32 %v616, 2147483648
  %v626 = vmul.f32 %v625, 1.442695
  %v627 = vpow.pop %v626
  %v628 = vadd.f32 %v627, 1.0
  %v629 = vrcp.pop %v628
  %v630 = vmul.f32 1.0, %v629
  %v631 = vtanh.pop %v617
  %v632 = vxor.u32 %v618, 2147483648
  %v633 = vmul.f32 %v632, 1.442695
  %v634 = vpow.pop %v633
  %v635 = vadd.f32 %v634, 1.0
  %v636 = vrcp.pop %v635
  %v637 = vmul.f32 1.0, %v636
  %v638 = vmul.f32 %v630, 0.0
  %v639 = vmul.f32 %v624, %v631
  %v640 = vadd.f32 %v638, %v639
  %v641 = vtanh.pop %v640
  %v642 = vmul.f32 %v637, %v641
  %643 = vst [vmem:[#allocation3] sm:$0xff] %v642
  %s644 = smul.u32 1, 4
  %s645 = smul.addr %s644, 8
  %s646 = scalar_lea.vmem [#allocation2], %s645
  %v647 = vld [vmem:[%s646] sm:$0xff]
  %v648 = vld [vmem:[%s646 + $0x8] sm:$0xff]
  %v649 = vld [vmem:[%s646 + $0x10] sm:$0xff]
  %v650 = vld [vmem:[%s646 + $0x18] sm:$0xff]
  %651 = vmatprep.subr.mxu0 %v463
  %652 = vmatpush1.msra.mxu0 %v462
  %653 = vmatprep.subr.mxu0 %v459
  %654 = vmatpush1.msra.mxu0 %v458
  %655 = vmatprep.subr.mxu0 %v455
  %656 = vmatpush1.msra.mxu0 %v454
  %657 = vmatprep.subr.mxu0 %v451
  %658 = vmatpush1.msra.mxu0 %v450
  %659 = vmatprep.subr.mxu0 %v447
  %660 = vmatpush1.msra.mxu0 %v446
  %661 = vmatprep.subr.mxu0 %v443
  %662 = vmatpush1.msra.mxu0 %v442
  %663 = vmatprep.subr.mxu0 %v439
  %664 = vmatpush1.msra.mxu0 %v438
  %665 = vmatprep.subr.mxu0 %v435
  %666 = vmatpush1.msra.mxu0 %v434
  %667 = vmatprep.subr.mxu0 %v431
  %668 = vmatpush1.msra.mxu0 %v430
  %669 = vmatprep.subr.mxu0 %v427
  %670 = vmatpush1.msra.mxu0 %v426
  %671 = vmatprep.subr.mxu0 %v423
  %672 = vmatpush1.msra.mxu0 %v422
  %673 = vmatprep.subr.mxu0 %v419
  %674 = vmatpush1.msra.mxu0 %v418
  %675 = vmatprep.subr.mxu0 %v415
  %676 = vmatpush1.msra.mxu0 %v414
  %677 = vmatprep.subr.mxu0 %v411
  %678 = vmatpush1.msra.mxu0 %v410
  %679 = vmatprep.subr.mxu0 %v407
  %680 = vmatpush1.msra.mxu0 %v406
  %681 = vmatprep.subr.mxu0 %v403
  %682 = vmatpush1.msra.mxu0 %v402
  %683 = vmatprep.subr.mxu0 0.0
  %684 = vmatpush2.msra.mxu0 0.0
  %685 = vmatprep.subr.mxu0 0.0
  %686 = vmatpush2.msra.mxu0 0.0
  %687 = vmatprep.subr.mxu0 0.0
  %688 = vmatpush2.msra.mxu0 0.0
  %689 = vmatprep.subr.mxu0 0.0
  %690 = vmatpush2.msra.mxu0 0.0
  %691 = vmatprep.subr.mxu0 0.0
  %692 = vmatpush2.msra.mxu0 0.0
  %693 = vmatprep.subr.mxu0 0.0
  %694 = vmatpush2.msra.mxu0 0.0
  %695 = vmatprep.subr.mxu0 0.0
  %696 = vmatpush2.msra.mxu0 0.0
  %697 = vmatprep.subr.mxu0 0.0
  %698 = vmatpush2.msra.mxu0 0.0
  %699 = vmatprep.subr.mxu0 0.0
  %700 = vmatpush2.msra.mxu0 0.0
  %701 = vmatprep.subr.mxu0 0.0
  %702 = vmatpush2.msra.mxu0 0.0
  %703 = vmatprep.subr.mxu0 0.0
  %704 = vmatpush2.msra.mxu0 0.0
  %705 = vmatprep.subr.mxu0 0.0
  %706 = vmatpush2.msra.mxu0 0.0
  %707 = vmatprep.subr.mxu0 0.0
  %708 = vmatpush2.msra.mxu0 0.0
  %709 = vmatprep.subr.mxu0 0.0
  %710 = vmatpush2.msra.mxu0 0.0
  %711 = vmatprep.subr.mxu0 0.0
  %712 = vmatpush2.msra.mxu0 0.0
  %713 = vmatprep.subr.mxu0 0.0
  %714 = vmatpush2.msra.mxu0 0.0
  %715 = vmatprep.mubr.f32.mxu0 0.0
  %716 = vmatmul.mubr.f32.gmra.mxu0 %v642
  %v717 = vpop.f32.mrf.mxu0
  %v718 = vadd.f32 0.0, %v717
  %v719 = vpop.f32.mrf.mxu0
  %v720 = vadd.f32 0.0, %v719
  %721 = vdwg.mxu0
  %722 = vmatprep.subr.mxu0 %v465
  %723 = vmatpush1.msra.mxu0 %v464
  %724 = vmatprep.subr.mxu0 %v461
  %725 = vmatpush1.msra.mxu0 %v460
  %726 = vmatprep.subr.mxu0 %v457
  %727 = vmatpush1.msra.mxu0 %v456
  %728 = vmatprep.subr.mxu0 %v453
  %729 = vmatpush1.msra.mxu0 %v452
  %730 = vmatprep.subr.mxu0 %v449
  %731 = vmatpush1.msra.mxu0 %v448
  %732 = vmatprep.subr.mxu0 %v445
  %733 = vmatpush1.msra.mxu0 %v444
  %734 = vmatprep.subr.mxu0 %v441
  %735 = vmatpush1.msra.mxu0 %v440
  %736 = vmatprep.subr.mxu0 %v437
  %737 = vmatpush1.msra.mxu0 %v436
  %738 = vmatprep.subr.mxu0 %v433
  %739 = vmatpush1.msra.mxu0 %v432
  %740 = vmatprep.subr.mxu0 %v429
  %741 = vmatpush1.msra.mxu0 %v428
  %742 = vmatprep.subr.mxu0 %v425
  %743 = vmatpush1.msra.mxu0 %v424
  %744 = vmatprep.subr.mxu0 %v421
  %745 = vmatpush1.msra.mxu0 %v420
  %746 = vmatprep.subr.mxu0 %v417
  %747 = vmatpush1.msra.mxu0 %v416
  %748 = vmatprep.subr.mxu0 %v413
  %749 = vmatpush1.msra.mxu0 %v412
  %750 = vmatprep.subr.mxu0 %v409
  %751 = vmatpush1.msra.mxu0 %v408
  %752 = vmatprep.subr.mxu0 %v405
  %753 = vmatpush1.msra.mxu0 %v404
  %754 = vmatprep.subr.mxu0 0.0
  %755 = vmatpush2.msra.mxu0 0.0
  %756 = vmatprep.subr.mxu0 0.0
  %757 = vmatpush2.msra.mxu0 0.0
  %758 = vmatprep.subr.mxu0 0.0
  %759 = vmatpush2.msra.mxu0 0.0
  %760 = vmatprep.subr.mxu0 0.0
  %761 = vmatpush2.msra.mxu0 0.0
  %762 = vmatprep.subr.mxu0 0.0
  %763 = vmatpush2.msra.mxu0 0.0
  %764 = vmatprep.subr.mxu0 0.0
  %765 = vmatpush2.msra.mxu0 0.0
  %766 = vmatprep.subr.mxu0 0.0
  %767 = vmatpush2.msra.mxu0 0.0
  %768 = vmatprep.subr.mxu0 0.0
  %769 = vmatpush2.msra.mxu0 0.0
  %770 = vmatprep.subr.mxu0 0.0
  %771 = vmatpush2.msra.mxu0 0.0
  %772 = vmatprep.subr.mxu0 0.0
  %773 = vmatpush2.msra.mxu0 0.0
  %774 = vmatprep.subr.mxu0 0.0
  %775 = vmatpush2.msra.mxu0 0.0
  %776 = vmatprep.subr.mxu0 0.0
  %777 = vmatpush2.msra.mxu0 0.0
  %778 = vmatprep.subr.mxu0 0.0
  %779 = vmatpush2.msra.mxu0 0.0
  %780 = vmatprep.subr.mxu0 0.0
  %781 = vmatpush2.msra.mxu0 0.0
  %782 = vmatprep.subr.mxu0 0.0
  %783 = vmatpush2.msra.mxu0 0.0
  %784 = vmatprep.subr.mxu0 0.0
  %785 = vmatpush2.msra.mxu0 0.0
  %786 = vmatprep.mubr.f32.mxu0 0.0
  %787 = vmatmul.mubr.f32.gmra.mxu0 %v642
  %v788 = vpop.f32.mrf.mxu0
  %v789 = vadd.f32 0.0, %v788
  %v790 = vpop.f32.mrf.mxu0
  %v791 = vadd.f32 0.0, %v790
  %792 = vdwg.mxu0
  %v793 = vadd.f32 %v647, %v718
  %v794 = vadd.f32 %v648, %v720
  %v795 = vadd.f32 %v649, %v789
  %v796 = vadd.f32 %v650, %v791
  %v797 = vxor.u32 %v793, 2147483648
  %v798 = vmul.f32 %v797, 1.442695
  %v799 = vpow.pop %v798
  %v800 = vadd.f32 %v799, 1.0
  %v801 = vrcp.pop %v800
  %v802 = vmul.f32 1.0, %v801
  %v803 = vxor.u32 %v794, 2147483648
  %v804 = vmul.f32 %v803, 1.442695
  %v805 = vpow.pop %v804
  %v806 = vadd.f32 %v805, 1.0
  %v807 = vrcp.pop %v806
  %v808 = vmul.f32 1.0, %v807
  %v809 = vtanh.pop %v795
  %v810 = vxor.u32 %v796, 2147483648
  %v811 = vmul.f32 %v810, 1.442695
  %v812 = vpow.pop %v811
  %v813 = vadd.f32 %v812, 1.0
  %v814 = vrcp.pop %v813
  %v815 = vmul.f32 1.0, %v814
  %v816 = vmul.f32 %v808, %v640
  %v817 = vmul.f32 %v802, %v809
  %v818 = vadd.f32 %v816, %v817
  %v819 = vtanh.pop %v818
  %v820 = vmul.f32 %v815, %v819
  %s821 = scalar_lea.vmem [#allocation3], 8
  %822 = vst [vmem:[%s821] sm:$0xff] %v820
  %s823 = smul.u32 2, 4
  %s824 = smul.addr %s823, 8
  %s825 = scalar_lea.vmem [#allocation2], %s824
  %v826 = vld [vmem:[%s825] sm:$0xff]
  %v827 = vld [vmem:[%s825 + $0x8] sm:$0xff]
  %v828 = vld [vmem:[%s825 + $0x10] sm:$0xff]
  %v829 = vld [vmem:[%s825 + $0x18] sm:$0xff]
  %830 = vmatprep.subr.mxu0 %v463
  %831 = vmatpush1.msra.mxu0 %v462
  %832 = vmatprep.subr.mxu0 %v459
  %833 = vmatpush1.msra.mxu0 %v458
  %834 = vmatprep.subr.mxu0 %v455
  %835 = vmatpush1.msra.mxu0 %v454
  %836 = vmatprep.subr.mxu0 %v451
  %837 = vmatpush1.msra.mxu0 %v450
  %838 = vmatprep.subr.mxu0 %v447
  %839 = vmatpush1.msra.mxu0 %v446
  %840 = vmatprep.subr.mxu0 %v443
  %841 = vmatpush1.msra.mxu0 %v442
  %842 = vmatprep.subr.mxu0 %v439
  %843 = vmatpush1.msra.mxu0 %v438
  %844 = vmatprep.subr.mxu0 %v435
  %845 = vmatpush1.msra.mxu0 %v434
  %846 = vmatprep.subr.mxu0 %v431
  %847 = vmatpush1.msra.mxu0 %v430
  %848 = vmatprep.subr.mxu0 %v427
  %849 = vmatpush1.msra.mxu0 %v426
  %850 = vmatprep.subr.mxu0 %v423
  %851 = vmatpush1.msra.mxu0 %v422
  %852 = vmatprep.subr.mxu0 %v419
  %853 = vmatpush1.msra.mxu0 %v418
  %854 = vmatprep.subr.mxu0 %v415
  %855 = vmatpush1.msra.mxu0 %v414
  %856 = vmatprep.subr.mxu0 %v411
  %857 = vmatpush1.msra.mxu0 %v410
  %858 = vmatprep.subr.mxu0 %v407
  %859 = vmatpush1.msra.mxu0 %v406
  %860 = vmatprep.subr.mxu0 %v403
  %861 = vmatpush1.msra.mxu0 %v402
  %862 = vmatprep.subr.mxu0 0.0
  %863 = vmatpush2.msra.mxu0 0.0
  %864 = vmatprep.subr.mxu0 0.0
  %865 = vmatpush2.msra.mxu0 0.0
  %866 = vmatprep.subr.mxu0 0.0
  %867 = vmatpush2.msra.mxu0 0.0
  %868 = vmatprep.subr.mxu0 0.0
  %869 = vmatpush2.msra.mxu0 0.0
  %870 = vmatprep.subr.mxu0 0.0
  %871 = vmatpush2.msra.mxu0 0.0
  %872 = vmatprep.subr.mxu0 0.0
  %873 = vmatpush2.msra.mxu0 0.0
  %874 = vmatprep.subr.mxu0 0.0
  %875 = vmatpush2.msra.mxu0 0.0
  %876 = vmatprep.subr.mxu0 0.0
  %877 = vmatpush2.msra.mxu0 0.0
  %878 = vmatprep.subr.mxu0 0.0
  %879 = vmatpush2.msra.mxu0 0.0
  %880 = vmatprep.subr.mxu0 0.0
  %881 = vmatpush2.msra.mxu0 0.0
  %882 = vmatprep.subr.mxu0 0.0
  %883 = vmatpush2.msra.mxu0 0.0
  %884 = vmatprep.subr.mxu0 0.0
  %885 = vmatpush2.msra.mxu0 0.0
  %886 = vmatprep.subr.mxu0 0.0
  %887 = vmatpush2.msra.mxu0 0.0
  %888 = vmatprep.subr.mxu0 0.0
  %889 = vmatpush2.msra.mxu0 0.0
  %890 = vmatprep.subr.mxu0 0.0
  %891 = vmatpush2.msra.mxu0 0.0
  %892 = vmatprep.subr.mxu0 0.0
  %893 = vmatpush2.msra.mxu0 0.0
  %894 = vmatprep.mubr.f32.mxu0 0.0
  %895 = vmatmul.mubr.f32.gmra.mxu0 %v820
  %v896 = vpop.f32.mrf.mxu0
  %v897 = vadd.f32 0.0, %v896
  %v898 = vpop.f32.mrf.mxu0
  %v899 = vadd.f32 0.0, %v898
  %900 = vdwg.mxu0
  %901 = vmatprep.subr.mxu0 %v465
  %902 = vmatpush1.msra.mxu0 %v464
  %903 = vmatprep.subr.mxu0 %v461
  %904 = vmatpush1.msra.mxu0 %v460
  %905 = vmatprep.subr.mxu0 %v457
  %906 = vmatpush1.msra.mxu0 %v456
  %907 = vmatprep.subr.mxu0 %v453
  %908 = vmatpush1.msra.mxu0 %v452
  %909 = vmatprep.subr.mxu0 %v449
  %910 = vmatpush1.msra.mxu0 %v448
  %911 = vmatprep.subr.mxu0 %v445
  %912 = vmatpush1.msra.mxu0 %v444
  %913 = vmatprep.subr.mxu0 %v441
  %914 = vmatpush1.msra.mxu0 %v440
  %915 = vmatprep.subr.mxu0 %v437
  %916 = vmatpush1.msra.mxu0 %v436
  %917 = vmatprep.subr.mxu0 %v433
  %918 = vmatpush1.msra.mxu0 %v432
  %919 = vmatprep.subr.mxu0 %v429
  %920 = vmatpush1.msra.mxu0 %v428
  %921 = vmatprep.subr.mxu0 %v425
  %922 = vmatpush1.msra.mxu0 %v424
  %923 = vmatprep.subr.mxu0 %v421
  %924 = vmatpush1.msra.mxu0 %v420
  %925 = vmatprep.subr.mxu0 %v417
  %926 = vmatpush1.msra.mxu0 %v416
  %927 = vmatprep.subr.mxu0 %v413
  %928 = vmatpush1.msra.mxu0 %v412
  %929 = vmatprep.subr.mxu0 %v409
  %930 = vmatpush1.msra.mxu0 %v408
  %931 = vmatprep.subr.mxu0 %v405
  %932 = vmatpush1.msra.mxu0 %v404
  %933 = vmatprep.subr.mxu0 0.0
  %934 = vmatpush2.msra.mxu0 0.0
  %935 = vmatprep.subr.mxu0 0.0
  %936 = vmatpush2.msra.mxu0 0.0
  %937 = vmatprep.subr.mxu0 0.0
  %938 = vmatpush2.msra.mxu0 0.0
  %939 = vmatprep.subr.mxu0 0.0
  %940 = vmatpush2.msra.mxu0 0.0
  %941 = vmatprep.subr.mxu0 0.0
  %942 = vmatpush2.msra.mxu0 0.0
  %943 = vmatprep.subr.mxu0 0.0
  %944 = vmatpush2.msra.mxu0 0.0
  %945 = vmatprep.subr.mxu0 0.0
  %946 = vmatpush2.msra.mxu0 0.0
  %947 = vmatprep.subr.mxu0 0.0
  %948 = vmatpush2.msra.mxu0 0.0
  %949 = vmatprep.subr.mxu0 0.0
  %950 = vmatpush2.msra.mxu0 0.0
  %951 = vmatprep.subr.mxu0 0.0
  %952 = vmatpush2.msra.mxu0 0.0
  %953 = vmatprep.subr.mxu0 0.0
  %954 = vmatpush2.msra.mxu0 0.0
  %955 = vmatprep.subr.mxu0 0.0
  %956 = vmatpush2.msra.mxu0 0.0
  %957 = vmatprep.subr.mxu0 0.0
  %958 = vmatpush2.msra.mxu0 0.0
  %959 = vmatprep.subr.mxu0 0.0
  %960 = vmatpush2.msra.mxu0 0.0
  %961 = vmatprep.subr.mxu0 0.0
  %962 = vmatpush2.msra.mxu0 0.0
  %963 = vmatprep.subr.mxu0 0.0
  %964 = vmatpush2.msra.mxu0 0.0
  %965 = vmatprep.mubr.f32.mxu0 0.0
  %966 = vmatmul.mubr.f32.gmra.mxu0 %v820
  %v967 = vpop.f32.mrf.mxu0
  %v968 = vadd.f32 0.0, %v967
  %v969 = vpop.f32.mrf.mxu0
  %v970 = vadd.f32 0.0, %v969
  %971 = vdwg.mxu0
  %v972 = vadd.f32 %v826, %v897
  %v973 = vadd.f32 %v827, %v899
  %v974 = vadd.f32 %v828, %v968
  %v975 = vadd.f32 %v829, %v970
  %v976 = vxor.u32 %v972, 2147483648
  %v977 = vmul.f32 %v976, 1.442695
  %v978 = vpow.pop %v977
  %v979 = vadd.f32 %v978, 1.0
  %v980 = vrcp.pop %v979
  %v981 = vmul.f32 1.0, %v980
  %v982 = vxor.u32 %v973, 2147483648
  %v983 = vmul.f32 %v982, 1.442695
  %v984 = vpow.pop %v983
  %v985 = vadd.f32 %v984, 1.0
  %v986 = vrcp.pop %v985
  %v987 = vmul.f32 1.0, %v986
  %v988 = vtanh.pop %v974
  %v989 = vxor.u32 %v975, 2147483648
  %v990 = vmul.f32 %v989, 1.442695
  %v991 = vpow.pop %v990
  %v992 = vadd.f32 %v991, 1.0
  %v993 = vrcp.pop %v992
  %v994 = vmul.f32 1.0, %v993
  %v995 = vmul.f32 %v987, %v818
  %v996 = vmul.f32 %v981, %v988
  %v997 = vadd.f32 %v995, %v996
  %v998 = vtanh.pop %v997
  %v999 = vmul.f32 %v994, %v998
  %s1000 = scalar_lea.vmem [#allocation3], 16
  %1001 = vst [vmem:[%s1000] sm:$0xff] %v999
  %s1002 = smul.u32 3, 4
  %s1003 = smul.addr %s1002, 8
  %s1004 = scalar_lea.vmem [#allocation2], %s1003
  %v1005 = vld [vmem:[%s1004] sm:$0xff]
  %v1006 = vld [vmem:[%s1004 + $0x8] sm:$0xff]
  %v1007 = vld [vmem:[%s1004 + $0x10] sm:$0xff]
  %v1008 = vld [vmem:[%s1004 + $0x18] sm:$0xff]
  %1009 = vmatprep.subr.mxu0 %v463
  %1010 = vmatpush1.msra.mxu0 %v462
  %1011 = vmatprep.subr.mxu0 %v459
  %1012 = vmatpush1.msra.mxu0 %v458
  %1013 = vmatprep.subr.mxu0 %v455
  %1014 = vmatpush1.msra.mxu0 %v454
  %1015 = vmatprep.subr.mxu0 %v451
  %1016 = vmatpush1.msra.mxu0 %v450
  %1017 = vmatprep.subr.mxu0 %v447
  %1018 = vmatpush1.msra.mxu0 %v446
  %1019 = vmatprep.subr.mxu0 %v443
  %1020 = vmatpush1.msra.mxu0 %v442
  %1021 = vmatprep.subr.mxu0 %v439
  %1022 = vmatpush1.msra.mxu0 %v438
  %1023 = vmatprep.subr.mxu0 %v435
  %1024 = vmatpush1.msra.mxu0 %v434
  %1025 = vmatprep.subr.mxu0 %v431
  %1026 = vmatpush1.msra.mxu0 %v430
  %1027 = vmatprep.subr.mxu0 %v427
  %1028 = vmatpush1.msra.mxu0 %v426
  %1029 = vmatprep.subr.mxu0 %v423
  %1030 = vmatpush1.msra.mxu0 %v422
  %1031 = vmatprep.subr.mxu0 %v419
  %1032 = vmatpush1.msra.mxu0 %v418
  %1033 = vmatprep.subr.mxu0 %v415
  %1034 = vmatpush1.msra.mxu0 %v414
  %1035 = vmatprep.subr.mxu0 %v411
  %1036 = vmatpush1.msra.mxu0 %v410
  %1037 = vmatprep.subr.mxu0 %v407
  %1038 = vmatpush1.msra.mxu0 %v406
  %1039 = vmatprep.subr.mxu0 %v403
  %1040 = vmatpush1.msra.mxu0 %v402
  %1041 = vmatprep.subr.mxu0 0.0
  %1042 = vmatpush2.msra.mxu0 0.0
  %1043 = vmatprep.subr.mxu0 0.0
  %1044 = vmatpush2.msra.mxu0 0.0
  %1045 = vmatprep.subr.mxu0 0.0
  %1046 = vmatpush2.msra.mxu0 0.0
  %1047 = vmatprep.subr.mxu0 0.0
  %1048 = vmatpush2.msra.mxu0 0.0
  %1049 = vmatprep.subr.mxu0 0.0
  %1050 = vmatpush2.msra.mxu0 0.0
  %1051 = vmatprep.subr.mxu0 0.0
  %1052 = vmatpush2.msra.mxu0 0.0
  %1053 = vmatprep.subr.mxu0 0.0
  %1054 = vmatpush2.msra.mxu0 0.0
  %1055 = vmatprep.subr.mxu0 0.0
  %1056 = vmatpush2.msra.mxu0 0.0
  %1057 = vmatprep.subr.mxu0 0.0
  %1058 = vmatpush2.msra.mxu0 0.0
  %1059 = vmatprep.subr.mxu0 0.0
  %1060 = vmatpush2.msra.mxu0 0.0
  %1061 = vmatprep.subr.mxu0 0.0
  %1062 = vmatpush2.msra.mxu0 0.0
  %1063 = vmatprep.subr.mxu0 0.0
  %1064 = vmatpush2.msra.mxu0 0.0
  %1065 = vmatprep.subr.mxu0 0.0
  %1066 = vmatpush2.msra.mxu0 0.0
  %1067 = vmatprep.subr.mxu0 0.0
  %1068 = vmatpush2.msra.mxu0 0.0
  %1069 = vmatprep.subr.mxu0 0.0
  %1070 = vmatpush2.msra.mxu0 0.0
  %1071 = vmatprep.subr.mxu0 0.0
  %1072 = vmatpush2.msra.mxu0 0.0
  %1073 = vmatprep.mubr.f32.mxu0 0.0
  %1074 = vmatmul.mubr.f32.gmra.mxu0 %v999
  %v1075 = vpop.f32.mrf.mxu0
  %v1076 = vadd.f32 0.0, %v1075
  %v1077 = vpop.f32.mrf.mxu0
  %v1078 = vadd.f32 0.0, %v1077
  %1079 = vdwg.mxu0
  %1080 = vmatprep.subr.mxu0 %v465
  %1081 = vmatpush1.msra.mxu0 %v464
  %1082 = vmatprep.subr.mxu0 %v461
  %1083 = vmatpush1.msra.mxu0 %v460
  %1084 = vmatprep.subr.mxu0 %v457
  %1085 = vmatpush1.msra.mxu0 %v456
  %1086 = vmatprep.subr.mxu0 %v453
  %1087 = vmatpush1.msra.mxu0 %v452
  %1088 = vmatprep.subr.mxu0 %v449
  %1089 = vmatpush1.msra.mxu0 %v448
  %1090 = vmatprep.subr.mxu0 %v445
  %1091 = vmatpush1.msra.mxu0 %v444
  %1092 = vmatprep.subr.mxu0 %v441
  %1093 = vmatpush1.msra.mxu0 %v440
  %1094 = vmatprep.subr.mxu0 %v437
  %1095 = vmatpush1.msra.mxu0 %v436
  %1096 = vmatprep.subr.mxu0 %v433
  %1097 = vmatpush1.msra.mxu0 %v432
  %1098 = vmatprep.subr.mxu0 %v429
  %1099 = vmatpush1.msra.mxu0 %v428
  %1100 = vmatprep.subr.mxu0 %v425
  %1101 = vmatpush1.msra.mxu0 %v424
  %1102 = vmatprep.subr.mxu0 %v421
  %1103 = vmatpush1.msra.mxu0 %v420
  %1104 = vmatprep.subr.mxu0 %v417
  %1105 = vmatpush1.msra.mxu0 %v416
  %1106 = vmatprep.subr.mxu0 %v413
  %1107 = vmatpush1.msra.mxu0 %v412
  %1108 = vmatprep.subr.mxu0 %v409
  %1109 = vmatpush1.msra.mxu0 %v408
  %1110 = vmatprep.subr.mxu0 %v405
  %1111 = vmatpush1.msra.mxu0 %v404
  %1112 = vmatprep.subr.mxu0 0.0
  %1113 = vmatpush2.msra.mxu0 0.0
  %1114 = vmatprep.subr.mxu0 0.0
  %1115 = vmatpush2.msra.mxu0 0.0
  %1116 = vmatprep.subr.mxu0 0.0
  %1117 = vmatpush2.msra.mxu0 0.0
  %1118 = vmatprep.subr.mxu0 0.0
  %1119 = vmatpush2.msra.mxu0 0.0
  %1120 = vmatprep.subr.mxu0 0.0
  %1121 = vmatpush2.msra.mxu0 0.0
  %1122 = vmatprep.subr.mxu0 0.0
  %1123 = vmatpush2.msra.mxu0 0.0
  %1124 = vmatprep.subr.mxu0 0.0
  %1125 = vmatpush2.msra.mxu0 0.0
  %1126 = vmatprep.subr.mxu0 0.0
  %1127 = vmatpush2.msra.mxu0 0.0
  %1128 = vmatprep.subr.mxu0 0.0
  %1129 = vmatpush2.msra.mxu0 0.0
  %1130 = vmatprep.subr.mxu0 0.0
  %1131 = vmatpush2.msra.mxu0 0.0
  %1132 = vmatprep.subr.mxu0 0.0
  %1133 = vmatpush2.msra.mxu0 0.0
  %1134 = vmatprep.subr.mxu0 0.0
  %1135 = vmatpush2.msra.mxu0 0.0
  %1136 = vmatprep.subr.mxu0 0.0
  %1137 = vmatpush2.msra.mxu0 0.0
  %1138 = vmatprep.subr.mxu0 0.0
  %1139 = vmatpush2.msra.mxu0 0.0
  %1140 = vmatprep.subr.mxu0 0.0
  %1141 = vmatpush2.msra.mxu0 0.0
  %1142 = vmatprep.subr.mxu0 0.0
  %1143 = vmatpush2.msra.mxu0 0.0
  %1144 = vmatprep.mubr.f32.mxu0 0.0
  %1145 = vmatmul.mubr.f32.gmra.mxu0 %v999
  %v1146 = vpop.f32.mrf.mxu0
  %v1147 = vadd.f32 0.0, %v1146
  %v1148 = vpop.f32.mrf.mxu0
  %v1149 = vadd.f32 0.0, %v1148
  %1150 = vdwg.mxu0
  %v1151 = vadd.f32 %v1005, %v1076
  %v1152 = vadd.f32 %v1006, %v1078
  %v1153 = vadd.f32 %v1007, %v1147
  %v1154 = vadd.f32 %v1008, %v1149
  %v1155 = vxor.u32 %v1151, 2147483648
  %v1156 = vmul.f32 %v1155, 1.442695
  %v1157 = vpow.pop %v1156
  %v1158 = vadd.f32 %v1157, 1.0
  %v1159 = vrcp.pop %v1158
  %v1160 = vmul.f32 1.0, %v1159
  %v1161 = vxor.u32 %v1152, 2147483648
  %v1162 = vmul.f32 %v1161, 1.442695
  %v1163 = vpow.pop %v1162
  %v1164 = vadd.f32 %v1163, 1.0
  %v1165 = vrcp.pop %v1164
  %v1166 = vmul.f32 1.0, %v1165
  %v1167 = vtanh.pop %v1153
  %v1168 = vxor.u32 %v1154, 2147483648
  %v1169 = vmul.f32 %v1168, 1.442695
  %v1170 = vpow.pop %v1169
  %v1171 = vadd.f32 %v1170, 1.0
  %v1172 = vrcp.pop %v1171
  %v1173 = vmul.f32 1.0, %v1172
  %v1174 = vmul.f32 %v1166, %v997
  %v1175 = vmul.f32 %v1160, %v1167
  %v1176 = vadd.f32 %v1174, %v1175
  %v1177 = vtanh.pop %v1176
  %v1178 = vmul.f32 %v1173, %v1177
  %s1179 = scalar_lea.vmem [#allocation3], 24
  %1180 = vst [vmem:[%s1179] sm:$0xff] %v1178
  %s1181 = smul.u32 4, 4
  %s1182 = smul.addr %s1181, 8
  %s1183 = scalar_lea.vmem [#allocation2], %s1182
  %v1184 = vld [vmem:[%s1183] sm:$0xff]
  %v1185 = vld [vmem:[%s1183 + $0x8] sm:$0xff]
  %v1186 = vld [vmem:[%s1183 + $0x10] sm:$0xff]
  %v1187 = vld [vmem:[%s1183 + $0x18] sm:$0xff]
  %1188 = vmatprep.subr.mxu0 %v463
  %1189 = vmatpush1.msra.mxu0 %v462
  %1190 = vmatprep.subr.mxu0 %v459
  %1191 = vmatpush1.msra.mxu0 %v458
  %1192 = vmatprep.subr.mxu0 %v455
  %1193 = vmatpush1.msra.mxu0 %v454
  %1194 = vmatprep.subr.mxu0 %v451
  %1195 = vmatpush1.msra.mxu0 %v450
  %1196 = vmatprep.subr.mxu0 %v447
  %1197 = vmatpush1.msra.mxu0 %v446
  %1198 = vmatprep.subr.mxu0 %v443
  %1199 = vmatpush1.msra.mxu0 %v442
  %1200 = vmatprep.subr.mxu0 %v439
  %1201 = vmatpush1.msra.mxu0 %v438
  %1202 = vmatprep.subr.mxu0 %v435
  %1203 = vmatpush1.msra.mxu0 %v434
  %1204 = vmatprep.subr.mxu0 %v431
  %1205 = vmatpush1.msra.mxu0 %v430
  %1206 = vmatprep.subr.mxu0 %v427
  %1207 = vmatpush1.msra.mxu0 %v426
  %1208 = vmatprep.subr.mxu0 %v423
  %1209 = vmatpush1.msra.mxu0 %v422
  %1210 = vmatprep.subr.mxu0 %v419
  %1211 = vmatpush1.msra.mxu0 %v418
  %1212 = vmatprep.subr.mxu0 %v415
  %1213 = vmatpush1.msra.mxu0 %v414
  %1214 = vmatprep.subr.mxu0 %v411
  %1215 = vmatpush1.msra.mxu0 %v410
  %1216 = vmatprep.subr.mxu0 %v407
  %1217 = vmatpush1.msra.mxu0 %v406
  %1218 = vmatprep.subr.mxu0 %v403
  %1219 = vmatpush1.msra.mxu0 %v402
  %1220 = vmatprep.subr.mxu0 0.0
  %1221 = vmatpush2.msra.mxu0 0.0
  %1222 = vmatprep.subr.mxu0 0.0
  %1223 = vmatpush2.msra.mxu0 0.0
  %1224 = vmatprep.subr.mxu0 0.0
  %1225 = vmatpush2.msra.mxu0 0.0
  %1226 = vmatprep.subr.mxu0 0.0
  %1227 = vmatpush2.msra.mxu0 0.0
  %1228 = vmatprep.subr.mxu0 0.0
  %1229 = vmatpush2.msra.mxu0 0.0
  %1230 = vmatprep.subr.mxu0 0.0
  %1231 = vmatpush2.msra.mxu0 0.0
  %1232 = vmatprep.subr.mxu0 0.0
  %1233 = vmatpush2.msra.mxu0 0.0
  %1234 = vmatprep.subr.mxu0 0.0
  %1235 = vmatpush2.msra.mxu0 0.0
  %1236 = vmatprep.subr.mxu0 0.0
  %1237 = vmatpush2.msra.mxu0 0.0
  %1238 = vmatprep.subr.mxu0 0.0
  %1239 = vmatpush2.msra.mxu0 0.0
  %1240 = vmatprep.subr.mxu0 0.0
  %1241 = vmatpush2.msra.mxu0 0.0
  %1242 = vmatprep.subr.mxu0 0.0
  %1243 = vmatpush2.msra.mxu0 0.0
  %1244 = vmatprep.subr.mxu0 0.0
  %1245 = vmatpush2.msra.mxu0 0.0
  %1246 = vmatprep.subr.mxu0 0.0
  %1247 = vmatpush2.msra.mxu0 0.0
  %1248 = vmatprep.subr.mxu0 0.0
  %1249 = vmatpush2.msra.mxu0 0.0
  %1250 = vmatprep.subr.mxu0 0.0
  %1251 = vmatpush2.msra.mxu0 0.0
  %1252 = vmatprep.mubr.f32.mxu0 0.0
  %1253 = vmatmul.mubr.f32.gmra.mxu0 %v1178
  %v1254 = vpop.f32.mrf.mxu0
  %v1255 = vadd.f32 0.0, %v1254
  %v1256 = vpop.f32.mrf.mxu0
  %v1257 = vadd.f32 0.0, %v1256
  %1258 = vdwg.mxu0
  %1259 = vmatprep.subr.mxu0 %v465
  %1260 = vmatpush1.msra.mxu0 %v464
  %1261 = vmatprep.subr.mxu0 %v461
  %1262 = vmatpush1.msra.mxu0 %v460
  %1263 = vmatprep.subr.mxu0 %v457
  %1264 = vmatpush1.msra.mxu0 %v456
  %1265 = vmatprep.subr.mxu0 %v453
  %1266 = vmatpush1.msra.mxu0 %v452
  %1267 = vmatprep.subr.mxu0 %v449
  %1268 = vmatpush1.msra.mxu0 %v448
  %1269 = vmatprep.subr.mxu0 %v445
  %1270 = vmatpush1.msra.mxu0 %v444
  %1271 = vmatprep.subr.mxu0 %v441
  %1272 = vmatpush1.msra.mxu0 %v440
  %1273 = vmatprep.subr.mxu0 %v437
  %1274 = vmatpush1.msra.mxu0 %v436
  %1275 = vmatprep.subr.mxu0 %v433
  %1276 = vmatpush1.msra.mxu0 %v432
  %1277 = vmatprep.subr.mxu0 %v429
  %1278 = vmatpush1.msra.mxu0 %v428
  %1279 = vmatprep.subr.mxu0 %v425
  %1280 = vmatpush1.msra.mxu0 %v424
  %1281 = vmatprep.subr.mxu0 %v421
  %1282 = vmatpush1.msra.mxu0 %v420
  %1283 = vmatprep.subr.mxu0 %v417
  %1284 = vmatpush1.msra.mxu0 %v416
  %1285 = vmatprep.subr.mxu0 %v413
  %1286 = vmatpush1.msra.mxu0 %v412
  %1287 = vmatprep.subr.mxu0 %v409
  %1288 = vmatpush1.msra.mxu0 %v408
  %1289 = vmatprep.subr.mxu0 %v405
  %1290 = vmatpush1.msra.mxu0 %v404
  %1291 = vmatprep.subr.mxu0 0.0
  %1292 = vmatpush2.msra.mxu0 0.0
  %1293 = vmatprep.subr.mxu0 0.0
  %1294 = vmatpush2.msra.mxu0 0.0
  %1295 = vmatprep.subr.mxu0 0.0
  %1296 = vmatpush2.msra.mxu0 0.0
  %1297 = vmatprep.subr.mxu0 0.0
  %1298 = vmatpush2.msra.mxu0 0.0
  %1299 = vmatprep.subr.mxu0 0.0
  %1300 = vmatpush2.msra.mxu0 0.0
  %1301 = vmatprep.subr.mxu0 0.0
  %1302 = vmatpush2.msra.mxu0 0.0
  %1303 = vmatprep.subr.mxu0 0.0
  %1304 = vmatpush2.msra.mxu0 0.0
  %1305 = vmatprep.subr.mxu0 0.0
  %1306 = vmatpush2.msra.mxu0 0.0
  %1307 = vmatprep.subr.mxu0 0.0
  %1308 = vmatpush2.msra.mxu0 0.0
  %1309 = vmatprep.subr.mxu0 0.0
  %1310 = vmatpush2.msra.mxu0 0.0
  %1311 = vmatprep.subr.mxu0 0.0
  %1312 = vmatpush2.msra.mxu0 0.0
  %1313 = vmatprep.subr.mxu0 0.0
  %1314 = vmatpush2.msra.mxu0 0.0
  %1315 = vmatprep.subr.mxu0 0.0
  %1316 = vmatpush2.msra.mxu0 0.0
  %1317 = vmatprep.subr.mxu0 0.0
  %1318 = vmatpush2.msra.mxu0 0.0
  %1319 = vmatprep.subr.mxu0 0.0
  %1320 = vmatpush2.msra.mxu0 0.0
  %1321 = vmatprep.subr.mxu0 0.0
  %1322 = vmatpush2.msra.mxu0 0.0
  %1323 = vmatprep.mubr.f32.mxu0 0.0
  %1324 = vmatmul.mubr.f32.gmra.mxu0 %v1178
  %v1325 = vpop.f32.mrf.mxu0
  %v1326 = vadd.f32 0.0, %v1325
  %v1327 = vpop.f32.mrf.mxu0
  %v1328 = vadd.f32 0.0, %v1327
  %1329 = vdwg.mxu0
  %v1330 = vadd.f32 %v1184, %v1255
  %v1331 = vadd.f32 %v1185, %v1257
  %v1332 = vadd.f32 %v1186, %v1326
  %v1333 = vadd.f32 %v1187, %v1328
  %v1334 = vxor.u32 %v1330, 2147483648
  %v1335 = vmul.f32 %v1334, 1.442695
  %v1336 = vpow.pop %v1335
  %v1337 = vadd.f32 %v1336, 1.0
  %v1338 = vrcp.pop %v1337
  %v1339 = vmul.f32 1.0, %v1338
  %v1340 = vxor.u32 %v1331, 2147483648
  %v1341 = vmul.f32 %v1340, 1.442695
  %v1342 = vpow.pop %v1341
  %v1343 = vadd.f32 %v1342, 1.0
  %v1344 = vrcp.pop %v1343
  %v1345 = vmul.f32 1.0, %v1344
  %v1346 = vtanh.pop %v1332
  %v1347 = vxor.u32 %v1333, 2147483648
  %v1348 = vmul.f32 %v1347, 1.442695
  %v1349 = vpow.pop %v1348
  %v1350 = vadd.f32 %v1349, 1.0
  %v1351 = vrcp.pop %v1350
  %v1352 = vmul.f32 1.0, %v1351
  %v1353 = vmul.f32 %v1345, %v1176
  %v1354 = vmul.f32 %v1339, %v1346
  %v1355 = vadd.f32 %v1353, %v1354
  %v1356 = vtanh.pop %v1355
  %v1357 = vmul.f32 %v1352, %v1356
  %s1358 = scalar_lea.vmem [#allocation3], 32
  %1359 = vst [vmem:[%s1358] sm:$0xff] %v1357
  %s1360 = smul.u32 5, 4
  %s1361 = smul.addr %s1360, 8
  %s1362 = scalar_lea.vmem [#allocation2], %s1361
  %v1363 = vld [vmem:[%s1362] sm:$0xff]
  %v1364 = vld [vmem:[%s1362 + $0x8] sm:$0xff]
  %v1365 = vld [vmem:[%s1362 + $0x10] sm:$0xff]
  %v1366 = vld [vmem:[%s1362 + $0x18] sm:$0xff]
  %1367 = vmatprep.subr.mxu0 %v463
  %1368 = vmatpush1.msra.mxu0 %v462
  %1369 = vmatprep.subr.mxu0 %v459
  %1370 = vmatpush1.msra.mxu0 %v458
  %1371 = vmatprep.subr.mxu0 %v455
  %1372 = vmatpush1.msra.mxu0 %v454
  %1373 = vmatprep.subr.mxu0 %v451
  %1374 = vmatpush1.msra.mxu0 %v450
  %1375 = vmatprep.subr.mxu0 %v447
  %1376 = vmatpush1.msra.mxu0 %v446
  %1377 = vmatprep.subr.mxu0 %v443
  %1378 = vmatpush1.msra.mxu0 %v442
  %1379 = vmatprep.subr.mxu0 %v439
  %1380 = vmatpush1.msra.mxu0 %v438
  %1381 = vmatprep.subr.mxu0 %v435
  %1382 = vmatpush1.msra.mxu0 %v434
  %1383 = vmatprep.subr.mxu0 %v431
  %1384 = vmatpush1.msra.mxu0 %v430
  %1385 = vmatprep.subr.mxu0 %v427
  %1386 = vmatpush1.msra.mxu0 %v426
  %1387 = vmatprep.subr.mxu0 %v423
  %1388 = vmatpush1.msra.mxu0 %v422
  %1389 = vmatprep.subr.mxu0 %v419
  %1390 = vmatpush1.msra.mxu0 %v418
  %1391 = vmatprep.subr.mxu0 %v415
  %1392 = vmatpush1.msra.mxu0 %v414
  %1393 = vmatprep.subr.mxu0 %v411
  %1394 = vmatpush1.msra.mxu0 %v410
  %1395 = vmatprep.subr.mxu0 %v407
  %1396 = vmatpush1.msra.mxu0 %v406
  %1397 = vmatprep.subr.mxu0 %v403
  %1398 = vmatpush1.msra.mxu0 %v402
  %1399 = vmatprep.subr.mxu0 0.0
  %1400 = vmatpush2.msra.mxu0 0.0
  %1401 = vmatprep.subr.mxu0 0.0
  %1402 = vmatpush2.msra.mxu0 0.0
  %1403 = vmatprep.subr.mxu0 0.0
  %1404 = vmatpush2.msra.mxu0 0.0
  %1405 = vmatprep.subr.mxu0 0.0
  %1406 = vmatpush2.msra.mxu0 0.0
  %1407 = vmatprep.subr.mxu0 0.0
  %1408 = vmatpush2.msra.mxu0 0.0
  %1409 = vmatprep.subr.mxu0 0.0
  %1410 = vmatpush2.msra.mxu0 0.0
  %1411 = vmatprep.subr.mxu0 0.0
  %1412 = vmatpush2.msra.mxu0 0.0
  %1413 = vmatprep.subr.mxu0 0.0
  %1414 = vmatpush2.msra.mxu0 0.0
  %1415 = vmatprep.subr.mxu0 0.0
  %1416 = vmatpush2.msra.mxu0 0.0
  %1417 = vmatprep.subr.mxu0 0.0
  %1418 = vmatpush2.msra.mxu0 0.0
  %1419 = vmatprep.subr.mxu0 0.0
  %1420 = vmatpush2.msra.mxu0 0.0
  %1421 = vmatprep.subr.mxu0 0.0
  %1422 = vmatpush2.msra.mxu0 0.0
  %1423 = vmatprep.subr.mxu0 0.0
  %1424 = vmatpush2.msra.mxu0 0.0
  %1425 = vmatprep.subr.mxu0 0.0
  %1426 = vmatpush2.msra.mxu0 0.0
  %1427 = vmatprep.subr.mxu0 0.0
  %1428 = vmatpush2.msra.mxu0 0.0
  %1429 = vmatprep.subr.mxu0 0.0
  %1430 = vmatpush2.msra.mxu0 0.0
  %1431 = vmatprep.mubr.f32.mxu0 0.0
  %1432 = vmatmul.mubr.f32.gmra.mxu0 %v1357
  %v1433 = vpop.f32.mrf.mxu0
  %v1434 = vadd.f32 0.0, %v1433
  %v1435 = vpop.f32.mrf.mxu0
  %v1436 = vadd.f32 0.0, %v1435
  %1437 = vdwg.mxu0
  %1438 = vmatprep.subr.mxu0 %v465
  %1439 = vmatpush1.msra.mxu0 %v464
  %1440 = vmatprep.subr.mxu0 %v461
  %1441 = vmatpush1.msra.mxu0 %v460
  %1442 = vmatprep.subr.mxu0 %v457
  %1443 = vmatpush1.msra.mxu0 %v456
  %1444 = vmatprep.subr.mxu0 %v453
  %1445 = vmatpush1.msra.mxu0 %v452
  %1446 = vmatprep.subr.mxu0 %v449
  %1447 = vmatpush1.msra.mxu0 %v448
  %1448 = vmatprep.subr.mxu0 %v445
  %1449 = vmatpush1.msra.mxu0 %v444
  %1450 = vmatprep.subr.mxu0 %v441
  %1451 = vmatpush1.msra.mxu0 %v440
  %1452 = vmatprep.subr.mxu0 %v437
  %1453 = vmatpush1.msra.mxu0 %v436
  %1454 = vmatprep.subr.mxu0 %v433
  %1455 = vmatpush1.msra.mxu0 %v432
  %1456 = vmatprep.subr.mxu0 %v429
  %1457 = vmatpush1.msra.mxu0 %v428
  %1458 = vmatprep.subr.mxu0 %v425
  %1459 = vmatpush1.msra.mxu0 %v424
  %1460 = vmatprep.subr.mxu0 %v421
  %1461 = vmatpush1.msra.mxu0 %v420
  %1462 = vmatprep.subr.mxu0 %v417
  %1463 = vmatpush1.msra.mxu0 %v416
  %1464 = vmatprep.subr.mxu0 %v413
  %1465 = vmatpush1.msra.mxu0 %v412
  %1466 = vmatprep.subr.mxu0 %v409
  %1467 = vmatpush1.msra.mxu0 %v408
  %1468 = vmatprep.subr.mxu0 %v405
  %1469 = vmatpush1.msra.mxu0 %v404
  %1470 = vmatprep.subr.mxu0 0.0
  %1471 = vmatpush2.msra.mxu0 0.0
  %1472 = vmatprep.subr.mxu0 0.0
  %1473 = vmatpush2.msra.mxu0 0.0
  %1474 = vmatprep.subr.mxu0 0.0
  %1475 = vmatpush2.msra.mxu0 0.0
  %1476 = vmatprep.subr.mxu0 0.0
  %1477 = vmatpush2.msra.mxu0 0.0
  %1478 = vmatprep.subr.mxu0 0.0
  %1479 = vmatpush2.msra.mxu0 0.0
  %1480 = vmatprep.subr.mxu0 0.0
  %1481 = vmatpush2.msra.mxu0 0.0
  %1482 = vmatprep.subr.mxu0 0.0
  %1483 = vmatpush2.msra.mxu0 0.0
  %1484 = vmatprep.subr.mxu0 0.0
  %1485 = vmatpush2.msra.mxu0 0.0
  %1486 = vmatprep.subr.mxu0 0.0
  %1487 = vmatpush2.msra.mxu0 0.0
  %1488 = vmatprep.subr.mxu0 0.0
  %1489 = vmatpush2.msra.mxu0 0.0
  %1490 = vmatprep.subr.mxu0 0.0
  %1491 = vmatpush2.msra.mxu0 0.0
  %1492 = vmatprep.subr.mxu0 0.0
  %1493 = vmatpush2.msra.mxu0 0.0
  %1494 = vmatprep.subr.mxu0 0.0
  %1495 = vmatpush2.msra.mxu0 0.0
  %1496 = vmatprep.subr.mxu0 0.0
  %1497 = vmatpush2.msra.mxu0 0.0
  %1498 = vmatprep.subr.mxu0 0.0
  %1499 = vmatpush2.msra.mxu0 0.0
  %1500 = vmatprep.subr.mxu0 0.0
  %1501 = vmatpush2.msra.mxu0 0.0
  %1502 = vmatprep.mubr.f32.mxu0 0.0
  %1503 = vmatmul.mubr.f32.gmra.mxu0 %v1357
  %v1504 = vpop.f32.mrf.mxu0
  %v1505 = vadd.f32 0.0, %v1504
  %v1506 = vpop.f32.mrf.mxu0
  %v1507 = vadd.f32 0.0, %v1506
  %1508 = vdwg.mxu0
  %v1509 = vadd.f32 %v1363, %v1434
  %v1510 = vadd.f32 %v1364, %v1436
  %v1511 = vadd.f32 %v1365, %v1505
  %v1512 = vadd.f32 %v1366, %v1507
  %v1513 = vxor.u32 %v1509, 2147483648
  %v1514 = vmul.f32 %v1513, 1.442695
  %v1515 = vpow.pop %v1514
  %v1516 = vadd.f32 %v1515, 1.0
  %v1517 = vrcp.pop %v1516
  %v1518 = vmul.f32 1.0, %v1517
  %v1519 = vxor.u32 %v1510, 2147483648
  %v1520 = vmul.f32 %v1519, 1.442695
  %v1521 = vpow.pop %v1520
  %v1522 = vadd.f32 %v1521, 1.0
  %v1523 = vrcp.pop %v1522
  %v1524 = vmul.f32 1.0, %v1523
  %v1525 = vtanh.pop %v1511
  %v1526 = vxor.u32 %v1512, 2147483648
  %v1527 = vmul.f32 %v1526, 1.442695
  %v1528 = vpow.pop %v1527
  %v1529 = vadd.f32 %v1528, 1.0
  %v1530 = vrcp.pop %v1529
  %v1531 = vmul.f32 1.0, %v1530
  %v1532 = vmul.f32 %v1524, %v1355
  %v1533 = vmul.f32 %v1518, %v1525
  %v1534 = vadd.f32 %v1532, %v1533
  %v1535 = vtanh.pop %v1534
  %v1536 = vmul.f32 %v1531, %v1535
  %s1537 = scalar_lea.vmem [#allocation3], 40
  %1538 = vst [vmem:[%s1537] sm:$0xff] %v1536
  %s1539 = smul.u32 6, 4
  %s1540 = smul.addr %s1539, 8
  %s1541 = scalar_lea.vmem [#allocation2], %s1540
  %v1542 = vld [vmem:[%s1541] sm:$0xff]
  %v1543 = vld [vmem:[%s1541 + $0x8] sm:$0xff]
  %v1544 = vld [vmem:[%s1541 + $0x10] sm:$0xff]
  %v1545 = vld [vmem:[%s1541 + $0x18] sm:$0xff]
  %1546 = vmatprep.subr.mxu0 %v463
  %1547 = vmatpush1.msra.mxu0 %v462
  %1548 = vmatprep.subr.mxu0 %v459
  %1549 = vmatpush1.msra.mxu0 %v458
  %1550 = vmatprep.subr.mxu0 %v455
  %1551 = vmatpush1.msra.mxu0 %v454
  %1552 = vmatprep.subr.mxu0 %v451
  %1553 = vmatpush1.msra.mxu0 %v450
  %1554 = vmatprep.subr.mxu0 %v447
  %1555 = vmatpush1.msra.mxu0 %v446
  %1556 = vmatprep.subr.mxu0 %v443
  %1557 = vmatpush1.msra.mxu0 %v442
  %1558 = vmatprep.subr.mxu0 %v439
  %1559 = vmatpush1.msra.mxu0 %v438
  %1560 = vmatprep.subr.mxu0 %v435
  %1561 = vmatpush1.msra.mxu0 %v434
  %1562 = vmatprep.subr.mxu0 %v431
  %1563 = vmatpush1.msra.mxu0 %v430
  %1564 = vmatprep.subr.mxu0 %v427
  %1565 = vmatpush1.msra.mxu0 %v426
  %1566 = vmatprep.subr.mxu0 %v423
  %1567 = vmatpush1.msra.mxu0 %v422
  %1568 = vmatprep.subr.mxu0 %v419
  %1569 = vmatpush1.msra.mxu0 %v418
  %1570 = vmatprep.subr.mxu0 %v415
  %1571 = vmatpush1.msra.mxu0 %v414
  %1572 = vmatprep.subr.mxu0 %v411
  %1573 = vmatpush1.msra.mxu0 %v410
  %1574 = vmatprep.subr.mxu0 %v407
  %1575 = vmatpush1.msra.mxu0 %v406
  %1576 = vmatprep.subr.mxu0 %v403
  %1577 = vmatpush1.msra.mxu0 %v402
  %1578 = vmatprep.subr.mxu0 0.0
  %1579 = vmatpush2.msra.mxu0 0.0
  %1580 = vmatprep.subr.mxu0 0.0
  %1581 = vmatpush2.msra.mxu0 0.0
  %1582 = vmatprep.subr.mxu0 0.0
  %1583 = vmatpush2.msra.mxu0 0.0
  %1584 = vmatprep.subr.mxu0 0.0
  %1585 = vmatpush2.msra.mxu0 0.0
  %1586 = vmatprep.subr.mxu0 0.0
  %1587 = vmatpush2.msra.mxu0 0.0
  %1588 = vmatprep.subr.mxu0 0.0
  %1589 = vmatpush2.msra.mxu0 0.0
  %1590 = vmatprep.subr.mxu0 0.0
  %1591 = vmatpush2.msra.mxu0 0.0
  %1592 = vmatprep.subr.mxu0 0.0
  %1593 = vmatpush2.msra.mxu0 0.0
  %1594 = vmatprep.subr.mxu0 0.0
  %1595 = vmatpush2.msra.mxu0 0.0
  %1596 = vmatprep.subr.mxu0 0.0
  %1597 = vmatpush2.msra.mxu0 0.0
  %1598 = vmatprep.subr.mxu0 0.0
  %1599 = vmatpush2.msra.mxu0 0.0
  %1600 = vmatprep.subr.mxu0 0.0
  %1601 = vmatpush2.msra.mxu0 0.0
  %1602 = vmatprep.subr.mxu0 0.0
  %1603 = vmatpush2.msra.mxu0 0.0
  %1604 = vmatprep.subr.mxu0 0.0
  %1605 = vmatpush2.msra.mxu0 0.0
  %1606 = vmatprep.subr.mxu0 0.0
  %1607 = vmatpush2.msra.mxu0 0.0
  %1608 = vmatprep.subr.mxu0 0.0
  %1609 = vmatpush2.msra.mxu0 0.0
  %1610 = vmatprep.mubr.f32.mxu0 0.0
  %1611 = vmatmul.mubr.f32.gmra.mxu0 %v1536
  %v1612 = vpop.f32.mrf.mxu0
  %v1613 = vadd.f32 0.0, %v1612
  %v1614 = vpop.f32.mrf.mxu0
  %v1615 = vadd.f32 0.0, %v1614
  %1616 = vdwg.mxu0
  %1617 = vmatprep.subr.mxu0 %v465
  %1618 = vmatpush1.msra.mxu0 %v464
  %1619 = vmatprep.subr.mxu0 %v461
  %1620 = vmatpush1.msra.mxu0 %v460
  %1621 = vmatprep.subr.mxu0 %v457
  %1622 = vmatpush1.msra.mxu0 %v456
  %1623 = vmatprep.subr.mxu0 %v453
  %1624 = vmatpush1.msra.mxu0 %v452
  %1625 = vmatprep.subr.mxu0 %v449
  %1626 = vmatpush1.msra.mxu0 %v448
  %1627 = vmatprep.subr.mxu0 %v445
  %1628 = vmatpush1.msra.mxu0 %v444
  %1629 = vmatprep.subr.mxu0 %v441
  %1630 = vmatpush1.msra.mxu0 %v440
  %1631 = vmatprep.subr.mxu0 %v437
  %1632 = vmatpush1.msra.mxu0 %v436
  %1633 = vmatprep.subr.mxu0 %v433
  %1634 = vmatpush1.msra.mxu0 %v432
  %1635 = vmatprep.subr.mxu0 %v429
  %1636 = vmatpush1.msra.mxu0 %v428
  %1637 = vmatprep.subr.mxu0 %v425
  %1638 = vmatpush1.msra.mxu0 %v424
  %1639 = vmatprep.subr.mxu0 %v421
  %1640 = vmatpush1.msra.mxu0 %v420
  %1641 = vmatprep.subr.mxu0 %v417
  %1642 = vmatpush1.msra.mxu0 %v416
  %1643 = vmatprep.subr.mxu0 %v413
  %1644 = vmatpush1.msra.mxu0 %v412
  %1645 = vmatprep.subr.mxu0 %v409
  %1646 = vmatpush1.msra.mxu0 %v408
  %1647 = vmatprep.subr.mxu0 %v405
  %1648 = vmatpush1.msra.mxu0 %v404
  %1649 = vmatprep.subr.mxu0 0.0
  %1650 = vmatpush2.msra.mxu0 0.0
  %1651 = vmatprep.subr.mxu0 0.0
  %1652 = vmatpush2.msra.mxu0 0.0
  %1653 = vmatprep.subr.mxu0 0.0
  %1654 = vmatpush2.msra.mxu0 0.0
  %1655 = vmatprep.subr.mxu0 0.0
  %1656 = vmatpush2.msra.mxu0 0.0
  %1657 = vmatprep.subr.mxu0 0.0
  %1658 = vmatpush2.msra.mxu0 0.0
  %1659 = vmatprep.subr.mxu0 0.0
  %1660 = vmatpush2.msra.mxu0 0.0
  %1661 = vmatprep.subr.mxu0 0.0
  %1662 = vmatpush2.msra.mxu0 0.0
  %1663 = vmatprep.subr.mxu0 0.0
  %1664 = vmatpush2.msra.mxu0 0.0
  %1665 = vmatprep.subr.mxu0 0.0
  %1666 = vmatpush2.msra.mxu0 0.0
  %1667 = vmatprep.subr.mxu0 0.0
  %1668 = vmatpush2.msra.mxu0 0.0
  %1669 = vmatprep.subr.mxu0 0.0
  %1670 = vmatpush2.msra.mxu0 0.0
  %1671 = vmatprep.subr.mxu0 0.0
  %1672 = vmatpush2.msra.mxu0 0.0
  %1673 = vmatprep.subr.mxu0 0.0
  %1674 = vmatpush2.msra.mxu0 0.0
  %1675 = vmatprep.subr.mxu0 0.0
  %1676 = vmatpush2.msra.mxu0 0.0
  %1677 = vmatprep.subr.mxu0 0.0
  %1678 = vmatpush2.msra.mxu0 0.0
  %1679 = vmatprep.subr.mxu0 0.0
  %1680 = vmatpush2.msra.mxu0 0.0
  %1681 = vmatprep.mubr.f32.mxu0 0.0
  %1682 = vmatmul.mubr.f32.gmra.mxu0 %v1536
  %v1683 = vpop.f32.mrf.mxu0
  %v1684 = vadd.f32 0.0, %v1683
  %v1685 = vpop.f32.mrf.mxu0
  %v1686 = vadd.f32 0.0, %v1685
  %1687 = vdwg.mxu0
  %v1688 = vadd.f32 %v1542, %v1613
  %v1689 = vadd.f32 %v1543, %v1615
  %v1690 = vadd.f32 %v1544, %v1684
  %v1691 = vadd.f32 %v1545, %v1686
  %v1692 = vxor.u32 %v1688, 2147483648
  %v1693 = vmul.f32 %v1692, 1.442695
  %v1694 = vpow.pop %v1693
  %v1695 = vadd.f32 %v1694, 1.0
  %v1696 = vrcp.pop %v1695
  %v1697 = vmul.f32 1.0, %v1696
  %v1698 = vxor.u32 %v1689, 2147483648
  %v1699 = vmul.f32 %v1698, 1.442695
  %v1700 = vpow.pop %v1699
  %v1701 = vadd.f32 %v1700, 1.0
  %v1702 = vrcp.pop %v1701
  %v1703 = vmul.f32 1.0, %v1702
  %v1704 = vtanh.pop %v1690
  %v1705 = vxor.u32 %v1691, 2147483648
  %v1706 = vmul.f32 %v1705, 1.442695
  %v1707 = vpow.pop %v1706
  %v1708 = vadd.f32 %v1707, 1.0
  %v1709 = vrcp.pop %v1708
  %v1710 = vmul.f32 1.0, %v1709
  %v1711 = vmul.f32 %v1703, %v1534
  %v1712 = vmul.f32 %v1697, %v1704
  %v1713 = vadd.f32 %v1711, %v1712
  %v1714 = vtanh.pop %v1713
  %v1715 = vmul.f32 %v1710, %v1714
  %s1716 = scalar_lea.vmem [#allocation3], 48
  %1717 = vst [vmem:[%s1716] sm:$0xff] %v1715
  %s1718 = smul.u32 7, 4
  %s1719 = smul.addr %s1718, 8
  %s1720 = scalar_lea.vmem [#allocation2], %s1719
  %v1721 = vld [vmem:[%s1720] sm:$0xff]
  %v1722 = vld [vmem:[%s1720 + $0x8] sm:$0xff]
  %v1723 = vld [vmem:[%s1720 + $0x10] sm:$0xff]
  %v1724 = vld [vmem:[%s1720 + $0x18] sm:$0xff]
  %1725 = vmatprep.subr.mxu0 %v463
  %1726 = vmatpush1.msra.mxu0 %v462
  %1727 = vmatprep.subr.mxu0 %v459
  %1728 = vmatpush1.msra.mxu0 %v458
  %1729 = vmatprep.subr.mxu0 %v455
  %1730 = vmatpush1.msra.mxu0 %v454
  %1731 = vmatprep.subr.mxu0 %v451
  %1732 = vmatpush1.msra.mxu0 %v450
  %1733 = vmatprep.subr.mxu0 %v447
  %1734 = vmatpush1.msra.mxu0 %v446
  %1735 = vmatprep.subr.mxu0 %v443
  %1736 = vmatpush1.msra.mxu0 %v442
  %1737 = vmatprep.subr.mxu0 %v439
  %1738 = vmatpush1.msra.mxu0 %v438
  %1739 = vmatprep.subr.mxu0 %v435
  %1740 = vmatpush1.msra.mxu0 %v434
  %1741 = vmatprep.subr.mxu0 %v431
  %1742 = vmatpush1.msra.mxu0 %v430
  %1743 = vmatprep.subr.mxu0 %v427
  %1744 = vmatpush1.msra.mxu0 %v426
  %1745 = vmatprep.subr.mxu0 %v423
  %1746 = vmatpush1.msra.mxu0 %v422
  %1747 = vmatprep.subr.mxu0 %v419
  %1748 = vmatpush1.msra.mxu0 %v418
  %1749 = vmatprep.subr.mxu0 %v415
  %1750 = vmatpush1.msra.mxu0 %v414
  %1751 = vmatprep.subr.mxu0 %v411
  %1752 = vmatpush1.msra.mxu0 %v410
  %1753 = vmatprep.subr.mxu0 %v407
  %1754 = vmatpush1.msra.mxu0 %v406
  %1755 = vmatprep.subr.mxu0 %v403
  %1756 = vmatpush1.msra.mxu0 %v402
  %1757 = vmatprep.subr.mxu0 0.0
  %1758 = vmatpush2.msra.mxu0 0.0
  %1759 = vmatprep.subr.mxu0 0.0
  %1760 = vmatpush2.msra.mxu0 0.0
  %1761 = vmatprep.subr.mxu0 0.0
  %1762 = vmatpush2.msra.mxu0 0.0
  %1763 = vmatprep.subr.mxu0 0.0
  %1764 = vmatpush2.msra.mxu0 0.0
  %1765 = vmatprep.subr.mxu0 0.0
  %1766 = vmatpush2.msra.mxu0 0.0
  %1767 = vmatprep.subr.mxu0 0.0
  %1768 = vmatpush2.msra.mxu0 0.0
  %1769 = vmatprep.subr.mxu0 0.0
  %1770 = vmatpush2.msra.mxu0 0.0
  %1771 = vmatprep.subr.mxu0 0.0
  %1772 = vmatpush2.msra.mxu0 0.0
  %1773 = vmatprep.subr.mxu0 0.0
  %1774 = vmatpush2.msra.mxu0 0.0
  %1775 = vmatprep.subr.mxu0 0.0
  %1776 = vmatpush2.msra.mxu0 0.0
  %1777 = vmatprep.subr.mxu0 0.0
  %1778 = vmatpush2.msra.mxu0 0.0
  %1779 = vmatprep.subr.mxu0 0.0
  %1780 = vmatpush2.msra.mxu0 0.0
  %1781 = vmatprep.subr.mxu0 0.0
  %1782 = vmatpush2.msra.mxu0 0.0
  %1783 = vmatprep.subr.mxu0 0.0
  %1784 = vmatpush2.msra.mxu0 0.0
  %1785 = vmatprep.subr.mxu0 0.0
  %1786 = vmatpush2.msra.mxu0 0.0
  %1787 = vmatprep.subr.mxu0 0.0
  %1788 = vmatpush2.msra.mxu0 0.0
  %1789 = vmatprep.mubr.f32.mxu0 0.0
  %1790 = vmatmul.mubr.f32.gmra.mxu0 %v1715
  %v1791 = vpop.f32.mrf.mxu0
  %v1792 = vadd.f32 0.0, %v1791
  %v1793 = vpop.f32.mrf.mxu0
  %v1794 = vadd.f32 0.0, %v1793
  %1795 = vdwg.mxu0
  %1796 = vmatprep.subr.mxu0 %v465
  %1797 = vmatpush1.msra.mxu0 %v464
  %1798 = vmatprep.subr.mxu0 %v461
  %1799 = vmatpush1.msra.mxu0 %v460
  %1800 = vmatprep.subr.mxu0 %v457
  %1801 = vmatpush1.msra.mxu0 %v456
  %1802 = vmatprep.subr.mxu0 %v453
  %1803 = vmatpush1.msra.mxu0 %v452
  %1804 = vmatprep.subr.mxu0 %v449
  %1805 = vmatpush1.msra.mxu0 %v448
  %1806 = vmatprep.subr.mxu0 %v445
  %1807 = vmatpush1.msra.mxu0 %v444
  %1808 = vmatprep.subr.mxu0 %v441
  %1809 = vmatpush1.msra.mxu0 %v440
  %1810 = vmatprep.subr.mxu0 %v437
  %1811 = vmatpush1.msra.mxu0 %v436
  %1812 = vmatprep.subr.mxu0 %v433
  %1813 = vmatpush1.msra.mxu0 %v432
  %1814 = vmatprep.subr.mxu0 %v429
  %1815 = vmatpush1.msra.mxu0 %v428
  %1816 = vmatprep.subr.mxu0 %v425
  %1817 = vmatpush1.msra.mxu0 %v424
  %1818 = vmatprep.subr.mxu0 %v421
  %1819 = vmatpush1.msra.mxu0 %v420
  %1820 = vmatprep.subr.mxu0 %v417
  %1821 = vmatpush1.msra.mxu0 %v416
  %1822 = vmatprep.subr.mxu0 %v413
  %1823 = vmatpush1.msra.mxu0 %v412
  %1824 = vmatprep.subr.mxu0 %v409
  %1825 = vmatpush1.msra.mxu0 %v408
  %1826 = vmatprep.subr.mxu0 %v405
  %1827 = vmatpush1.msra.mxu0 %v404
  %1828 = vmatprep.subr.mxu0 0.0
  %1829 = vmatpush2.msra.mxu0 0.0
  %1830 = vmatprep.subr.mxu0 0.0
  %1831 = vmatpush2.msra.mxu0 0.0
  %1832 = vmatprep.subr.mxu0 0.0
  %1833 = vmatpush2.msra.mxu0 0.0
  %1834 = vmatprep.subr.mxu0 0.0
  %1835 = vmatpush2.msra.mxu0 0.0
  %1836 = vmatprep.subr.mxu0 0.0
  %1837 = vmatpush2.msra.mxu0 0.0
  %1838 = vmatprep.subr.mxu0 0.0
  %1839 = vmatpush2.msra.mxu0 0.0
  %1840 = vmatprep.subr.mxu0 0.0
  %1841 = vmatpush2.msra.mxu0 0.0
  %1842 = vmatprep.subr.mxu0 0.0
  %1843 = vmatpush2.msra.mxu0 0.0
  %1844 = vmatprep.subr.mxu0 0.0
  %1845 = vmatpush2.msra.mxu0 0.0
  %1846 = vmatprep.subr.mxu0 0.0
  %1847 = vmatpush2.msra.mxu0 0.0
  %1848 = vmatprep.subr.mxu0 0.0
  %1849 = vmatpush2.msra.mxu0 0.0
  %1850 = vmatprep.subr.mxu0 0.0
  %1851 = vmatpush2.msra.mxu0 0.0
  %1852 = vmatprep.subr.mxu0 0.0
  %1853 = vmatpush2.msra.mxu0 0.0
  %1854 = vmatprep.subr.mxu0 0.0
  %1855 = vmatpush2.msra.mxu0 0.0
  %1856 = vmatprep.subr.mxu0 0.0
  %1857 = vmatpush2.msra.mxu0 0.0
  %1858 = vmatprep.subr.mxu0 0.0
  %1859 = vmatpush2.msra.mxu0 0.0
  %1860 = vmatprep.mubr.f32.mxu0 0.0
  %1861 = vmatmul.mubr.f32.gmra.mxu0 %v1715
  %v1862 = vpop.f32.mrf.mxu0
  %v1863 = vadd.f32 0.0, %v1862
  %v1864 = vpop.f32.mrf.mxu0
  %v1865 = vadd.f32 0.0, %v1864
  %1866 = vdwg.mxu0
  %v1867 = vadd.f32 %v1721, %v1792
  %v1868 = vadd.f32 %v1722, %v1794
  %v1869 = vadd.f32 %v1723, %v1863
  %v1870 = vadd.f32 %v1724, %v1865
  %v1871 = vxor.u32 %v1867, 2147483648
  %v1872 = vmul.f32 %v1871, 1.442695
  %v1873 = vpow.pop %v1872
  %v1874 = vadd.f32 %v1873, 1.0
  %v1875 = vrcp.pop %v1874
  %v1876 = vmul.f32 1.0, %v1875
  %v1877 = vxor.u32 %v1868, 2147483648
  %v1878 = vmul.f32 %v1877, 1.442695
  %v1879 = vpow.pop %v1878
  %v1880 = vadd.f32 %v1879, 1.0
  %v1881 = vrcp.pop %v1880
  %v1882 = vmul.f32 1.0, %v1881
  %v1883 = vtanh.pop %v1869
  %v1884 = vxor.u32 %v1870, 2147483648
  %v1885 = vmul.f32 %v1884, 1.442695
  %v1886 = vpow.pop %v1885
  %v1887 = vadd.f32 %v1886, 1.0
  %v1888 = vrcp.pop %v1887
  %v1889 = vmul.f32 1.0, %v1888
  %v1890 = vmul.f32 %v1882, %v1713
  %v1891 = vmul.f32 %v1876, %v1883
  %v1892 = vadd.f32 %v1890, %v1891
  %v1893 = vtanh.pop %v1892
  %v1894 = vmul.f32 %v1889, %v1893
  %s1895 = scalar_lea.vmem [#allocation3], 56
  %1896 = vst [vmem:[%s1895] sm:$0xff] %v1894
  %v1897 = vld [vmem:[#allocation3] sm:$0xff]
  %v1898 = vld [vmem:[#allocation3 + $0x8] sm:$0xff]
  %v1899 = vld [vmem:[#allocation3 + $0x10] sm:$0xff]
  %v1900 = vld [vmem:[#allocation3 + $0x18] sm:$0xff]
  %v1901 = vld [vmem:[#allocation3 + $0x20] sm:$0xff]
  %v1902 = vld [vmem:[#allocation3 + $0x28] sm:$0xff]
  %v1903 = vld [vmem:[#allocation3 + $0x30] sm:$0xff]
  %v1904 = vld [vmem:[#allocation3 + $0x38] sm:$0xff]
  %v1905 = vld [vmem:[%s4] sm:$0xff]
  %v1906 = vld [vmem:[%s4 + $0x8] sm:$0xff]
  %v1907 = vld [vmem:[%s4 + $0x10] sm:$0xff]
  %v1908 = vld [vmem:[%s4 + $0x18] sm:$0xff]
  %v1909 = vld [vmem:[%s4 + $0x20] sm:$0xff]
  %v1910 = vld [vmem:[%s4 + $0x28] sm:$0xff]
  %v1911 = vld [vmem:[%s4 + $0x30] sm:$0xff]
  %v1912 = vld [vmem:[%s4 + $0x38] sm:$0xff]
  %v1913 = vld [vmem:[%s4 + $0x40] sm:$0xff]
  %v1914 = vld [vmem:[%s4 + $0x48] sm:$0xff]
  %v1915 = vld [vmem:[%s4 + $0x50] sm:$0xff]
  %v1916 = vld [vmem:[%s4 + $0x58] sm:$0xff]
  %v1917 = vld [vmem:[%s4 + $0x60] sm:$0xff]
  %v1918 = vld [vmem:[%s4 + $0x68] sm:$0xff]
  %v1919 = vld [vmem:[%s4 + $0x70] sm:$0xff]
  %v1920 = vld [vmem:[%s4 + $0x78] sm:$0xff]
  %v1921 = vld [vmem:[%s4 + $0x80] sm:$0xff]
  %v1922 = vld [vmem:[%s4 + $0x88] sm:$0xff]
  %v1923 = vld [vmem:[%s4 + $0x90] sm:$0xff]
  %v1924 = vld [vmem:[%s4 + $0x98] sm:$0xff]
  %v1925 = vld [vmem:[%s4 + $0xa0] sm:$0xff]
  %v1926 = vld [vmem:[%s4 + $0xa8] sm:$0xff]
  %v1927 = vld [vmem:[%s4 + $0xb0] sm:$0xff]
  %v1928 = vld [vmem:[%s4 + $0xb8] sm:$0xff]
  %v1929 = vld [vmem:[%s4 + $0xc0] sm:$0xff]
  %v1930 = vld [vmem:[%s4 + $0xc8] sm:$0xff]
  %v1931 = vld [vmem:[%s4 + $0xd0] sm:$0xff]
  %v1932 = vld [vmem:[%s4 + $0xd8] sm:$0xff]
  %v1933 = vld [vmem:[%s4 + $0xe0] sm:$0xff]
  %v1934 = vld [vmem:[%s4 + $0xe8] sm:$0xff]
  %v1935 = vld [vmem:[%s4 + $0xf0] sm:$0xff]
  %v1936 = vld [vmem:[%s4 + $0xf8] sm:$0xff]
  %v1937 = vld [vmem:[%s4 + $0x100] sm:$0xff]
  %v1938 = vld [vmem:[%s4 + $0x108] sm:$0xff]
  %v1939 = vld [vmem:[%s4 + $0x110] sm:$0xff]
  %v1940 = vld [vmem:[%s4 + $0x118] sm:$0xff]
  %v1941 = vld [vmem:[%s4 + $0x120] sm:$0xff]
  %v1942 = vld [vmem:[%s4 + $0x128] sm:$0xff]
  %v1943 = vld [vmem:[%s4 + $0x130] sm:$0xff]
  %v1944 = vld [vmem:[%s4 + $0x138] sm:$0xff]
  %v1945 = vld [vmem:[%s4 + $0x140] sm:$0xff]
  %v1946 = vld [vmem:[%s4 + $0x148] sm:$0xff]
  %v1947 = vld [vmem:[%s4 + $0x150] sm:$0xff]
  %v1948 = vld [vmem:[%s4 + $0x158] sm:$0xff]
  %v1949 = vld [vmem:[%s4 + $0x160] sm:$0xff]
  %v1950 = vld [vmem:[%s4 + $0x168] sm:$0xff]
  %v1951 = vld [vmem:[%s4 + $0x170] sm:$0xff]
  %v1952 = vld [vmem:[%s4 + $0x178] sm:$0xff]
  %v1953 = vld [vmem:[%s4 + $0x180] sm:$0xff]
  %v1954 = vld [vmem:[%s4 + $0x188] sm:$0xff]
  %v1955 = vld [vmem:[%s4 + $0x190] sm:$0xff]
  %v1956 = vld [vmem:[%s4 + $0x198] sm:$0xff]
  %v1957 = vld [vmem:[%s4 + $0x1a0] sm:$0xff]
  %v1958 = vld [vmem:[%s4 + $0x1a8] sm:$0xff]
  %v1959 = vld [vmem:[%s4 + $0x1b0] sm:$0xff]
  %v1960 = vld [vmem:[%s4 + $0x1b8] sm:$0xff]
  %v1961 = vld [vmem:[%s4 + $0x1c0] sm:$0xff]
  %v1962 = vld [vmem:[%s4 + $0x1c8] sm:$0xff]
  %v1963 = vld [vmem:[%s4 + $0x1d0] sm:$0xff]
  %v1964 = vld [vmem:[%s4 + $0x1d8] sm:$0xff]
  %v1965 = vld [vmem:[%s4 + $0x1e0] sm:$0xff]
  %v1966 = vld [vmem:[%s4 + $0x1e8] sm:$0xff]
  %v1967 = vld [vmem:[%s4 + $0x1f0] sm:$0xff]
  %v1968 = vld [vmem:[%s4 + $0x1f8] sm:$0xff]
  %v1969 = vld [vmem:[%s6] sm:$0xf]
  %v1971 = vlaneseq
  %v1972 = vshrl.u32 %v1971, 7
  %v1973 = vsub.s32 0, %v1972
  %v1974 = vrot.slane %v1969, %v1973
  %v1975 = vlaneseq
  %v1976 = vshrl.u32 %v1975, 7
  %v1977 = vsub.s32 1, %v1976
  %v1978 = vrot.slane %v1969, %v1977
  %v1979 = vlaneseq
  %v1980 = vshrl.u32 %v1979, 7
  %v1981 = vsub.s32 2, %v1980
  %v1982 = vrot.slane %v1969, %v1981
  %v1983 = vlaneseq
  %v1984 = vshrl.u32 %v1983, 7
  %v1985 = vsub.s32 3, %v1984
  %v1986 = vrot.slane %v1969, %v1985
  %1991 = vmatprep.subr.mxu0 %v1966
  %1992 = vmatpush1.msra.mxu0 %v1965
  %1993 = vmatprep.subr.mxu0 %v1962
  %1994 = vmatpush1.msra.mxu0 %v1961
  %1995 = vmatprep.subr.mxu0 %v1958
  %1996 = vmatpush1.msra.mxu0 %v1957
  %1997 = vmatprep.subr.mxu0 %v1954
  %1998 = vmatpush1.msra.mxu0 %v1953
  %1999 = vmatprep.subr.mxu0 %v1950
  %2000 = vmatpush1.msra.mxu0 %v1949
  %2001 = vmatprep.subr.mxu0 %v1946
  %2002 = vmatpush1.msra.mxu0 %v1945
  %2003 = vmatprep.subr.mxu0 %v1942
  %2004 = vmatpush1.msra.mxu0 %v1941
  %2005 = vmatprep.subr.mxu0 %v1938
  %2006 = vmatpush1.msra.mxu0 %v1937
  %2007 = vmatprep.subr.mxu0 %v1934
  %2008 = vmatpush1.msra.mxu0 %v1933
  %2009 = vmatprep.subr.mxu0 %v1930
  %2010 = vmatpush1.msra.mxu0 %v1929
  %2011 = vmatprep.subr.mxu0 %v1926
  %2012 = vmatpush1.msra.mxu0 %v1925
  %2013 = vmatprep.subr.mxu0 %v1922
  %2014 = vmatpush1.msra.mxu0 %v1921
  %2015 = vmatprep.subr.mxu0 %v1918
  %2016 = vmatpush1.msra.mxu0 %v1917
  %2017 = vmatprep.subr.mxu0 %v1914
  %2018 = vmatpush1.msra.mxu0 %v1913
  %2019 = vmatprep.subr.mxu0 %v1910
  %2020 = vmatpush1.msra.mxu0 %v1909
  %2021 = vmatprep.subr.mxu0 %v1906
  %2022 = vmatpush1.msra.mxu0 %v1905
  %2023 = vmatprep.subr.mxu0 0.0
  %2024 = vmatpush2.msra.mxu0 0.0
  %2025 = vmatprep.subr.mxu0 0.0
  %2026 = vmatpush2.msra.mxu0 0.0
  %2027 = vmatprep.subr.mxu0 0.0
  %2028 = vmatpush2.msra.mxu0 0.0
  %2029 = vmatprep.subr.mxu0 0.0
  %2030 = vmatpush2.msra.mxu0 0.0
  %2031 = vmatprep.subr.mxu0 0.0
  %2032 = vmatpush2.msra.mxu0 0.0
  %2033 = vmatprep.subr.mxu0 0.0
  %2034 = vmatpush2.msra.mxu0 0.0
  %2035 = vmatprep.subr.mxu0 0.0
  %2036 = vmatpush2.msra.mxu0 0.0
  %2037 = vmatprep.subr.mxu0 0.0
  %2038 = vmatpush2.msra.mxu0 0.0
  %2039 = vmatprep.subr.mxu0 0.0
  %2040 = vmatpush2.msra.mxu0 0.0
  %2041 = vmatprep.subr.mxu0 0.0
  %2042 = vmatpush2.msra.mxu0 0.0
  %2043 = vmatprep.subr.mxu0 0.0
  %2044 = vmatpush2.msra.mxu0 0.0
  %2045 = vmatprep.subr.mxu0 0.0
  %2046 = vmatpush2.msra.mxu0 0.0
  %2047 = vmatprep.subr.mxu0 0.0
  %2048 = vmatpush2.msra.mxu0 0.0
  %2049 = vmatprep.subr.mxu0 0.0
  %2050 = vmatpush2.msra.mxu0 0.0
  %2051 = vmatprep.subr.mxu0 0.0
  %2052 = vmatpush2.msra.mxu0 0.0
  %2053 = vmatprep.subr.mxu0 0.0
  %2054 = vmatpush2.msra.mxu0 0.0
  %2055 = vmatprep.mubr.f32.mxu0 0.0
  %2056 = vmatmul.mubr.f32.gmra.mxu0 %v1897
  %v2057 = vpop.f32.mrf.mxu0
  %v2058 = vadd.f32 %v1974, %v2057
  %v2059 = vpop.f32.mrf.mxu0
  %v2060 = vadd.f32 %v1978, %v2059
  %2061 = vmatprep.mubr.f32.mxu0 0.0
  %2062 = vmatmul.mubr.f32.gmra.mxu0 %v1898
  %v2063 = vpop.f32.mrf.mxu0
  %v2064 = vadd.f32 %v1974, %v2063
  %v2065 = vpop.f32.mrf.mxu0
  %v2066 = vadd.f32 %v1978, %v2065
  %2067 = vmatprep.mubr.f32.mxu0 0.0
  %2068 = vmatmul.mubr.f32.gmra.mxu0 %v1899
  %v2069 = vpop.f32.mrf.mxu0
  %v2070 = vadd.f32 %v1974, %v2069
  %v2071 = vpop.f32.mrf.mxu0
  %v2072 = vadd.f32 %v1978, %v2071
  %2073 = vmatprep.mubr.f32.mxu0 0.0
  %2074 = vmatmul.mubr.f32.gmra.mxu0 %v1900
  %v2075 = vpop.f32.mrf.mxu0
  %v2076 = vadd.f32 %v1974, %v2075
  %v2077 = vpop.f32.mrf.mxu0
  %v2078 = vadd.f32 %v1978, %v2077
  %2079 = vmatprep.mubr.f32.mxu0 0.0
  %2080 = vmatmul.mubr.f32.gmra.mxu0 %v1901
  %v2081 = vpop.f32.mrf.mxu0
  %v2082 = vadd.f32 %v1974, %v2081
  %v2083 = vpop.f32.mrf.mxu0
  %v2084 = vadd.f32 %v1978, %v2083
  %2085 = vmatprep.mubr.f32.mxu0 0.0
  %2086 = vmatmul.mubr.f32.gmra.mxu0 %v1902
  %v2087 = vpop.f32.mrf.mxu0
  %v2088 = vadd.f32 %v1974, %v2087
  %v2089 = vpop.f32.mrf.mxu0
  %v2090 = vadd.f32 %v1978, %v2089
  %2091 = vmatprep.mubr.f32.mxu0 0.0
  %2092 = vmatmul.mubr.f32.gmra.mxu0 %v1903
  %v2093 = vpop.f32.mrf.mxu0
  %v2094 = vadd.f32 %v1974, %v2093
  %v2095 = vpop.f32.mrf.mxu0
  %v2096 = vadd.f32 %v1978, %v2095
  %2097 = vmatprep.mubr.f32.mxu0 0.0
  %2098 = vmatmul.mubr.f32.gmra.mxu0 %v1904
  %v2099 = vpop.f32.mrf.mxu0
  %v2100 = vadd.f32 %v1974, %v2099
  %v2101 = vpop.f32.mrf.mxu0
  %v2102 = vadd.f32 %v1978, %v2101
  %2103 = vdwg.mxu0
  %2104 = vmatprep.subr.mxu0 %v1968
  %2105 = vmatpush1.msra.mxu0 %v1967
  %2106 = vmatprep.subr.mxu0 %v1964
  %2107 = vmatpush1.msra.mxu0 %v1963
  %2108 = vmatprep.subr.mxu0 %v1960
  %2109 = vmatpush1.msra.mxu0 %v1959
  %2110 = vmatprep.subr.mxu0 %v1956
  %2111 = vmatpush1.msra.mxu0 %v1955
  %2112 = vmatprep.subr.mxu0 %v1952
  %2113 = vmatpush1.msra.mxu0 %v1951
  %2114 = vmatprep.subr.mxu0 %v1948
  %2115 = vmatpush1.msra.mxu0 %v1947
  %2116 = vmatprep.subr.mxu0 %v1944
  %2117 = vmatpush1.msra.mxu0 %v1943
  %2118 = vmatprep.subr.mxu0 %v1940
  %2119 = vmatpush1.msra.mxu0 %v1939
  %2120 = vmatprep.subr.mxu0 %v1936
  %2121 = vmatpush1.msra.mxu0 %v1935
  %2122 = vmatprep.subr.mxu0 %v1932
  %2123 = vmatpush1.msra.mxu0 %v1931
  %2124 = vmatprep.subr.mxu0 %v1928
  %2125 = vmatpush1.msra.mxu0 %v1927
  %2126 = vmatprep.subr.mxu0 %v1924
  %2127 = vmatpush1.msra.mxu0 %v1923
  %2128 = vmatprep.subr.mxu0 %v1920
  %2129 = vmatpush1.msra.mxu0 %v1919
  %2130 = vmatprep.subr.mxu0 %v1916
  %2131 = vmatpush1.msra.mxu0 %v1915
  %2132 = vmatprep.subr.mxu0 %v1912
  %2133 = vmatpush1.msra.mxu0 %v1911
  %2134 = vmatprep.subr.mxu0 %v1908
  %2135 = vmatpush1.msra.mxu0 %v1907
  %2136 = vmatprep.subr.mxu0 0.0
  %2137 = vmatpush2.msra.mxu0 0.0
  %2138 = vmatprep.subr.mxu0 0.0
  %2139 = vmatpush2.msra.mxu0 0.0
  %2140 = vmatprep.subr.mxu0 0.0
  %2141 = vmatpush2.msra.mxu0 0.0
  %2142 = vmatprep.subr.mxu0 0.0
  %2143 = vmatpush2.msra.mxu0 0.0
  %2144 = vmatprep.subr.mxu0 0.0
  %2145 = vmatpush2.msra.mxu0 0.0
  %2146 = vmatprep.subr.mxu0 0.0
  %2147 = vmatpush2.msra.mxu0 0.0
  %2148 = vmatprep.subr.mxu0 0.0
  %2149 = vmatpush2.msra.mxu0 0.0
  %2150 = vmatprep.subr.mxu0 0.0
  %2151 = vmatpush2.msra.mxu0 0.0
  %2152 = vmatprep.subr.mxu0 0.0
  %2153 = vmatpush2.msra.mxu0 0.0
  %2154 = vmatprep.subr.mxu0 0.0
  %2155 = vmatpush2.msra.mxu0 0.0
  %2156 = vmatprep.subr.mxu0 0.0
  %2157 = vmatpush2.msra.mxu0 0.0
  %2158 = vmatprep.subr.mxu0 0.0
  %2159 = vmatpush2.msra.mxu0 0.0
  %2160 = vmatprep.subr.mxu0 0.0
  %2161 = vmatpush2.msra.mxu0 0.0
  %2162 = vmatprep.subr.mxu0 0.0
  %2163 = vmatpush2.msra.mxu0 0.0
  %2164 = vmatprep.subr.mxu0 0.0
  %2165 = vmatpush2.msra.mxu0 0.0
  %2166 = vmatprep.subr.mxu0 0.0
  %2167 = vmatpush2.msra.mxu0 0.0
  %2168 = vmatprep.mubr.f32.mxu0 0.0
  %2169 = vmatmul.mubr.f32.gmra.mxu0 %v1897
  %v2170 = vpop.f32.mrf.mxu0
  %v2171 = vadd.f32 %v1982, %v2170
  %v2172 = vpop.f32.mrf.mxu0
  %v2173 = vadd.f32 %v1986, %v2172
  %2174 = vmatprep.mubr.f32.mxu0 0.0
  %2175 = vmatmul.mubr.f32.gmra.mxu0 %v1898
  %v2176 = vpop.f32.mrf.mxu0
  %v2177 = vadd.f32 %v1982, %v2176
  %v2178 = vpop.f32.mrf.mxu0
  %v2179 = vadd.f32 %v1986, %v2178
  %2180 = vmatprep.mubr.f32.mxu0 0.0
  %2181 = vmatmul.mubr.f32.gmra.mxu0 %v1899
  %v2182 = vpop.f32.mrf.mxu0
  %v2183 = vadd.f32 %v1982, %v2182
  %v2184 = vpop.f32.mrf.mxu0
  %v2185 = vadd.f32 %v1986, %v2184
  %2186 = vmatprep.mubr.f32.mxu0 0.0
  %2187 = vmatmul.mubr.f32.gmra.mxu0 %v1900
  %v2188 = vpop.f32.mrf.mxu0
  %v2189 = vadd.f32 %v1982, %v2188
  %v2190 = vpop.f32.mrf.mxu0
  %v2191 = vadd.f32 %v1986, %v2190
  %2192 = vmatprep.mubr.f32.mxu0 0.0
  %2193 = vmatmul.mubr.f32.gmra.mxu0 %v1901
  %v2194 = vpop.f32.mrf.mxu0
  %v2195 = vadd.f32 %v1982, %v2194
  %v2196 = vpop.f32.mrf.mxu0
  %v2197 = vadd.f32 %v1986, %v2196
  %2198 = vmatprep.mubr.f32.mxu0 0.0
  %2199 = vmatmul.mubr.f32.gmra.mxu0 %v1902
  %v2200 = vpop.f32.mrf.mxu0
  %v2201 = vadd.f32 %v1982, %v2200
  %v2202 = vpop.f32.mrf.mxu0
  %v2203 = vadd.f32 %v1986, %v2202
  %2204 = vmatprep.mubr.f32.mxu0 0.0
  %2205 = vmatmul.mubr.f32.gmra.mxu0 %v1903
  %v2206 = vpop.f32.mrf.mxu0
  %v2207 = vadd.f32 %v1982, %v2206
  %v2208 = vpop.f32.mrf.mxu0
  %v2209 = vadd.f32 %v1986, %v2208
  %2210 = vmatprep.mubr.f32.mxu0 0.0
  %2211 = vmatmul.mubr.f32.gmra.mxu0 %v1904
  %v2212 = vpop.f32.mrf.mxu0
  %v2213 = vadd.f32 %v1982, %v2212
  %v2214 = vpop.f32.mrf.mxu0
  %v2215 = vadd.f32 %v1986, %v2214
  %2216 = vdwg.mxu0
  %2217 = vst [vmem:[#allocation2] sm:$0xff] %v2058
  %2218 = vst [vmem:[#allocation2 + $0x8] sm:$0xff] %v2060
  %2219 = vst [vmem:[#allocation2 + $0x10] sm:$0xff] %v2171
  %2220 = vst [vmem:[#allocation2 + $0x18] sm:$0xff] %v2173
  %2221 = vst [vmem:[#allocation2 + $0x20] sm:$0xff] %v2064
  %2222 = vst [vmem:[#allocation2 + $0x28] sm:$0xff] %v2066
  %2223 = vst [vmem:[#allocation2 + $0x30] sm:$0xff] %v2177
  %2224 = vst [vmem:[#allocation2 + $0x38] sm:$0xff] %v2179
  %2225 = vst [vmem:[#allocation2 + $0x40] sm:$0xff] %v2070
  %2226 = vst [vmem:[#allocation2 + $0x48] sm:$0xff] %v2072
  %2227 = vst [vmem:[#allocation2 + $0x50] sm:$0xff] %v2183
  %2228 = vst [vmem:[#allocation2 + $0x58] sm:$0xff] %v2185
  %2229 = vst [vmem:[#allocation2 + $0x60] sm:$0xff] %v2076
  %2230 = vst [vmem:[#allocation2 + $0x68] sm:$0xff] %v2078
  %2231 = vst [vmem:[#allocation2 + $0x70] sm:$0xff] %v2189
  %2232 = vst [vmem:[#allocation2 + $0x78] sm:$0xff] %v2191
  %2233 = vst [vmem:[#allocation2 + $0x80] sm:$0xff] %v2082
  %2234 = vst [vmem:[#allocation2 + $0x88] sm:$0xff] %v2084
  %2235 = vst [vmem:[#allocation2 + $0x90] sm:$0xff] %v2195
  %2236 = vst [vmem:[#allocation2 + $0x98] sm:$0xff] %v2197
  %2237 = vst [vmem:[#allocation2 + $0xa0] sm:$0xff] %v2088
  %2238 = vst [vmem:[#allocation2 + $0xa8] sm:$0xff] %v2090
  %2239 = vst [vmem:[#allocation2 + $0xb0] sm:$0xff] %v2201
  %2240 = vst [vmem:[#allocation2 + $0xb8] sm:$0xff] %v2203
  %2241 = vst [vmem:[#allocation2 + $0xc0] sm:$0xff] %v2094
  %2242 = vst [vmem:[#allocation2 + $0xc8] sm:$0xff] %v2096
  %2243 = vst [vmem:[#allocation2 + $0xd0] sm:$0xff] %v2207
  %2244 = vst [vmem:[#allocation2 + $0xd8] sm:$0xff] %v2209
  %2245 = vst [vmem:[#allocation2 + $0xe0] sm:$0xff] %v2100
  %2246 = vst [vmem:[#allocation2 + $0xe8] sm:$0xff] %v2102
  %2247 = vst [vmem:[#allocation2 + $0xf0] sm:$0xff] %v2213
  %2248 = vst [vmem:[#allocation2 + $0xf8] sm:$0xff] %v2215
  %v2249 = vld [vmem:[%s5] sm:$0xff]
  %v2250 = vld [vmem:[%s5 + $0x8] sm:$0xff]
  %v2251 = vld [vmem:[%s5 + $0x10] sm:$0xff]
  %v2252 = vld [vmem:[%s5 + $0x18] sm:$0xff]
  %v2253 = vld [vmem:[%s5 + $0x20] sm:$0xff]
  %v2254 = vld [vmem:[%s5 + $0x28] sm:$0xff]
  %v2255 = vld [vmem:[%s5 + $0x30] sm:$0xff]
  %v2256 = vld [vmem:[%s5 + $0x38] sm:$0xff]
  %v2257 = vld [vmem:[%s5 + $0x40] sm:$0xff]
  %v2258 = vld [vmem:[%s5 + $0x48] sm:$0xff]
  %v2259 = vld [vmem:[%s5 + $0x50] sm:$0xff]
  %v2260 = vld [vmem:[%s5 + $0x58] sm:$0xff]
  %v2261 = vld [vmem:[%s5 + $0x60] sm:$0xff]
  %v2262 = vld [vmem:[%s5 + $0x68] sm:$0xff]
  %v2263 = vld [vmem:[%s5 + $0x70] sm:$0xff]
  %v2264 = vld [vmem:[%s5 + $0x78] sm:$0xff]
  %v2265 = vld [vmem:[%s5 + $0x80] sm:$0xff]
  %v2266 = vld [vmem:[%s5 + $0x88] sm:$0xff]
  %v2267 = vld [vmem:[%s5 + $0x90] sm:$0xff]
  %v2268 = vld [vmem:[%s5 + $0x98] sm:$0xff]
  %v2269 = vld [vmem:[%s5 + $0xa0] sm:$0xff]
  %v2270 = vld [vmem:[%s5 + $0xa8] sm:$0xff]
  %v2271 = vld [vmem:[%s5 + $0xb0] sm:$0xff]
  %v2272 = vld [vmem:[%s5 + $0xb8] sm:$0xff]
  %v2273 = vld [vmem:[%s5 + $0xc0] sm:$0xff]
  %v2274 = vld [vmem:[%s5 + $0xc8] sm:$0xff]
  %v2275 = vld [vmem:[%s5 + $0xd0] sm:$0xff]
  %v2276 = vld [vmem:[%s5 + $0xd8] sm:$0xff]
  %v2277 = vld [vmem:[%s5 + $0xe0] sm:$0xff]
  %v2278 = vld [vmem:[%s5 + $0xe8] sm:$0xff]
  %v2279 = vld [vmem:[%s5 + $0xf0] sm:$0xff]
  %v2280 = vld [vmem:[%s5 + $0xf8] sm:$0xff]
  %v2281 = vld [vmem:[%s5 + $0x100] sm:$0xff]
  %v2282 = vld [vmem:[%s5 + $0x108] sm:$0xff]
  %v2283 = vld [vmem:[%s5 + $0x110] sm:$0xff]
  %v2284 = vld [vmem:[%s5 + $0x118] sm:$0xff]
  %v2285 = vld [vmem:[%s5 + $0x120] sm:$0xff]
  %v2286 = vld [vmem:[%s5 + $0x128] sm:$0xff]
  %v2287 = vld [vmem:[%s5 + $0x130] sm:$0xff]
  %v2288 = vld [vmem:[%s5 + $0x138] sm:$0xff]
  %v2289 = vld [vmem:[%s5 + $0x140] sm:$0xff]
  %v2290 = vld [vmem:[%s5 + $0x148] sm:$0xff]
  %v2291 = vld [vmem:[%s5 + $0x150] sm:$0xff]
  %v2292 = vld [vmem:[%s5 + $0x158] sm:$0xff]
  %v2293 = vld [vmem:[%s5 + $0x160] sm:$0xff]
  %v2294 = vld [vmem:[%s5 + $0x168] sm:$0xff]
  %v2295 = vld [vmem:[%s5 + $0x170] sm:$0xff]
  %v2296 = vld [vmem:[%s5 + $0x178] sm:$0xff]
  %v2297 = vld [vmem:[%s5 + $0x180] sm:$0xff]
  %v2298 = vld [vmem:[%s5 + $0x188] sm:$0xff]
  %v2299 = vld [vmem:[%s5 + $0x190] sm:$0xff]
  %v2300 = vld [vmem:[%s5 + $0x198] sm:$0xff]
  %v2301 = vld [vmem:[%s5 + $0x1a0] sm:$0xff]
  %v2302 = vld [vmem:[%s5 + $0x1a8] sm:$0xff]
  %v2303 = vld [vmem:[%s5 + $0x1b0] sm:$0xff]
  %v2304 = vld [vmem:[%s5 + $0x1b8] sm:$0xff]
  %v2305 = vld [vmem:[%s5 + $0x1c0] sm:$0xff]
  %v2306 = vld [vmem:[%s5 + $0x1c8] sm:$0xff]
  %v2307 = vld [vmem:[%s5 + $0x1d0] sm:$0xff]
  %v2308 = vld [vmem:[%s5 + $0x1d8] sm:$0xff]
  %v2309 = vld [vmem:[%s5 + $0x1e0] sm:$0xff]
  %v2310 = vld [vmem:[%s5 + $0x1e8] sm:$0xff]
  %v2311 = vld [vmem:[%s5 + $0x1f0] sm:$0xff]
  %v2312 = vld [vmem:[%s5 + $0x1f8] sm:$0xff]
  %v2313 = vld [vmem:[%s468] sm:$0xff]
  %v2314 = vld [vmem:[%s468 + $0x8] sm:$0xff]
  %v2315 = vld [vmem:[%s468 + $0x10] sm:$0xff]
  %v2316 = vld [vmem:[%s468 + $0x18] sm:$0xff]
  %2317 = vmatprep.subr.mxu0 %v2310
  %2318 = vmatpush1.msra.mxu0 %v2309
  %2319 = vmatprep.subr.mxu0 %v2306
  %2320 = vmatpush1.msra.mxu0 %v2305
  %2321 = vmatprep.subr.mxu0 %v2302
  %2322 = vmatpush1.msra.mxu0 %v2301
  %2323 = vmatprep.subr.mxu0 %v2298
  %2324 = vmatpush1.msra.mxu0 %v2297
  %2325 = vmatprep.subr.mxu0 %v2294
  %2326 = vmatpush1.msra.mxu0 %v2293
  %2327 = vmatprep.subr.mxu0 %v2290
  %2328 = vmatpush1.msra.mxu0 %v2289
  %2329 = vmatprep.subr.mxu0 %v2286
  %2330 = vmatpush1.msra.mxu0 %v2285
  %2331 = vmatprep.subr.mxu0 %v2282
  %2332 = vmatpush1.msra.mxu0 %v2281
  %2333 = vmatprep.subr.mxu0 %v2278
  %2334 = vmatpush1.msra.mxu0 %v2277
  %2335 = vmatprep.subr.mxu0 %v2274
  %2336 = vmatpush1.msra.mxu0 %v2273
  %2337 = vmatprep.subr.mxu0 %v2270
  %2338 = vmatpush1.msra.mxu0 %v2269
  %2339 = vmatprep.subr.mxu0 %v2266
  %2340 = vmatpush1.msra.mxu0 %v2265
  %2341 = vmatprep.subr.mxu0 %v2262
  %2342 = vmatpush1.msra.mxu0 %v2261
  %2343 = vmatprep.subr.mxu0 %v2258
  %2344 = vmatpush1.msra.mxu0 %v2257
  %2345 = vmatprep.subr.mxu0 %v2254
  %2346 = vmatpush1.msra.mxu0 %v2253
  %2347 = vmatprep.subr.mxu0 %v2250
  %2348 = vmatpush1.msra.mxu0 %v2249
  %2349 = vmatprep.subr.mxu0 0.0
  %2350 = vmatpush2.msra.mxu0 0.0
  %2351 = vmatprep.subr.mxu0 0.0
  %2352 = vmatpush2.msra.mxu0 0.0
  %2353 = vmatprep.subr.mxu0 0.0
  %2354 = vmatpush2.msra.mxu0 0.0
  %2355 = vmatprep.subr.mxu0 0.0
  %2356 = vmatpush2.msra.mxu0 0.0
  %2357 = vmatprep.subr.mxu0 0.0
  %2358 = vmatpush2.msra.mxu0 0.0
  %2359 = vmatprep.subr.mxu0 0.0
  %2360 = vmatpush2.msra.mxu0 0.0
  %2361 = vmatprep.subr.mxu0 0.0
  %2362 = vmatpush2.msra.mxu0 0.0
  %2363 = vmatprep.subr.mxu0 0.0
  %2364 = vmatpush2.msra.mxu0 0.0
  %2365 = vmatprep.subr.mxu0 0.0
  %2366 = vmatpush2.msra.mxu0 0.0
  %2367 = vmatprep.subr.mxu0 0.0
  %2368 = vmatpush2.msra.mxu0 0.0
  %2369 = vmatprep.subr.mxu0 0.0
  %2370 = vmatpush2.msra.mxu0 0.0
  %2371 = vmatprep.subr.mxu0 0.0
  %2372 = vmatpush2.msra.mxu0 0.0
  %2373 = vmatprep.subr.mxu0 0.0
  %2374 = vmatpush2.msra.mxu0 0.0
  %2375 = vmatprep.subr.mxu0 0.0
  %2376 = vmatpush2.msra.mxu0 0.0
  %2377 = vmatprep.subr.mxu0 0.0
  %2378 = vmatpush2.msra.mxu0 0.0
  %2379 = vmatprep.subr.mxu0 0.0
  %2380 = vmatpush2.msra.mxu0 0.0
  %2381 = vmatprep.mubr.f32.mxu0 0.0
  %2382 = vmatmul.mubr.f32.gmra.mxu0 0.0
  %v2383 = vpop.f32.mrf.mxu0
  %v2384 = vadd.f32 0.0, %v2383
  %v2385 = vpop.f32.mrf.mxu0
  %v2386 = vadd.f32 0.0, %v2385
  %2387 = vdwg.mxu0
  %2388 = vmatprep.subr.mxu0 %v2312
  %2389 = vmatpush1.msra.mxu0 %v2311
  %2390 = vmatprep.subr.mxu0 %v2308
  %2391 = vmatpush1.msra.mxu0 %v2307
  %2392 = vmatprep.subr.mxu0 %v2304
  %2393 = vmatpush1.msra.mxu0 %v2303
  %2394 = vmatprep.subr.mxu0 %v2300
  %2395 = vmatpush1.msra.mxu0 %v2299
  %2396 = vmatprep.subr.mxu0 %v2296
  %2397 = vmatpush1.msra.mxu0 %v2295
  %2398 = vmatprep.subr.mxu0 %v2292
  %2399 = vmatpush1.msra.mxu0 %v2291
  %2400 = vmatprep.subr.mxu0 %v2288
  %2401 = vmatpush1.msra.mxu0 %v2287
  %2402 = vmatprep.subr.mxu0 %v2284
  %2403 = vmatpush1.msra.mxu0 %v2283
  %2404 = vmatprep.subr.mxu0 %v2280
  %2405 = vmatpush1.msra.mxu0 %v2279
  %2406 = vmatprep.subr.mxu0 %v2276
  %2407 = vmatpush1.msra.mxu0 %v2275
  %2408 = vmatprep.subr.mxu0 %v2272
  %2409 = vmatpush1.msra.mxu0 %v2271
  %2410 = vmatprep.subr.mxu0 %v2268
  %2411 = vmatpush1.msra.mxu0 %v2267
  %2412 = vmatprep.subr.mxu0 %v2264
  %2413 = vmatpush1.msra.mxu0 %v2263
  %2414 = vmatprep.subr.mxu0 %v2260
  %2415 = vmatpush1.msra.mxu0 %v2259
  %2416 = vmatprep.subr.mxu0 %v2256
  %2417 = vmatpush1.msra.mxu0 %v2255
  %2418 = vmatprep.subr.mxu0 %v2252
  %2419 = vmatpush1.msra.mxu0 %v2251
  %2420 = vmatprep.subr.mxu0 0.0
  %2421 = vmatpush2.msra.mxu0 0.0
  %2422 = vmatprep.subr.mxu0 0.0
  %2423 = vmatpush2.msra.mxu0 0.0
  %2424 = vmatprep.subr.mxu0 0.0
  %2425 = vmatpush2.msra.mxu0 0.0
  %2426 = vmatprep.subr.mxu0 0.0
  %2427 = vmatpush2.msra.mxu0 0.0
  %2428 = vmatprep.subr.mxu0 0.0
  %2429 = vmatpush2.msra.mxu0 0.0
  %2430 = vmatprep.subr.mxu0 0.0
  %2431 = vmatpush2.msra.mxu0 0.0
  %2432 = vmatprep.subr.mxu0 0.0
  %2433 = vmatpush2.msra.mxu0 0.0
  %2434 = vmatprep.subr.mxu0 0.0
  %2435 = vmatpush2.msra.mxu0 0.0
  %2436 = vmatprep.subr.mxu0 0.0
  %2437 = vmatpush2.msra.mxu0 0.0
  %2438 = vmatprep.subr.mxu0 0.0
  %2439 = vmatpush2.msra.mxu0 0.0
  %2440 = vmatprep.subr.mxu0 0.0
  %2441 = vmatpush2.msra.mxu0 0.0
  %2442 = vmatprep.subr.mxu0 0.0
  %2443 = vmatpush2.msra.mxu0 0.0
  %2444 = vmatprep.subr.mxu0 0.0
  %2445 = vmatpush2.msra.mxu0 0.0
  %2446 = vmatprep.subr.mxu0 0.0
  %2447 = vmatpush2.msra.mxu0 0.0
  %2448 = vmatprep.subr.mxu0 0.0
  %2449 = vmatpush2.msra.mxu0 0.0
  %2450 = vmatprep.subr.mxu0 0.0
  %2451 = vmatpush2.msra.mxu0 0.0
  %2452 = vmatprep.mubr.f32.mxu0 0.0
  %2453 = vmatmul.mubr.f32.gmra.mxu0 0.0
  %v2454 = vpop.f32.mrf.mxu0
  %v2455 = vadd.f32 0.0, %v2454
  %v2456 = vpop.f32.mrf.mxu0
  %v2457 = vadd.f32 0.0, %v2456
  %2458 = vdwg.mxu0
  %v2459 = vadd.f32 %v2313, %v2384
  %v2460 = vadd.f32 %v2314, %v2386
  %v2461 = vadd.f32 %v2315, %v2455
  %v2462 = vadd.f32 %v2316, %v2457
  %v2463 = vxor.u32 %v2459, 2147483648
  %v2464 = vmul.f32 %v2463, 1.442695
  %v2465 = vpow.pop %v2464
  %v2466 = vadd.f32 %v2465, 1.0
  %v2467 = vrcp.pop %v2466
  %v2468 = vmul.f32 1.0, %v2467
  %v2469 = vxor.u32 %v2460, 2147483648
  %v2470 = vmul.f32 %v2469, 1.442695
  %v2471 = vpow.pop %v2470
  %v2472 = vadd.f32 %v2471, 1.0
  %v2473 = vrcp.pop %v2472
  %v2474 = vmul.f32 1.0, %v2473
  %v2475 = vtanh.pop %v2461
  %v2476 = vxor.u32 %v2462, 2147483648
  %v2477 = vmul.f32 %v2476, 1.442695
  %v2478 = vpow.pop %v2477
  %v2479 = vadd.f32 %v2478, 1.0
  %v2480 = vrcp.pop %v2479
  %v2481 = vmul.f32 1.0, %v2480
  %v2482 = vmul.f32 %v2474, 0.0
  %v2483 = vmul.f32 %v2468, %v2475
  %v2484 = vadd.f32 %v2482, %v2483
  %v2485 = vtanh.pop %v2484
  %v2486 = vmul.f32 %v2481, %v2485
  %2487 = vst [vmem:[#allocation3] sm:$0xff] %v2486
  %v2488 = vld [vmem:[%s646] sm:$0xff]
  %v2489 = vld [vmem:[%s646 + $0x8] sm:$0xff]
  %v2490 = vld [vmem:[%s646 + $0x10] sm:$0xff]
  %v2491 = vld [vmem:[%s646 + $0x18] sm:$0xff]
  %2492 = vmatprep.subr.mxu0 %v2310
  %2493 = vmatpush1.msra.mxu0 %v2309
  %2494 = vmatprep.subr.mxu0 %v2306
  %2495 = vmatpush1.msra.mxu0 %v2305
  %2496 = vmatprep.subr.mxu0 %v2302
  %2497 = vmatpush1.msra.mxu0 %v2301
  %2498 = vmatprep.subr.mxu0 %v2298
  %2499 = vmatpush1.msra.mxu0 %v2297
  %2500 = vmatprep.subr.mxu0 %v2294
  %2501 = vmatpush1.msra.mxu0 %v2293
  %2502 = vmatprep.subr.mxu0 %v2290
  %2503 = vmatpush1.msra.mxu0 %v2289
  %2504 = vmatprep.subr.mxu0 %v2286
  %2505 = vmatpush1.msra.mxu0 %v2285
  %2506 = vmatprep.subr.mxu0 %v2282
  %2507 = vmatpush1.msra.mxu0 %v2281
  %2508 = vmatprep.subr.mxu0 %v2278
  %2509 = vmatpush1.msra.mxu0 %v2277
  %2510 = vmatprep.subr.mxu0 %v2274
  %2511 = vmatpush1.msra.mxu0 %v2273
  %2512 = vmatprep.subr.mxu0 %v2270
  %2513 = vmatpush1.msra.mxu0 %v2269
  %2514 = vmatprep.subr.mxu0 %v2266
  %2515 = vmatpush1.msra.mxu0 %v2265
  %2516 = vmatprep.subr.mxu0 %v2262
  %2517 = vmatpush1.msra.mxu0 %v2261
  %2518 = vmatprep.subr.mxu0 %v2258
  %2519 = vmatpush1.msra.mxu0 %v2257
  %2520 = vmatprep.subr.mxu0 %v2254
  %2521 = vmatpush1.msra.mxu0 %v2253
  %2522 = vmatprep.subr.mxu0 %v2250
  %2523 = vmatpush1.msra.mxu0 %v2249
  %2524 = vmatprep.subr.mxu0 0.0
  %2525 = vmatpush2.msra.mxu0 0.0
  %2526 = vmatprep.subr.mxu0 0.0
  %2527 = vmatpush2.msra.mxu0 0.0
  %2528 = vmatprep.subr.mxu0 0.0
  %2529 = vmatpush2.msra.mxu0 0.0
  %2530 = vmatprep.subr.mxu0 0.0
  %2531 = vmatpush2.msra.mxu0 0.0
  %2532 = vmatprep.subr.mxu0 0.0
  %2533 = vmatpush2.msra.mxu0 0.0
  %2534 = vmatprep.subr.mxu0 0.0
  %2535 = vmatpush2.msra.mxu0 0.0
  %2536 = vmatprep.subr.mxu0 0.0
  %2537 = vmatpush2.msra.mxu0 0.0
  %2538 = vmatprep.subr.mxu0 0.0
  %2539 = vmatpush2.msra.mxu0 0.0
  %2540 = vmatprep.subr.mxu0 0.0
  %2541 = vmatpush2.msra.mxu0 0.0
  %2542 = vmatprep.subr.mxu0 0.0
  %2543 = vmatpush2.msra.mxu0 0.0
  %2544 = vmatprep.subr.mxu0 0.0
  %2545 = vmatpush2.msra.mxu0 0.0
  %2546 = vmatprep.subr.mxu0 0.0
  %2547 = vmatpush2.msra.mxu0 0.0
  %2548 = vmatprep.subr.mxu0 0.0
  %2549 = vmatpush2.msra.mxu0 0.0
  %2550 = vmatprep.subr.mxu0 0.0
  %2551 = vmatpush2.msra.mxu0 0.0
  %2552 = vmatprep.subr.mxu0 0.0
  %2553 = vmatpush2.msra.mxu0 0.0
  %2554 = vmatprep.subr.mxu0 0.0
  %2555 = vmatpush2.msra.mxu0 0.0
  %2556 = vmatprep.mubr.f32.mxu0 0.0
  %2557 = vmatmul.mubr.f32.gmra.mxu0 %v2486
  %v2558 = vpop.f32.mrf.mxu0
  %v2559 = vadd.f32 0.0, %v2558
  %v2560 = vpop.f32.mrf.mxu0
  %v2561 = vadd.f32 0.0, %v2560
  %2562 = vdwg.mxu0
  %2563 = vmatprep.subr.mxu0 %v2312
  %2564 = vmatpush1.msra.mxu0 %v2311
  %2565 = vmatprep.subr.mxu0 %v2308
  %2566 = vmatpush1.msra.mxu0 %v2307
  %2567 = vmatprep.subr.mxu0 %v2304
  %2568 = vmatpush1.msra.mxu0 %v2303
  %2569 = vmatprep.subr.mxu0 %v2300
  %2570 = vmatpush1.msra.mxu0 %v2299
  %2571 = vmatprep.subr.mxu0 %v2296
  %2572 = vmatpush1.msra.mxu0 %v2295
  %2573 = vmatprep.subr.mxu0 %v2292
  %2574 = vmatpush1.msra.mxu0 %v2291
  %2575 = vmatprep.subr.mxu0 %v2288
  %2576 = vmatpush1.msra.mxu0 %v2287
  %2577 = vmatprep.subr.mxu0 %v2284
  %2578 = vmatpush1.msra.mxu0 %v2283
  %2579 = vmatprep.subr.mxu0 %v2280
  %2580 = vmatpush1.msra.mxu0 %v2279
  %2581 = vmatprep.subr.mxu0 %v2276
  %2582 = vmatpush1.msra.mxu0 %v2275
  %2583 = vmatprep.subr.mxu0 %v2272
  %2584 = vmatpush1.msra.mxu0 %v2271
  %2585 = vmatprep.subr.mxu0 %v2268
  %2586 = vmatpush1.msra.mxu0 %v2267
  %2587 = vmatprep.subr.mxu0 %v2264
  %2588 = vmatpush1.msra.mxu0 %v2263
  %2589 = vmatprep.subr.mxu0 %v2260
  %2590 = vmatpush1.msra.mxu0 %v2259
  %2591 = vmatprep.subr.mxu0 %v2256
  %2592 = vmatpush1.msra.mxu0 %v2255
  %2593 = vmatprep.subr.mxu0 %v2252
  %2594 = vmatpush1.msra.mxu0 %v2251
  %2595 = vmatprep.subr.mxu0 0.0
  %2596 = vmatpush2.msra.mxu0 0.0
  %2597 = vmatprep.subr.mxu0 0.0
  %2598 = vmatpush2.msra.mxu0 0.0
  %2599 = vmatprep.subr.mxu0 0.0
  %2600 = vmatpush2.msra.mxu0 0.0
  %2601 = vmatprep.subr.mxu0 0.0
  %2602 = vmatpush2.msra.mxu0 0.0
  %2603 = vmatprep.subr.mxu0 0.0
  %2604 = vmatpush2.msra.mxu0 0.0
  %2605 = vmatprep.subr.mxu0 0.0
  %2606 = vmatpush2.msra.mxu0 0.0
  %2607 = vmatprep.subr.mxu0 0.0
  %2608 = vmatpush2.msra.mxu0 0.0
  %2609 = vmatprep.subr.mxu0 0.0
  %2610 = vmatpush2.msra.mxu0 0.0
  %2611 = vmatprep.subr.mxu0 0.0
  %2612 = vmatpush2.msra.mxu0 0.0
  %2613 = vmatprep.subr.mxu0 0.0
  %2614 = vmatpush2.msra.mxu0 0.0
  %2615 = vmatprep.subr.mxu0 0.0
  %2616 = vmatpush2.msra.mxu0 0.0
  %2617 = vmatprep.subr.mxu0 0.0
  %2618 = vmatpush2.msra.mxu0 0.0
  %2619 = vmatprep.subr.mxu0 0.0
  %2620 = vmatpush2.msra.mxu0 0.0
  %2621 = vmatprep.subr.mxu0 0.0
  %2622 = vmatpush2.msra.mxu0 0.0
  %2623 = vmatprep.subr.mxu0 0.0
  %2624 = vmatpush2.msra.mxu0 0.0
  %2625 = vmatprep.subr.mxu0 0.0
  %2626 = vmatpush2.msra.mxu0 0.0
  %2627 = vmatprep.mubr.f32.mxu0 0.0
  %2628 = vmatmul.mubr.f32.gmra.mxu0 %v2486
  %v2629 = vpop.f32.mrf.mxu0
  %v2630 = vadd.f32 0.0, %v2629
  %v2631 = vpop.f32.mrf.mxu0
  %v2632 = vadd.f32 0.0, %v2631
  %2633 = vdwg.mxu0
  %v2634 = vadd.f32 %v2488, %v2559
  %v2635 = vadd.f32 %v2489, %v2561
  %v2636 = vadd.f32 %v2490, %v2630
  %v2637 = vadd.f32 %v2491, %v2632
  %v2638 = vxor.u32 %v2634, 2147483648
  %v2639 = vmul.f32 %v2638, 1.442695
  %v2640 = vpow.pop %v2639
  %v2641 = vadd.f32 %v2640, 1.0
  %v2642 = vrcp.pop %v2641
  %v2643 = vmul.f32 1.0, %v2642
  %v2644 = vxor.u32 %v2635, 2147483648
  %v2645 = vmul.f32 %v2644, 1.442695
  %v2646 = vpow.pop %v2645
  %v2647 = vadd.f32 %v2646, 1.0
  %v2648 = vrcp.pop %v2647
  %v2649 = vmul.f32 1.0, %v2648
  %v2650 = vtanh.pop %v2636
  %v2651 = vxor.u32 %v2637, 2147483648
  %v2652 = vmul.f32 %v2651, 1.442695
  %v2653 = vpow.pop %v2652
  %v2654 = vadd.f32 %v2653, 1.0
  %v2655 = vrcp.pop %v2654
  %v2656 = vmul.f32 1.0, %v2655
  %v2657 = vmul.f32 %v2649, %v2484
  %v2658 = vmul.f32 %v2643, %v2650
  %v2659 = vadd.f32 %v2657, %v2658
  %v2660 = vtanh.pop %v2659
  %v2661 = vmul.f32 %v2656, %v2660
  %2662 = vst [vmem:[%s821] sm:$0xff] %v2661
  %v2663 = vld [vmem:[%s825] sm:$0xff]
  %v2664 = vld [vmem:[%s825 + $0x8] sm:$0xff]
  %v2665 = vld [vmem:[%s825 + $0x10] sm:$0xff]
  %v2666 = vld [vmem:[%s825 + $0x18] sm:$0xff]
  %2667 = vmatprep.subr.mxu0 %v2310
  %2668 = vmatpush1.msra.mxu0 %v2309
  %2669 = vmatprep.subr.mxu0 %v2306
  %2670 = vmatpush1.msra.mxu0 %v2305
  %2671 = vmatprep.subr.mxu0 %v2302
  %2672 = vmatpush1.msra.mxu0 %v2301
  %2673 = vmatprep.subr.mxu0 %v2298
  %2674 = vmatpush1.msra.mxu0 %v2297
  %2675 = vmatprep.subr.mxu0 %v2294
  %2676 = vmatpush1.msra.mxu0 %v2293
  %2677 = vmatprep.subr.mxu0 %v2290
  %2678 = vmatpush1.msra.mxu0 %v2289
  %2679 = vmatprep.subr.mxu0 %v2286
  %2680 = vmatpush1.msra.mxu0 %v2285
  %2681 = vmatprep.subr.mxu0 %v2282
  %2682 = vmatpush1.msra.mxu0 %v2281
  %2683 = vmatprep.subr.mxu0 %v2278
  %2684 = vmatpush1.msra.mxu0 %v2277
  %2685 = vmatprep.subr.mxu0 %v2274
  %2686 = vmatpush1.msra.mxu0 %v2273
  %2687 = vmatprep.subr.mxu0 %v2270
  %2688 = vmatpush1.msra.mxu0 %v2269
  %2689 = vmatprep.subr.mxu0 %v2266
  %2690 = vmatpush1.msra.mxu0 %v2265
  %2691 = vmatprep.subr.mxu0 %v2262
  %2692 = vmatpush1.msra.mxu0 %v2261
  %2693 = vmatprep.subr.mxu0 %v2258
  %2694 = vmatpush1.msra.mxu0 %v2257
  %2695 = vmatprep.subr.mxu0 %v2254
  %2696 = vmatpush1.msra.mxu0 %v2253
  %2697 = vmatprep.subr.mxu0 %v2250
  %2698 = vmatpush1.msra.mxu0 %v2249
  %2699 = vmatprep.subr.mxu0 0.0
  %2700 = vmatpush2.msra.mxu0 0.0
  %2701 = vmatprep.subr.mxu0 0.0
  %2702 = vmatpush2.msra.mxu0 0.0
  %2703 = vmatprep.subr.mxu0 0.0
  %2704 = vmatpush2.msra.mxu0 0.0
  %2705 = vmatprep.subr.mxu0 0.0
  %2706 = vmatpush2.msra.mxu0 0.0
  %2707 = vmatprep.subr.mxu0 0.0
  %2708 = vmatpush2.msra.mxu0 0.0
  %2709 = vmatprep.subr.mxu0 0.0
  %2710 = vmatpush2.msra.mxu0 0.0
  %2711 = vmatprep.subr.mxu0 0.0
  %2712 = vmatpush2.msra.mxu0 0.0
  %2713 = vmatprep.subr.mxu0 0.0
  %2714 = vmatpush2.msra.mxu0 0.0
  %2715 = vmatprep.subr.mxu0 0.0
  %2716 = vmatpush2.msra.mxu0 0.0
  %2717 = vmatprep.subr.mxu0 0.0
  %2718 = vmatpush2.msra.mxu0 0.0
  %2719 = vmatprep.subr.mxu0 0.0
  %2720 = vmatpush2.msra.mxu0 0.0
  %2721 = vmatprep.subr.mxu0 0.0
  %2722 = vmatpush2.msra.mxu0 0.0
  %2723 = vmatprep.subr.mxu0 0.0
  %2724 = vmatpush2.msra.mxu0 0.0
  %2725 = vmatprep.subr.mxu0 0.0
  %2726 = vmatpush2.msra.mxu0 0.0
  %2727 = vmatprep.subr.mxu0 0.0
  %2728 = vmatpush2.msra.mxu0 0.0
  %2729 = vmatprep.subr.mxu0 0.0
  %2730 = vmatpush2.msra.mxu0 0.0
  %2731 = vmatprep.mubr.f32.mxu0 0.0
  %2732 = vmatmul.mubr.f32.gmra.mxu0 %v2661
  %v2733 = vpop.f32.mrf.mxu0
  %v2734 = vadd.f32 0.0, %v2733
  %v2735 = vpop.f32.mrf.mxu0
  %v2736 = vadd.f32 0.0, %v2735
  %2737 = vdwg.mxu0
  %2738 = vmatprep.subr.mxu0 %v2312
  %2739 = vmatpush1.msra.mxu0 %v2311
  %2740 = vmatprep.subr.mxu0 %v2308
  %2741 = vmatpush1.msra.mxu0 %v2307
  %2742 = vmatprep.subr.mxu0 %v2304
  %2743 = vmatpush1.msra.mxu0 %v2303
  %2744 = vmatprep.subr.mxu0 %v2300
  %2745 = vmatpush1.msra.mxu0 %v2299
  %2746 = vmatprep.subr.mxu0 %v2296
  %2747 = vmatpush1.msra.mxu0 %v2295
  %2748 = vmatprep.subr.mxu0 %v2292
  %2749 = vmatpush1.msra.mxu0 %v2291
  %2750 = vmatprep.subr.mxu0 %v2288
  %2751 = vmatpush1.msra.mxu0 %v2287
  %2752 = vmatprep.subr.mxu0 %v2284
  %2753 = vmatpush1.msra.mxu0 %v2283
  %2754 = vmatprep.subr.mxu0 %v2280
  %2755 = vmatpush1.msra.mxu0 %v2279
  %2756 = vmatprep.subr.mxu0 %v2276
  %2757 = vmatpush1.msra.mxu0 %v2275
  %2758 = vmatprep.subr.mxu0 %v2272
  %2759 = vmatpush1.msra.mxu0 %v2271
  %2760 = vmatprep.subr.mxu0 %v2268
  %2761 = vmatpush1.msra.mxu0 %v2267
  %2762 = vmatprep.subr.mxu0 %v2264
  %2763 = vmatpush1.msra.mxu0 %v2263
  %2764 = vmatprep.subr.mxu0 %v2260
  %2765 = vmatpush1.msra.mxu0 %v2259
  %2766 = vmatprep.subr.mxu0 %v2256
  %2767 = vmatpush1.msra.mxu0 %v2255
  %2768 = vmatprep.subr.mxu0 %v2252
  %2769 = vmatpush1.msra.mxu0 %v2251
  %2770 = vmatprep.subr.mxu0 0.0
  %2771 = vmatpush2.msra.mxu0 0.0
  %2772 = vmatprep.subr.mxu0 0.0
  %2773 = vmatpush2.msra.mxu0 0.0
  %2774 = vmatprep.subr.mxu0 0.0
  %2775 = vmatpush2.msra.mxu0 0.0
  %2776 = vmatprep.subr.mxu0 0.0
  %2777 = vmatpush2.msra.mxu0 0.0
  %2778 = vmatprep.subr.mxu0 0.0
  %2779 = vmatpush2.msra.mxu0 0.0
  %2780 = vmatprep.subr.mxu0 0.0
  %2781 = vmatpush2.msra.mxu0 0.0
  %2782 = vmatprep.subr.mxu0 0.0
  %2783 = vmatpush2.msra.mxu0 0.0
  %2784 = vmatprep.subr.mxu0 0.0
  %2785 = vmatpush2.msra.mxu0 0.0
  %2786 = vmatprep.subr.mxu0 0.0
  %2787 = vmatpush2.msra.mxu0 0.0
  %2788 = vmatprep.subr.mxu0 0.0
  %2789 = vmatpush2.msra.mxu0 0.0
  %2790 = vmatprep.subr.mxu0 0.0
  %2791 = vmatpush2.msra.mxu0 0.0
  %2792 = vmatprep.subr.mxu0 0.0
  %2793 = vmatpush2.msra.mxu0 0.0
  %2794 = vmatprep.subr.mxu0 0.0
  %2795 = vmatpush2.msra.mxu0 0.0
  %2796 = vmatprep.subr.mxu0 0.0
  %2797 = vmatpush2.msra.mxu0 0.0
  %2798 = vmatprep.subr.mxu0 0.0
  %2799 = vmatpush2.msra.mxu0 0.0
  %2800 = vmatprep.subr.mxu0 0.0
  %2801 = vmatpush2.msra.mxu0 0.0
  %2802 = vmatprep.mubr.f32.mxu0 0.0
  %2803 = vmatmul.mubr.f32.gmra.mxu0 %v2661
  %v2804 = vpop.f32.mrf.mxu0
  %v2805 = vadd.f32 0.0, %v2804
  %v2806 = vpop.f32.mrf.mxu0
  %v2807 = vadd.f32 0.0, %v2806
  %2808 = vdwg.mxu0
  %v2809 = vadd.f32 %v2663, %v2734
  %v2810 = vadd.f32 %v2664, %v2736
  %v2811 = vadd.f32 %v2665, %v2805
  %v2812 = vadd.f32 %v2666, %v2807
  %v2813 = vxor.u32 %v2809, 2147483648
  %v2814 = vmul.f32 %v2813, 1.442695
  %v2815 = vpow.pop %v2814
  %v2816 = vadd.f32 %v2815, 1.0
  %v2817 = vrcp.pop %v2816
  %v2818 = vmul.f32 1.0, %v2817
  %v2819 = vxor.u32 %v2810, 2147483648
  %v2820 = vmul.f32 %v2819, 1.442695
  %v2821 = vpow.pop %v2820
  %v2822 = vadd.f32 %v2821, 1.0
  %v2823 = vrcp.pop %v2822
  %v2824 = vmul.f32 1.0, %v2823
  %v2825 = vtanh.pop %v2811
  %v2826 = vxor.u32 %v2812, 2147483648
  %v2827 = vmul.f32 %v2826, 1.442695
  %v2828 = vpow.pop %v2827
  %v2829 = vadd.f32 %v2828, 1.0
  %v2830 = vrcp.pop %v2829
  %v2831 = vmul.f32 1.0, %v2830
  %v2832 = vmul.f32 %v2824, %v2659
  %v2833 = vmul.f32 %v2818, %v2825
  %v2834 = vadd.f32 %v2832, %v2833
  %v2835 = vtanh.pop %v2834
  %v2836 = vmul.f32 %v2831, %v2835
  %2837 = vst [vmem:[%s1000] sm:$0xff] %v2836
  %v2838 = vld [vmem:[%s1004] sm:$0xff]
  %v2839 = vld [vmem:[%s1004 + $0x8] sm:$0xff]
  %v2840 = vld [vmem:[%s1004 + $0x10] sm:$0xff]
  %v2841 = vld [vmem:[%s1004 + $0x18] sm:$0xff]
  %2842 = vmatprep.subr.mxu0 %v2310
  %2843 = vmatpush1.msra.mxu0 %v2309
  %2844 = vmatprep.subr.mxu0 %v2306
  %2845 = vmatpush1.msra.mxu0 %v2305
  %2846 = vmatprep.subr.mxu0 %v2302
  %2847 = vmatpush1.msra.mxu0 %v2301
  %2848 = vmatprep.subr.mxu0 %v2298
  %2849 = vmatpush1.msra.mxu0 %v2297
  %2850 = vmatprep.subr.mxu0 %v2294
  %2851 = vmatpush1.msra.mxu0 %v2293
  %2852 = vmatprep.subr.mxu0 %v2290
  %2853 = vmatpush1.msra.mxu0 %v2289
  %2854 = vmatprep.subr.mxu0 %v2286
  %2855 = vmatpush1.msra.mxu0 %v2285
  %2856 = vmatprep.subr.mxu0 %v2282
  %2857 = vmatpush1.msra.mxu0 %v2281
  %2858 = vmatprep.subr.mxu0 %v2278
  %2859 = vmatpush1.msra.mxu0 %v2277
  %2860 = vmatprep.subr.mxu0 %v2274
  %2861 = vmatpush1.msra.mxu0 %v2273
  %2862 = vmatprep.subr.mxu0 %v2270
  %2863 = vmatpush1.msra.mxu0 %v2269
  %2864 = vmatprep.subr.mxu0 %v2266
  %2865 = vmatpush1.msra.mxu0 %v2265
  %2866 = vmatprep.subr.mxu0 %v2262
  %2867 = vmatpush1.msra.mxu0 %v2261
  %2868 = vmatprep.subr.mxu0 %v2258
  %2869 = vmatpush1.msra.mxu0 %v2257
  %2870 = vmatprep.subr.mxu0 %v2254
  %2871 = vmatpush1.msra.mxu0 %v2253
  %2872 = vmatprep.subr.mxu0 %v2250
  %2873 = vmatpush1.msra.mxu0 %v2249
  %2874 = vmatprep.subr.mxu0 0.0
  %2875 = vmatpush2.msra.mxu0 0.0
  %2876 = vmatprep.subr.mxu0 0.0
  %2877 = vmatpush2.msra.mxu0 0.0
  %2878 = vmatprep.subr.mxu0 0.0
  %2879 = vmatpush2.msra.mxu0 0.0
  %2880 = vmatprep.subr.mxu0 0.0
  %2881 = vmatpush2.msra.mxu0 0.0
  %2882 = vmatprep.subr.mxu0 0.0
  %2883 = vmatpush2.msra.mxu0 0.0
  %2884 = vmatprep.subr.mxu0 0.0
  %2885 = vmatpush2.msra.mxu0 0.0
  %2886 = vmatprep.subr.mxu0 0.0
  %2887 = vmatpush2.msra.mxu0 0.0
  %2888 = vmatprep.subr.mxu0 0.0
  %2889 = vmatpush2.msra.mxu0 0.0
  %2890 = vmatprep.subr.mxu0 0.0
  %2891 = vmatpush2.msra.mxu0 0.0
  %2892 = vmatprep.subr.mxu0 0.0
  %2893 = vmatpush2.msra.mxu0 0.0
  %2894 = vmatprep.subr.mxu0 0.0
  %2895 = vmatpush2.msra.mxu0 0.0
  %2896 = vmatprep.subr.mxu0 0.0
  %2897 = vmatpush2.msra.mxu0 0.0
  %2898 = vmatprep.subr.mxu0 0.0
  %2899 = vmatpush2.msra.mxu0 0.0
  %2900 = vmatprep.subr.mxu0 0.0
  %2901 = vmatpush2.msra.mxu0 0.0
  %2902 = vmatprep.subr.mxu0 0.0
  %2903 = vmatpush2.msra.mxu0 0.0
  %2904 = vmatprep.subr.mxu0 0.0
  %2905 = vmatpush2.msra.mxu0 0.0
  %2906 = vmatprep.mubr.f32.mxu0 0.0
  %2907 = vmatmul.mubr.f32.gmra.mxu0 %v2836
  %v2908 = vpop.f32.mrf.mxu0
  %v2909 = vadd.f32 0.0, %v2908
  %v2910 = vpop.f32.mrf.mxu0
  %v2911 = vadd.f32 0.0, %v2910
  %2912 = vdwg.mxu0
  %2913 = vmatprep.subr.mxu0 %v2312
  %2914 = vmatpush1.msra.mxu0 %v2311
  %2915 = vmatprep.subr.mxu0 %v2308
  %2916 = vmatpush1.msra.mxu0 %v2307
  %2917 = vmatprep.subr.mxu0 %v2304
  %2918 = vmatpush1.msra.mxu0 %v2303
  %2919 = vmatprep.subr.mxu0 %v2300
  %2920 = vmatpush1.msra.mxu0 %v2299
  %2921 = vmatprep.subr.mxu0 %v2296
  %2922 = vmatpush1.msra.mxu0 %v2295
  %2923 = vmatprep.subr.mxu0 %v2292
  %2924 = vmatpush1.msra.mxu0 %v2291
  %2925 = vmatprep.subr.mxu0 %v2288
  %2926 = vmatpush1.msra.mxu0 %v2287
  %2927 = vmatprep.subr.mxu0 %v2284
  %2928 = vmatpush1.msra.mxu0 %v2283
  %2929 = vmatprep.subr.mxu0 %v2280
  %2930 = vmatpush1.msra.mxu0 %v2279
  %2931 = vmatprep.subr.mxu0 %v2276
  %2932 = vmatpush1.msra.mxu0 %v2275
  %2933 = vmatprep.subr.mxu0 %v2272
  %2934 = vmatpush1.msra.mxu0 %v2271
  %2935 = vmatprep.subr.mxu0 %v2268
  %2936 = vmatpush1.msra.mxu0 %v2267
  %2937 = vmatprep.subr.mxu0 %v2264
  %2938 = vmatpush1.msra.mxu0 %v2263
  %2939 = vmatprep.subr.mxu0 %v2260
  %2940 = vmatpush1.msra.mxu0 %v2259
  %2941 = vmatprep.subr.mxu0 %v2256
  %2942 = vmatpush1.msra.mxu0 %v2255
  %2943 = vmatprep.subr.mxu0 %v2252
  %2944 = vmatpush1.msra.mxu0 %v2251
  %2945 = vmatprep.subr.mxu0 0.0
  %2946 = vmatpush2.msra.mxu0 0.0
  %2947 = vmatprep.subr.mxu0 0.0
  %2948 = vmatpush2.msra.mxu0 0.0
  %2949 = vmatprep.subr.mxu0 0.0
  %2950 = vmatpush2.msra.mxu0 0.0
  %2951 = vmatprep.subr.mxu0 0.0
  %2952 = vmatpush2.msra.mxu0 0.0
  %2953 = vmatprep.subr.mxu0 0.0
  %2954 = vmatpush2.msra.mxu0 0.0
  %2955 = vmatprep.subr.mxu0 0.0
  %2956 = vmatpush2.msra.mxu0 0.0
  %2957 = vmatprep.subr.mxu0 0.0
  %2958 = vmatpush2.msra.mxu0 0.0
  %2959 = vmatprep.subr.mxu0 0.0
  %2960 = vmatpush2.msra.mxu0 0.0
  %2961 = vmatprep.subr.mxu0 0.0
  %2962 = vmatpush2.msra.mxu0 0.0
  %2963 = vmatprep.subr.mxu0 0.0
  %2964 = vmatpush2.msra.mxu0 0.0
  %2965 = vmatprep.subr.mxu0 0.0
  %2966 = vmatpush2.msra.mxu0 0.0
  %2967 = vmatprep.subr.mxu0 0.0
  %2968 = vmatpush2.msra.mxu0 0.0
  %2969 = vmatprep.subr.mxu0 0.0
  %2970 = vmatpush2.msra.mxu0 0.0
  %2971 = vmatprep.subr.mxu0 0.0
  %2972 = vmatpush2.msra.mxu0 0.0
  %2973 = vmatprep.subr.mxu0 0.0
  %2974 = vmatpush2.msra.mxu0 0.0
  %2975 = vmatprep.subr.mxu0 0.0
  %2976 = vmatpush2.msra.mxu0 0.0
  %2977 = vmatprep.mubr.f32.mxu0 0.0
  %2978 = vmatmul.mubr.f32.gmra.mxu0 %v2836
  %v2979 = vpop.f32.mrf.mxu0
  %v2980 = vadd.f32 0.0, %v2979
  %v2981 = vpop.f32.mrf.mxu0
  %v2982 = vadd.f32 0.0, %v2981
  %2983 = vdwg.mxu0
  %v2984 = vadd.f32 %v2838, %v2909
  %v2985 = vadd.f32 %v2839, %v2911
  %v2986 = vadd.f32 %v2840, %v2980
  %v2987 = vadd.f32 %v2841, %v2982
  %v2988 = vxor.u32 %v2984, 2147483648
  %v2989 = vmul.f32 %v2988, 1.442695
  %v2990 = vpow.pop %v2989
  %v2991 = vadd.f32 %v2990, 1.0
  %v2992 = vrcp.pop %v2991
  %v2993 = vmul.f32 1.0, %v2992
  %v2994 = vxor.u32 %v2985, 2147483648
  %v2995 = vmul.f32 %v2994, 1.442695
  %v2996 = vpow.pop %v2995
  %v2997 = vadd.f32 %v2996, 1.0
  %v2998 = vrcp.pop %v2997
  %v2999 = vmul.f32 1.0, %v2998
  %v3000 = vtanh.pop %v2986
  %v3001 = vxor.u32 %v2987, 2147483648
  %v3002 = vmul.f32 %v3001, 1.442695
  %v3003 = vpow.pop %v3002
  %v3004 = vadd.f32 %v3003, 1.0
  %v3005 = vrcp.pop %v3004
  %v3006 = vmul.f32 1.0, %v3005
  %v3007 = vmul.f32 %v2999, %v2834
  %v3008 = vmul.f32 %v2993, %v3000
  %v3009 = vadd.f32 %v3007, %v3008
  %v3010 = vtanh.pop %v3009
  %v3011 = vmul.f32 %v3006, %v3010
  %3012 = vst [vmem:[%s1179] sm:$0xff] %v3011
  %v3013 = vld [vmem:[%s1183] sm:$0xff]
  %v3014 = vld [vmem:[%s1183 + $0x8] sm:$0xff]
  %v3015 = vld [vmem:[%s1183 + $0x10] sm:$0xff]
  %v3016 = vld [vmem:[%s1183 + $0x18] sm:$0xff]
  %3017 = vmatprep.subr.mxu0 %v2310
  %3018 = vmatpush1.msra.mxu0 %v2309
  %3019 = vmatprep.subr.mxu0 %v2306
  %3020 = vmatpush1.msra.mxu0 %v2305
  %3021 = vmatprep.subr.mxu0 %v2302
  %3022 = vmatpush1.msra.mxu0 %v2301
  %3023 = vmatprep.subr.mxu0 %v2298
  %3024 = vmatpush1.msra.mxu0 %v2297
  %3025 = vmatprep.subr.mxu0 %v2294
  %3026 = vmatpush1.msra.mxu0 %v2293
  %3027 = vmatprep.subr.mxu0 %v2290
  %3028 = vmatpush1.msra.mxu0 %v2289
  %3029 = vmatprep.subr.mxu0 %v2286
  %3030 = vmatpush1.msra.mxu0 %v2285
  %3031 = vmatprep.subr.mxu0 %v2282
  %3032 = vmatpush1.msra.mxu0 %v2281
  %3033 = vmatprep.subr.mxu0 %v2278
  %3034 = vmatpush1.msra.mxu0 %v2277
  %3035 = vmatprep.subr.mxu0 %v2274
  %3036 = vmatpush1.msra.mxu0 %v2273
  %3037 = vmatprep.subr.mxu0 %v2270
  %3038 = vmatpush1.msra.mxu0 %v2269
  %3039 = vmatprep.subr.mxu0 %v2266
  %3040 = vmatpush1.msra.mxu0 %v2265
  %3041 = vmatprep.subr.mxu0 %v2262
  %3042 = vmatpush1.msra.mxu0 %v2261
  %3043 = vmatprep.subr.mxu0 %v2258
  %3044 = vmatpush1.msra.mxu0 %v2257
  %3045 = vmatprep.subr.mxu0 %v2254
  %3046 = vmatpush1.msra.mxu0 %v2253
  %3047 = vmatprep.subr.mxu0 %v2250
  %3048 = vmatpush1.msra.mxu0 %v2249
  %3049 = vmatprep.subr.mxu0 0.0
  %3050 = vmatpush2.msra.mxu0 0.0
  %3051 = vmatprep.subr.mxu0 0.0
  %3052 = vmatpush2.msra.mxu0 0.0
  %3053 = vmatprep.subr.mxu0 0.0
  %3054 = vmatpush2.msra.mxu0 0.0
  %3055 = vmatprep.subr.mxu0 0.0
  %3056 = vmatpush2.msra.mxu0 0.0
  %3057 = vmatprep.subr.mxu0 0.0
  %3058 = vmatpush2.msra.mxu0 0.0
  %3059 = vmatprep.subr.mxu0 0.0
  %3060 = vmatpush2.msra.mxu0 0.0
  %3061 = vmatprep.subr.mxu0 0.0
  %3062 = vmatpush2.msra.mxu0 0.0
  %3063 = vmatprep.subr.mxu0 0.0
  %3064 = vmatpush2.msra.mxu0 0.0
  %3065 = vmatprep.subr.mxu0 0.0
  %3066 = vmatpush2.msra.mxu0 0.0
  %3067 = vmatprep.subr.mxu0 0.0
  %3068 = vmatpush2.msra.mxu0 0.0
  %3069 = vmatprep.subr.mxu0 0.0
  %3070 = vmatpush2.msra.mxu0 0.0
  %3071 = vmatprep.subr.mxu0 0.0
  %3072 = vmatpush2.msra.mxu0 0.0
  %3073 = vmatprep.subr.mxu0 0.0
  %3074 = vmatpush2.msra.mxu0 0.0
  %3075 = vmatprep.subr.mxu0 0.0
  %3076 = vmatpush2.msra.mxu0 0.0
  %3077 = vmatprep.subr.mxu0 0.0
  %3078 = vmatpush2.msra.mxu0 0.0
  %3079 = vmatprep.subr.mxu0 0.0
  %3080 = vmatpush2.msra.mxu0 0.0
  %3081 = vmatprep.mubr.f32.mxu0 0.0
  %3082 = vmatmul.mubr.f32.gmra.mxu0 %v3011
  %v3083 = vpop.f32.mrf.mxu0
  %v3084 = vadd.f32 0.0, %v3083
  %v3085 = vpop.f32.mrf.mxu0
  %v3086 = vadd.f32 0.0, %v3085
  %3087 = vdwg.mxu0
  %3088 = vmatprep.subr.mxu0 %v2312
  %3089 = vmatpush1.msra.mxu0 %v2311
  %3090 = vmatprep.subr.mxu0 %v2308
  %3091 = vmatpush1.msra.mxu0 %v2307
  %3092 = vmatprep.subr.mxu0 %v2304
  %3093 = vmatpush1.msra.mxu0 %v2303
  %3094 = vmatprep.subr.mxu0 %v2300
  %3095 = vmatpush1.msra.mxu0 %v2299
  %3096 = vmatprep.subr.mxu0 %v2296
  %3097 = vmatpush1.msra.mxu0 %v2295
  %3098 = vmatprep.subr.mxu0 %v2292
  %3099 = vmatpush1.msra.mxu0 %v2291
  %3100 = vmatprep.subr.mxu0 %v2288
  %3101 = vmatpush1.msra.mxu0 %v2287
  %3102 = vmatprep.subr.mxu0 %v2284
  %3103 = vmatpush1.msra.mxu0 %v2283
  %3104 = vmatprep.subr.mxu0 %v2280
  %3105 = vmatpush1.msra.mxu0 %v2279
  %3106 = vmatprep.subr.mxu0 %v2276
  %3107 = vmatpush1.msra.mxu0 %v2275
  %3108 = vmatprep.subr.mxu0 %v2272
  %3109 = vmatpush1.msra.mxu0 %v2271
  %3110 = vmatprep.subr.mxu0 %v2268
  %3111 = vmatpush1.msra.mxu0 %v2267
  %3112 = vmatprep.subr.mxu0 %v2264
  %3113 = vmatpush1.msra.mxu0 %v2263
  %3114 = vmatprep.subr.mxu0 %v2260
  %3115 = vmatpush1.msra.mxu0 %v2259
  %3116 = vmatprep.subr.mxu0 %v2256
  %3117 = vmatpush1.msra.mxu0 %v2255
  %3118 = vmatprep.subr.mxu0 %v2252
  %3119 = vmatpush1.msra.mxu0 %v2251
  %3120 = vmatprep.subr.mxu0 0.0
  %3121 = vmatpush2.msra.mxu0 0.0
  %3122 = vmatprep.subr.mxu0 0.0
  %3123 = vmatpush2.msra.mxu0 0.0
  %3124 = vmatprep.subr.mxu0 0.0
  %3125 = vmatpush2.msra.mxu0 0.0
  %3126 = vmatprep.subr.mxu0 0.0
  %3127 = vmatpush2.msra.mxu0 0.0
  %3128 = vmatprep.subr.mxu0 0.0
  %3129 = vmatpush2.msra.mxu0 0.0
  %3130 = vmatprep.subr.mxu0 0.0
  %3131 = vmatpush2.msra.mxu0 0.0
  %3132 = vmatprep.subr.mxu0 0.0
  %3133 = vmatpush2.msra.mxu0 0.0
  %3134 = vmatprep.subr.mxu0 0.0
  %3135 = vmatpush2.msra.mxu0 0.0
  %3136 = vmatprep.subr.mxu0 0.0
  %3137 = vmatpush2.msra.mxu0 0.0
  %3138 = vmatprep.subr.mxu0 0.0
  %3139 = vmatpush2.msra.mxu0 0.0
  %3140 = vmatprep.subr.mxu0 0.0
  %3141 = vmatpush2.msra.mxu0 0.0
  %3142 = vmatprep.subr.mxu0 0.0
  %3143 = vmatpush2.msra.mxu0 0.0
  %3144 = vmatprep.subr.mxu0 0.0
  %3145 = vmatpush2.msra.mxu0 0.0
  %3146 = vmatprep.subr.mxu0 0.0
  %3147 = vmatpush2.msra.mxu0 0.0
  %3148 = vmatprep.subr.mxu0 0.0
  %3149 = vmatpush2.msra.mxu0 0.0
  %3150 = vmatprep.subr.mxu0 0.0
  %3151 = vmatpush2.msra.mxu0 0.0
  %3152 = vmatprep.mubr.f32.mxu0 0.0
  %3153 = vmatmul.mubr.f32.gmra.mxu0 %v3011
  %v3154 = vpop.f32.mrf.mxu0
  %v3155 = vadd.f32 0.0, %v3154
  %v3156 = vpop.f32.mrf.mxu0
  %v3157 = vadd.f32 0.0, %v3156
  %3158 = vdwg.mxu0
  %v3159 = vadd.f32 %v3013, %v3084
  %v3160 = vadd.f32 %v3014, %v3086
  %v3161 = vadd.f32 %v3015, %v3155
  %v3162 = vadd.f32 %v3016, %v3157
  %v3163 = vxor.u32 %v3159, 2147483648
  %v3164 = vmul.f32 %v3163, 1.442695
  %v3165 = vpow.pop %v3164
  %v3166 = vadd.f32 %v3165, 1.0
  %v3167 = vrcp.pop %v3166
  %v3168 = vmul.f32 1.0, %v3167
  %v3169 = vxor.u32 %v3160, 2147483648
  %v3170 = vmul.f32 %v3169, 1.442695
  %v3171 = vpow.pop %v3170
  %v3172 = vadd.f32 %v3171, 1.0
  %v3173 = vrcp.pop %v3172
  %v3174 = vmul.f32 1.0, %v3173
  %v3175 = vtanh.pop %v3161
  %v3176 = vxor.u32 %v3162, 2147483648
  %v3177 = vmul.f32 %v3176, 1.442695
  %v3178 = vpow.pop %v3177
  %v3179 = vadd.f32 %v3178, 1.0
  %v3180 = vrcp.pop %v3179
  %v3181 = vmul.f32 1.0, %v3180
  %v3182 = vmul.f32 %v3174, %v3009
  %v3183 = vmul.f32 %v3168, %v3175
  %v3184 = vadd.f32 %v3182, %v3183
  %v3185 = vtanh.pop %v3184
  %v3186 = vmul.f32 %v3181, %v3185
  %3187 = vst [vmem:[%s1358] sm:$0xff] %v3186
  %v3188 = vld [vmem:[%s1362] sm:$0xff]
  %v3189 = vld [vmem:[%s1362 + $0x8] sm:$0xff]
  %v3190 = vld [vmem:[%s1362 + $0x10] sm:$0xff]
  %v3191 = vld [vmem:[%s1362 + $0x18] sm:$0xff]
  %3192 = vmatprep.subr.mxu0 %v2310
  %3193 = vmatpush1.msra.mxu0 %v2309
  %3194 = vmatprep.subr.mxu0 %v2306
  %3195 = vmatpush1.msra.mxu0 %v2305
  %3196 = vmatprep.subr.mxu0 %v2302
  %3197 = vmatpush1.msra.mxu0 %v2301
  %3198 = vmatprep.subr.mxu0 %v2298
  %3199 = vmatpush1.msra.mxu0 %v2297
  %3200 = vmatprep.subr.mxu0 %v2294
  %3201 = vmatpush1.msra.mxu0 %v2293
  %3202 = vmatprep.subr.mxu0 %v2290
  %3203 = vmatpush1.msra.mxu0 %v2289
  %3204 = vmatprep.subr.mxu0 %v2286
  %3205 = vmatpush1.msra.mxu0 %v2285
  %3206 = vmatprep.subr.mxu0 %v2282
  %3207 = vmatpush1.msra.mxu0 %v2281
  %3208 = vmatprep.subr.mxu0 %v2278
  %3209 = vmatpush1.msra.mxu0 %v2277
  %3210 = vmatprep.subr.mxu0 %v2274
  %3211 = vmatpush1.msra.mxu0 %v2273
  %3212 = vmatprep.subr.mxu0 %v2270
  %3213 = vmatpush1.msra.mxu0 %v2269
  %3214 = vmatprep.subr.mxu0 %v2266
  %3215 = vmatpush1.msra.mxu0 %v2265
  %3216 = vmatprep.subr.mxu0 %v2262
  %3217 = vmatpush1.msra.mxu0 %v2261
  %3218 = vmatprep.subr.mxu0 %v2258
  %3219 = vmatpush1.msra.mxu0 %v2257
  %3220 = vmatprep.subr.mxu0 %v2254
  %3221 = vmatpush1.msra.mxu0 %v2253
  %3222 = vmatprep.subr.mxu0 %v2250
  %3223 = vmatpush1.msra.mxu0 %v2249
  %3224 = vmatprep.subr.mxu0 0.0
  %3225 = vmatpush2.msra.mxu0 0.0
  %3226 = vmatprep.subr.mxu0 0.0
  %3227 = vmatpush2.msra.mxu0 0.0
  %3228 = vmatprep.subr.mxu0 0.0
  %3229 = vmatpush2.msra.mxu0 0.0
  %3230 = vmatprep.subr.mxu0 0.0
  %3231 = vmatpush2.msra.mxu0 0.0
  %3232 = vmatprep.subr.mxu0 0.0
  %3233 = vmatpush2.msra.mxu0 0.0
  %3234 = vmatprep.subr.mxu0 0.0
  %3235 = vmatpush2.msra.mxu0 0.0
  %3236 = vmatprep.subr.mxu0 0.0
  %3237 = vmatpush2.msra.mxu0 0.0
  %3238 = vmatprep.subr.mxu0 0.0
  %3239 = vmatpush2.msra.mxu0 0.0
  %3240 = vmatprep.subr.mxu0 0.0
  %3241 = vmatpush2.msra.mxu0 0.0
  %3242 = vmatprep.subr.mxu0 0.0
  %3243 = vmatpush2.msra.mxu0 0.0
  %3244 = vmatprep.subr.mxu0 0.0
  %3245 = vmatpush2.msra.mxu0 0.0
  %3246 = vmatprep.subr.mxu0 0.0
  %3247 = vmatpush2.msra.mxu0 0.0
  %3248 = vmatprep.subr.mxu0 0.0
  %3249 = vmatpush2.msra.mxu0 0.0
  %3250 = vmatprep.subr.mxu0 0.0
  %3251 = vmatpush2.msra.mxu0 0.0
  %3252 = vmatprep.subr.mxu0 0.0
  %3253 = vmatpush2.msra.mxu0 0.0
  %3254 = vmatprep.subr.mxu0 0.0
  %3255 = vmatpush2.msra.mxu0 0.0
  %3256 = vmatprep.mubr.f32.mxu0 0.0
  %3257 = vmatmul.mubr.f32.gmra.mxu0 %v3186
  %v3258 = vpop.f32.mrf.mxu0
  %v3259 = vadd.f32 0.0, %v3258
  %v3260 = vpop.f32.mrf.mxu0
  %v3261 = vadd.f32 0.0, %v3260
  %3262 = vdwg.mxu0
  %3263 = vmatprep.subr.mxu0 %v2312
  %3264 = vmatpush1.msra.mxu0 %v2311
  %3265 = vmatprep.subr.mxu0 %v2308
  %3266 = vmatpush1.msra.mxu0 %v2307
  %3267 = vmatprep.subr.mxu0 %v2304
  %3268 = vmatpush1.msra.mxu0 %v2303
  %3269 = vmatprep.subr.mxu0 %v2300
  %3270 = vmatpush1.msra.mxu0 %v2299
  %3271 = vmatprep.subr.mxu0 %v2296
  %3272 = vmatpush1.msra.mxu0 %v2295
  %3273 = vmatprep.subr.mxu0 %v2292
  %3274 = vmatpush1.msra.mxu0 %v2291
  %3275 = vmatprep.subr.mxu0 %v2288
  %3276 = vmatpush1.msra.mxu0 %v2287
  %3277 = vmatprep.subr.mxu0 %v2284
  %3278 = vmatpush1.msra.mxu0 %v2283
  %3279 = vmatprep.subr.mxu0 %v2280
  %3280 = vmatpush1.msra.mxu0 %v2279
  %3281 = vmatprep.subr.mxu0 %v2276
  %3282 = vmatpush1.msra.mxu0 %v2275
  %3283 = vmatprep.subr.mxu0 %v2272
  %3284 = vmatpush1.msra.mxu0 %v2271
  %3285 = vmatprep.subr.mxu0 %v2268
  %3286 = vmatpush1.msra.mxu0 %v2267
  %3287 = vmatprep.subr.mxu0 %v2264
  %3288 = vmatpush1.msra.mxu0 %v2263
  %3289 = vmatprep.subr.mxu0 %v2260
  %3290 = vmatpush1.msra.mxu0 %v2259
  %3291 = vmatprep.subr.mxu0 %v2256
  %3292 = vmatpush1.msra.mxu0 %v2255
  %3293 = vmatprep.subr.mxu0 %v2252
  %3294 = vmatpush1.msra.mxu0 %v2251
  %3295 = vmatprep.subr.mxu0 0.0
  %3296 = vmatpush2.msra.mxu0 0.0
  %3297 = vmatprep.subr.mxu0 0.0
  %3298 = vmatpush2.msra.mxu0 0.0
  %3299 = vmatprep.subr.mxu0 0.0
  %3300 = vmatpush2.msra.mxu0 0.0
  %3301 = vmatprep.subr.mxu0 0.0
  %3302 = vmatpush2.msra.mxu0 0.0
  %3303 = vmatprep.subr.mxu0 0.0
  %3304 = vmatpush2.msra.mxu0 0.0
  %3305 = vmatprep.subr.mxu0 0.0
  %3306 = vmatpush2.msra.mxu0 0.0
  %3307 = vmatprep.subr.mxu0 0.0
  %3308 = vmatpush2.msra.mxu0 0.0
  %3309 = vmatprep.subr.mxu0 0.0
  %3310 = vmatpush2.msra.mxu0 0.0
  %3311 = vmatprep.subr.mxu0 0.0
  %3312 = vmatpush2.msra.mxu0 0.0
  %3313 = vmatprep.subr.mxu0 0.0
  %3314 = vmatpush2.msra.mxu0 0.0
  %3315 = vmatprep.subr.mxu0 0.0
  %3316 = vmatpush2.msra.mxu0 0.0
  %3317 = vmatprep.subr.mxu0 0.0
  %3318 = vmatpush2.msra.mxu0 0.0
  %3319 = vmatprep.subr.mxu0 0.0
  %3320 = vmatpush2.msra.mxu0 0.0
  %3321 = vmatprep.subr.mxu0 0.0
  %3322 = vmatpush2.msra.mxu0 0.0
  %3323 = vmatprep.subr.mxu0 0.0
  %3324 = vmatpush2.msra.mxu0 0.0
  %3325 = vmatprep.subr.mxu0 0.0
  %3326 = vmatpush2.msra.mxu0 0.0
  %3327 = vmatprep.mubr.f32.mxu0 0.0
  %3328 = vmatmul.mubr.f32.gmra.mxu0 %v3186
  %v3329 = vpop.f32.mrf.mxu0
  %v3330 = vadd.f32 0.0, %v3329
  %v3331 = vpop.f32.mrf.mxu0
  %v3332 = vadd.f32 0.0, %v3331
  %3333 = vdwg.mxu0
  %v3334 = vadd.f32 %v3188, %v3259
  %v3335 = vadd.f32 %v3189, %v3261
  %v3336 = vadd.f32 %v3190, %v3330
  %v3337 = vadd.f32 %v3191, %v3332
  %v3338 = vxor.u32 %v3334, 2147483648
  %v3339 = vmul.f32 %v3338, 1.442695
  %v3340 = vpow.pop %v3339
  %v3341 = vadd.f32 %v3340, 1.0
  %v3342 = vrcp.pop %v3341
  %v3343 = vmul.f32 1.0, %v3342
  %v3344 = vxor.u32 %v3335, 2147483648
  %v3345 = vmul.f32 %v3344, 1.442695
  %v3346 = vpow.pop %v3345
  %v3347 = vadd.f32 %v3346, 1.0
  %v3348 = vrcp.pop %v3347
  %v3349 = vmul.f32 1.0, %v3348
  %v3350 = vtanh.pop %v3336
  %v3351 = vxor.u32 %v3337, 2147483648
  %v3352 = vmul.f32 %v3351, 1.442695
  %v3353 = vpow.pop %v3352
  %v3354 = vadd.f32 %v3353, 1.0
  %v3355 = vrcp.pop %v3354
  %v3356 = vmul.f32 1.0, %v3355
  %v3357 = vmul.f32 %v3349, %v3184
  %v3358 = vmul.f32 %v3343, %v3350
  %v3359 = vadd.f32 %v3357, %v3358
  %v3360 = vtanh.pop %v3359
  %v3361 = vmul.f32 %v3356, %v3360
  %3362 = vst [vmem:[%s1537] sm:$0xff] %v3361
  %v3363 = vld [vmem:[%s1541] sm:$0xff]
  %v3364 = vld [vmem:[%s1541 + $0x8] sm:$0xff]
  %v3365 = vld [vmem:[%s1541 + $0x10] sm:$0xff]
  %v3366 = vld [vmem:[%s1541 + $0x18] sm:$0xff]
  %3367 = vmatprep.subr.mxu0 %v2310
  %3368 = vmatpush1.msra.mxu0 %v2309
  %3369 = vmatprep.subr.mxu0 %v2306
  %3370 = vmatpush1.msra.mxu0 %v2305
  %3371 = vmatprep.subr.mxu0 %v2302
  %3372 = vmatpush1.msra.mxu0 %v2301
  %3373 = vmatprep.subr.mxu0 %v2298
  %3374 = vmatpush1.msra.mxu0 %v2297
  %3375 = vmatprep.subr.mxu0 %v2294
  %3376 = vmatpush1.msra.mxu0 %v2293
  %3377 = vmatprep.subr.mxu0 %v2290
  %3378 = vmatpush1.msra.mxu0 %v2289
  %3379 = vmatprep.subr.mxu0 %v2286
  %3380 = vmatpush1.msra.mxu0 %v2285
  %3381 = vmatprep.subr.mxu0 %v2282
  %3382 = vmatpush1.msra.mxu0 %v2281
  %3383 = vmatprep.subr.mxu0 %v2278
  %3384 = vmatpush1.msra.mxu0 %v2277
  %3385 = vmatprep.subr.mxu0 %v2274
  %3386 = vmatpush1.msra.mxu0 %v2273
  %3387 = vmatprep.subr.mxu0 %v2270
  %3388 = vmatpush1.msra.mxu0 %v2269
  %3389 = vmatprep.subr.mxu0 %v2266
  %3390 = vmatpush1.msra.mxu0 %v2265
  %3391 = vmatprep.subr.mxu0 %v2262
  %3392 = vmatpush1.msra.mxu0 %v2261
  %3393 = vmatprep.subr.mxu0 %v2258
  %3394 = vmatpush1.msra.mxu0 %v2257
  %3395 = vmatprep.subr.mxu0 %v2254
  %3396 = vmatpush1.msra.mxu0 %v2253
  %3397 = vmatprep.subr.mxu0 %v2250
  %3398 = vmatpush1.msra.mxu0 %v2249
  %3399 = vmatprep.subr.mxu0 0.0
  %3400 = vmatpush2.msra.mxu0 0.0
  %3401 = vmatprep.subr.mxu0 0.0
  %3402 = vmatpush2.msra.mxu0 0.0
  %3403 = vmatprep.subr.mxu0 0.0
  %3404 = vmatpush2.msra.mxu0 0.0
  %3405 = vmatprep.subr.mxu0 0.0
  %3406 = vmatpush2.msra.mxu0 0.0
  %3407 = vmatprep.subr.mxu0 0.0
  %3408 = vmatpush2.msra.mxu0 0.0
  %3409 = vmatprep.subr.mxu0 0.0
  %3410 = vmatpush2.msra.mxu0 0.0
  %3411 = vmatprep.subr.mxu0 0.0
  %3412 = vmatpush2.msra.mxu0 0.0
  %3413 = vmatprep.subr.mxu0 0.0
  %3414 = vmatpush2.msra.mxu0 0.0
  %3415 = vmatprep.subr.mxu0 0.0
  %3416 = vmatpush2.msra.mxu0 0.0
  %3417 = vmatprep.subr.mxu0 0.0
  %3418 = vmatpush2.msra.mxu0 0.0
  %3419 = vmatprep.subr.mxu0 0.0
  %3420 = vmatpush2.msra.mxu0 0.0
  %3421 = vmatprep.subr.mxu0 0.0
  %3422 = vmatpush2.msra.mxu0 0.0
  %3423 = vmatprep.subr.mxu0 0.0
  %3424 = vmatpush2.msra.mxu0 0.0
  %3425 = vmatprep.subr.mxu0 0.0
  %3426 = vmatpush2.msra.mxu0 0.0
  %3427 = vmatprep.subr.mxu0 0.0
  %3428 = vmatpush2.msra.mxu0 0.0
  %3429 = vmatprep.subr.mxu0 0.0
  %3430 = vmatpush2.msra.mxu0 0.0
  %3431 = vmatprep.mubr.f32.mxu0 0.0
  %3432 = vmatmul.mubr.f32.gmra.mxu0 %v3361
  %v3433 = vpop.f32.mrf.mxu0
  %v3434 = vadd.f32 0.0, %v3433
  %v3435 = vpop.f32.mrf.mxu0
  %v3436 = vadd.f32 0.0, %v3435
  %3437 = vdwg.mxu0
  %3438 = vmatprep.subr.mxu0 %v2312
  %3439 = vmatpush1.msra.mxu0 %v2311
  %3440 = vmatprep.subr.mxu0 %v2308
  %3441 = vmatpush1.msra.mxu0 %v2307
  %3442 = vmatprep.subr.mxu0 %v2304
  %3443 = vmatpush1.msra.mxu0 %v2303
  %3444 = vmatprep.subr.mxu0 %v2300
  %3445 = vmatpush1.msra.mxu0 %v2299
  %3446 = vmatprep.subr.mxu0 %v2296
  %3447 = vmatpush1.msra.mxu0 %v2295
  %3448 = vmatprep.subr.mxu0 %v2292
  %3449 = vmatpush1.msra.mxu0 %v2291
  %3450 = vmatprep.subr.mxu0 %v2288
  %3451 = vmatpush1.msra.mxu0 %v2287
  %3452 = vmatprep.subr.mxu0 %v2284
  %3453 = vmatpush1.msra.mxu0 %v2283
  %3454 = vmatprep.subr.mxu0 %v2280
  %3455 = vmatpush1.msra.mxu0 %v2279
  %3456 = vmatprep.subr.mxu0 %v2276
  %3457 = vmatpush1.msra.mxu0 %v2275
  %3458 = vmatprep.subr.mxu0 %v2272
  %3459 = vmatpush1.msra.mxu0 %v2271
  %3460 = vmatprep.subr.mxu0 %v2268
  %3461 = vmatpush1.msra.mxu0 %v2267
  %3462 = vmatprep.subr.mxu0 %v2264
  %3463 = vmatpush1.msra.mxu0 %v2263
  %3464 = vmatprep.subr.mxu0 %v2260
  %3465 = vmatpush1.msra.mxu0 %v2259
  %3466 = vmatprep.subr.mxu0 %v2256
  %3467 = vmatpush1.msra.mxu0 %v2255
  %3468 = vmatprep.subr.mxu0 %v2252
  %3469 = vmatpush1.msra.mxu0 %v2251
  %3470 = vmatprep.subr.mxu0 0.0
  %3471 = vmatpush2.msra.mxu0 0.0
  %3472 = vmatprep.subr.mxu0 0.0
  %3473 = vmatpush2.msra.mxu0 0.0
  %3474 = vmatprep.subr.mxu0 0.0
  %3475 = vmatpush2.msra.mxu0 0.0
  %3476 = vmatprep.subr.mxu0 0.0
  %3477 = vmatpush2.msra.mxu0 0.0
  %3478 = vmatprep.subr.mxu0 0.0
  %3479 = vmatpush2.msra.mxu0 0.0
  %3480 = vmatprep.subr.mxu0 0.0
  %3481 = vmatpush2.msra.mxu0 0.0
  %3482 = vmatprep.subr.mxu0 0.0
  %3483 = vmatpush2.msra.mxu0 0.0
  %3484 = vmatprep.subr.mxu0 0.0
  %3485 = vmatpush2.msra.mxu0 0.0
  %3486 = vmatprep.subr.mxu0 0.0
  %3487 = vmatpush2.msra.mxu0 0.0
  %3488 = vmatprep.subr.mxu0 0.0
  %3489 = vmatpush2.msra.mxu0 0.0
  %3490 = vmatprep.subr.mxu0 0.0
  %3491 = vmatpush2.msra.mxu0 0.0
  %3492 = vmatprep.subr.mxu0 0.0
  %3493 = vmatpush2.msra.mxu0 0.0
  %3494 = vmatprep.subr.mxu0 0.0
  %3495 = vmatpush2.msra.mxu0 0.0
  %3496 = vmatprep.subr.mxu0 0.0
  %3497 = vmatpush2.msra.mxu0 0.0
  %3498 = vmatprep.subr.mxu0 0.0
  %3499 = vmatpush2.msra.mxu0 0.0
  %3500 = vmatprep.subr.mxu0 0.0
  %3501 = vmatpush2.msra.mxu0 0.0
  %3502 = vmatprep.mubr.f32.mxu0 0.0
  %3503 = vmatmul.mubr.f32.gmra.mxu0 %v3361
  %v3504 = vpop.f32.mrf.mxu0
  %v3505 = vadd.f32 0.0, %v3504
  %v3506 = vpop.f32.mrf.mxu0
  %v3507 = vadd.f32 0.0, %v3506
  %3508 = vdwg.mxu0
  %v3509 = vadd.f32 %v3363, %v3434
  %v3510 = vadd.f32 %v3364, %v3436
  %v3511 = vadd.f32 %v3365, %v3505
  %v3512 = vadd.f32 %v3366, %v3507
  %v3513 = vxor.u32 %v3509, 2147483648
  %v3514 = vmul.f32 %v3513, 1.442695
  %v3515 = vpow.pop %v3514
  %v3516 = vadd.f32 %v3515, 1.0
  %v3517 = vrcp.pop %v3516
  %v3518 = vmul.f32 1.0, %v3517
  %v3519 = vxor.u32 %v3510, 2147483648
  %v3520 = vmul.f32 %v3519, 1.442695
  %v3521 = vpow.pop %v3520
  %v3522 = vadd.f32 %v3521, 1.0
  %v3523 = vrcp.pop %v3522
  %v3524 = vmul.f32 1.0, %v3523
  %v3525 = vtanh.pop %v3511
  %v3526 = vxor.u32 %v3512, 2147483648
  %v3527 = vmul.f32 %v3526, 1.442695
  %v3528 = vpow.pop %v3527
  %v3529 = vadd.f32 %v3528, 1.0
  %v3530 = vrcp.pop %v3529
  %v3531 = vmul.f32 1.0, %v3530
  %v3532 = vmul.f32 %v3524, %v3359
  %v3533 = vmul.f32 %v3518, %v3525
  %v3534 = vadd.f32 %v3532, %v3533
  %v3535 = vtanh.pop %v3534
  %v3536 = vmul.f32 %v3531, %v3535
  %3537 = vst [vmem:[%s1716] sm:$0xff] %v3536
  %v3538 = vld [vmem:[%s1720] sm:$0xff]
  %v3539 = vld [vmem:[%s1720 + $0x8] sm:$0xff]
  %v3540 = vld [vmem:[%s1720 + $0x10] sm:$0xff]
  %v3541 = vld [vmem:[%s1720 + $0x18] sm:$0xff]
  %3542 = vmatprep.subr.mxu0 %v2310
  %3543 = vmatpush1.msra.mxu0 %v2309
  %3544 = vmatprep.subr.mxu0 %v2306
  %3545 = vmatpush1.msra.mxu0 %v2305
  %3546 = vmatprep.subr.mxu0 %v2302
  %3547 = vmatpush1.msra.mxu0 %v2301
  %3548 = vmatprep.subr.mxu0 %v2298
  %3549 = vmatpush1.msra.mxu0 %v2297
  %3550 = vmatprep.subr.mxu0 %v2294
  %3551 = vmatpush1.msra.mxu0 %v2293
  %3552 = vmatprep.subr.mxu0 %v2290
  %3553 = vmatpush1.msra.mxu0 %v2289
  %3554 = vmatprep.subr.mxu0 %v2286
  %3555 = vmatpush1.msra.mxu0 %v2285
  %3556 = vmatprep.subr.mxu0 %v2282
  %3557 = vmatpush1.msra.mxu0 %v2281
  %3558 = vmatprep.subr.mxu0 %v2278
  %3559 = vmatpush1.msra.mxu0 %v2277
  %3560 = vmatprep.subr.mxu0 %v2274
  %3561 = vmatpush1.msra.mxu0 %v2273
  %3562 = vmatprep.subr.mxu0 %v2270
  %3563 = vmatpush1.msra.mxu0 %v2269
  %3564 = vmatprep.subr.mxu0 %v2266
  %3565 = vmatpush1.msra.mxu0 %v2265
  %3566 = vmatprep.subr.mxu0 %v2262
  %3567 = vmatpush1.msra.mxu0 %v2261
  %3568 = vmatprep.subr.mxu0 %v2258
  %3569 = vmatpush1.msra.mxu0 %v2257
  %3570 = vmatprep.subr.mxu0 %v2254
  %3571 = vmatpush1.msra.mxu0 %v2253
  %3572 = vmatprep.subr.mxu0 %v2250
  %3573 = vmatpush1.msra.mxu0 %v2249
  %3574 = vmatprep.subr.mxu0 0.0
  %3575 = vmatpush2.msra.mxu0 0.0
  %3576 = vmatprep.subr.mxu0 0.0
  %3577 = vmatpush2.msra.mxu0 0.0
  %3578 = vmatprep.subr.mxu0 0.0
  %3579 = vmatpush2.msra.mxu0 0.0
  %3580 = vmatprep.subr.mxu0 0.0
  %3581 = vmatpush2.msra.mxu0 0.0
  %3582 = vmatprep.subr.mxu0 0.0
  %3583 = vmatpush2.msra.mxu0 0.0
  %3584 = vmatprep.subr.mxu0 0.0
  %3585 = vmatpush2.msra.mxu0 0.0
  %3586 = vmatprep.subr.mxu0 0.0
  %3587 = vmatpush2.msra.mxu0 0.0
  %3588 = vmatprep.subr.mxu0 0.0
  %3589 = vmatpush2.msra.mxu0 0.0
  %3590 = vmatprep.subr.mxu0 0.0
  %3591 = vmatpush2.msra.mxu0 0.0
  %3592 = vmatprep.subr.mxu0 0.0
  %3593 = vmatpush2.msra.mxu0 0.0
  %3594 = vmatprep.subr.mxu0 0.0
  %3595 = vmatpush2.msra.mxu0 0.0
  %3596 = vmatprep.subr.mxu0 0.0
  %3597 = vmatpush2.msra.mxu0 0.0
  %3598 = vmatprep.subr.mxu0 0.0
  %3599 = vmatpush2.msra.mxu0 0.0
  %3600 = vmatprep.subr.mxu0 0.0
  %3601 = vmatpush2.msra.mxu0 0.0
  %3602 = vmatprep.subr.mxu0 0.0
  %3603 = vmatpush2.msra.mxu0 0.0
  %3604 = vmatprep.subr.mxu0 0.0
  %3605 = vmatpush2.msra.mxu0 0.0
  %3606 = vmatprep.mubr.f32.mxu0 0.0
  %3607 = vmatmul.mubr.f32.gmra.mxu0 %v3536
  %v3608 = vpop.f32.mrf.mxu0
  %v3609 = vadd.f32 0.0, %v3608
  %v3610 = vpop.f32.mrf.mxu0
  %v3611 = vadd.f32 0.0, %v3610
  %3612 = vdwg.mxu0
  %3613 = vmatprep.subr.mxu0 %v2312
  %3614 = vmatpush1.msra.mxu0 %v2311
  %3615 = vmatprep.subr.mxu0 %v2308
  %3616 = vmatpush1.msra.mxu0 %v2307
  %3617 = vmatprep.subr.mxu0 %v2304
  %3618 = vmatpush1.msra.mxu0 %v2303
  %3619 = vmatprep.subr.mxu0 %v2300
  %3620 = vmatpush1.msra.mxu0 %v2299
  %3621 = vmatprep.subr.mxu0 %v2296
  %3622 = vmatpush1.msra.mxu0 %v2295
  %3623 = vmatprep.subr.mxu0 %v2292
  %3624 = vmatpush1.msra.mxu0 %v2291
  %3625 = vmatprep.subr.mxu0 %v2288
  %3626 = vmatpush1.msra.mxu0 %v2287
  %3627 = vmatprep.subr.mxu0 %v2284
  %3628 = vmatpush1.msra.mxu0 %v2283
  %3629 = vmatprep.subr.mxu0 %v2280
  %3630 = vmatpush1.msra.mxu0 %v2279
  %3631 = vmatprep.subr.mxu0 %v2276
  %3632 = vmatpush1.msra.mxu0 %v2275
  %3633 = vmatprep.subr.mxu0 %v2272
  %3634 = vmatpush1.msra.mxu0 %v2271
  %3635 = vmatprep.subr.mxu0 %v2268
  %3636 = vmatpush1.msra.mxu0 %v2267
  %3637 = vmatprep.subr.mxu0 %v2264
  %3638 = vmatpush1.msra.mxu0 %v2263
  %3639 = vmatprep.subr.mxu0 %v2260
  %3640 = vmatpush1.msra.mxu0 %v2259
  %3641 = vmatprep.subr.mxu0 %v2256
  %3642 = vmatpush1.msra.mxu0 %v2255
  %3643 = vmatprep.subr.mxu0 %v2252
  %3644 = vmatpush1.msra.mxu0 %v2251
  %3645 = vmatprep.subr.mxu0 0.0
  %3646 = vmatpush2.msra.mxu0 0.0
  %3647 = vmatprep.subr.mxu0 0.0
  %3648 = vmatpush2.msra.mxu0 0.0
  %3649 = vmatprep.subr.mxu0 0.0
  %3650 = vmatpush2.msra.mxu0 0.0
  %3651 = vmatprep.subr.mxu0 0.0
  %3652 = vmatpush2.msra.mxu0 0.0
  %3653 = vmatprep.subr.mxu0 0.0
  %3654 = vmatpush2.msra.mxu0 0.0
  %3655 = vmatprep.subr.mxu0 0.0
  %3656 = vmatpush2.msra.mxu0 0.0
  %3657 = vmatprep.subr.mxu0 0.0
  %3658 = vmatpush2.msra.mxu0 0.0
  %3659 = vmatprep.subr.mxu0 0.0
  %3660 = vmatpush2.msra.mxu0 0.0
  %3661 = vmatprep.subr.mxu0 0.0
  %3662 = vmatpush2.msra.mxu0 0.0
  %3663 = vmatprep.subr.mxu0 0.0
  %3664 = vmatpush2.msra.mxu0 0.0
  %3665 = vmatprep.subr.mxu0 0.0
  %3666 = vmatpush2.msra.mxu0 0.0
  %3667 = vmatprep.subr.mxu0 0.0
  %3668 = vmatpush2.msra.mxu0 0.0
  %3669 = vmatprep.subr.mxu0 0.0
  %3670 = vmatpush2.msra.mxu0 0.0
  %3671 = vmatprep.subr.mxu0 0.0
  %3672 = vmatpush2.msra.mxu0 0.0
  %3673 = vmatprep.subr.mxu0 0.0
  %3674 = vmatpush2.msra.mxu0 0.0
  %3675 = vmatprep.subr.mxu0 0.0
  %3676 = vmatpush2.msra.mxu0 0.0
  %3677 = vmatprep.mubr.f32.mxu0 0.0
  %3678 = vmatmul.mubr.f32.gmra.mxu0 %v3536
  %v3679 = vpop.f32.mrf.mxu0
  %v3680 = vadd.f32 0.0, %v3679
  %v3681 = vpop.f32.mrf.mxu0
  %v3682 = vadd.f32 0.0, %v3681
  %3683 = vdwg.mxu0
  %v3684 = vadd.f32 %v3538, %v3609
  %v3685 = vadd.f32 %v3539, %v3611
  %v3686 = vadd.f32 %v3540, %v3680
  %v3687 = vadd.f32 %v3541, %v3682
  %v3688 = vxor.u32 %v3684, 2147483648
  %v3689 = vmul.f32 %v3688, 1.442695
  %v3690 = vpow.pop %v3689
  %v3691 = vadd.f32 %v3690, 1.0
  %v3692 = vrcp.pop %v3691
  %v3693 = vmul.f32 1.0, %v3692
  %v3694 = vxor.u32 %v3685, 2147483648
  %v3695 = vmul.f32 %v3694, 1.442695
  %v3696 = vpow.pop %v3695
  %v3697 = vadd.f32 %v3696, 1.0
  %v3698 = vrcp.pop %v3697
  %v3699 = vmul.f32 1.0, %v3698
  %v3700 = vtanh.pop %v3686
  %v3701 = vxor.u32 %v3687, 2147483648
  %v3702 = vmul.f32 %v3701, 1.442695
  %v3703 = vpow.pop %v3702
  %v3704 = vadd.f32 %v3703, 1.0
  %v3705 = vrcp.pop %v3704
  %v3706 = vmul.f32 1.0, %v3705
  %v3707 = vmul.f32 %v3699, %v3534
  %v3708 = vmul.f32 %v3693, %v3700
  %v3709 = vadd.f32 %v3707, %v3708
  %v3710 = vtanh.pop %v3709
  %v3711 = vmul.f32 %v3706, %v3710
  %3712 = vst [vmem:[%s1895] sm:$0xff] %v3711
  %v3713 = vld [vmem:[#allocation3] sm:$0xff]
  %v3714 = vld [vmem:[#allocation3 + $0x8] sm:$0xff]
  %v3715 = vld [vmem:[#allocation3 + $0x10] sm:$0xff]
  %v3716 = vld [vmem:[#allocation3 + $0x18] sm:$0xff]
  %v3717 = vld [vmem:[#allocation3 + $0x20] sm:$0xff]
  %v3718 = vld [vmem:[#allocation3 + $0x28] sm:$0xff]
  %v3719 = vld [vmem:[#allocation3 + $0x30] sm:$0xff]
  %v3720 = vld [vmem:[#allocation3 + $0x38] sm:$0xff]
  %v3721 = vld [vmem:[%s7] sm:$0xff]
  %v3722 = vld [vmem:[%s7 + $0x8] sm:$0xff]
  %v3723 = vld [vmem:[%s7 + $0x10] sm:$0xff]
  %v3724 = vld [vmem:[%s7 + $0x18] sm:$0xff]
  %v3725 = vld [vmem:[%s7 + $0x20] sm:$0xff]
  %v3726 = vld [vmem:[%s7 + $0x28] sm:$0xff]
  %v3727 = vld [vmem:[%s7 + $0x30] sm:$0xff]
  %v3728 = vld [vmem:[%s7 + $0x38] sm:$0xff]
  %v3729 = vld [vmem:[%s7 + $0x40] sm:$0xff]
  %v3730 = vld [vmem:[%s7 + $0x48] sm:$0xff]
  %v3731 = vld [vmem:[%s7 + $0x50] sm:$0xff]
  %v3732 = vld [vmem:[%s7 + $0x58] sm:$0xff]
  %v3733 = vld [vmem:[%s7 + $0x60] sm:$0xff]
  %v3734 = vld [vmem:[%s7 + $0x68] sm:$0xff]
  %v3735 = vld [vmem:[%s7 + $0x70] sm:$0xff]
  %v3736 = vld [vmem:[%s7 + $0x78] sm:$0xff]
  %v3737 = vld [vmem:[%s7 + $0x80] sm:$0xff]
  %v3738 = vld [vmem:[%s7 + $0x88] sm:$0xff]
  %v3739 = vld [vmem:[%s7 + $0x90] sm:$0xff]
  %v3740 = vld [vmem:[%s7 + $0x98] sm:$0xff]
  %v3741 = vld [vmem:[%s7 + $0xa0] sm:$0xff]
  %v3742 = vld [vmem:[%s7 + $0xa8] sm:$0xff]
  %v3743 = vld [vmem:[%s7 + $0xb0] sm:$0xff]
  %v3744 = vld [vmem:[%s7 + $0xb8] sm:$0xff]
  %v3745 = vld [vmem:[%s7 + $0xc0] sm:$0xff]
  %v3746 = vld [vmem:[%s7 + $0xc8] sm:$0xff]
  %v3747 = vld [vmem:[%s7 + $0xd0] sm:$0xff]
  %v3748 = vld [vmem:[%s7 + $0xd8] sm:$0xff]
  %v3749 = vld [vmem:[%s7 + $0xe0] sm:$0xff]
  %v3750 = vld [vmem:[%s7 + $0xe8] sm:$0xff]
  %v3751 = vld [vmem:[%s7 + $0xf0] sm:$0xff]
  %v3752 = vld [vmem:[%s7 + $0xf8] sm:$0xff]
  %v3753 = vld [vmem:[%s7 + $0x100] sm:$0xff]
  %v3754 = vld [vmem:[%s7 + $0x108] sm:$0xff]
  %v3755 = vld [vmem:[%s7 + $0x110] sm:$0xff]
  %v3756 = vld [vmem:[%s7 + $0x118] sm:$0xff]
  %v3757 = vld [vmem:[%s7 + $0x120] sm:$0xff]
  %v3758 = vld [vmem:[%s7 + $0x128] sm:$0xff]
  %v3759 = vld [vmem:[%s7 + $0x130] sm:$0xff]
  %v3760 = vld [vmem:[%s7 + $0x138] sm:$0xff]
  %v3761 = vld [vmem:[%s7 + $0x140] sm:$0xff]
  %v3762 = vld [vmem:[%s7 + $0x148] sm:$0xff]
  %v3763 = vld [vmem:[%s7 + $0x150] sm:$0xff]
  %v3764 = vld [vmem:[%s7 + $0x158] sm:$0xff]
  %v3765 = vld [vmem:[%s7 + $0x160] sm:$0xff]
  %v3766 = vld [vmem:[%s7 + $0x168] sm:$0xff]
  %v3767 = vld [vmem:[%s7 + $0x170] sm:$0xff]
  %v3768 = vld [vmem:[%s7 + $0x178] sm:$0xff]
  %v3769 = vld [vmem:[%s7 + $0x180] sm:$0xff]
  %v3770 = vld [vmem:[%s7 + $0x188] sm:$0xff]
  %v3771 = vld [vmem:[%s7 + $0x190] sm:$0xff]
  %v3772 = vld [vmem:[%s7 + $0x198] sm:$0xff]
  %v3773 = vld [vmem:[%s7 + $0x1a0] sm:$0xff]
  %v3774 = vld [vmem:[%s7 + $0x1a8] sm:$0xff]
  %v3775 = vld [vmem:[%s7 + $0x1b0] sm:$0xff]
  %v3776 = vld [vmem:[%s7 + $0x1b8] sm:$0xff]
  %v3777 = vld [vmem:[%s7 + $0x1c0] sm:$0xff]
  %v3778 = vld [vmem:[%s7 + $0x1c8] sm:$0xff]
  %v3779 = vld [vmem:[%s7 + $0x1d0] sm:$0xff]
  %v3780 = vld [vmem:[%s7 + $0x1d8] sm:$0xff]
  %v3781 = vld [vmem:[%s7 + $0x1e0] sm:$0xff]
  %v3782 = vld [vmem:[%s7 + $0x1e8] sm:$0xff]
  %v3783 = vld [vmem:[%s7 + $0x1f0] sm:$0xff]
  %v3784 = vld [vmem:[%s7 + $0x1f8] sm:$0xff]
  %v3785 = vld [vmem:[%s9] sm:$0xf]
  %v3787 = vlaneseq
  %v3788 = vshrl.u32 %v3787, 7
  %v3789 = vsub.s32 0, %v3788
  %v3790 = vrot.slane %v3785, %v3789
  %v3791 = vlaneseq
  %v3792 = vshrl.u32 %v3791, 7
  %v3793 = vsub.s32 1, %v3792
  %v3794 = vrot.slane %v3785, %v3793
  %v3795 = vlaneseq
  %v3796 = vshrl.u32 %v3795, 7
  %v3797 = vsub.s32 2, %v3796
  %v3798 = vrot.slane %v3785, %v3797
  %v3799 = vlaneseq
  %v3800 = vshrl.u32 %v3799, 7
  %v3801 = vsub.s32 3, %v3800
  %v3802 = vrot.slane %v3785, %v3801
  %3807 = vmatprep.subr.mxu0 %v3782
  %3808 = vmatpush1.msra.mxu0 %v3781
  %3809 = vmatprep.subr.mxu0 %v3778
  %3810 = vmatpush1.msra.mxu0 %v3777
  %3811 = vmatprep.subr.mxu0 %v3774
  %3812 = vmatpush1.msra.mxu0 %v3773
  %3813 = vmatprep.subr.mxu0 %v3770
  %3814 = vmatpush1.msra.mxu0 %v3769
  %3815 = vmatprep.subr.mxu0 %v3766
  %3816 = vmatpush1.msra.mxu0 %v3765
  %3817 = vmatprep.subr.mxu0 %v3762
  %3818 = vmatpush1.msra.mxu0 %v3761
  %3819 = vmatprep.subr.mxu0 %v3758
  %3820 = vmatpush1.msra.mxu0 %v3757
  %3821 = vmatprep.subr.mxu0 %v3754
  %3822 = vmatpush1.msra.mxu0 %v3753
  %3823 = vmatprep.subr.mxu0 %v3750
  %3824 = vmatpush1.msra.mxu0 %v3749
  %3825 = vmatprep.subr.mxu0 %v3746
  %3826 = vmatpush1.msra.mxu0 %v3745
  %3827 = vmatprep.subr.mxu0 %v3742
  %3828 = vmatpush1.msra.mxu0 %v3741
  %3829 = vmatprep.subr.mxu0 %v3738
  %3830 = vmatpush1.msra.mxu0 %v3737
  %3831 = vmatprep.subr.mxu0 %v3734
  %3832 = vmatpush1.msra.mxu0 %v3733
  %3833 = vmatprep.subr.mxu0 %v3730
  %3834 = vmatpush1.msra.mxu0 %v3729
  %3835 = vmatprep.subr.mxu0 %v3726
  %3836 = vmatpush1.msra.mxu0 %v3725
  %3837 = vmatprep.subr.mxu0 %v3722
  %3838 = vmatpush1.msra.mxu0 %v3721
  %3839 = vmatprep.subr.mxu0 0.0
  %3840 = vmatpush2.msra.mxu0 0.0
  %3841 = vmatprep.subr.mxu0 0.0
  %3842 = vmatpush2.msra.mxu0 0.0
  %3843 = vmatprep.subr.mxu0 0.0
  %3844 = vmatpush2.msra.mxu0 0.0
  %3845 = vmatprep.subr.mxu0 0.0
  %3846 = vmatpush2.msra.mxu0 0.0
  %3847 = vmatprep.subr.mxu0 0.0
  %3848 = vmatpush2.msra.mxu0 0.0
  %3849 = vmatprep.subr.mxu0 0.0
  %3850 = vmatpush2.msra.mxu0 0.0
  %3851 = vmatprep.subr.mxu0 0.0
  %3852 = vmatpush2.msra.mxu0 0.0
  %3853 = vmatprep.subr.mxu0 0.0
  %3854 = vmatpush2.msra.mxu0 0.0
  %3855 = vmatprep.subr.mxu0 0.0
  %3856 = vmatpush2.msra.mxu0 0.0
  %3857 = vmatprep.subr.mxu0 0.0
  %3858 = vmatpush2.msra.mxu0 0.0
  %3859 = vmatprep.subr.mxu0 0.0
  %3860 = vmatpush2.msra.mxu0 0.0
  %3861 = vmatprep.subr.mxu0 0.0
  %3862 = vmatpush2.msra.mxu0 0.0
  %3863 = vmatprep.subr.mxu0 0.0
  %3864 = vmatpush2.msra.mxu0 0.0
  %3865 = vmatprep.subr.mxu0 0.0
  %3866 = vmatpush2.msra.mxu0 0.0
  %3867 = vmatprep.subr.mxu0 0.0
  %3868 = vmatpush2.msra.mxu0 0.0
  %3869 = vmatprep.subr.mxu0 0.0
  %3870 = vmatpush2.msra.mxu0 0.0
  %3871 = vmatprep.mubr.f32.mxu0 0.0
  %3872 = vmatmul.mubr.f32.gmra.mxu0 %v3713
  %v3873 = vpop.f32.mrf.mxu0
  %v3874 = vadd.f32 %v3790, %v3873
  %v3875 = vpop.f32.mrf.mxu0
  %v3876 = vadd.f32 %v3794, %v3875
  %3877 = vmatprep.mubr.f32.mxu0 0.0
  %3878 = vmatmul.mubr.f32.gmra.mxu0 %v3714
  %v3879 = vpop.f32.mrf.mxu0
  %v3880 = vadd.f32 %v3790, %v3879
  %v3881 = vpop.f32.mrf.mxu0
  %v3882 = vadd.f32 %v3794, %v3881
  %3883 = vmatprep.mubr.f32.mxu0 0.0
  %3884 = vmatmul.mubr.f32.gmra.mxu0 %v3715
  %v3885 = vpop.f32.mrf.mxu0
  %v3886 = vadd.f32 %v3790, %v3885
  %v3887 = vpop.f32.mrf.mxu0
  %v3888 = vadd.f32 %v3794, %v3887
  %3889 = vmatprep.mubr.f32.mxu0 0.0
  %3890 = vmatmul.mubr.f32.gmra.mxu0 %v3716
  %v3891 = vpop.f32.mrf.mxu0
  %v3892 = vadd.f32 %v3790, %v3891
  %v3893 = vpop.f32.mrf.mxu0
  %v3894 = vadd.f32 %v3794, %v3893
  %3895 = vmatprep.mubr.f32.mxu0 0.0
  %3896 = vmatmul.mubr.f32.gmra.mxu0 %v3717
  %v3897 = vpop.f32.mrf.mxu0
  %v3898 = vadd.f32 %v3790, %v3897
  %v3899 = vpop.f32.mrf.mxu0
  %v3900 = vadd.f32 %v3794, %v3899
  %3901 = vmatprep.mubr.f32.mxu0 0.0
  %3902 = vmatmul.mubr.f32.gmra.mxu0 %v3718
  %v3903 = vpop.f32.mrf.mxu0
  %v3904 = vadd.f32 %v3790, %v3903
  %v3905 = vpop.f32.mrf.mxu0
  %v3906 = vadd.f32 %v3794, %v3905
  %3907 = vmatprep.mubr.f32.mxu0 0.0
  %3908 = vmatmul.mubr.f32.gmra.mxu0 %v3719
  %v3909 = vpop.f32.mrf.mxu0
  %v3910 = vadd.f32 %v3790, %v3909
  %v3911 = vpop.f32.mrf.mxu0
  %v3912 = vadd.f32 %v3794, %v3911
  %3913 = vmatprep.mubr.f32.mxu0 0.0
  %3914 = vmatmul.mubr.f32.gmra.mxu0 %v3720
  %v3915 = vpop.f32.mrf.mxu0
  %v3916 = vadd.f32 %v3790, %v3915
  %v3917 = vpop.f32.mrf.mxu0
  %v3918 = vadd.f32 %v3794, %v3917
  %3919 = vdwg.mxu0
  %3920 = vmatprep.subr.mxu0 %v3784
  %3921 = vmatpush1.msra.mxu0 %v3783
  %3922 = vmatprep.subr.mxu0 %v3780
  %3923 = vmatpush1.msra.mxu0 %v3779
  %3924 = vmatprep.subr.mxu0 %v3776
  %3925 = vmatpush1.msra.mxu0 %v3775
  %3926 = vmatprep.subr.mxu0 %v3772
  %3927 = vmatpush1.msra.mxu0 %v3771
  %3928 = vmatprep.subr.mxu0 %v3768
  %3929 = vmatpush1.msra.mxu0 %v3767
  %3930 = vmatprep.subr.mxu0 %v3764
  %3931 = vmatpush1.msra.mxu0 %v3763
  %3932 = vmatprep.subr.mxu0 %v3760
  %3933 = vmatpush1.msra.mxu0 %v3759
  %3934 = vmatprep.subr.mxu0 %v3756
  %3935 = vmatpush1.msra.mxu0 %v3755
  %3936 = vmatprep.subr.mxu0 %v3752
  %3937 = vmatpush1.msra.mxu0 %v3751
  %3938 = vmatprep.subr.mxu0 %v3748
  %3939 = vmatpush1.msra.mxu0 %v3747
  %3940 = vmatprep.subr.mxu0 %v3744
  %3941 = vmatpush1.msra.mxu0 %v3743
  %3942 = vmatprep.subr.mxu0 %v3740
  %3943 = vmatpush1.msra.mxu0 %v3739
  %3944 = vmatprep.subr.mxu0 %v3736
  %3945 = vmatpush1.msra.mxu0 %v3735
  %3946 = vmatprep.subr.mxu0 %v3732
  %3947 = vmatpush1.msra.mxu0 %v3731
  %3948 = vmatprep.subr.mxu0 %v3728
  %3949 = vmatpush1.msra.mxu0 %v3727
  %3950 = vmatprep.subr.mxu0 %v3724
  %3951 = vmatpush1.msra.mxu0 %v3723
  %3952 = vmatprep.subr.mxu0 0.0
  %3953 = vmatpush2.msra.mxu0 0.0
  %3954 = vmatprep.subr.mxu0 0.0
  %3955 = vmatpush2.msra.mxu0 0.0
  %3956 = vmatprep.subr.mxu0 0.0
  %3957 = vmatpush2.msra.mxu0 0.0
  %3958 = vmatprep.subr.mxu0 0.0
  %3959 = vmatpush2.msra.mxu0 0.0
  %3960 = vmatprep.subr.mxu0 0.0
  %3961 = vmatpush2.msra.mxu0 0.0
  %3962 = vmatprep.subr.mxu0 0.0
  %3963 = vmatpush2.msra.mxu0 0.0
  %3964 = vmatprep.subr.mxu0 0.0
  %3965 = vmatpush2.msra.mxu0 0.0
  %3966 = vmatprep.subr.mxu0 0.0
  %3967 = vmatpush2.msra.mxu0 0.0
  %3968 = vmatprep.subr.mxu0 0.0
  %3969 = vmatpush2.msra.mxu0 0.0
  %3970 = vmatprep.subr.mxu0 0.0
  %3971 = vmatpush2.msra.mxu0 0.0
  %3972 = vmatprep.subr.mxu0 0.0
  %3973 = vmatpush2.msra.mxu0 0.0
  %3974 = vmatprep.subr.mxu0 0.0
  %3975 = vmatpush2.msra.mxu0 0.0
  %3976 = vmatprep.subr.mxu0 0.0
  %3977 = vmatpush2.msra.mxu0 0.0
  %3978 = vmatprep.subr.mxu0 0.0
  %3979 = vmatpush2.msra.mxu0 0.0
  %3980 = vmatprep.subr.mxu0 0.0
  %3981 = vmatpush2.msra.mxu0 0.0
  %3982 = vmatprep.subr.mxu0 0.0
  %3983 = vmatpush2.msra.mxu0 0.0
  %3984 = vmatprep.mubr.f32.mxu0 0.0
  %3985 = vmatmul.mubr.f32.gmra.mxu0 %v3713
  %v3986 = vpop.f32.mrf.mxu0
  %v3987 = vadd.f32 %v3798, %v3986
  %v3988 = vpop.f32.mrf.mxu0
  %v3989 = vadd.f32 %v3802, %v3988
  %3990 = vmatprep.mubr.f32.mxu0 0.0
  %3991 = vmatmul.mubr.f32.gmra.mxu0 %v3714
  %v3992 = vpop.f32.mrf.mxu0
  %v3993 = vadd.f32 %v3798, %v3992
  %v3994 = vpop.f32.mrf.mxu0
  %v3995 = vadd.f32 %v3802, %v3994
  %3996 = vmatprep.mubr.f32.mxu0 0.0
  %3997 = vmatmul.mubr.f32.gmra.mxu0 %v3715
  %v3998 = vpop.f32.mrf.mxu0
  %v3999 = vadd.f32 %v3798, %v3998
  %v4000 = vpop.f32.mrf.mxu0
  %v4001 = vadd.f32 %v3802, %v4000
  %4002 = vmatprep.mubr.f32.mxu0 0.0
  %4003 = vmatmul.mubr.f32.gmra.mxu0 %v3716
  %v4004 = vpop.f32.mrf.mxu0
  %v4005 = vadd.f32 %v3798, %v4004
  %v4006 = vpop.f32.mrf.mxu0
  %v4007 = vadd.f32 %v3802, %v4006
  %4008 = vmatprep.mubr.f32.mxu0 0.0
  %4009 = vmatmul.mubr.f32.gmra.mxu0 %v3717
  %v4010 = vpop.f32.mrf.mxu0
  %v4011 = vadd.f32 %v3798, %v4010
  %v4012 = vpop.f32.mrf.mxu0
  %v4013 = vadd.f32 %v3802, %v4012
  %4014 = vmatprep.mubr.f32.mxu0 0.0
  %4015 = vmatmul.mubr.f32.gmra.mxu0 %v3718
  %v4016 = vpop.f32.mrf.mxu0
  %v4017 = vadd.f32 %v3798, %v4016
  %v4018 = vpop.f32.mrf.mxu0
  %v4019 = vadd.f32 %v3802, %v4018
  %4020 = vmatprep.mubr.f32.mxu0 0.0
  %4021 = vmatmul.mubr.f32.gmra.mxu0 %v3719
  %v4022 = vpop.f32.mrf.mxu0
  %v4023 = vadd.f32 %v3798, %v4022
  %v4024 = vpop.f32.mrf.mxu0
  %v4025 = vadd.f32 %v3802, %v4024
  %4026 = vmatprep.mubr.f32.mxu0 0.0
  %4027 = vmatmul.mubr.f32.gmra.mxu0 %v3720
  %v4028 = vpop.f32.mrf.mxu0
  %v4029 = vadd.f32 %v3798, %v4028
  %v4030 = vpop.f32.mrf.mxu0
  %v4031 = vadd.f32 %v3802, %v4030
  %4032 = vdwg.mxu0
  %4033 = vst [vmem:[#allocation2] sm:$0xff] %v3874
  %4034 = vst [vmem:[#allocation2 + $0x8] sm:$0xff] %v3876
  %4035 = vst [vmem:[#allocation2 + $0x10] sm:$0xff] %v3987
  %4036 = vst [vmem:[#allocation2 + $0x18] sm:$0xff] %v3989
  %4037 = vst [vmem:[#allocation2 + $0x20] sm:$0xff] %v3880
  %4038 = vst [vmem:[#allocation2 + $0x28] sm:$0xff] %v3882
  %4039 = vst [vmem:[#allocation2 + $0x30] sm:$0xff] %v3993
  %4040 = vst [vmem:[#allocation2 + $0x38] sm:$0xff] %v3995
  %4041 = vst [vmem:[#allocation2 + $0x40] sm:$0xff] %v3886
  %4042 = vst [vmem:[#allocation2 + $0x48] sm:$0xff] %v3888
  %4043 = vst [vmem:[#allocation2 + $0x50] sm:$0xff] %v3999
  %4044 = vst [vmem:[#allocation2 + $0x58] sm:$0xff] %v4001
  %4045 = vst [vmem:[#allocation2 + $0x60] sm:$0xff] %v3892
  %4046 = vst [vmem:[#allocation2 + $0x68] sm:$0xff] %v3894
  %4047 = vst [vmem:[#allocation2 + $0x70] sm:$0xff] %v4005
  %4048 = vst [vmem:[#allocation2 + $0x78] sm:$0xff] %v4007
  %4049 = vst [vmem:[#allocation2 + $0x80] sm:$0xff] %v3898
  %4050 = vst [vmem:[#allocation2 + $0x88] sm:$0xff] %v3900
  %4051 = vst [vmem:[#allocation2 + $0x90] sm:$0xff] %v4011
  %4052 = vst [vmem:[#allocation2 + $0x98] sm:$0xff] %v4013
  %4053 = vst [vmem:[#allocation2 + $0xa0] sm:$0xff] %v3904
  %4054 = vst [vmem:[#allocation2 + $0xa8] sm:$0xff] %v3906
  %4055 = vst [vmem:[#allocation2 + $0xb0] sm:$0xff] %v4017
  %4056 = vst [vmem:[#allocation2 + $0xb8] sm:$0xff] %v4019
  %4057 = vst [vmem:[#allocation2 + $0xc0] sm:$0xff] %v3910
  %4058 = vst [vmem:[#allocation2 + $0xc8] sm:$0xff] %v3912
  %4059 = vst [vmem:[#allocation2 + $0xd0] sm:$0xff] %v4023
  %4060 = vst [vmem:[#allocation2 + $0xd8] sm:$0xff] %v4025
  %4061 = vst [vmem:[#allocation2 + $0xe0] sm:$0xff] %v3916
  %4062 = vst [vmem:[#allocation2 + $0xe8] sm:$0xff] %v3918
  %4063 = vst [vmem:[#allocation2 + $0xf0] sm:$0xff] %v4029
  %4064 = vst [vmem:[#allocation2 + $0xf8] sm:$0xff] %v4031
  %v4065 = vld [vmem:[%s8] sm:$0xff]
  %v4066 = vld [vmem:[%s8 + $0x8] sm:$0xff]
  %v4067 = vld [vmem:[%s8 + $0x10] sm:$0xff]
  %v4068 = vld [vmem:[%s8 + $0x18] sm:$0xff]
  %v4069 = vld [vmem:[%s8 + $0x20] sm:$0xff]
  %v4070 = vld [vmem:[%s8 + $0x28] sm:$0xff]
  %v4071 = vld [vmem:[%s8 + $0x30] sm:$0xff]
  %v4072 = vld [vmem:[%s8 + $0x38] sm:$0xff]
  %v4073 = vld [vmem:[%s8 + $0x40] sm:$0xff]
  %v4074 = vld [vmem:[%s8 + $0x48] sm:$0xff]
  %v4075 = vld [vmem:[%s8 + $0x50] sm:$0xff]
  %v4076 = vld [vmem:[%s8 + $0x58] sm:$0xff]
  %v4077 = vld [vmem:[%s8 + $0x60] sm:$0xff]
  %v4078 = vld [vmem:[%s8 + $0x68] sm:$0xff]
  %v4079 = vld [vmem:[%s8 + $0x70] sm:$0xff]
  %v4080 = vld [vmem:[%s8 + $0x78] sm:$0xff]
  %v4081 = vld [vmem:[%s8 + $0x80] sm:$0xff]
  %v4082 = vld [vmem:[%s8 + $0x88] sm:$0xff]
  %v4083 = vld [vmem:[%s8 + $0x90] sm:$0xff]
  %v4084 = vld [vmem:[%s8 + $0x98] sm:$0xff]
  %v4085 = vld [vmem:[%s8 + $0xa0] sm:$0xff]
  %v4086 = vld [vmem:[%s8 + $0xa8] sm:$0xff]
  %v4087 = vld [vmem:[%s8 + $0xb0] sm:$0xff]
  %v4088 = vld [vmem:[%s8 + $0xb8] sm:$0xff]
  %v4089 = vld [vmem:[%s8 + $0xc0] sm:$0xff]
  %v4090 = vld [vmem:[%s8 + $0xc8] sm:$0xff]
  %v4091 = vld [vmem:[%s8 + $0xd0] sm:$0xff]
  %v4092 = vld [vmem:[%s8 + $0xd8] sm:$0xff]
  %v4093 = vld [vmem:[%s8 + $0xe0] sm:$0xff]
  %v4094 = vld [vmem:[%s8 + $0xe8] sm:$0xff]
  %v4095 = vld [vmem:[%s8 + $0xf0] sm:$0xff]
  %v4096 = vld [vmem:[%s8 + $0xf8] sm:$0xff]
  %v4097 = vld [vmem:[%s8 + $0x100] sm:$0xff]
  %v4098 = vld [vmem:[%s8 + $0x108] sm:$0xff]
  %v4099 = vld [vmem:[%s8 + $0x110] sm:$0xff]
  %v4100 = vld [vmem:[%s8 + $0x118] sm:$0xff]
  %v4101 = vld [vmem:[%s8 + $0x120] sm:$0xff]
  %v4102 = vld [vmem:[%s8 + $0x128] sm:$0xff]
  %v4103 = vld [vmem:[%s8 + $0x130] sm:$0xff]
  %v4104 = vld [vmem:[%s8 + $0x138] sm:$0xff]
  %v4105 = vld [vmem:[%s8 + $0x140] sm:$0xff]
  %v4106 = vld [vmem:[%s8 + $0x148] sm:$0xff]
  %v4107 = vld [vmem:[%s8 + $0x150] sm:$0xff]
  %v4108 = vld [vmem:[%s8 + $0x158] sm:$0xff]
  %v4109 = vld [vmem:[%s8 + $0x160] sm:$0xff]
  %v4110 = vld [vmem:[%s8 + $0x168] sm:$0xff]
  %v4111 = vld [vmem:[%s8 + $0x170] sm:$0xff]
  %v4112 = vld [vmem:[%s8 + $0x178] sm:$0xff]
  %v4113 = vld [vmem:[%s8 + $0x180] sm:$0xff]
  %v4114 = vld [vmem:[%s8 + $0x188] sm:$0xff]
  %v4115 = vld [vmem:[%s8 + $0x190] sm:$0xff]
  %v4116 = vld [vmem:[%s8 + $0x198] sm:$0xff]
  %v4117 = vld [vmem:[%s8 + $0x1a0] sm:$0xff]
  %v4118 = vld [vmem:[%s8 + $0x1a8] sm:$0xff]
  %v4119 = vld [vmem:[%s8 + $0x1b0] sm:$0xff]
  %v4120 = vld [vmem:[%s8 + $0x1b8] sm:$0xff]
  %v4121 = vld [vmem:[%s8 + $0x1c0] sm:$0xff]
  %v4122 = vld [vmem:[%s8 + $0x1c8] sm:$0xff]
  %v4123 = vld [vmem:[%s8 + $0x1d0] sm:$0xff]
  %v4124 = vld [vmem:[%s8 + $0x1d8] sm:$0xff]
  %v4125 = vld [vmem:[%s8 + $0x1e0] sm:$0xff]
  %v4126 = vld [vmem:[%s8 + $0x1e8] sm:$0xff]
  %v4127 = vld [vmem:[%s8 + $0x1f0] sm:$0xff]
  %v4128 = vld [vmem:[%s8 + $0x1f8] sm:$0xff]
  %v4129 = vld [vmem:[%s468] sm:$0xff]
  %v4130 = vld [vmem:[%s468 + $0x8] sm:$0xff]
  %v4131 = vld [vmem:[%s468 + $0x10] sm:$0xff]
  %v4132 = vld [vmem:[%s468 + $0x18] sm:$0xff]
  %4133 = vmatprep.subr.mxu0 %v4126
  %4134 = vmatpush1.msra.mxu0 %v4125
  %4135 = vmatprep.subr.mxu0 %v4122
  %4136 = vmatpush1.msra.mxu0 %v4121
  %4137 = vmatprep.subr.mxu0 %v4118
  %4138 = vmatpush1.msra.mxu0 %v4117
  %4139 = vmatprep.subr.mxu0 %v4114
  %4140 = vmatpush1.msra.mxu0 %v4113
  %4141 = vmatprep.subr.mxu0 %v4110
  %4142 = vmatpush1.msra.mxu0 %v4109
  %4143 = vmatprep.subr.mxu0 %v4106
  %4144 = vmatpush1.msra.mxu0 %v4105
  %4145 = vmatprep.subr.mxu0 %v4102
  %4146 = vmatpush1.msra.mxu0 %v4101
  %4147 = vmatprep.subr.mxu0 %v4098
  %4148 = vmatpush1.msra.mxu0 %v4097
  %4149 = vmatprep.subr.mxu0 %v4094
  %4150 = vmatpush1.msra.mxu0 %v4093
  %4151 = vmatprep.subr.mxu0 %v4090
  %4152 = vmatpush1.msra.mxu0 %v4089
  %4153 = vmatprep.subr.mxu0 %v4086
  %4154 = vmatpush1.msra.mxu0 %v4085
  %4155 = vmatprep.subr.mxu0 %v4082
  %4156 = vmatpush1.msra.mxu0 %v4081
  %4157 = vmatprep.subr.mxu0 %v4078
  %4158 = vmatpush1.msra.mxu0 %v4077
  %4159 = vmatprep.subr.mxu0 %v4074
  %4160 = vmatpush1.msra.mxu0 %v4073
  %4161 = vmatprep.subr.mxu0 %v4070
  %4162 = vmatpush1.msra.mxu0 %v4069
  %4163 = vmatprep.subr.mxu0 %v4066
  %4164 = vmatpush1.msra.mxu0 %v4065
  %4165 = vmatprep.subr.mxu0 0.0
  %4166 = vmatpush2.msra.mxu0 0.0
  %4167 = vmatprep.subr.mxu0 0.0
  %4168 = vmatpush2.msra.mxu0 0.0
  %4169 = vmatprep.subr.mxu0 0.0
  %4170 = vmatpush2.msra.mxu0 0.0
  %4171 = vmatprep.subr.mxu0 0.0
  %4172 = vmatpush2.msra.mxu0 0.0
  %4173 = vmatprep.subr.mxu0 0.0
  %4174 = vmatpush2.msra.mxu0 0.0
  %4175 = vmatprep.subr.mxu0 0.0
  %4176 = vmatpush2.msra.mxu0 0.0
  %4177 = vmatprep.subr.mxu0 0.0
  %4178 = vmatpush2.msra.mxu0 0.0
  %4179 = vmatprep.subr.mxu0 0.0
  %4180 = vmatpush2.msra.mxu0 0.0
  %4181 = vmatprep.subr.mxu0 0.0
  %4182 = vmatpush2.msra.mxu0 0.0
  %4183 = vmatprep.subr.mxu0 0.0
  %4184 = vmatpush2.msra.mxu0 0.0
  %4185 = vmatprep.subr.mxu0 0.0
  %4186 = vmatpush2.msra.mxu0 0.0
  %4187 = vmatprep.subr.mxu0 0.0
  %4188 = vmatpush2.msra.mxu0 0.0
  %4189 = vmatprep.subr.mxu0 0.0
  %4190 = vmatpush2.msra.mxu0 0.0
  %4191 = vmatprep.subr.mxu0 0.0
  %4192 = vmatpush2.msra.mxu0 0.0
  %4193 = vmatprep.subr.mxu0 0.0
  %4194 = vmatpush2.msra.mxu0 0.0
  %4195 = vmatprep.subr.mxu0 0.0
  %4196 = vmatpush2.msra.mxu0 0.0
  %4197 = vmatprep.mubr.f32.mxu0 0.0
  %4198 = vmatmul.mubr.f32.gmra.mxu0 0.0
  %v4199 = vpop.f32.mrf.mxu0
  %v4200 = vadd.f32 0.0, %v4199
  %v4201 = vpop.f32.mrf.mxu0
  %v4202 = vadd.f32 0.0, %v4201
  %4203 = vdwg.mxu0
  %4204 = vmatprep.subr.mxu0 %v4128
  %4205 = vmatpush1.msra.mxu0 %v4127
  %4206 = vmatprep.subr.mxu0 %v4124
  %4207 = vmatpush1.msra.mxu0 %v4123
  %4208 = vmatprep.subr.mxu0 %v4120
  %4209 = vmatpush1.msra.mxu0 %v4119
  %4210 = vmatprep.subr.mxu0 %v4116
  %4211 = vmatpush1.msra.mxu0 %v4115
  %4212 = vmatprep.subr.mxu0 %v4112
  %4213 = vmatpush1.msra.mxu0 %v4111
  %4214 = vmatprep.subr.mxu0 %v4108
  %4215 = vmatpush1.msra.mxu0 %v4107
  %4216 = vmatprep.subr.mxu0 %v4104
  %4217 = vmatpush1.msra.mxu0 %v4103
  %4218 = vmatprep.subr.mxu0 %v4100
  %4219 = vmatpush1.msra.mxu0 %v4099
  %4220 = vmatprep.subr.mxu0 %v4096
  %4221 = vmatpush1.msra.mxu0 %v4095
  %4222 = vmatprep.subr.mxu0 %v4092
  %4223 = vmatpush1.msra.mxu0 %v4091
  %4224 = vmatprep.subr.mxu0 %v4088
  %4225 = vmatpush1.msra.mxu0 %v4087
  %4226 = vmatprep.subr.mxu0 %v4084
  %4227 = vmatpush1.msra.mxu0 %v4083
  %4228 = vmatprep.subr.mxu0 %v4080
  %4229 = vmatpush1.msra.mxu0 %v4079
  %4230 = vmatprep.subr.mxu0 %v4076
  %4231 = vmatpush1.msra.mxu0 %v4075
  %4232 = vmatprep.subr.mxu0 %v4072
  %4233 = vmatpush1.msra.mxu0 %v4071
  %4234 = vmatprep.subr.mxu0 %v4068
  %4235 = vmatpush1.msra.mxu0 %v4067
  %4236 = vmatprep.subr.mxu0 0.0
  %4237 = vmatpush2.msra.mxu0 0.0
  %4238 = vmatprep.subr.mxu0 0.0
  %4239 = vmatpush2.msra.mxu0 0.0
  %4240 = vmatprep.subr.mxu0 0.0
  %4241 = vmatpush2.msra.mxu0 0.0
  %4242 = vmatprep.subr.mxu0 0.0
  %4243 = vmatpush2.msra.mxu0 0.0
  %4244 = vmatprep.subr.mxu0 0.0
  %4245 = vmatpush2.msra.mxu0 0.0
  %4246 = vmatprep.subr.mxu0 0.0
  %4247 = vmatpush2.msra.mxu0 0.0
  %4248 = vmatprep.subr.mxu0 0.0
  %4249 = vmatpush2.msra.mxu0 0.0
  %4250 = vmatprep.subr.mxu0 0.0
  %4251 = vmatpush2.msra.mxu0 0.0
  %4252 = vmatprep.subr.mxu0 0.0
  %4253 = vmatpush2.msra.mxu0 0.0
  %4254 = vmatprep.subr.mxu0 0.0
  %4255 = vmatpush2.msra.mxu0 0.0
  %4256 = vmatprep.subr.mxu0 0.0
  %4257 = vmatpush2.msra.mxu0 0.0
  %4258 = vmatprep.subr.mxu0 0.0
  %4259 = vmatpush2.msra.mxu0 0.0
  %4260 = vmatprep.subr.mxu0 0.0
  %4261 = vmatpush2.msra.mxu0 0.0
  %4262 = vmatprep.subr.mxu0 0.0
  %4263 = vmatpush2.msra.mxu0 0.0
  %4264 = vmatprep.subr.mxu0 0.0
  %4265 = vmatpush2.msra.mxu0 0.0
  %4266 = vmatprep.subr.mxu0 0.0
  %4267 = vmatpush2.msra.mxu0 0.0
  %4268 = vmatprep.mubr.f32.mxu0 0.0
  %4269 = vmatmul.mubr.f32.gmra.mxu0 0.0
  %v4270 = vpop.f32.mrf.mxu0
  %v4271 = vadd.f32 0.0, %v4270
  %v4272 = vpop.f32.mrf.mxu0
  %v4273 = vadd.f32 0.0, %v4272
  %4274 = vdwg.mxu0
  %v4275 = vadd.f32 %v4129, %v4200
  %v4276 = vadd.f32 %v4130, %v4202
  %v4277 = vadd.f32 %v4131, %v4271
  %v4278 = vadd.f32 %v4132, %v4273
  %v4279 = vxor.u32 %v4275, 2147483648
  %v4280 = vmul.f32 %v4279, 1.442695
  %v4281 = vpow.pop %v4280
  %v4282 = vadd.f32 %v4281, 1.0
  %v4283 = vrcp.pop %v4282
  %v4284 = vmul.f32 1.0, %v4283
  %v4285 = vxor.u32 %v4276, 2147483648
  %v4286 = vmul.f32 %v4285, 1.442695
  %v4287 = vpow.pop %v4286
  %v4288 = vadd.f32 %v4287, 1.0
  %v4289 = vrcp.pop %v4288
  %v4290 = vmul.f32 1.0, %v4289
  %v4291 = vtanh.pop %v4277
  %v4292 = vxor.u32 %v4278, 2147483648
  %v4293 = vmul.f32 %v4292, 1.442695
  %v4294 = vpow.pop %v4293
  %v4295 = vadd.f32 %v4294, 1.0
  %v4296 = vrcp.pop %v4295
  %v4297 = vmul.f32 1.0, %v4296
  %v4298 = vmul.f32 %v4290, 0.0
  %v4299 = vmul.f32 %v4284, %v4291
  %v4300 = vadd.f32 %v4298, %v4299
  %v4301 = vtanh.pop %v4300
  %v4302 = vmul.f32 %v4297, %v4301
  %4303 = vst [vmem:[#allocation3] sm:$0xff] %v4302
  %v4304 = vld [vmem:[%s646] sm:$0xff]
  %v4305 = vld [vmem:[%s646 + $0x8] sm:$0xff]
  %v4306 = vld [vmem:[%s646 + $0x10] sm:$0xff]
  %v4307 = vld [vmem:[%s646 + $0x18] sm:$0xff]
  %4308 = vmatprep.subr.mxu0 %v4126
  %4309 = vmatpush1.msra.mxu0 %v4125
  %4310 = vmatprep.subr.mxu0 %v4122
  %4311 = vmatpush1.msra.mxu0 %v4121
  %4312 = vmatprep.subr.mxu0 %v4118
  %4313 = vmatpush1.msra.mxu0 %v4117
  %4314 = vmatprep.subr.mxu0 %v4114
  %4315 = vmatpush1.msra.mxu0 %v4113
  %4316 = vmatprep.subr.mxu0 %v4110
  %4317 = vmatpush1.msra.mxu0 %v4109
  %4318 = vmatprep.subr.mxu0 %v4106
  %4319 = vmatpush1.msra.mxu0 %v4105
  %4320 = vmatprep.subr.mxu0 %v4102
  %4321 = vmatpush1.msra.mxu0 %v4101
  %4322 = vmatprep.subr.mxu0 %v4098
  %4323 = vmatpush1.msra.mxu0 %v4097
  %4324 = vmatprep.subr.mxu0 %v4094
  %4325 = vmatpush1.msra.mxu0 %v4093
  %4326 = vmatprep.subr.mxu0 %v4090
  %4327 = vmatpush1.msra.mxu0 %v4089
  %4328 = vmatprep.subr.mxu0 %v4086
  %4329 = vmatpush1.msra.mxu0 %v4085
  %4330 = vmatprep.subr.mxu0 %v4082
  %4331 = vmatpush1.msra.mxu0 %v4081
  %4332 = vmatprep.subr.mxu0 %v4078
  %4333 = vmatpush1.msra.mxu0 %v4077
  %4334 = vmatprep.subr.mxu0 %v4074
  %4335 = vmatpush1.msra.mxu0 %v4073
  %4336 = vmatprep.subr.mxu0 %v4070
  %4337 = vmatpush1.msra.mxu0 %v4069
  %4338 = vmatprep.subr.mxu0 %v4066
  %4339 = vmatpush1.msra.mxu0 %v4065
  %4340 = vmatprep.subr.mxu0 0.0
  %4341 = vmatpush2.msra.mxu0 0.0
  %4342 = vmatprep.subr.mxu0 0.0
  %4343 = vmatpush2.msra.mxu0 0.0
  %4344 = vmatprep.subr.mxu0 0.0
  %4345 = vmatpush2.msra.mxu0 0.0
  %4346 = vmatprep.subr.mxu0 0.0
  %4347 = vmatpush2.msra.mxu0 0.0
  %4348 = vmatprep.subr.mxu0 0.0
  %4349 = vmatpush2.msra.mxu0 0.0
  %4350 = vmatprep.subr.mxu0 0.0
  %4351 = vmatpush2.msra.mxu0 0.0
  %4352 = vmatprep.subr.mxu0 0.0
  %4353 = vmatpush2.msra.mxu0 0.0
  %4354 = vmatprep.subr.mxu0 0.0
  %4355 = vmatpush2.msra.mxu0 0.0
  %4356 = vmatprep.subr.mxu0 0.0
  %4357 = vmatpush2.msra.mxu0 0.0
  %4358 = vmatprep.subr.mxu0 0.0
  %4359 = vmatpush2.msra.mxu0 0.0
  %4360 = vmatprep.subr.mxu0 0.0
  %4361 = vmatpush2.msra.mxu0 0.0
  %4362 = vmatprep.subr.mxu0 0.0
  %4363 = vmatpush2.msra.mxu0 0.0
  %4364 = vmatprep.subr.mxu0 0.0
  %4365 = vmatpush2.msra.mxu0 0.0
  %4366 = vmatprep.subr.mxu0 0.0
  %4367 = vmatpush2.msra.mxu0 0.0
  %4368 = vmatprep.subr.mxu0 0.0
  %4369 = vmatpush2.msra.mxu0 0.0
  %4370 = vmatprep.subr.mxu0 0.0
  %4371 = vmatpush2.msra.mxu0 0.0
  %4372 = vmatprep.mubr.f32.mxu0 0.0
  %4373 = vmatmul.mubr.f32.gmra.mxu0 %v4302
  %v4374 = vpop.f32.mrf.mxu0
  %v4375 = vadd.f32 0.0, %v4374
  %v4376 = vpop.f32.mrf.mxu0
  %v4377 = vadd.f32 0.0, %v4376
  %4378 = vdwg.mxu0
  %4379 = vmatprep.subr.mxu0 %v4128
  %4380 = vmatpush1.msra.mxu0 %v4127
  %4381 = vmatprep.subr.mxu0 %v4124
  %4382 = vmatpush1.msra.mxu0 %v4123
  %4383 = vmatprep.subr.mxu0 %v4120
  %4384 = vmatpush1.msra.mxu0 %v4119
  %4385 = vmatprep.subr.mxu0 %v4116
  %4386 = vmatpush1.msra.mxu0 %v4115
  %4387 = vmatprep.subr.mxu0 %v4112
  %4388 = vmatpush1.msra.mxu0 %v4111
  %4389 = vmatprep.subr.mxu0 %v4108
  %4390 = vmatpush1.msra.mxu0 %v4107
  %4391 = vmatprep.subr.mxu0 %v4104
  %4392 = vmatpush1.msra.mxu0 %v4103
  %4393 = vmatprep.subr.mxu0 %v4100
  %4394 = vmatpush1.msra.mxu0 %v4099
  %4395 = vmatprep.subr.mxu0 %v4096
  %4396 = vmatpush1.msra.mxu0 %v4095
  %4397 = vmatprep.subr.mxu0 %v4092
  %4398 = vmatpush1.msra.mxu0 %v4091
  %4399 = vmatprep.subr.mxu0 %v4088
  %4400 = vmatpush1.msra.mxu0 %v4087
  %4401 = vmatprep.subr.mxu0 %v4084
  %4402 = vmatpush1.msra.mxu0 %v4083
  %4403 = vmatprep.subr.mxu0 %v4080
  %4404 = vmatpush1.msra.mxu0 %v4079
  %4405 = vmatprep.subr.mxu0 %v4076
  %4406 = vmatpush1.msra.mxu0 %v4075
  %4407 = vmatprep.subr.mxu0 %v4072
  %4408 = vmatpush1.msra.mxu0 %v4071
  %4409 = vmatprep.subr.mxu0 %v4068
  %4410 = vmatpush1.msra.mxu0 %v4067
  %4411 = vmatprep.subr.mxu0 0.0
  %4412 = vmatpush2.msra.mxu0 0.0
  %4413 = vmatprep.subr.mxu0 0.0
  %4414 = vmatpush2.msra.mxu0 0.0
  %4415 = vmatprep.subr.mxu0 0.0
  %4416 = vmatpush2.msra.mxu0 0.0
  %4417 = vmatprep.subr.mxu0 0.0
  %4418 = vmatpush2.msra.mxu0 0.0
  %4419 = vmatprep.subr.mxu0 0.0
  %4420 = vmatpush2.msra.mxu0 0.0
  %4421 = vmatprep.subr.mxu0 0.0
  %4422 = vmatpush2.msra.mxu0 0.0
  %4423 = vmatprep.subr.mxu0 0.0
  %4424 = vmatpush2.msra.mxu0 0.0
  %4425 = vmatprep.subr.mxu0 0.0
  %4426 = vmatpush2.msra.mxu0 0.0
  %4427 = vmatprep.subr.mxu0 0.0
  %4428 = vmatpush2.msra.mxu0 0.0
  %4429 = vmatprep.subr.mxu0 0.0
  %4430 = vmatpush2.msra.mxu0 0.0
  %4431 = vmatprep.subr.mxu0 0.0
  %4432 = vmatpush2.msra.mxu0 0.0
  %4433 = vmatprep.subr.mxu0 0.0
  %4434 = vmatpush2.msra.mxu0 0.0
  %4435 = vmatprep.subr.mxu0 0.0
  %4436 = vmatpush2.msra.mxu0 0.0
  %4437 = vmatprep.subr.mxu0 0.0
  %4438 = vmatpush2.msra.mxu0 0.0
  %4439 = vmatprep.subr.mxu0 0.0
  %4440 = vmatpush2.msra.mxu0 0.0
  %4441 = vmatprep.subr.mxu0 0.0
  %4442 = vmatpush2.msra.mxu0 0.0
  %4443 = vmatprep.mubr.f32.mxu0 0.0
  %4444 = vmatmul.mubr.f32.gmra.mxu0 %v4302
  %v4445 = vpop.f32.mrf.mxu0
  %v4446 = vadd.f32 0.0, %v4445
  %v4447 = vpop.f32.mrf.mxu0
  %v4448 = vadd.f32 0.0, %v4447
  %4449 = vdwg.mxu0
  %v4450 = vadd.f32 %v4304, %v4375
  %v4451 = vadd.f32 %v4305, %v4377
  %v4452 = vadd.f32 %v4306, %v4446
  %v4453 = vadd.f32 %v4307, %v4448
  %v4454 = vxor.u32 %v4450, 2147483648
  %v4455 = vmul.f32 %v4454, 1.442695
  %v4456 = vpow.pop %v4455
  %v4457 = vadd.f32 %v4456, 1.0
  %v4458 = vrcp.pop %v4457
  %v4459 = vmul.f32 1.0, %v4458
  %v4460 = vxor.u32 %v4451, 2147483648
  %v4461 = vmul.f32 %v4460, 1.442695
  %v4462 = vpow.pop %v4461
  %v4463 = vadd.f32 %v4462, 1.0
  %v4464 = vrcp.pop %v4463
  %v4465 = vmul.f32 1.0, %v4464
  %v4466 = vtanh.pop %v4452
  %v4467 = vxor.u32 %v4453, 2147483648
  %v4468 = vmul.f32 %v4467, 1.442695
  %v4469 = vpow.pop %v4468
  %v4470 = vadd.f32 %v4469, 1.0
  %v4471 = vrcp.pop %v4470
  %v4472 = vmul.f32 1.0, %v4471
  %v4473 = vmul.f32 %v4465, %v4300
  %v4474 = vmul.f32 %v4459, %v4466
  %v4475 = vadd.f32 %v4473, %v4474
  %v4476 = vtanh.pop %v4475
  %v4477 = vmul.f32 %v4472, %v4476
  %4478 = vst [vmem:[%s821] sm:$0xff] %v4477
  %v4479 = vld [vmem:[%s825] sm:$0xff]
  %v4480 = vld [vmem:[%s825 + $0x8] sm:$0xff]
  %v4481 = vld [vmem:[%s825 + $0x10] sm:$0xff]
  %v4482 = vld [vmem:[%s825 + $0x18] sm:$0xff]
  %4483 = vmatprep.subr.mxu0 %v4126
  %4484 = vmatpush1.msra.mxu0 %v4125
  %4485 = vmatprep.subr.mxu0 %v4122
  %4486 = vmatpush1.msra.mxu0 %v4121
  %4487 = vmatprep.subr.mxu0 %v4118
  %4488 = vmatpush1.msra.mxu0 %v4117
  %4489 = vmatprep.subr.mxu0 %v4114
  %4490 = vmatpush1.msra.mxu0 %v4113
  %4491 = vmatprep.subr.mxu0 %v4110
  %4492 = vmatpush1.msra.mxu0 %v4109
  %4493 = vmatprep.subr.mxu0 %v4106
  %4494 = vmatpush1.msra.mxu0 %v4105
  %4495 = vmatprep.subr.mxu0 %v4102
  %4496 = vmatpush1.msra.mxu0 %v4101
  %4497 = vmatprep.subr.mxu0 %v4098
  %4498 = vmatpush1.msra.mxu0 %v4097
  %4499 = vmatprep.subr.mxu0 %v4094
  %4500 = vmatpush1.msra.mxu0 %v4093
  %4501 = vmatprep.subr.mxu0 %v4090
  %4502 = vmatpush1.msra.mxu0 %v4089
  %4503 = vmatprep.subr.mxu0 %v4086
  %4504 = vmatpush1.msra.mxu0 %v4085
  %4505 = vmatprep.subr.mxu0 %v4082
  %4506 = vmatpush1.msra.mxu0 %v4081
  %4507 = vmatprep.subr.mxu0 %v4078
  %4508 = vmatpush1.msra.mxu0 %v4077
  %4509 = vmatprep.subr.mxu0 %v4074
  %4510 = vmatpush1.msra.mxu0 %v4073
  %4511 = vmatprep.subr.mxu0 %v4070
  %4512 = vmatpush1.msra.mxu0 %v4069
  %4513 = vmatprep.subr.mxu0 %v4066
  %4514 = vmatpush1.msra.mxu0 %v4065
  %4515 = vmatprep.subr.mxu0 0.0
  %4516 = vmatpush2.msra.mxu0 0.0
  %4517 = vmatprep.subr.mxu0 0.0
  %4518 = vmatpush2.msra.mxu0 0.0
  %4519 = vmatprep.subr.mxu0 0.0
  %4520 = vmatpush2.msra.mxu0 0.0
  %4521 = vmatprep.subr.mxu0 0.0
  %4522 = vmatpush2.msra.mxu0 0.0
  %4523 = vmatprep.subr.mxu0 0.0
  %4524 = vmatpush2.msra.mxu0 0.0
  %4525 = vmatprep.subr.mxu0 0.0
  %4526 = vmatpush2.msra.mxu0 0.0
  %4527 = vmatprep.subr.mxu0 0.0
  %4528 = vmatpush2.msra.mxu0 0.0
  %4529 = vmatprep.subr.mxu0 0.0
  %4530 = vmatpush2.msra.mxu0 0.0
  %4531 = vmatprep.subr.mxu0 0.0
  %4532 = vmatpush2.msra.mxu0 0.0
  %4533 = vmatprep.subr.mxu0 0.0
  %4534 = vmatpush2.msra.mxu0 0.0
  %4535 = vmatprep.subr.mxu0 0.0
  %4536 = vmatpush2.msra.mxu0 0.0
  %4537 = vmatprep.subr.mxu0 0.0
  %4538 = vmatpush2.msra.mxu0 0.0
  %4539 = vmatprep.subr.mxu0 0.0
  %4540 = vmatpush2.msra.mxu0 0.0
  %4541 = vmatprep.subr.mxu0 0.0
  %4542 = vmatpush2.msra.mxu0 0.0
  %4543 = vmatprep.subr.mxu0 0.0
  %4544 = vmatpush2.msra.mxu0 0.0
  %4545 = vmatprep.subr.mxu0 0.0
  %4546 = vmatpush2.msra.mxu0 0.0
  %4547 = vmatprep.mubr.f32.mxu0 0.0
  %4548 = vmatmul.mubr.f32.gmra.mxu0 %v4477
  %v4549 = vpop.f32.mrf.mxu0
  %v4550 = vadd.f32 0.0, %v4549
  %v4551 = vpop.f32.mrf.mxu0
  %v4552 = vadd.f32 0.0, %v4551
  %4553 = vdwg.mxu0
  %4554 = vmatprep.subr.mxu0 %v4128
  %4555 = vmatpush1.msra.mxu0 %v4127
  %4556 = vmatprep.subr.mxu0 %v4124
  %4557 = vmatpush1.msra.mxu0 %v4123
  %4558 = vmatprep.subr.mxu0 %v4120
  %4559 = vmatpush1.msra.mxu0 %v4119
  %4560 = vmatprep.subr.mxu0 %v4116
  %4561 = vmatpush1.msra.mxu0 %v4115
  %4562 = vmatprep.subr.mxu0 %v4112
  %4563 = vmatpush1.msra.mxu0 %v4111
  %4564 = vmatprep.subr.mxu0 %v4108
  %4565 = vmatpush1.msra.mxu0 %v4107
  %4566 = vmatprep.subr.mxu0 %v4104
  %4567 = vmatpush1.msra.mxu0 %v4103
  %4568 = vmatprep.subr.mxu0 %v4100
  %4569 = vmatpush1.msra.mxu0 %v4099
  %4570 = vmatprep.subr.mxu0 %v4096
  %4571 = vmatpush1.msra.mxu0 %v4095
  %4572 = vmatprep.subr.mxu0 %v4092
  %4573 = vmatpush1.msra.mxu0 %v4091
  %4574 = vmatprep.subr.mxu0 %v4088
  %4575 = vmatpush1.msra.mxu0 %v4087
  %4576 = vmatprep.subr.mxu0 %v4084
  %4577 = vmatpush1.msra.mxu0 %v4083
  %4578 = vmatprep.subr.mxu0 %v4080
  %4579 = vmatpush1.msra.mxu0 %v4079
  %4580 = vmatprep.subr.mxu0 %v4076
  %4581 = vmatpush1.msra.mxu0 %v4075
  %4582 = vmatprep.subr.mxu0 %v4072
  %4583 = vmatpush1.msra.mxu0 %v4071
  %4584 = vmatprep.subr.mxu0 %v4068
  %4585 = vmatpush1.msra.mxu0 %v4067
  %4586 = vmatprep.subr.mxu0 0.0
  %4587 = vmatpush2.msra.mxu0 0.0
  %4588 = vmatprep.subr.mxu0 0.0
  %4589 = vmatpush2.msra.mxu0 0.0
  %4590 = vmatprep.subr.mxu0 0.0
  %4591 = vmatpush2.msra.mxu0 0.0
  %4592 = vmatprep.subr.mxu0 0.0
  %4593 = vmatpush2.msra.mxu0 0.0
  %4594 = vmatprep.subr.mxu0 0.0
  %4595 = vmatpush2.msra.mxu0 0.0
  %4596 = vmatprep.subr.mxu0 0.0
  %4597 = vmatpush2.msra.mxu0 0.0
  %4598 = vmatprep.subr.mxu0 0.0
  %4599 = vmatpush2.msra.mxu0 0.0
  %4600 = vmatprep.subr.mxu0 0.0
  %4601 = vmatpush2.msra.mxu0 0.0
  %4602 = vmatprep.subr.mxu0 0.0
  %4603 = vmatpush2.msra.mxu0 0.0
  %4604 = vmatprep.subr.mxu0 0.0
  %4605 = vmatpush2.msra.mxu0 0.0
  %4606 = vmatprep.subr.mxu0 0.0
  %4607 = vmatpush2.msra.mxu0 0.0
  %4608 = vmatprep.subr.mxu0 0.0
  %4609 = vmatpush2.msra.mxu0 0.0
  %4610 = vmatprep.subr.mxu0 0.0
  %4611 = vmatpush2.msra.mxu0 0.0
  %4612 = vmatprep.subr.mxu0 0.0
  %4613 = vmatpush2.msra.mxu0 0.0
  %4614 = vmatprep.subr.mxu0 0.0
  %4615 = vmatpush2.msra.mxu0 0.0
  %4616 = vmatprep.subr.mxu0 0.0
  %4617 = vmatpush2.msra.mxu0 0.0
  %4618 = vmatprep.mubr.f32.mxu0 0.0
  %4619 = vmatmul.mubr.f32.gmra.mxu0 %v4477
  %v4620 = vpop.f32.mrf.mxu0
  %v4621 = vadd.f32 0.0, %v4620
  %v4622 = vpop.f32.mrf.mxu0
  %v4623 = vadd.f32 0.0, %v4622
  %4624 = vdwg.mxu0
  %v4625 = vadd.f32 %v4479, %v4550
  %v4626 = vadd.f32 %v4480, %v4552
  %v4627 = vadd.f32 %v4481, %v4621
  %v4628 = vadd.f32 %v4482, %v4623
  %v4629 = vxor.u32 %v4625, 2147483648
  %v4630 = vmul.f32 %v4629, 1.442695
  %v4631 = vpow.pop %v4630
  %v4632 = vadd.f32 %v4631, 1.0
  %v4633 = vrcp.pop %v4632
  %v4634 = vmul.f32 1.0, %v4633
  %v4635 = vxor.u32 %v4626, 2147483648
  %v4636 = vmul.f32 %v4635, 1.442695
  %v4637 = vpow.pop %v4636
  %v4638 = vadd.f32 %v4637, 1.0
  %v4639 = vrcp.pop %v4638
  %v4640 = vmul.f32 1.0, %v4639
  %v4641 = vtanh.pop %v4627
  %v4642 = vxor.u32 %v4628, 2147483648
  %v4643 = vmul.f32 %v4642, 1.442695
  %v4644 = vpow.pop %v4643
  %v4645 = vadd.f32 %v4644, 1.0
  %v4646 = vrcp.pop %v4645
  %v4647 = vmul.f32 1.0, %v4646
  %v4648 = vmul.f32 %v4640, %v4475
  %v4649 = vmul.f32 %v4634, %v4641
  %v4650 = vadd.f32 %v4648, %v4649
  %v4651 = vtanh.pop %v4650
  %v4652 = vmul.f32 %v4647, %v4651
  %4653 = vst [vmem:[%s1000] sm:$0xff] %v4652
  %v4654 = vld [vmem:[%s1004] sm:$0xff]
  %v4655 = vld [vmem:[%s1004 + $0x8] sm:$0xff]
  %v4656 = vld [vmem:[%s1004 + $0x10] sm:$0xff]
  %v4657 = vld [vmem:[%s1004 + $0x18] sm:$0xff]
  %4658 = vmatprep.subr.mxu0 %v4126
  %4659 = vmatpush1.msra.mxu0 %v4125
  %4660 = vmatprep.subr.mxu0 %v4122
  %4661 = vmatpush1.msra.mxu0 %v4121
  %4662 = vmatprep.subr.mxu0 %v4118
  %4663 = vmatpush1.msra.mxu0 %v4117
  %4664 = vmatprep.subr.mxu0 %v4114
  %4665 = vmatpush1.msra.mxu0 %v4113
  %4666 = vmatprep.subr.mxu0 %v4110
  %4667 = vmatpush1.msra.mxu0 %v4109
  %4668 = vmatprep.subr.mxu0 %v4106
  %4669 = vmatpush1.msra.mxu0 %v4105
  %4670 = vmatprep.subr.mxu0 %v4102
  %4671 = vmatpush1.msra.mxu0 %v4101
  %4672 = vmatprep.subr.mxu0 %v4098
  %4673 = vmatpush1.msra.mxu0 %v4097
  %4674 = vmatprep.subr.mxu0 %v4094
  %4675 = vmatpush1.msra.mxu0 %v4093
  %4676 = vmatprep.subr.mxu0 %v4090
  %4677 = vmatpush1.msra.mxu0 %v4089
  %4678 = vmatprep.subr.mxu0 %v4086
  %4679 = vmatpush1.msra.mxu0 %v4085
  %4680 = vmatprep.subr.mxu0 %v4082
  %4681 = vmatpush1.msra.mxu0 %v4081
  %4682 = vmatprep.subr.mxu0 %v4078
  %4683 = vmatpush1.msra.mxu0 %v4077
  %4684 = vmatprep.subr.mxu0 %v4074
  %4685 = vmatpush1.msra.mxu0 %v4073
  %4686 = vmatprep.subr.mxu0 %v4070
  %4687 = vmatpush1.msra.mxu0 %v4069
  %4688 = vmatprep.subr.mxu0 %v4066
  %4689 = vmatpush1.msra.mxu0 %v4065
  %4690 = vmatprep.subr.mxu0 0.0
  %4691 = vmatpush2.msra.mxu0 0.0
  %4692 = vmatprep.subr.mxu0 0.0
  %4693 = vmatpush2.msra.mxu0 0.0
  %4694 = vmatprep.subr.mxu0 0.0
  %4695 = vmatpush2.msra.mxu0 0.0
  %4696 = vmatprep.subr.mxu0 0.0
  %4697 = vmatpush2.msra.mxu0 0.0
  %4698 = vmatprep.subr.mxu0 0.0
  %4699 = vmatpush2.msra.mxu0 0.0
  %4700 = vmatprep.subr.mxu0 0.0
  %4701 = vmatpush2.msra.mxu0 0.0
  %4702 = vmatprep.subr.mxu0 0.0
  %4703 = vmatpush2.msra.mxu0 0.0
  %4704 = vmatprep.subr.mxu0 0.0
  %4705 = vmatpush2.msra.mxu0 0.0
  %4706 = vmatprep.subr.mxu0 0.0
  %4707 = vmatpush2.msra.mxu0 0.0
  %4708 = vmatprep.subr.mxu0 0.0
  %4709 = vmatpush2.msra.mxu0 0.0
  %4710 = vmatprep.subr.mxu0 0.0
  %4711 = vmatpush2.msra.mxu0 0.0
  %4712 = vmatprep.subr.mxu0 0.0
  %4713 = vmatpush2.msra.mxu0 0.0
  %4714 = vmatprep.subr.mxu0 0.0
  %4715 = vmatpush2.msra.mxu0 0.0
  %4716 = vmatprep.subr.mxu0 0.0
  %4717 = vmatpush2.msra.mxu0 0.0
  %4718 = vmatprep.subr.mxu0 0.0
  %4719 = vmatpush2.msra.mxu0 0.0
  %4720 = vmatprep.subr.mxu0 0.0
  %4721 = vmatpush2.msra.mxu0 0.0
  %4722 = vmatprep.mubr.f32.mxu0 0.0
  %4723 = vmatmul.mubr.f32.gmra.mxu0 %v4652
  %v4724 = vpop.f32.mrf.mxu0
  %v4725 = vadd.f32 0.0, %v4724
  %v4726 = vpop.f32.mrf.mxu0
  %v4727 = vadd.f32 0.0, %v4726
  %4728 = vdwg.mxu0
  %4729 = vmatprep.subr.mxu0 %v4128
  %4730 = vmatpush1.msra.mxu0 %v4127
  %4731 = vmatprep.subr.mxu0 %v4124
  %4732 = vmatpush1.msra.mxu0 %v4123
  %4733 = vmatprep.subr.mxu0 %v4120
  %4734 = vmatpush1.msra.mxu0 %v4119
  %4735 = vmatprep.subr.mxu0 %v4116
  %4736 = vmatpush1.msra.mxu0 %v4115
  %4737 = vmatprep.subr.mxu0 %v4112
  %4738 = vmatpush1.msra.mxu0 %v4111
  %4739 = vmatprep.subr.mxu0 %v4108
  %4740 = vmatpush1.msra.mxu0 %v4107
  %4741 = vmatprep.subr.mxu0 %v4104
  %4742 = vmatpush1.msra.mxu0 %v4103
  %4743 = vmatprep.subr.mxu0 %v4100
  %4744 = vmatpush1.msra.mxu0 %v4099
  %4745 = vmatprep.subr.mxu0 %v4096
  %4746 = vmatpush1.msra.mxu0 %v4095
  %4747 = vmatprep.subr.mxu0 %v4092
  %4748 = vmatpush1.msra.mxu0 %v4091
  %4749 = vmatprep.subr.mxu0 %v4088
  %4750 = vmatpush1.msra.mxu0 %v4087
  %4751 = vmatprep.subr.mxu0 %v4084
  %4752 = vmatpush1.msra.mxu0 %v4083
  %4753 = vmatprep.subr.mxu0 %v4080
  %4754 = vmatpush1.msra.mxu0 %v4079
  %4755 = vmatprep.subr.mxu0 %v4076
  %4756 = vmatpush1.msra.mxu0 %v4075
  %4757 = vmatprep.subr.mxu0 %v4072
  %4758 = vmatpush1.msra.mxu0 %v4071
  %4759 = vmatprep.subr.mxu0 %v4068
  %4760 = vmatpush1.msra.mxu0 %v4067
  %4761 = vmatprep.subr.mxu0 0.0
  %4762 = vmatpush2.msra.mxu0 0.0
  %4763 = vmatprep.subr.mxu0 0.0
  %4764 = vmatpush2.msra.mxu0 0.0
  %4765 = vmatprep.subr.mxu0 0.0
  %4766 = vmatpush2.msra.mxu0 0.0
  %4767 = vmatprep.subr.mxu0 0.0
  %4768 = vmatpush2.msra.mxu0 0.0
  %4769 = vmatprep.subr.mxu0 0.0
  %4770 = vmatpush2.msra.mxu0 0.0
  %4771 = vmatprep.subr.mxu0 0.0
  %4772 = vmatpush2.msra.mxu0 0.0
  %4773 = vmatprep.subr.mxu0 0.0
  %4774 = vmatpush2.msra.mxu0 0.0
  %4775 = vmatprep.subr.mxu0 0.0
  %4776 = vmatpush2.msra.mxu0 0.0
  %4777 = vmatprep.subr.mxu0 0.0
  %4778 = vmatpush2.msra.mxu0 0.0
  %4779 = vmatprep.subr.mxu0 0.0
  %4780 = vmatpush2.msra.mxu0 0.0
  %4781 = vmatprep.subr.mxu0 0.0
  %4782 = vmatpush2.msra.mxu0 0.0
  %4783 = vmatprep.subr.mxu0 0.0
  %4784 = vmatpush2.msra.mxu0 0.0
  %4785 = vmatprep.subr.mxu0 0.0
  %4786 = vmatpush2.msra.mxu0 0.0
  %4787 = vmatprep.subr.mxu0 0.0
  %4788 = vmatpush2.msra.mxu0 0.0
  %4789 = vmatprep.subr.mxu0 0.0
  %4790 = vmatpush2.msra.mxu0 0.0
  %4791 = vmatprep.subr.mxu0 0.0
  %4792 = vmatpush2.msra.mxu0 0.0
  %4793 = vmatprep.mubr.f32.mxu0 0.0
  %4794 = vmatmul.mubr.f32.gmra.mxu0 %v4652
  %v4795 = vpop.f32.mrf.mxu0
  %v4796 = vadd.f32 0.0, %v4795
  %v4797 = vpop.f32.mrf.mxu0
  %v4798 = vadd.f32 0.0, %v4797
  %4799 = vdwg.mxu0
  %v4800 = vadd.f32 %v4654, %v4725
  %v4801 = vadd.f32 %v4655, %v4727
  %v4802 = vadd.f32 %v4656, %v4796
  %v4803 = vadd.f32 %v4657, %v4798
  %v4804 = vxor.u32 %v4800, 2147483648
  %v4805 = vmul.f32 %v4804, 1.442695
  %v4806 = vpow.pop %v4805
  %v4807 = vadd.f32 %v4806, 1.0
  %v4808 = vrcp.pop %v4807
  %v4809 = vmul.f32 1.0, %v4808
  %v4810 = vxor.u32 %v4801, 2147483648
  %v4811 = vmul.f32 %v4810, 1.442695
  %v4812 = vpow.pop %v4811
  %v4813 = vadd.f32 %v4812, 1.0
  %v4814 = vrcp.pop %v4813
  %v4815 = vmul.f32 1.0, %v4814
  %v4816 = vtanh.pop %v4802
  %v4817 = vxor.u32 %v4803, 2147483648
  %v4818 = vmul.f32 %v4817, 1.442695
  %v4819 = vpow.pop %v4818
  %v4820 = vadd.f32 %v4819, 1.0
  %v4821 = vrcp.pop %v4820
  %v4822 = vmul.f32 1.0, %v4821
  %v4823 = vmul.f32 %v4815, %v4650
  %v4824 = vmul.f32 %v4809, %v4816
  %v4825 = vadd.f32 %v4823, %v4824
  %v4826 = vtanh.pop %v4825
  %v4827 = vmul.f32 %v4822, %v4826
  %4828 = vst [vmem:[%s1179] sm:$0xff] %v4827
  %v4829 = vld [vmem:[%s1183] sm:$0xff]
  %v4830 = vld [vmem:[%s1183 + $0x8] sm:$0xff]
  %v4831 = vld [vmem:[%s1183 + $0x10] sm:$0xff]
  %v4832 = vld [vmem:[%s1183 + $0x18] sm:$0xff]
  %4833 = vmatprep.subr.mxu0 %v4126
  %4834 = vmatpush1.msra.mxu0 %v4125
  %4835 = vmatprep.subr.mxu0 %v4122
  %4836 = vmatpush1.msra.mxu0 %v4121
  %4837 = vmatprep.subr.mxu0 %v4118
  %4838 = vmatpush1.msra.mxu0 %v4117
  %4839 = vmatprep.subr.mxu0 %v4114
  %4840 = vmatpush1.msra.mxu0 %v4113
  %4841 = vmatprep.subr.mxu0 %v4110
  %4842 = vmatpush1.msra.mxu0 %v4109
  %4843 = vmatprep.subr.mxu0 %v4106
  %4844 = vmatpush1.msra.mxu0 %v4105
  %4845 = vmatprep.subr.mxu0 %v4102
  %4846 = vmatpush1.msra.mxu0 %v4101
  %4847 = vmatprep.subr.mxu0 %v4098
  %4848 = vmatpush1.msra.mxu0 %v4097
  %4849 = vmatprep.subr.mxu0 %v4094
  %4850 = vmatpush1.msra.mxu0 %v4093
  %4851 = vmatprep.subr.mxu0 %v4090
  %4852 = vmatpush1.msra.mxu0 %v4089
  %4853 = vmatprep.subr.mxu0 %v4086
  %4854 = vmatpush1.msra.mxu0 %v4085
  %4855 = vmatprep.subr.mxu0 %v4082
  %4856 = vmatpush1.msra.mxu0 %v4081
  %4857 = vmatprep.subr.mxu0 %v4078
  %4858 = vmatpush1.msra.mxu0 %v4077
  %4859 = vmatprep.subr.mxu0 %v4074
  %4860 = vmatpush1.msra.mxu0 %v4073
  %4861 = vmatprep.subr.mxu0 %v4070
  %4862 = vmatpush1.msra.mxu0 %v4069
  %4863 = vmatprep.subr.mxu0 %v4066
  %4864 = vmatpush1.msra.mxu0 %v4065
  %4865 = vmatprep.subr.mxu0 0.0
  %4866 = vmatpush2.msra.mxu0 0.0
  %4867 = vmatprep.subr.mxu0 0.0
  %4868 = vmatpush2.msra.mxu0 0.0
  %4869 = vmatprep.subr.mxu0 0.0
  %4870 = vmatpush2.msra.mxu0 0.0
  %4871 = vmatprep.subr.mxu0 0.0
  %4872 = vmatpush2.msra.mxu0 0.0
  %4873 = vmatprep.subr.mxu0 0.0
  %4874 = vmatpush2.msra.mxu0 0.0
  %4875 = vmatprep.subr.mxu0 0.0
  %4876 = vmatpush2.msra.mxu0 0.0
  %4877 = vmatprep.subr.mxu0 0.0
  %4878 = vmatpush2.msra.mxu0 0.0
  %4879 = vmatprep.subr.mxu0 0.0
  %4880 = vmatpush2.msra.mxu0 0.0
  %4881 = vmatprep.subr.mxu0 0.0
  %4882 = vmatpush2.msra.mxu0 0.0
  %4883 = vmatprep.subr.mxu0 0.0
  %4884 = vmatpush2.msra.mxu0 0.0
  %4885 = vmatprep.subr.mxu0 0.0
  %4886 = vmatpush2.msra.mxu0 0.0
  %4887 = vmatprep.subr.mxu0 0.0
  %4888 = vmatpush2.msra.mxu0 0.0
  %4889 = vmatprep.subr.mxu0 0.0
  %4890 = vmatpush2.msra.mxu0 0.0
  %4891 = vmatprep.subr.mxu0 0.0
  %4892 = vmatpush2.msra.mxu0 0.0
  %4893 = vmatprep.subr.mxu0 0.0
  %4894 = vmatpush2.msra.mxu0 0.0
  %4895 = vmatprep.subr.mxu0 0.0
  %4896 = vmatpush2.msra.mxu0 0.0
  %4897 = vmatprep.mubr.f32.mxu0 0.0
  %4898 = vmatmul.mubr.f32.gmra.mxu0 %v4827
  %v4899 = vpop.f32.mrf.mxu0
  %v4900 = vadd.f32 0.0, %v4899
  %v4901 = vpop.f32.mrf.mxu0
  %v4902 = vadd.f32 0.0, %v4901
  %4903 = vdwg.mxu0
  %4904 = vmatprep.subr.mxu0 %v4128
  %4905 = vmatpush1.msra.mxu0 %v4127
  %4906 = vmatprep.subr.mxu0 %v4124
  %4907 = vmatpush1.msra.mxu0 %v4123
  %4908 = vmatprep.subr.mxu0 %v4120
  %4909 = vmatpush1.msra.mxu0 %v4119
  %4910 = vmatprep.subr.mxu0 %v4116
  %4911 = vmatpush1.msra.mxu0 %v4115
  %4912 = vmatprep.subr.mxu0 %v4112
  %4913 = vmatpush1.msra.mxu0 %v4111
  %4914 = vmatprep.subr.mxu0 %v4108
  %4915 = vmatpush1.msra.mxu0 %v4107
  %4916 = vmatprep.subr.mxu0 %v4104
  %4917 = vmatpush1.msra.mxu0 %v4103
  %4918 = vmatprep.subr.mxu0 %v4100
  %4919 = vmatpush1.msra.mxu0 %v4099
  %4920 = vmatprep.subr.mxu0 %v4096
  %4921 = vmatpush1.msra.mxu0 %v4095
  %4922 = vmatprep.subr.mxu0 %v4092
  %4923 = vmatpush1.msra.mxu0 %v4091
  %4924 = vmatprep.subr.mxu0 %v4088
  %4925 = vmatpush1.msra.mxu0 %v4087
  %4926 = vmatprep.subr.mxu0 %v4084
  %4927 = vmatpush1.msra.mxu0 %v4083
  %4928 = vmatprep.subr.mxu0 %v4080
  %4929 = vmatpush1.msra.mxu0 %v4079
  %4930 = vmatprep.subr.mxu0 %v4076
  %4931 = vmatpush1.msra.mxu0 %v4075
  %4932 = vmatprep.subr.mxu0 %v4072
  %4933 = vmatpush1.msra.mxu0 %v4071
  %4934 = vmatprep.subr.mxu0 %v4068
  %4935 = vmatpush1.msra.mxu0 %v4067
  %4936 = vmatprep.subr.mxu0 0.0
  %4937 = vmatpush2.msra.mxu0 0.0
  %4938 = vmatprep.subr.mxu0 0.0
  %4939 = vmatpush2.msra.mxu0 0.0
  %4940 = vmatprep.subr.mxu0 0.0
  %4941 = vmatpush2.msra.mxu0 0.0
  %4942 = vmatprep.subr.mxu0 0.0
  %4943 = vmatpush2.msra.mxu0 0.0
  %4944 = vmatprep.subr.mxu0 0.0
  %4945 = vmatpush2.msra.mxu0 0.0
  %4946 = vmatprep.subr.mxu0 0.0
  %4947 = vmatpush2.msra.mxu0 0.0
  %4948 = vmatprep.subr.mxu0 0.0
  %4949 = vmatpush2.msra.mxu0 0.0
  %4950 = vmatprep.subr.mxu0 0.0
  %4951 = vmatpush2.msra.mxu0 0.0
  %4952 = vmatprep.subr.mxu0 0.0
  %4953 = vmatpush2.msra.mxu0 0.0
  %4954 = vmatprep.subr.mxu0 0.0
  %4955 = vmatpush2.msra.mxu0 0.0
  %4956 = vmatprep.subr.mxu0 0.0
  %4957 = vmatpush2.msra.mxu0 0.0
  %4958 = vmatprep.subr.mxu0 0.0
  %4959 = vmatpush2.msra.mxu0 0.0
  %4960 = vmatprep.subr.mxu0 0.0
  %4961 = vmatpush2.msra.mxu0 0.0
  %4962 = vmatprep.subr.mxu0 0.0
  %4963 = vmatpush2.msra.mxu0 0.0
  %4964 = vmatprep.subr.mxu0 0.0
  %4965 = vmatpush2.msra.mxu0 0.0
  %4966 = vmatprep.subr.mxu0 0.0
  %4967 = vmatpush2.msra.mxu0 0.0
  %4968 = vmatprep.mubr.f32.mxu0 0.0
  %4969 = vmatmul.mubr.f32.gmra.mxu0 %v4827
  %v4970 = vpop.f32.mrf.mxu0
  %v4971 = vadd.f32 0.0, %v4970
  %v4972 = vpop.f32.mrf.mxu0
  %v4973 = vadd.f32 0.0, %v4972
  %4974 = vdwg.mxu0
  %v4975 = vadd.f32 %v4829, %v4900
  %v4976 = vadd.f32 %v4830, %v4902
  %v4977 = vadd.f32 %v4831, %v4971
  %v4978 = vadd.f32 %v4832, %v4973
  %v4979 = vxor.u32 %v4975, 2147483648
  %v4980 = vmul.f32 %v4979, 1.442695
  %v4981 = vpow.pop %v4980
  %v4982 = vadd.f32 %v4981, 1.0
  %v4983 = vrcp.pop %v4982
  %v4984 = vmul.f32 1.0, %v4983
  %v4985 = vxor.u32 %v4976, 2147483648
  %v4986 = vmul.f32 %v4985, 1.442695
  %v4987 = vpow.pop %v4986
  %v4988 = vadd.f32 %v4987, 1.0
  %v4989 = vrcp.pop %v4988
  %v4990 = vmul.f32 1.0, %v4989
  %v4991 = vtanh.pop %v4977
  %v4992 = vxor.u32 %v4978, 2147483648
  %v4993 = vmul.f32 %v4992, 1.442695
  %v4994 = vpow.pop %v4993
  %v4995 = vadd.f32 %v4994, 1.0
  %v4996 = vrcp.pop %v4995
  %v4997 = vmul.f32 1.0, %v4996
  %v4998 = vmul.f32 %v4990, %v4825
  %v4999 = vmul.f32 %v4984, %v4991
  %v5000 = vadd.f32 %v4998, %v4999
  %v5001 = vtanh.pop %v5000
  %v5002 = vmul.f32 %v4997, %v5001
  %5003 = vst [vmem:[%s1358] sm:$0xff] %v5002
  %v5004 = vld [vmem:[%s1362] sm:$0xff]
  %v5005 = vld [vmem:[%s1362 + $0x8] sm:$0xff]
  %v5006 = vld [vmem:[%s1362 + $0x10] sm:$0xff]
  %v5007 = vld [vmem:[%s1362 + $0x18] sm:$0xff]
  %5008 = vmatprep.subr.mxu0 %v4126
  %5009 = vmatpush1.msra.mxu0 %v4125
  %5010 = vmatprep.subr.mxu0 %v4122
  %5011 = vmatpush1.msra.mxu0 %v4121
  %5012 = vmatprep.subr.mxu0 %v4118
  %5013 = vmatpush1.msra.mxu0 %v4117
  %5014 = vmatprep.subr.mxu0 %v4114
  %5015 = vmatpush1.msra.mxu0 %v4113
  %5016 = vmatprep.subr.mxu0 %v4110
  %5017 = vmatpush1.msra.mxu0 %v4109
  %5018 = vmatprep.subr.mxu0 %v4106
  %5019 = vmatpush1.msra.mxu0 %v4105
  %5020 = vmatprep.subr.mxu0 %v4102
  %5021 = vmatpush1.msra.mxu0 %v4101
  %5022 = vmatprep.subr.mxu0 %v4098
  %5023 = vmatpush1.msra.mxu0 %v4097
  %5024 = vmatprep.subr.mxu0 %v4094
  %5025 = vmatpush1.msra.mxu0 %v4093
  %5026 = vmatprep.subr.mxu0 %v4090
  %5027 = vmatpush1.msra.mxu0 %v4089
  %5028 = vmatprep.subr.mxu0 %v4086
  %5029 = vmatpush1.msra.mxu0 %v4085
  %5030 = vmatprep.subr.mxu0 %v4082
  %5031 = vmatpush1.msra.mxu0 %v4081
  %5032 = vmatprep.subr.mxu0 %v4078
  %5033 = vmatpush1.msra.mxu0 %v4077
  %5034 = vmatprep.subr.mxu0 %v4074
  %5035 = vmatpush1.msra.mxu0 %v4073
  %5036 = vmatprep.subr.mxu0 %v4070
  %5037 = vmatpush1.msra.mxu0 %v4069
  %5038 = vmatprep.subr.mxu0 %v4066
  %5039 = vmatpush1.msra.mxu0 %v4065
  %5040 = vmatprep.subr.mxu0 0.0
  %5041 = vmatpush2.msra.mxu0 0.0
  %5042 = vmatprep.subr.mxu0 0.0
  %5043 = vmatpush2.msra.mxu0 0.0
  %5044 = vmatprep.subr.mxu0 0.0
  %5045 = vmatpush2.msra.mxu0 0.0
  %5046 = vmatprep.subr.mxu0 0.0
  %5047 = vmatpush2.msra.mxu0 0.0
  %5048 = vmatprep.subr.mxu0 0.0
  %5049 = vmatpush2.msra.mxu0 0.0
  %5050 = vmatprep.subr.mxu0 0.0
  %5051 = vmatpush2.msra.mxu0 0.0
  %5052 = vmatprep.subr.mxu0 0.0
  %5053 = vmatpush2.msra.mxu0 0.0
  %5054 = vmatprep.subr.mxu0 0.0
  %5055 = vmatpush2.msra.mxu0 0.0
  %5056 = vmatprep.subr.mxu0 0.0
  %5057 = vmatpush2.msra.mxu0 0.0
  %5058 = vmatprep.subr.mxu0 0.0
  %5059 = vmatpush2.msra.mxu0 0.0
  %5060 = vmatprep.subr.mxu0 0.0
  %5061 = vmatpush2.msra.mxu0 0.0
  %5062 = vmatprep.subr.mxu0 0.0
  %5063 = vmatpush2.msra.mxu0 0.0
  %5064 = vmatprep.subr.mxu0 0.0
  %5065 = vmatpush2.msra.mxu0 0.0
  %5066 = vmatprep.subr.mxu0 0.0
  %5067 = vmatpush2.msra.mxu0 0.0
  %5068 = vmatprep.subr.mxu0 0.0
  %5069 = vmatpush2.msra.mxu0 0.0
  %5070 = vmatprep.subr.mxu0 0.0
  %5071 = vmatpush2.msra.mxu0 0.0
  %5072 = vmatprep.mubr.f32.mxu0 0.0
  %5073 = vmatmul.mubr.f32.gmra.mxu0 %v5002
  %v5074 = vpop.f32.mrf.mxu0
  %v5075 = vadd.f32 0.0, %v5074
  %v5076 = vpop.f32.mrf.mxu0
  %v5077 = vadd.f32 0.0, %v5076
  %5078 = vdwg.mxu0
  %5079 = vmatprep.subr.mxu0 %v4128
  %5080 = vmatpush1.msra.mxu0 %v4127
  %5081 = vmatprep.subr.mxu0 %v4124
  %5082 = vmatpush1.msra.mxu0 %v4123
  %5083 = vmatprep.subr.mxu0 %v4120
  %5084 = vmatpush1.msra.mxu0 %v4119
  %5085 = vmatprep.subr.mxu0 %v4116
  %5086 = vmatpush1.msra.mxu0 %v4115
  %5087 = vmatprep.subr.mxu0 %v4112
  %5088 = vmatpush1.msra.mxu0 %v4111
  %5089 = vmatprep.subr.mxu0 %v4108
  %5090 = vmatpush1.msra.mxu0 %v4107
  %5091 = vmatprep.subr.mxu0 %v4104
  %5092 = vmatpush1.msra.mxu0 %v4103
  %5093 = vmatprep.subr.mxu0 %v4100
  %5094 = vmatpush1.msra.mxu0 %v4099
  %5095 = vmatprep.subr.mxu0 %v4096
  %5096 = vmatpush1.msra.mxu0 %v4095
  %5097 = vmatprep.subr.mxu0 %v4092
  %5098 = vmatpush1.msra.mxu0 %v4091
  %5099 = vmatprep.subr.mxu0 %v4088
  %5100 = vmatpush1.msra.mxu0 %v4087
  %5101 = vmatprep.subr.mxu0 %v4084
  %5102 = vmatpush1.msra.mxu0 %v4083
  %5103 = vmatprep.subr.mxu0 %v4080
  %5104 = vmatpush1.msra.mxu0 %v4079
  %5105 = vmatprep.subr.mxu0 %v4076
  %5106 = vmatpush1.msra.mxu0 %v4075
  %5107 = vmatprep.subr.mxu0 %v4072
  %5108 = vmatpush1.msra.mxu0 %v4071
  %5109 = vmatprep.subr.mxu0 %v4068
  %5110 = vmatpush1.msra.mxu0 %v4067
  %5111 = vmatprep.subr.mxu0 0.0
  %5112 = vmatpush2.msra.mxu0 0.0
  %5113 = vmatprep.subr.mxu0 0.0
  %5114 = vmatpush2.msra.mxu0 0.0
  %5115 = vmatprep.subr.mxu0 0.0
  %5116 = vmatpush2.msra.mxu0 0.0
  %5117 = vmatprep.subr.mxu0 0.0
  %5118 = vmatpush2.msra.mxu0 0.0
  %5119 = vmatprep.subr.mxu0 0.0
  %5120 = vmatpush2.msra.mxu0 0.0
  %5121 = vmatprep.subr.mxu0 0.0
  %5122 = vmatpush2.msra.mxu0 0.0
  %5123 = vmatprep.subr.mxu0 0.0
  %5124 = vmatpush2.msra.mxu0 0.0
  %5125 = vmatprep.subr.mxu0 0.0
  %5126 = vmatpush2.msra.mxu0 0.0
  %5127 = vmatprep.subr.mxu0 0.0
  %5128 = vmatpush2.msra.mxu0 0.0
  %5129 = vmatprep.subr.mxu0 0.0
  %5130 = vmatpush2.msra.mxu0 0.0
  %5131 = vmatprep.subr.mxu0 0.0
  %5132 = vmatpush2.msra.mxu0 0.0
  %5133 = vmatprep.subr.mxu0 0.0
  %5134 = vmatpush2.msra.mxu0 0.0
  %5135 = vmatprep.subr.mxu0 0.0
  %5136 = vmatpush2.msra.mxu0 0.0
  %5137 = vmatprep.subr.mxu0 0.0
  %5138 = vmatpush2.msra.mxu0 0.0
  %5139 = vmatprep.subr.mxu0 0.0
  %5140 = vmatpush2.msra.mxu0 0.0
  %5141 = vmatprep.subr.mxu0 0.0
  %5142 = vmatpush2.msra.mxu0 0.0
  %5143 = vmatprep.mubr.f32.mxu0 0.0
  %5144 = vmatmul.mubr.f32.gmra.mxu0 %v5002
  %v5145 = vpop.f32.mrf.mxu0
  %v5146 = vadd.f32 0.0, %v5145
  %v5147 = vpop.f32.mrf.mxu0
  %v5148 = vadd.f32 0.0, %v5147
  %5149 = vdwg.mxu0
  %v5150 = vadd.f32 %v5004, %v5075
  %v5151 = vadd.f32 %v5005, %v5077
  %v5152 = vadd.f32 %v5006, %v5146
  %v5153 = vadd.f32 %v5007, %v5148
  %v5154 = vxor.u32 %v5150, 2147483648
  %v5155 = vmul.f32 %v5154, 1.442695
  %v5156 = vpow.pop %v5155
  %v5157 = vadd.f32 %v5156, 1.0
  %v5158 = vrcp.pop %v5157
  %v5159 = vmul.f32 1.0, %v5158
  %v5160 = vxor.u32 %v5151, 2147483648
  %v5161 = vmul.f32 %v5160, 1.442695
  %v5162 = vpow.pop %v5161
  %v5163 = vadd.f32 %v5162, 1.0
  %v5164 = vrcp.pop %v5163
  %v5165 = vmul.f32 1.0, %v5164
  %v5166 = vtanh.pop %v5152
  %v5167 = vxor.u32 %v5153, 2147483648
  %v5168 = vmul.f32 %v5167, 1.442695
  %v5169 = vpow.pop %v5168
  %v5170 = vadd.f32 %v5169, 1.0
  %v5171 = vrcp.pop %v5170
  %v5172 = vmul.f32 1.0, %v5171
  %v5173 = vmul.f32 %v5165, %v5000
  %v5174 = vmul.f32 %v5159, %v5166
  %v5175 = vadd.f32 %v5173, %v5174
  %v5176 = vtanh.pop %v5175
  %v5177 = vmul.f32 %v5172, %v5176
  %5178 = vst [vmem:[%s1537] sm:$0xff] %v5177
  %v5179 = vld [vmem:[%s1541] sm:$0xff]
  %v5180 = vld [vmem:[%s1541 + $0x8] sm:$0xff]
  %v5181 = vld [vmem:[%s1541 + $0x10] sm:$0xff]
  %v5182 = vld [vmem:[%s1541 + $0x18] sm:$0xff]
  %5183 = vmatprep.subr.mxu0 %v4126
  %5184 = vmatpush1.msra.mxu0 %v4125
  %5185 = vmatprep.subr.mxu0 %v4122
  %5186 = vmatpush1.msra.mxu0 %v4121
  %5187 = vmatprep.subr.mxu0 %v4118
  %5188 = vmatpush1.msra.mxu0 %v4117
  %5189 = vmatprep.subr.mxu0 %v4114
  %5190 = vmatpush1.msra.mxu0 %v4113
  %5191 = vmatprep.subr.mxu0 %v4110
  %5192 = vmatpush1.msra.mxu0 %v4109
  %5193 = vmatprep.subr.mxu0 %v4106
  %5194 = vmatpush1.msra.mxu0 %v4105
  %5195 = vmatprep.subr.mxu0 %v4102
  %5196 = vmatpush1.msra.mxu0 %v4101
  %5197 = vmatprep.subr.mxu0 %v4098
  %5198 = vmatpush1.msra.mxu0 %v4097
  %5199 = vmatprep.subr.mxu0 %v4094
  %5200 = vmatpush1.msra.mxu0 %v4093
  %5201 = vmatprep.subr.mxu0 %v4090
  %5202 = vmatpush1.msra.mxu0 %v4089
  %5203 = vmatprep.subr.mxu0 %v4086
  %5204 = vmatpush1.msra.mxu0 %v4085
  %5205 = vmatprep.subr.mxu0 %v4082
  %5206 = vmatpush1.msra.mxu0 %v4081
  %5207 = vmatprep.subr.mxu0 %v4078
  %5208 = vmatpush1.msra.mxu0 %v4077
  %5209 = vmatprep.subr.mxu0 %v4074
  %5210 = vmatpush1.msra.mxu0 %v4073
  %5211 = vmatprep.subr.mxu0 %v4070
  %5212 = vmatpush1.msra.mxu0 %v4069
  %5213 = vmatprep.subr.mxu0 %v4066
  %5214 = vmatpush1.msra.mxu0 %v4065
  %5215 = vmatprep.subr.mxu0 0.0
  %5216 = vmatpush2.msra.mxu0 0.0
  %5217 = vmatprep.subr.mxu0 0.0
  %5218 = vmatpush2.msra.mxu0 0.0
  %5219 = vmatprep.subr.mxu0 0.0
  %5220 = vmatpush2.msra.mxu0 0.0
  %5221 = vmatprep.subr.mxu0 0.0
  %5222 = vmatpush2.msra.mxu0 0.0
  %5223 = vmatprep.subr.mxu0 0.0
  %5224 = vmatpush2.msra.mxu0 0.0
  %5225 = vmatprep.subr.mxu0 0.0
  %5226 = vmatpush2.msra.mxu0 0.0
  %5227 = vmatprep.subr.mxu0 0.0
  %5228 = vmatpush2.msra.mxu0 0.0
  %5229 = vmatprep.subr.mxu0 0.0
  %5230 = vmatpush2.msra.mxu0 0.0
  %5231 = vmatprep.subr.mxu0 0.0
  %5232 = vmatpush2.msra.mxu0 0.0
  %5233 = vmatprep.subr.mxu0 0.0
  %5234 = vmatpush2.msra.mxu0 0.0
  %5235 = vmatprep.subr.mxu0 0.0
  %5236 = vmatpush2.msra.mxu0 0.0
  %5237 = vmatprep.subr.mxu0 0.0
  %5238 = vmatpush2.msra.mxu0 0.0
  %5239 = vmatprep.subr.mxu0 0.0
  %5240 = vmatpush2.msra.mxu0 0.0
  %5241 = vmatprep.subr.mxu0 0.0
  %5242 = vmatpush2.msra.mxu0 0.0
  %5243 = vmatprep.subr.mxu0 0.0
  %5244 = vmatpush2.msra.mxu0 0.0
  %5245 = vmatprep.subr.mxu0 0.0
  %5246 = vmatpush2.msra.mxu0 0.0
  %5247 = vmatprep.mubr.f32.mxu0 0.0
  %5248 = vmatmul.mubr.f32.gmra.mxu0 %v5177
  %v5249 = vpop.f32.mrf.mxu0
  %v5250 = vadd.f32 0.0, %v5249
  %v5251 = vpop.f32.mrf.mxu0
  %v5252 = vadd.f32 0.0, %v5251
  %5253 = vdwg.mxu0
  %5254 = vmatprep.subr.mxu0 %v4128
  %5255 = vmatpush1.msra.mxu0 %v4127
  %5256 = vmatprep.subr.mxu0 %v4124
  %5257 = vmatpush1.msra.mxu0 %v4123
  %5258 = vmatprep.subr.mxu0 %v4120
  %5259 = vmatpush1.msra.mxu0 %v4119
  %5260 = vmatprep.subr.mxu0 %v4116
  %5261 = vmatpush1.msra.mxu0 %v4115
  %5262 = vmatprep.subr.mxu0 %v4112
  %5263 = vmatpush1.msra.mxu0 %v4111
  %5264 = vmatprep.subr.mxu0 %v4108
  %5265 = vmatpush1.msra.mxu0 %v4107
  %5266 = vmatprep.subr.mxu0 %v4104
  %5267 = vmatpush1.msra.mxu0 %v4103
  %5268 = vmatprep.subr.mxu0 %v4100
  %5269 = vmatpush1.msra.mxu0 %v4099
  %5270 = vmatprep.subr.mxu0 %v4096
  %5271 = vmatpush1.msra.mxu0 %v4095
  %5272 = vmatprep.subr.mxu0 %v4092
  %5273 = vmatpush1.msra.mxu0 %v4091
  %5274 = vmatprep.subr.mxu0 %v4088
  %5275 = vmatpush1.msra.mxu0 %v4087
  %5276 = vmatprep.subr.mxu0 %v4084
  %5277 = vmatpush1.msra.mxu0 %v4083
  %5278 = vmatprep.subr.mxu0 %v4080
  %5279 = vmatpush1.msra.mxu0 %v4079
  %5280 = vmatprep.subr.mxu0 %v4076
  %5281 = vmatpush1.msra.mxu0 %v4075
  %5282 = vmatprep.subr.mxu0 %v4072
  %5283 = vmatpush1.msra.mxu0 %v4071
  %5284 = vmatprep.subr.mxu0 %v4068
  %5285 = vmatpush1.msra.mxu0 %v4067
  %5286 = vmatprep.subr.mxu0 0.0
  %5287 = vmatpush2.msra.mxu0 0.0
  %5288 = vmatprep.subr.mxu0 0.0
  %5289 = vmatpush2.msra.mxu0 0.0
  %5290 = vmatprep.subr.mxu0 0.0
  %5291 = vmatpush2.msra.mxu0 0.0
  %5292 = vmatprep.subr.mxu0 0.0
  %5293 = vmatpush2.msra.mxu0 0.0
  %5294 = vmatprep.subr.mxu0 0.0
  %5295 = vmatpush2.msra.mxu0 0.0
  %5296 = vmatprep.subr.mxu0 0.0
  %5297 = vmatpush2.msra.mxu0 0.0
  %5298 = vmatprep.subr.mxu0 0.0
  %5299 = vmatpush2.msra.mxu0 0.0
  %5300 = vmatprep.subr.mxu0 0.0
  %5301 = vmatpush2.msra.mxu0 0.0
  %5302 = vmatprep.subr.mxu0 0.0
  %5303 = vmatpush2.msra.mxu0 0.0
  %5304 = vmatprep.subr.mxu0 0.0
  %5305 = vmatpush2.msra.mxu0 0.0
  %5306 = vmatprep.subr.mxu0 0.0
  %5307 = vmatpush2.msra.mxu0 0.0
  %5308 = vmatprep.subr.mxu0 0.0
  %5309 = vmatpush2.msra.mxu0 0.0
  %5310 = vmatprep.subr.mxu0 0.0
  %5311 = vmatpush2.msra.mxu0 0.0
  %5312 = vmatprep.subr.mxu0 0.0
  %5313 = vmatpush2.msra.mxu0 0.0
  %5314 = vmatprep.subr.mxu0 0.0
  %5315 = vmatpush2.msra.mxu0 0.0
  %5316 = vmatprep.subr.mxu0 0.0
  %5317 = vmatpush2.msra.mxu0 0.0
  %5318 = vmatprep.mubr.f32.mxu0 0.0
  %5319 = vmatmul.mubr.f32.gmra.mxu0 %v5177
  %v5320 = vpop.f32.mrf.mxu0
  %v5321 = vadd.f32 0.0, %v5320
  %v5322 = vpop.f32.mrf.mxu0
  %v5323 = vadd.f32 0.0, %v5322
  %5324 = vdwg.mxu0
  %v5325 = vadd.f32 %v5179, %v5250
  %v5326 = vadd.f32 %v5180, %v5252
  %v5327 = vadd.f32 %v5181, %v5321
  %v5328 = vadd.f32 %v5182, %v5323
  %v5329 = vxor.u32 %v5325, 2147483648
  %v5330 = vmul.f32 %v5329, 1.442695
  %v5331 = vpow.pop %v5330
  %v5332 = vadd.f32 %v5331, 1.0
  %v5333 = vrcp.pop %v5332
  %v5334 = vmul.f32 1.0, %v5333
  %v5335 = vxor.u32 %v5326, 2147483648
  %v5336 = vmul.f32 %v5335, 1.442695
  %v5337 = vpow.pop %v5336
  %v5338 = vadd.f32 %v5337, 1.0
  %v5339 = vrcp.pop %v5338
  %v5340 = vmul.f32 1.0, %v5339
  %v5341 = vtanh.pop %v5327
  %v5342 = vxor.u32 %v5328, 2147483648
  %v5343 = vmul.f32 %v5342, 1.442695
  %v5344 = vpow.pop %v5343
  %v5345 = vadd.f32 %v5344, 1.0
  %v5346 = vrcp.pop %v5345
  %v5347 = vmul.f32 1.0, %v5346
  %v5348 = vmul.f32 %v5340, %v5175
  %v5349 = vmul.f32 %v5334, %v5341
  %v5350 = vadd.f32 %v5348, %v5349
  %v5351 = vtanh.pop %v5350
  %v5352 = vmul.f32 %v5347, %v5351
  %5353 = vst [vmem:[%s1716] sm:$0xff] %v5352
  %v5354 = vld [vmem:[%s1720] sm:$0xff]
  %v5355 = vld [vmem:[%s1720 + $0x8] sm:$0xff]
  %v5356 = vld [vmem:[%s1720 + $0x10] sm:$0xff]
  %v5357 = vld [vmem:[%s1720 + $0x18] sm:$0xff]
  %5358 = vmatprep.subr.mxu0 %v4126
  %5359 = vmatpush1.msra.mxu0 %v4125
  %5360 = vmatprep.subr.mxu0 %v4122
  %5361 = vmatpush1.msra.mxu0 %v4121
  %5362 = vmatprep.subr.mxu0 %v4118
  %5363 = vmatpush1.msra.mxu0 %v4117
  %5364 = vmatprep.subr.mxu0 %v4114
  %5365 = vmatpush1.msra.mxu0 %v4113
  %5366 = vmatprep.subr.mxu0 %v4110
  %5367 = vmatpush1.msra.mxu0 %v4109
  %5368 = vmatprep.subr.mxu0 %v4106
  %5369 = vmatpush1.msra.mxu0 %v4105
  %5370 = vmatprep.subr.mxu0 %v4102
  %5371 = vmatpush1.msra.mxu0 %v4101
  %5372 = vmatprep.subr.mxu0 %v4098
  %5373 = vmatpush1.msra.mxu0 %v4097
  %5374 = vmatprep.subr.mxu0 %v4094
  %5375 = vmatpush1.msra.mxu0 %v4093
  %5376 = vmatprep.subr.mxu0 %v4090
  %5377 = vmatpush1.msra.mxu0 %v4089
  %5378 = vmatprep.subr.mxu0 %v4086
  %5379 = vmatpush1.msra.mxu0 %v4085
  %5380 = vmatprep.subr.mxu0 %v4082
  %5381 = vmatpush1.msra.mxu0 %v4081
  %5382 = vmatprep.subr.mxu0 %v4078
  %5383 = vmatpush1.msra.mxu0 %v4077
  %5384 = vmatprep.subr.mxu0 %v4074
  %5385 = vmatpush1.msra.mxu0 %v4073
  %5386 = vmatprep.subr.mxu0 %v4070
  %5387 = vmatpush1.msra.mxu0 %v4069
  %5388 = vmatprep.subr.mxu0 %v4066
  %5389 = vmatpush1.msra.mxu0 %v4065
  %5390 = vmatprep.subr.mxu0 0.0
  %5391 = vmatpush2.msra.mxu0 0.0
  %5392 = vmatprep.subr.mxu0 0.0
  %5393 = vmatpush2.msra.mxu0 0.0
  %5394 = vmatprep.subr.mxu0 0.0
  %5395 = vmatpush2.msra.mxu0 0.0
  %5396 = vmatprep.subr.mxu0 0.0
  %5397 = vmatpush2.msra.mxu0 0.0
  %5398 = vmatprep.subr.mxu0 0.0
  %5399 = vmatpush2.msra.mxu0 0.0
  %5400 = vmatprep.subr.mxu0 0.0
  %5401 = vmatpush2.msra.mxu0 0.0
  %5402 = vmatprep.subr.mxu0 0.0
  %5403 = vmatpush2.msra.mxu0 0.0
  %5404 = vmatprep.subr.mxu0 0.0
  %5405 = vmatpush2.msra.mxu0 0.0
  %5406 = vmatprep.subr.mxu0 0.0
  %5407 = vmatpush2.msra.mxu0 0.0
  %5408 = vmatprep.subr.mxu0 0.0
  %5409 = vmatpush2.msra.mxu0 0.0
  %5410 = vmatprep.subr.mxu0 0.0
  %5411 = vmatpush2.msra.mxu0 0.0
  %5412 = vmatprep.subr.mxu0 0.0
  %5413 = vmatpush2.msra.mxu0 0.0
  %5414 = vmatprep.subr.mxu0 0.0
  %5415 = vmatpush2.msra.mxu0 0.0
  %5416 = vmatprep.subr.mxu0 0.0
  %5417 = vmatpush2.msra.mxu0 0.0
  %5418 = vmatprep.subr.mxu0 0.0
  %5419 = vmatpush2.msra.mxu0 0.0
  %5420 = vmatprep.subr.mxu0 0.0
  %5421 = vmatpush2.msra.mxu0 0.0
  %5422 = vmatprep.mubr.f32.mxu0 0.0
  %5423 = vmatmul.mubr.f32.gmra.mxu0 %v5352
  %v5424 = vpop.f32.mrf.mxu0
  %v5425 = vadd.f32 0.0, %v5424
  %v5426 = vpop.f32.mrf.mxu0
  %v5427 = vadd.f32 0.0, %v5426
  %5428 = vdwg.mxu0
  %5429 = vmatprep.subr.mxu0 %v4128
  %5430 = vmatpush1.msra.mxu0 %v4127
  %5431 = vmatprep.subr.mxu0 %v4124
  %5432 = vmatpush1.msra.mxu0 %v4123
  %5433 = vmatprep.subr.mxu0 %v4120
  %5434 = vmatpush1.msra.mxu0 %v4119
  %5435 = vmatprep.subr.mxu0 %v4116
  %5436 = vmatpush1.msra.mxu0 %v4115
  %5437 = vmatprep.subr.mxu0 %v4112
  %5438 = vmatpush1.msra.mxu0 %v4111
  %5439 = vmatprep.subr.mxu0 %v4108
  %5440 = vmatpush1.msra.mxu0 %v4107
  %5441 = vmatprep.subr.mxu0 %v4104
  %5442 = vmatpush1.msra.mxu0 %v4103
  %5443 = vmatprep.subr.mxu0 %v4100
  %5444 = vmatpush1.msra.mxu0 %v4099
  %5445 = vmatprep.subr.mxu0 %v4096
  %5446 = vmatpush1.msra.mxu0 %v4095
  %5447 = vmatprep.subr.mxu0 %v4092
  %5448 = vmatpush1.msra.mxu0 %v4091
  %5449 = vmatprep.subr.mxu0 %v4088
  %5450 = vmatpush1.msra.mxu0 %v4087
  %5451 = vmatprep.subr.mxu0 %v4084
  %5452 = vmatpush1.msra.mxu0 %v4083
  %5453 = vmatprep.subr.mxu0 %v4080
  %5454 = vmatpush1.msra.mxu0 %v4079
  %5455 = vmatprep.subr.mxu0 %v4076
  %5456 = vmatpush1.msra.mxu0 %v4075
  %5457 = vmatprep.subr.mxu0 %v4072
  %5458 = vmatpush1.msra.mxu0 %v4071
  %5459 = vmatprep.subr.mxu0 %v4068
  %5460 = vmatpush1.msra.mxu0 %v4067
  %5461 = vmatprep.subr.mxu0 0.0
  %5462 = vmatpush2.msra.mxu0 0.0
  %5463 = vmatprep.subr.mxu0 0.0
  %5464 = vmatpush2.msra.mxu0 0.0
  %5465 = vmatprep.subr.mxu0 0.0
  %5466 = vmatpush2.msra.mxu0 0.0
  %5467 = vmatprep.subr.mxu0 0.0
  %5468 = vmatpush2.msra.mxu0 0.0
  %5469 = vmatprep.subr.mxu0 0.0
  %5470 = vmatpush2.msra.mxu0 0.0
  %5471 = vmatprep.subr.mxu0 0.0
  %5472 = vmatpush2.msra.mxu0 0.0
  %5473 = vmatprep.subr.mxu0 0.0
  %5474 = vmatpush2.msra.mxu0 0.0
  %5475 = vmatprep.subr.mxu0 0.0
  %5476 = vmatpush2.msra.mxu0 0.0
  %5477 = vmatprep.subr.mxu0 0.0
  %5478 = vmatpush2.msra.mxu0 0.0
  %5479 = vmatprep.subr.mxu0 0.0
  %5480 = vmatpush2.msra.mxu0 0.0
  %5481 = vmatprep.subr.mxu0 0.0
  %5482 = vmatpush2.msra.mxu0 0.0
  %5483 = vmatprep.subr.mxu0 0.0
  %5484 = vmatpush2.msra.mxu0 0.0
  %5485 = vmatprep.subr.mxu0 0.0
  %5486 = vmatpush2.msra.mxu0 0.0
  %5487 = vmatprep.subr.mxu0 0.0
  %5488 = vmatpush2.msra.mxu0 0.0
  %5489 = vmatprep.subr.mxu0 0.0
  %5490 = vmatpush2.msra.mxu0 0.0
  %5491 = vmatprep.subr.mxu0 0.0
  %5492 = vmatpush2.msra.mxu0 0.0
  %5493 = vmatprep.mubr.f32.mxu0 0.0
  %5494 = vmatmul.mubr.f32.gmra.mxu0 %v5352
  %v5495 = vpop.f32.mrf.mxu0
  %v5496 = vadd.f32 0.0, %v5495
  %v5497 = vpop.f32.mrf.mxu0
  %v5498 = vadd.f32 0.0, %v5497
  %5499 = vdwg.mxu0
  %v5500 = vadd.f32 %v5354, %v5425
  %v5501 = vadd.f32 %v5355, %v5427
  %v5502 = vadd.f32 %v5356, %v5496
  %v5503 = vadd.f32 %v5357, %v5498
  %v5504 = vxor.u32 %v5500, 2147483648
  %v5505 = vmul.f32 %v5504, 1.442695
  %v5506 = vpow.pop %v5505
  %v5507 = vadd.f32 %v5506, 1.0
  %v5508 = vrcp.pop %v5507
  %v5509 = vmul.f32 1.0, %v5508
  %v5510 = vxor.u32 %v5501, 2147483648
  %v5511 = vmul.f32 %v5510, 1.442695
  %v5512 = vpow.pop %v5511
  %v5513 = vadd.f32 %v5512, 1.0
  %v5514 = vrcp.pop %v5513
  %v5515 = vmul.f32 1.0, %v5514
  %v5516 = vtanh.pop %v5502
  %v5517 = vxor.u32 %v5503, 2147483648
  %v5518 = vmul.f32 %v5517, 1.442695
  %v5519 = vpow.pop %v5518
  %v5520 = vadd.f32 %v5519, 1.0
  %v5521 = vrcp.pop %v5520
  %v5522 = vmul.f32 1.0, %v5521
  %v5523 = vmul.f32 %v5515, %v5350
  %v5524 = vmul.f32 %v5509, %v5516
  %v5525 = vadd.f32 %v5523, %v5524
  %v5526 = vtanh.pop %v5525
  %v5527 = vmul.f32 %v5522, %v5526
  %5528 = vst [vmem:[%s1895] sm:$0xff] %v5527
  %v5529 = vld [vmem:[#allocation3] sm:$0xff]
  %v5530 = vld [vmem:[#allocation3 + $0x8] sm:$0xff]
  %v5531 = vld [vmem:[#allocation3 + $0x10] sm:$0xff]
  %v5532 = vld [vmem:[#allocation3 + $0x18] sm:$0xff]
  %v5533 = vld [vmem:[#allocation3 + $0x20] sm:$0xff]
  %v5534 = vld [vmem:[#allocation3 + $0x28] sm:$0xff]
  %v5535 = vld [vmem:[#allocation3 + $0x30] sm:$0xff]
  %v5536 = vld [vmem:[#allocation3 + $0x38] sm:$0xff]
  %v5537 = vld [vmem:[%s10] sm:$0xff]
  %v5538 = vld [vmem:[%s10 + $0x8] sm:$0xff]
  %v5539 = vld [vmem:[%s10 + $0x10] sm:$0xff]
  %v5540 = vld [vmem:[%s10 + $0x18] sm:$0xff]
  %v5541 = vld [vmem:[%s10 + $0x20] sm:$0xff]
  %v5542 = vld [vmem:[%s10 + $0x28] sm:$0xff]
  %v5543 = vld [vmem:[%s10 + $0x30] sm:$0xff]
  %v5544 = vld [vmem:[%s10 + $0x38] sm:$0xff]
  %v5545 = vld [vmem:[%s10 + $0x40] sm:$0xff]
  %v5546 = vld [vmem:[%s10 + $0x48] sm:$0xff]
  %v5547 = vld [vmem:[%s10 + $0x50] sm:$0xff]
  %v5548 = vld [vmem:[%s10 + $0x58] sm:$0xff]
  %v5549 = vld [vmem:[%s10 + $0x60] sm:$0xff]
  %v5550 = vld [vmem:[%s10 + $0x68] sm:$0xff]
  %v5551 = vld [vmem:[%s10 + $0x70] sm:$0xff]
  %v5552 = vld [vmem:[%s10 + $0x78] sm:$0xff]
  %v5553 = vld [vmem:[%s10 + $0x80] sm:$0xff]
  %v5554 = vld [vmem:[%s10 + $0x88] sm:$0xff]
  %v5555 = vld [vmem:[%s10 + $0x90] sm:$0xff]
  %v5556 = vld [vmem:[%s10 + $0x98] sm:$0xff]
  %v5557 = vld [vmem:[%s10 + $0xa0] sm:$0xff]
  %v5558 = vld [vmem:[%s10 + $0xa8] sm:$0xff]
  %v5559 = vld [vmem:[%s10 + $0xb0] sm:$0xff]
  %v5560 = vld [vmem:[%s10 + $0xb8] sm:$0xff]
  %v5561 = vld [vmem:[%s10 + $0xc0] sm:$0xff]
  %v5562 = vld [vmem:[%s10 + $0xc8] sm:$0xff]
  %v5563 = vld [vmem:[%s10 + $0xd0] sm:$0xff]
  %v5564 = vld [vmem:[%s10 + $0xd8] sm:$0xff]
  %v5565 = vld [vmem:[%s10 + $0xe0] sm:$0xff]
  %v5566 = vld [vmem:[%s10 + $0xe8] sm:$0xff]
  %v5567 = vld [vmem:[%s10 + $0xf0] sm:$0xff]
  %v5568 = vld [vmem:[%s10 + $0xf8] sm:$0xff]
  %v5569 = vld [vmem:[%s10 + $0x100] sm:$0xff]
  %v5570 = vld [vmem:[%s10 + $0x108] sm:$0xff]
  %v5571 = vld [vmem:[%s10 + $0x110] sm:$0xff]
  %v5572 = vld [vmem:[%s10 + $0x118] sm:$0xff]
  %v5573 = vld [vmem:[%s10 + $0x120] sm:$0xff]
  %v5574 = vld [vmem:[%s10 + $0x128] sm:$0xff]
  %v5575 = vld [vmem:[%s10 + $0x130] sm:$0xff]
  %v5576 = vld [vmem:[%s10 + $0x138] sm:$0xff]
  %v5577 = vld [vmem:[%s10 + $0x140] sm:$0xff]
  %v5578 = vld [vmem:[%s10 + $0x148] sm:$0xff]
  %v5579 = vld [vmem:[%s10 + $0x150] sm:$0xff]
  %v5580 = vld [vmem:[%s10 + $0x158] sm:$0xff]
  %v5581 = vld [vmem:[%s10 + $0x160] sm:$0xff]
  %v5582 = vld [vmem:[%s10 + $0x168] sm:$0xff]
  %v5583 = vld [vmem:[%s10 + $0x170] sm:$0xff]
  %v5584 = vld [vmem:[%s10 + $0x178] sm:$0xff]
  %v5585 = vld [vmem:[%s10 + $0x180] sm:$0xff]
  %v5586 = vld [vmem:[%s10 + $0x188] sm:$0xff]
  %v5587 = vld [vmem:[%s10 + $0x190] sm:$0xff]
  %v5588 = vld [vmem:[%s10 + $0x198] sm:$0xff]
  %v5589 = vld [vmem:[%s10 + $0x1a0] sm:$0xff]
  %v5590 = vld [vmem:[%s10 + $0x1a8] sm:$0xff]
  %v5591 = vld [vmem:[%s10 + $0x1b0] sm:$0xff]
  %v5592 = vld [vmem:[%s10 + $0x1b8] sm:$0xff]
  %v5593 = vld [vmem:[%s10 + $0x1c0] sm:$0xff]
  %v5594 = vld [vmem:[%s10 + $0x1c8] sm:$0xff]
  %v5595 = vld [vmem:[%s10 + $0x1d0] sm:$0xff]
  %v5596 = vld [vmem:[%s10 + $0x1d8] sm:$0xff]
  %v5597 = vld [vmem:[%s10 + $0x1e0] sm:$0xff]
  %v5598 = vld [vmem:[%s10 + $0x1e8] sm:$0xff]
  %v5599 = vld [vmem:[%s10 + $0x1f0] sm:$0xff]
  %v5600 = vld [vmem:[%s10 + $0x1f8] sm:$0xff]
  %v5601 = vld [vmem:[%s12] sm:$0xf]
  %v5603 = vlaneseq
  %v5604 = vshrl.u32 %v5603, 7
  %v5605 = vsub.s32 0, %v5604
  %v5606 = vrot.slane %v5601, %v5605
  %v5607 = vlaneseq
  %v5608 = vshrl.u32 %v5607, 7
  %v5609 = vsub.s32 1, %v5608
  %v5610 = vrot.slane %v5601, %v5609
  %v5611 = vlaneseq
  %v5612 = vshrl.u32 %v5611, 7
  %v5613 = vsub.s32 2, %v5612
  %v5614 = vrot.slane %v5601, %v5613
  %v5615 = vlaneseq
  %v5616 = vshrl.u32 %v5615, 7
  %v5617 = vsub.s32 3, %v5616
  %v5618 = vrot.slane %v5601, %v5617
  %5623 = vmatprep.subr.mxu0 %v5598
  %5624 = vmatpush1.msra.mxu0 %v5597
  %5625 = vmatprep.subr.mxu0 %v5594
  %5626 = vmatpush1.msra.mxu0 %v5593
  %5627 = vmatprep.subr.mxu0 %v5590
  %5628 = vmatpush1.msra.mxu0 %v5589
  %5629 = vmatprep.subr.mxu0 %v5586
  %5630 = vmatpush1.msra.mxu0 %v5585
  %5631 = vmatprep.subr.mxu0 %v5582
  %5632 = vmatpush1.msra.mxu0 %v5581
  %5633 = vmatprep.subr.mxu0 %v5578
  %5634 = vmatpush1.msra.mxu0 %v5577
  %5635 = vmatprep.subr.mxu0 %v5574
  %5636 = vmatpush1.msra.mxu0 %v5573
  %5637 = vmatprep.subr.mxu0 %v5570
  %5638 = vmatpush1.msra.mxu0 %v5569
  %5639 = vmatprep.subr.mxu0 %v5566
  %5640 = vmatpush1.msra.mxu0 %v5565
  %5641 = vmatprep.subr.mxu0 %v5562
  %5642 = vmatpush1.msra.mxu0 %v5561
  %5643 = vmatprep.subr.mxu0 %v5558
  %5644 = vmatpush1.msra.mxu0 %v5557
  %5645 = vmatprep.subr.mxu0 %v5554
  %5646 = vmatpush1.msra.mxu0 %v5553
  %5647 = vmatprep.subr.mxu0 %v5550
  %5648 = vmatpush1.msra.mxu0 %v5549
  %5649 = vmatprep.subr.mxu0 %v5546
  %5650 = vmatpush1.msra.mxu0 %v5545
  %5651 = vmatprep.subr.mxu0 %v5542
  %5652 = vmatpush1.msra.mxu0 %v5541
  %5653 = vmatprep.subr.mxu0 %v5538
  %5654 = vmatpush1.msra.mxu0 %v5537
  %5655 = vmatprep.subr.mxu0 0.0
  %5656 = vmatpush2.msra.mxu0 0.0
  %5657 = vmatprep.subr.mxu0 0.0
  %5658 = vmatpush2.msra.mxu0 0.0
  %5659 = vmatprep.subr.mxu0 0.0
  %5660 = vmatpush2.msra.mxu0 0.0
  %5661 = vmatprep.subr.mxu0 0.0
  %5662 = vmatpush2.msra.mxu0 0.0
  %5663 = vmatprep.subr.mxu0 0.0
  %5664 = vmatpush2.msra.mxu0 0.0
  %5665 = vmatprep.subr.mxu0 0.0
  %5666 = vmatpush2.msra.mxu0 0.0
  %5667 = vmatprep.subr.mxu0 0.0
  %5668 = vmatpush2.msra.mxu0 0.0
  %5669 = vmatprep.subr.mxu0 0.0
  %5670 = vmatpush2.msra.mxu0 0.0
  %5671 = vmatprep.subr.mxu0 0.0
  %5672 = vmatpush2.msra.mxu0 0.0
  %5673 = vmatprep.subr.mxu0 0.0
  %5674 = vmatpush2.msra.mxu0 0.0
  %5675 = vmatprep.subr.mxu0 0.0
  %5676 = vmatpush2.msra.mxu0 0.0
  %5677 = vmatprep.subr.mxu0 0.0
  %5678 = vmatpush2.msra.mxu0 0.0
  %5679 = vmatprep.subr.mxu0 0.0
  %5680 = vmatpush2.msra.mxu0 0.0
  %5681 = vmatprep.subr.mxu0 0.0
  %5682 = vmatpush2.msra.mxu0 0.0
  %5683 = vmatprep.subr.mxu0 0.0
  %5684 = vmatpush2.msra.mxu0 0.0
  %5685 = vmatprep.subr.mxu0 0.0
  %5686 = vmatpush2.msra.mxu0 0.0
  %5687 = vmatprep.mubr.f32.mxu0 0.0
  %5688 = vmatmul.mubr.f32.gmra.mxu0 %v5529
  %v5689 = vpop.f32.mrf.mxu0
  %v5690 = vadd.f32 %v5606, %v5689
  %v5691 = vpop.f32.mrf.mxu0
  %v5692 = vadd.f32 %v5610, %v5691
  %5693 = vmatprep.mubr.f32.mxu0 0.0
  %5694 = vmatmul.mubr.f32.gmra.mxu0 %v5530
  %v5695 = vpop.f32.mrf.mxu0
  %v5696 = vadd.f32 %v5606, %v5695
  %v5697 = vpop.f32.mrf.mxu0
  %v5698 = vadd.f32 %v5610, %v5697
  %5699 = vmatprep.mubr.f32.mxu0 0.0
  %5700 = vmatmul.mubr.f32.gmra.mxu0 %v5531
  %v5701 = vpop.f32.mrf.mxu0
  %v5702 = vadd.f32 %v5606, %v5701
  %v5703 = vpop.f32.mrf.mxu0
  %v5704 = vadd.f32 %v5610, %v5703
  %5705 = vmatprep.mubr.f32.mxu0 0.0
  %5706 = vmatmul.mubr.f32.gmra.mxu0 %v5532
  %v5707 = vpop.f32.mrf.mxu0
  %v5708 = vadd.f32 %v5606, %v5707
  %v5709 = vpop.f32.mrf.mxu0
  %v5710 = vadd.f32 %v5610, %v5709
  %5711 = vmatprep.mubr.f32.mxu0 0.0
  %5712 = vmatmul.mubr.f32.gmra.mxu0 %v5533
  %v5713 = vpop.f32.mrf.mxu0
  %v5714 = vadd.f32 %v5606, %v5713
  %v5715 = vpop.f32.mrf.mxu0
  %v5716 = vadd.f32 %v5610, %v5715
  %5717 = vmatprep.mubr.f32.mxu0 0.0
  %5718 = vmatmul.mubr.f32.gmra.mxu0 %v5534
  %v5719 = vpop.f32.mrf.mxu0
  %v5720 = vadd.f32 %v5606, %v5719
  %v5721 = vpop.f32.mrf.mxu0
  %v5722 = vadd.f32 %v5610, %v5721
  %5723 = vmatprep.mubr.f32.mxu0 0.0
  %5724 = vmatmul.mubr.f32.gmra.mxu0 %v5535
  %v5725 = vpop.f32.mrf.mxu0
  %v5726 = vadd.f32 %v5606, %v5725
  %v5727 = vpop.f32.mrf.mxu0
  %v5728 = vadd.f32 %v5610, %v5727
  %5729 = vmatprep.mubr.f32.mxu0 0.0
  %5730 = vmatmul.mubr.f32.gmra.mxu0 %v5536
  %v5731 = vpop.f32.mrf.mxu0
  %v5732 = vadd.f32 %v5606, %v5731
  %v5733 = vpop.f32.mrf.mxu0
  %v5734 = vadd.f32 %v5610, %v5733
  %5735 = vdwg.mxu0
  %5736 = vmatprep.subr.mxu0 %v5600
  %5737 = vmatpush1.msra.mxu0 %v5599
  %5738 = vmatprep.subr.mxu0 %v5596
  %5739 = vmatpush1.msra.mxu0 %v5595
  %5740 = vmatprep.subr.mxu0 %v5592
  %5741 = vmatpush1.msra.mxu0 %v5591
  %5742 = vmatprep.subr.mxu0 %v5588
  %5743 = vmatpush1.msra.mxu0 %v5587
  %5744 = vmatprep.subr.mxu0 %v5584
  %5745 = vmatpush1.msra.mxu0 %v5583
  %5746 = vmatprep.subr.mxu0 %v5580
  %5747 = vmatpush1.msra.mxu0 %v5579
  %5748 = vmatprep.subr.mxu0 %v5576
  %5749 = vmatpush1.msra.mxu0 %v5575
  %5750 = vmatprep.subr.mxu0 %v5572
  %5751 = vmatpush1.msra.mxu0 %v5571
  %5752 = vmatprep.subr.mxu0 %v5568
  %5753 = vmatpush1.msra.mxu0 %v5567
  %5754 = vmatprep.subr.mxu0 %v5564
  %5755 = vmatpush1.msra.mxu0 %v5563
  %5756 = vmatprep.subr.mxu0 %v5560
  %5757 = vmatpush1.msra.mxu0 %v5559
  %5758 = vmatprep.subr.mxu0 %v5556
  %5759 = vmatpush1.msra.mxu0 %v5555
  %5760 = vmatprep.subr.mxu0 %v5552
  %5761 = vmatpush1.msra.mxu0 %v5551
  %5762 = vmatprep.subr.mxu0 %v5548
  %5763 = vmatpush1.msra.mxu0 %v5547
  %5764 = vmatprep.subr.mxu0 %v5544
  %5765 = vmatpush1.msra.mxu0 %v5543
  %5766 = vmatprep.subr.mxu0 %v5540
  %5767 = vmatpush1.msra.mxu0 %v5539
  %5768 = vmatprep.subr.mxu0 0.0
  %5769 = vmatpush2.msra.mxu0 0.0
  %5770 = vmatprep.subr.mxu0 0.0
  %5771 = vmatpush2.msra.mxu0 0.0
  %5772 = vmatprep.subr.mxu0 0.0
  %5773 = vmatpush2.msra.mxu0 0.0
  %5774 = vmatprep.subr.mxu0 0.0
  %5775 = vmatpush2.msra.mxu0 0.0
  %5776 = vmatprep.subr.mxu0 0.0
  %5777 = vmatpush2.msra.mxu0 0.0
  %5778 = vmatprep.subr.mxu0 0.0
  %5779 = vmatpush2.msra.mxu0 0.0
  %5780 = vmatprep.subr.mxu0 0.0
  %5781 = vmatpush2.msra.mxu0 0.0
  %5782 = vmatprep.subr.mxu0 0.0
  %5783 = vmatpush2.msra.mxu0 0.0
  %5784 = vmatprep.subr.mxu0 0.0
  %5785 = vmatpush2.msra.mxu0 0.0
  %5786 = vmatprep.subr.mxu0 0.0
  %5787 = vmatpush2.msra.mxu0 0.0
  %5788 = vmatprep.subr.mxu0 0.0
  %5789 = vmatpush2.msra.mxu0 0.0
  %5790 = vmatprep.subr.mxu0 0.0
  %5791 = vmatpush2.msra.mxu0 0.0
  %5792 = vmatprep.subr.mxu0 0.0
  %5793 = vmatpush2.msra.mxu0 0.0
  %5794 = vmatprep.subr.mxu0 0.0
  %5795 = vmatpush2.msra.mxu0 0.0
  %5796 = vmatprep.subr.mxu0 0.0
  %5797 = vmatpush2.msra.mxu0 0.0
  %5798 = vmatprep.subr.mxu0 0.0
  %5799 = vmatpush2.msra.mxu0 0.0
  %5800 = vmatprep.mubr.f32.mxu0 0.0
  %5801 = vmatmul.mubr.f32.gmra.mxu0 %v5529
  %v5802 = vpop.f32.mrf.mxu0
  %v5803 = vadd.f32 %v5614, %v5802
  %v5804 = vpop.f32.mrf.mxu0
  %v5805 = vadd.f32 %v5618, %v5804
  %5806 = vmatprep.mubr.f32.mxu0 0.0
  %5807 = vmatmul.mubr.f32.gmra.mxu0 %v5530
  %v5808 = vpop.f32.mrf.mxu0
  %v5809 = vadd.f32 %v5614, %v5808
  %v5810 = vpop.f32.mrf.mxu0
  %v5811 = vadd.f32 %v5618, %v5810
  %5812 = vmatprep.mubr.f32.mxu0 0.0
  %5813 = vmatmul.mubr.f32.gmra.mxu0 %v5531
  %v5814 = vpop.f32.mrf.mxu0
  %v5815 = vadd.f32 %v5614, %v5814
  %v5816 = vpop.f32.mrf.mxu0
  %v5817 = vadd.f32 %v5618, %v5816
  %5818 = vmatprep.mubr.f32.mxu0 0.0
  %5819 = vmatmul.mubr.f32.gmra.mxu0 %v5532
  %v5820 = vpop.f32.mrf.mxu0
  %v5821 = vadd.f32 %v5614, %v5820
  %v5822 = vpop.f32.mrf.mxu0
  %v5823 = vadd.f32 %v5618, %v5822
  %5824 = vmatprep.mubr.f32.mxu0 0.0
  %5825 = vmatmul.mubr.f32.gmra.mxu0 %v5533
  %v5826 = vpop.f32.mrf.mxu0
  %v5827 = vadd.f32 %v5614, %v5826
  %v5828 = vpop.f32.mrf.mxu0
  %v5829 = vadd.f32 %v5618, %v5828
  %5830 = vmatprep.mubr.f32.mxu0 0.0
  %5831 = vmatmul.mubr.f32.gmra.mxu0 %v5534
  %v5832 = vpop.f32.mrf.mxu0
  %v5833 = vadd.f32 %v5614, %v5832
  %v5834 = vpop.f32.mrf.mxu0
  %v5835 = vadd.f32 %v5618, %v5834
  %5836 = vmatprep.mubr.f32.mxu0 0.0
  %5837 = vmatmul.mubr.f32.gmra.mxu0 %v5535
  %v5838 = vpop.f32.mrf.mxu0
  %v5839 = vadd.f32 %v5614, %v5838
  %v5840 = vpop.f32.mrf.mxu0
  %v5841 = vadd.f32 %v5618, %v5840
  %5842 = vmatprep.mubr.f32.mxu0 0.0
  %5843 = vmatmul.mubr.f32.gmra.mxu0 %v5536
  %v5844 = vpop.f32.mrf.mxu0
  %v5845 = vadd.f32 %v5614, %v5844
  %v5846 = vpop.f32.mrf.mxu0
  %v5847 = vadd.f32 %v5618, %v5846
  %5848 = vdwg.mxu0
  %5849 = vst [vmem:[#allocation2] sm:$0xff] %v5690
  %5850 = vst [vmem:[#allocation2 + $0x8] sm:$0xff] %v5692
  %5851 = vst [vmem:[#allocation2 + $0x10] sm:$0xff] %v5803
  %5852 = vst [vmem:[#allocation2 + $0x18] sm:$0xff] %v5805
  %5853 = vst [vmem:[#allocation2 + $0x20] sm:$0xff] %v5696
  %5854 = vst [vmem:[#allocation2 + $0x28] sm:$0xff] %v5698
  %5855 = vst [vmem:[#allocation2 + $0x30] sm:$0xff] %v5809
  %5856 = vst [vmem:[#allocation2 + $0x38] sm:$0xff] %v5811
  %5857 = vst [vmem:[#allocation2 + $0x40] sm:$0xff] %v5702
  %5858 = vst [vmem:[#allocation2 + $0x48] sm:$0xff] %v5704
  %5859 = vst [vmem:[#allocation2 + $0x50] sm:$0xff] %v5815
  %5860 = vst [vmem:[#allocation2 + $0x58] sm:$0xff] %v5817
  %5861 = vst [vmem:[#allocation2 + $0x60] sm:$0xff] %v5708
  %5862 = vst [vmem:[#allocation2 + $0x68] sm:$0xff] %v5710
  %5863 = vst [vmem:[#allocation2 + $0x70] sm:$0xff] %v5821
  %5864 = vst [vmem:[#allocation2 + $0x78] sm:$0xff] %v5823
  %5865 = vst [vmem:[#allocation2 + $0x80] sm:$0xff] %v5714
  %5866 = vst [vmem:[#allocation2 + $0x88] sm:$0xff] %v5716
  %5867 = vst [vmem:[#allocation2 + $0x90] sm:$0xff] %v5827
  %5868 = vst [vmem:[#allocation2 + $0x98] sm:$0xff] %v5829
  %5869 = vst [vmem:[#allocation2 + $0xa0] sm:$0xff] %v5720
  %5870 = vst [vmem:[#allocation2 + $0xa8] sm:$0xff] %v5722
  %5871 = vst [vmem:[#allocation2 + $0xb0] sm:$0xff] %v5833
  %5872 = vst [vmem:[#allocation2 + $0xb8] sm:$0xff] %v5835
  %5873 = vst [vmem:[#allocation2 + $0xc0] sm:$0xff] %v5726
  %5874 = vst [vmem:[#allocation2 + $0xc8] sm:$0xff] %v5728
  %5875 = vst [vmem:[#allocation2 + $0xd0] sm:$0xff] %v5839
  %5876 = vst [vmem:[#allocation2 + $0xd8] sm:$0xff] %v5841
  %5877 = vst [vmem:[#allocation2 + $0xe0] sm:$0xff] %v5732
  %5878 = vst [vmem:[#allocation2 + $0xe8] sm:$0xff] %v5734
  %5879 = vst [vmem:[#allocation2 + $0xf0] sm:$0xff] %v5845
  %5880 = vst [vmem:[#allocation2 + $0xf8] sm:$0xff] %v5847
  %v5881 = vld [vmem:[%s11] sm:$0xff]
  %v5882 = vld [vmem:[%s11 + $0x8] sm:$0xff]
  %v5883 = vld [vmem:[%s11 + $0x10] sm:$0xff]
  %v5884 = vld [vmem:[%s11 + $0x18] sm:$0xff]
  %v5885 = vld [vmem:[%s11 + $0x20] sm:$0xff]
  %v5886 = vld [vmem:[%s11 + $0x28] sm:$0xff]
  %v5887 = vld [vmem:[%s11 + $0x30] sm:$0xff]
  %v5888 = vld [vmem:[%s11 + $0x38] sm:$0xff]
  %v5889 = vld [vmem:[%s11 + $0x40] sm:$0xff]
  %v5890 = vld [vmem:[%s11 + $0x48] sm:$0xff]
  %v5891 = vld [vmem:[%s11 + $0x50] sm:$0xff]
  %v5892 = vld [vmem:[%s11 + $0x58] sm:$0xff]
  %v5893 = vld [vmem:[%s11 + $0x60] sm:$0xff]
  %v5894 = vld [vmem:[%s11 + $0x68] sm:$0xff]
  %v5895 = vld [vmem:[%s11 + $0x70] sm:$0xff]
  %v5896 = vld [vmem:[%s11 + $0x78] sm:$0xff]
  %v5897 = vld [vmem:[%s11 + $0x80] sm:$0xff]
  %v5898 = vld [vmem:[%s11 + $0x88] sm:$0xff]
  %v5899 = vld [vmem:[%s11 + $0x90] sm:$0xff]
  %v5900 = vld [vmem:[%s11 + $0x98] sm:$0xff]
  %v5901 = vld [vmem:[%s11 + $0xa0] sm:$0xff]
  %v5902 = vld [vmem:[%s11 + $0xa8] sm:$0xff]
  %v5903 = vld [vmem:[%s11 + $0xb0] sm:$0xff]
  %v5904 = vld [vmem:[%s11 + $0xb8] sm:$0xff]
  %v5905 = vld [vmem:[%s11 + $0xc0] sm:$0xff]
  %v5906 = vld [vmem:[%s11 + $0xc8] sm:$0xff]
  %v5907 = vld [vmem:[%s11 + $0xd0] sm:$0xff]
  %v5908 = vld [vmem:[%s11 + $0xd8] sm:$0xff]
  %v5909 = vld [vmem:[%s11 + $0xe0] sm:$0xff]
  %v5910 = vld [vmem:[%s11 + $0xe8] sm:$0xff]
  %v5911 = vld [vmem:[%s11 + $0xf0] sm:$0xff]
  %v5912 = vld [vmem:[%s11 + $0xf8] sm:$0xff]
  %v5913 = vld [vmem:[%s11 + $0x100] sm:$0xff]
  %v5914 = vld [vmem:[%s11 + $0x108] sm:$0xff]
  %v5915 = vld [vmem:[%s11 + $0x110] sm:$0xff]
  %v5916 = vld [vmem:[%s11 + $0x118] sm:$0xff]
  %v5917 = vld [vmem:[%s11 + $0x120] sm:$0xff]
  %v5918 = vld [vmem:[%s11 + $0x128] sm:$0xff]
  %v5919 = vld [vmem:[%s11 + $0x130] sm:$0xff]
  %v5920 = vld [vmem:[%s11 + $0x138] sm:$0xff]
  %v5921 = vld [vmem:[%s11 + $0x140] sm:$0xff]
  %v5922 = vld [vmem:[%s11 + $0x148] sm:$0xff]
  %v5923 = vld [vmem:[%s11 + $0x150] sm:$0xff]
  %v5924 = vld [vmem:[%s11 + $0x158] sm:$0xff]
  %v5925 = vld [vmem:[%s11 + $0x160] sm:$0xff]
  %v5926 = vld [vmem:[%s11 + $0x168] sm:$0xff]
  %v5927 = vld [vmem:[%s11 + $0x170] sm:$0xff]
  %v5928 = vld [vmem:[%s11 + $0x178] sm:$0xff]
  %v5929 = vld [vmem:[%s11 + $0x180] sm:$0xff]
  %v5930 = vld [vmem:[%s11 + $0x188] sm:$0xff]
  %v5931 = vld [vmem:[%s11 + $0x190] sm:$0xff]
  %v5932 = vld [vmem:[%s11 + $0x198] sm:$0xff]
  %v5933 = vld [vmem:[%s11 + $0x1a0] sm:$0xff]
  %v5934 = vld [vmem:[%s11 + $0x1a8] sm:$0xff]
  %v5935 = vld [vmem:[%s11 + $0x1b0] sm:$0xff]
  %v5936 = vld [vmem:[%s11 + $0x1b8] sm:$0xff]
  %v5937 = vld [vmem:[%s11 + $0x1c0] sm:$0xff]
  %v5938 = vld [vmem:[%s11 + $0x1c8] sm:$0xff]
  %v5939 = vld [vmem:[%s11 + $0x1d0] sm:$0xff]
  %v5940 = vld [vmem:[%s11 + $0x1d8] sm:$0xff]
  %v5941 = vld [vmem:[%s11 + $0x1e0] sm:$0xff]
  %v5942 = vld [vmem:[%s11 + $0x1e8] sm:$0xff]
  %v5943 = vld [vmem:[%s11 + $0x1f0] sm:$0xff]
  %v5944 = vld [vmem:[%s11 + $0x1f8] sm:$0xff]
  %v5945 = vld [vmem:[%s468] sm:$0xff]
  %v5946 = vld [vmem:[%s468 + $0x8] sm:$0xff]
  %v5947 = vld [vmem:[%s468 + $0x10] sm:$0xff]
  %v5948 = vld [vmem:[%s468 + $0x18] sm:$0xff]
  %5949 = vmatprep.subr.mxu0 %v5942
  %5950 = vmatpush1.msra.mxu0 %v5941
  %5951 = vmatprep.subr.mxu0 %v5938
  %5952 = vmatpush1.msra.mxu0 %v5937
  %5953 = vmatprep.subr.mxu0 %v5934
  %5954 = vmatpush1.msra.mxu0 %v5933
  %5955 = vmatprep.subr.mxu0 %v5930
  %5956 = vmatpush1.msra.mxu0 %v5929
  %5957 = vmatprep.subr.mxu0 %v5926
  %5958 = vmatpush1.msra.mxu0 %v5925
  %5959 = vmatprep.subr.mxu0 %v5922
  %5960 = vmatpush1.msra.mxu0 %v5921
  %5961 = vmatprep.subr.mxu0 %v5918
  %5962 = vmatpush1.msra.mxu0 %v5917
  %5963 = vmatprep.subr.mxu0 %v5914
  %5964 = vmatpush1.msra.mxu0 %v5913
  %5965 = vmatprep.subr.mxu0 %v5910
  %5966 = vmatpush1.msra.mxu0 %v5909
  %5967 = vmatprep.subr.mxu0 %v5906
  %5968 = vmatpush1.msra.mxu0 %v5905
  %5969 = vmatprep.subr.mxu0 %v5902
  %5970 = vmatpush1.msra.mxu0 %v5901
  %5971 = vmatprep.subr.mxu0 %v5898
  %5972 = vmatpush1.msra.mxu0 %v5897
  %5973 = vmatprep.subr.mxu0 %v5894
  %5974 = vmatpush1.msra.mxu0 %v5893
  %5975 = vmatprep.subr.mxu0 %v5890
  %5976 = vmatpush1.msra.mxu0 %v5889
  %5977 = vmatprep.subr.mxu0 %v5886
  %5978 = vmatpush1.msra.mxu0 %v5885
  %5979 = vmatprep.subr.mxu0 %v5882
  %5980 = vmatpush1.msra.mxu0 %v5881
  %5981 = vmatprep.subr.mxu0 0.0
  %5982 = vmatpush2.msra.mxu0 0.0
  %5983 = vmatprep.subr.mxu0 0.0
  %5984 = vmatpush2.msra.mxu0 0.0
  %5985 = vmatprep.subr.mxu0 0.0
  %5986 = vmatpush2.msra.mxu0 0.0
  %5987 = vmatprep.subr.mxu0 0.0
  %5988 = vmatpush2.msra.mxu0 0.0
  %5989 = vmatprep.subr.mxu0 0.0
  %5990 = vmatpush2.msra.mxu0 0.0
  %5991 = vmatprep.subr.mxu0 0.0
  %5992 = vmatpush2.msra.mxu0 0.0
  %5993 = vmatprep.subr.mxu0 0.0
  %5994 = vmatpush2.msra.mxu0 0.0
  %5995 = vmatprep.subr.mxu0 0.0
  %5996 = vmatpush2.msra.mxu0 0.0
  %5997 = vmatprep.subr.mxu0 0.0
  %5998 = vmatpush2.msra.mxu0 0.0
  %5999 = vmatprep.subr.mxu0 0.0
  %6000 = vmatpush2.msra.mxu0 0.0
  %6001 = vmatprep.subr.mxu0 0.0
  %6002 = vmatpush2.msra.mxu0 0.0
  %6003 = vmatprep.subr.mxu0 0.0
  %6004 = vmatpush2.msra.mxu0 0.0
  %6005 = vmatprep.subr.mxu0 0.0
  %6006 = vmatpush2.msra.mxu0 0.0
  %6007 = vmatprep.subr.mxu0 0.0
  %6008 = vmatpush2.msra.mxu0 0.0
  %6009 = vmatprep.subr.mxu0 0.0
  %6010 = vmatpush2.msra.mxu0 0.0
  %6011 = vmatprep.subr.mxu0 0.0
  %6012 = vmatpush2.msra.mxu0 0.0
  %6013 = vmatprep.mubr.f32.mxu0 0.0
  %6014 = vmatmul.mubr.f32.gmra.mxu0 0.0
  %v6015 = vpop.f32.mrf.mxu0
  %v6016 = vadd.f32 0.0, %v6015
  %v6017 = vpop.f32.mrf.mxu0
  %v6018 = vadd.f32 0.0, %v6017
  %6019 = vdwg.mxu0
  %6020 = vmatprep.subr.mxu0 %v5944
  %6021 = vmatpush1.msra.mxu0 %v5943
  %6022 = vmatprep.subr.mxu0 %v5940
  %6023 = vmatpush1.msra.mxu0 %v5939
  %6024 = vmatprep.subr.mxu0 %v5936
  %6025 = vmatpush1.msra.mxu0 %v5935
  %6026 = vmatprep.subr.mxu0 %v5932
  %6027 = vmatpush1.msra.mxu0 %v5931
  %6028 = vmatprep.subr.mxu0 %v5928
  %6029 = vmatpush1.msra.mxu0 %v5927
  %6030 = vmatprep.subr.mxu0 %v5924
  %6031 = vmatpush1.msra.mxu0 %v5923
  %6032 = vmatprep.subr.mxu0 %v5920
  %6033 = vmatpush1.msra.mxu0 %v5919
  %6034 = vmatprep.subr.mxu0 %v5916
  %6035 = vmatpush1.msra.mxu0 %v5915
  %6036 = vmatprep.subr.mxu0 %v5912
  %6037 = vmatpush1.msra.mxu0 %v5911
  %6038 = vmatprep.subr.mxu0 %v5908
  %6039 = vmatpush1.msra.mxu0 %v5907
  %6040 = vmatprep.subr.mxu0 %v5904
  %6041 = vmatpush1.msra.mxu0 %v5903
  %6042 = vmatprep.subr.mxu0 %v5900
  %6043 = vmatpush1.msra.mxu0 %v5899
  %6044 = vmatprep.subr.mxu0 %v5896
  %6045 = vmatpush1.msra.mxu0 %v5895
  %6046 = vmatprep.subr.mxu0 %v5892
  %6047 = vmatpush1.msra.mxu0 %v5891
  %6048 = vmatprep.subr.mxu0 %v5888
  %6049 = vmatpush1.msra.mxu0 %v5887
  %6050 = vmatprep.subr.mxu0 %v5884
  %6051 = vmatpush1.msra.mxu0 %v5883
  %6052 = vmatprep.subr.mxu0 0.0
  %6053 = vmatpush2.msra.mxu0 0.0
  %6054 = vmatprep.subr.mxu0 0.0
  %6055 = vmatpush2.msra.mxu0 0.0
  %6056 = vmatprep.subr.mxu0 0.0
  %6057 = vmatpush2.msra.mxu0 0.0
  %6058 = vmatprep.subr.mxu0 0.0
  %6059 = vmatpush2.msra.mxu0 0.0
  %6060 = vmatprep.subr.mxu0 0.0
  %6061 = vmatpush2.msra.mxu0 0.0
  %6062 = vmatprep.subr.mxu0 0.0
  %6063 = vmatpush2.msra.mxu0 0.0
  %6064 = vmatprep.subr.mxu0 0.0
  %6065 = vmatpush2.msra.mxu0 0.0
  %6066 = vmatprep.subr.mxu0 0.0
  %6067 = vmatpush2.msra.mxu0 0.0
  %6068 = vmatprep.subr.mxu0 0.0
  %6069 = vmatpush2.msra.mxu0 0.0
  %6070 = vmatprep.subr.mxu0 0.0
  %6071 = vmatpush2.msra.mxu0 0.0
  %6072 = vmatprep.subr.mxu0 0.0
  %6073 = vmatpush2.msra.mxu0 0.0
  %6074 = vmatprep.subr.mxu0 0.0
  %6075 = vmatpush2.msra.mxu0 0.0
  %6076 = vmatprep.subr.mxu0 0.0
  %6077 = vmatpush2.msra.mxu0 0.0
  %6078 = vmatprep.subr.mxu0 0.0
  %6079 = vmatpush2.msra.mxu0 0.0
  %6080 = vmatprep.subr.mxu0 0.0
  %6081 = vmatpush2.msra.mxu0 0.0
  %6082 = vmatprep.subr.mxu0 0.0
  %6083 = vmatpush2.msra.mxu0 0.0
  %6084 = vmatprep.mubr.f32.mxu0 0.0
  %6085 = vmatmul.mubr.f32.gmra.mxu0 0.0
  %v6086 = vpop.f32.mrf.mxu0
  %v6087 = vadd.f32 0.0, %v6086
  %v6088 = vpop.f32.mrf.mxu0
  %v6089 = vadd.f32 0.0, %v6088
  %6090 = vdwg.mxu0
  %v6091 = vadd.f32 %v5945, %v6016
  %v6092 = vadd.f32 %v5946, %v6018
  %v6093 = vadd.f32 %v5947, %v6087
  %v6094 = vadd.f32 %v5948, %v6089
  %v6095 = vxor.u32 %v6091, 2147483648
  %v6096 = vmul.f32 %v6095, 1.442695
  %v6097 = vpow.pop %v6096
  %v6098 = vadd.f32 %v6097, 1.0
  %v6099 = vrcp.pop %v6098
  %v6100 = vmul.f32 1.0, %v6099
  %v6101 = vxor.u32 %v6092, 2147483648
  %v6102 = vmul.f32 %v6101, 1.442695
  %v6103 = vpow.pop %v6102
  %v6104 = vadd.f32 %v6103, 1.0
  %v6105 = vrcp.pop %v6104
  %v6106 = vmul.f32 1.0, %v6105
  %v6107 = vtanh.pop %v6093
  %v6108 = vxor.u32 %v6094, 2147483648
  %v6109 = vmul.f32 %v6108, 1.442695
  %v6110 = vpow.pop %v6109
  %v6111 = vadd.f32 %v6110, 1.0
  %v6112 = vrcp.pop %v6111
  %v6113 = vmul.f32 1.0, %v6112
  %v6114 = vmul.f32 %v6106, 0.0
  %v6115 = vmul.f32 %v6100, %v6107
  %v6116 = vadd.f32 %v6114, %v6115
  %v6117 = vtanh.pop %v6116
  %v6118 = vmul.f32 %v6113, %v6117
  %v6119 = vld [vmem:[%s646] sm:$0xff]
  %v6120 = vld [vmem:[%s646 + $0x8] sm:$0xff]
  %v6121 = vld [vmem:[%s646 + $0x10] sm:$0xff]
  %v6122 = vld [vmem:[%s646 + $0x18] sm:$0xff]
  %6123 = vmatprep.subr.mxu0 %v5942
  %6124 = vmatpush1.msra.mxu0 %v5941
  %6125 = vmatprep.subr.mxu0 %v5938
  %6126 = vmatpush1.msra.mxu0 %v5937
  %6127 = vmatprep.subr.mxu0 %v5934
  %6128 = vmatpush1.msra.mxu0 %v5933
  %6129 = vmatprep.subr.mxu0 %v5930
  %6130 = vmatpush1.msra.mxu0 %v5929
  %6131 = vmatprep.subr.mxu0 %v5926
  %6132 = vmatpush1.msra.mxu0 %v5925
  %6133 = vmatprep.subr.mxu0 %v5922
  %6134 = vmatpush1.msra.mxu0 %v5921
  %6135 = vmatprep.subr.mxu0 %v5918
  %6136 = vmatpush1.msra.mxu0 %v5917
  %6137 = vmatprep.subr.mxu0 %v5914
  %6138 = vmatpush1.msra.mxu0 %v5913
  %6139 = vmatprep.subr.mxu0 %v5910
  %6140 = vmatpush1.msra.mxu0 %v5909
  %6141 = vmatprep.subr.mxu0 %v5906
  %6142 = vmatpush1.msra.mxu0 %v5905
  %6143 = vmatprep.subr.mxu0 %v5902
  %6144 = vmatpush1.msra.mxu0 %v5901
  %6145 = vmatprep.subr.mxu0 %v5898
  %6146 = vmatpush1.msra.mxu0 %v5897
  %6147 = vmatprep.subr.mxu0 %v5894
  %6148 = vmatpush1.msra.mxu0 %v5893
  %6149 = vmatprep.subr.mxu0 %v5890
  %6150 = vmatpush1.msra.mxu0 %v5889
  %6151 = vmatprep.subr.mxu0 %v5886
  %6152 = vmatpush1.msra.mxu0 %v5885
  %6153 = vmatprep.subr.mxu0 %v5882
  %6154 = vmatpush1.msra.mxu0 %v5881
  %6155 = vmatprep.subr.mxu0 0.0
  %6156 = vmatpush2.msra.mxu0 0.0
  %6157 = vmatprep.subr.mxu0 0.0
  %6158 = vmatpush2.msra.mxu0 0.0
  %6159 = vmatprep.subr.mxu0 0.0
  %6160 = vmatpush2.msra.mxu0 0.0
  %6161 = vmatprep.subr.mxu0 0.0
  %6162 = vmatpush2.msra.mxu0 0.0
  %6163 = vmatprep.subr.mxu0 0.0
  %6164 = vmatpush2.msra.mxu0 0.0
  %6165 = vmatprep.subr.mxu0 0.0
  %6166 = vmatpush2.msra.mxu0 0.0
  %6167 = vmatprep.subr.mxu0 0.0
  %6168 = vmatpush2.msra.mxu0 0.0
  %6169 = vmatprep.subr.mxu0 0.0
  %6170 = vmatpush2.msra.mxu0 0.0
  %6171 = vmatprep.subr.mxu0 0.0
  %6172 = vmatpush2.msra.mxu0 0.0
  %6173 = vmatprep.subr.mxu0 0.0
  %6174 = vmatpush2.msra.mxu0 0.0
  %6175 = vmatprep.subr.mxu0 0.0
  %6176 = vmatpush2.msra.mxu0 0.0
  %6177 = vmatprep.subr.mxu0 0.0
  %6178 = vmatpush2.msra.mxu0 0.0
  %6179 = vmatprep.subr.mxu0 0.0
  %6180 = vmatpush2.msra.mxu0 0.0
  %6181 = vmatprep.subr.mxu0 0.0
  %6182 = vmatpush2.msra.mxu0 0.0
  %6183 = vmatprep.subr.mxu0 0.0
  %6184 = vmatpush2.msra.mxu0 0.0
  %6185 = vmatprep.subr.mxu0 0.0
  %6186 = vmatpush2.msra.mxu0 0.0
  %6187 = vmatprep.mubr.f32.mxu0 0.0
  %6188 = vmatmul.mubr.f32.gmra.mxu0 %v6118
  %v6189 = vpop.f32.mrf.mxu0
  %v6190 = vadd.f32 0.0, %v6189
  %v6191 = vpop.f32.mrf.mxu0
  %v6192 = vadd.f32 0.0, %v6191
  %6193 = vdwg.mxu0
  %6194 = vmatprep.subr.mxu0 %v5944
  %6195 = vmatpush1.msra.mxu0 %v5943
  %6196 = vmatprep.subr.mxu0 %v5940
  %6197 = vmatpush1.msra.mxu0 %v5939
  %6198 = vmatprep.subr.mxu0 %v5936
  %6199 = vmatpush1.msra.mxu0 %v5935
  %6200 = vmatprep.subr.mxu0 %v5932
  %6201 = vmatpush1.msra.mxu0 %v5931
  %6202 = vmatprep.subr.mxu0 %v5928
  %6203 = vmatpush1.msra.mxu0 %v5927
  %6204 = vmatprep.subr.mxu0 %v5924
  %6205 = vmatpush1.msra.mxu0 %v5923
  %6206 = vmatprep.subr.mxu0 %v5920
  %6207 = vmatpush1.msra.mxu0 %v5919
  %6208 = vmatprep.subr.mxu0 %v5916
  %6209 = vmatpush1.msra.mxu0 %v5915
  %6210 = vmatprep.subr.mxu0 %v5912
  %6211 = vmatpush1.msra.mxu0 %v5911
  %6212 = vmatprep.subr.mxu0 %v5908
  %6213 = vmatpush1.msra.mxu0 %v5907
  %6214 = vmatprep.subr.mxu0 %v5904
  %6215 = vmatpush1.msra.mxu0 %v5903
  %6216 = vmatprep.subr.mxu0 %v5900
  %6217 = vmatpush1.msra.mxu0 %v5899
  %6218 = vmatprep.subr.mxu0 %v5896
  %6219 = vmatpush1.msra.mxu0 %v5895
  %6220 = vmatprep.subr.mxu0 %v5892
  %6221 = vmatpush1.msra.mxu0 %v5891
  %6222 = vmatprep.subr.mxu0 %v5888
  %6223 = vmatpush1.msra.mxu0 %v5887
  %6224 = vmatprep.subr.mxu0 %v5884
  %6225 = vmatpush1.msra.mxu0 %v5883
  %6226 = vmatprep.subr.mxu0 0.0
  %6227 = vmatpush2.msra.mxu0 0.0
  %6228 = vmatprep.subr.mxu0 0.0
  %6229 = vmatpush2.msra.mxu0 0.0
  %6230 = vmatprep.subr.mxu0 0.0
  %6231 = vmatpush2.msra.mxu0 0.0
  %6232 = vmatprep.subr.mxu0 0.0
  %6233 = vmatpush2.msra.mxu0 0.0
  %6234 = vmatprep.subr.mxu0 0.0
  %6235 = vmatpush2.msra.mxu0 0.0
  %6236 = vmatprep.subr.mxu0 0.0
  %6237 = vmatpush2.msra.mxu0 0.0
  %6238 = vmatprep.subr.mxu0 0.0
  %6239 = vmatpush2.msra.mxu0 0.0
  %6240 = vmatprep.subr.mxu0 0.0
  %6241 = vmatpush2.msra.mxu0 0.0
  %6242 = vmatprep.subr.mxu0 0.0
  %6243 = vmatpush2.msra.mxu0 0.0
  %6244 = vmatprep.subr.mxu0 0.0
  %6245 = vmatpush2.msra.mxu0 0.0
  %6246 = vmatprep.subr.mxu0 0.0
  %6247 = vmatpush2.msra.mxu0 0.0
  %6248 = vmatprep.subr.mxu0 0.0
  %6249 = vmatpush2.msra.mxu0 0.0
  %6250 = vmatprep.subr.mxu0 0.0
  %6251 = vmatpush2.msra.mxu0 0.0
  %6252 = vmatprep.subr.mxu0 0.0
  %6253 = vmatpush2.msra.mxu0 0.0
  %6254 = vmatprep.subr.mxu0 0.0
  %6255 = vmatpush2.msra.mxu0 0.0
  %6256 = vmatprep.subr.mxu0 0.0
  %6257 = vmatpush2.msra.mxu0 0.0
  %6258 = vmatprep.mubr.f32.mxu0 0.0
  %6259 = vmatmul.mubr.f32.gmra.mxu0 %v6118
  %v6260 = vpop.f32.mrf.mxu0
  %v6261 = vadd.f32 0.0, %v6260
  %v6262 = vpop.f32.mrf.mxu0
  %v6263 = vadd.f32 0.0, %v6262
  %6264 = vdwg.mxu0
  %v6265 = vadd.f32 %v6119, %v6190
  %v6266 = vadd.f32 %v6120, %v6192
  %v6267 = vadd.f32 %v6121, %v6261
  %v6268 = vadd.f32 %v6122, %v6263
  %v6269 = vxor.u32 %v6265, 2147483648
  %v6270 = vmul.f32 %v6269, 1.442695
  %v6271 = vpow.pop %v6270
  %v6272 = vadd.f32 %v6271, 1.0
  %v6273 = vrcp.pop %v6272
  %v6274 = vmul.f32 1.0, %v6273
  %v6275 = vxor.u32 %v6266, 2147483648
  %v6276 = vmul.f32 %v6275, 1.442695
  %v6277 = vpow.pop %v6276
  %v6278 = vadd.f32 %v6277, 1.0
  %v6279 = vrcp.pop %v6278
  %v6280 = vmul.f32 1.0, %v6279
  %v6281 = vtanh.pop %v6267
  %v6282 = vxor.u32 %v6268, 2147483648
  %v6283 = vmul.f32 %v6282, 1.442695
  %v6284 = vpow.pop %v6283
  %v6285 = vadd.f32 %v6284, 1.0
  %v6286 = vrcp.pop %v6285
  %v6287 = vmul.f32 1.0, %v6286
  %v6288 = vmul.f32 %v6280, %v6116
  %v6289 = vmul.f32 %v6274, %v6281
  %v6290 = vadd.f32 %v6288, %v6289
  %v6291 = vtanh.pop %v6290
  %v6292 = vmul.f32 %v6287, %v6291
  %v6293 = vld [vmem:[%s825] sm:$0xff]
  %v6294 = vld [vmem:[%s825 + $0x8] sm:$0xff]
  %v6295 = vld [vmem:[%s825 + $0x10] sm:$0xff]
  %v6296 = vld [vmem:[%s825 + $0x18] sm:$0xff]
  %6297 = vmatprep.subr.mxu0 %v5942
  %6298 = vmatpush1.msra.mxu0 %v5941
  %6299 = vmatprep.subr.mxu0 %v5938
  %6300 = vmatpush1.msra.mxu0 %v5937
  %6301 = vmatprep.subr.mxu0 %v5934
  %6302 = vmatpush1.msra.mxu0 %v5933
  %6303 = vmatprep.subr.mxu0 %v5930
  %6304 = vmatpush1.msra.mxu0 %v5929
  %6305 = vmatprep.subr.mxu0 %v5926
  %6306 = vmatpush1.msra.mxu0 %v5925
  %6307 = vmatprep.subr.mxu0 %v5922
  %6308 = vmatpush1.msra.mxu0 %v5921
  %6309 = vmatprep.subr.mxu0 %v5918
  %6310 = vmatpush1.msra.mxu0 %v5917
  %6311 = vmatprep.subr.mxu0 %v5914
  %6312 = vmatpush1.msra.mxu0 %v5913
  %6313 = vmatprep.subr.mxu0 %v5910
  %6314 = vmatpush1.msra.mxu0 %v5909
  %6315 = vmatprep.subr.mxu0 %v5906
  %6316 = vmatpush1.msra.mxu0 %v5905
  %6317 = vmatprep.subr.mxu0 %v5902
  %6318 = vmatpush1.msra.mxu0 %v5901
  %6319 = vmatprep.subr.mxu0 %v5898
  %6320 = vmatpush1.msra.mxu0 %v5897
  %6321 = vmatprep.subr.mxu0 %v5894
  %6322 = vmatpush1.msra.mxu0 %v5893
  %6323 = vmatprep.subr.mxu0 %v5890
  %6324 = vmatpush1.msra.mxu0 %v5889
  %6325 = vmatprep.subr.mxu0 %v5886
  %6326 = vmatpush1.msra.mxu0 %v5885
  %6327 = vmatprep.subr.mxu0 %v5882
  %6328 = vmatpush1.msra.mxu0 %v5881
  %6329 = vmatprep.subr.mxu0 0.0
  %6330 = vmatpush2.msra.mxu0 0.0
  %6331 = vmatprep.subr.mxu0 0.0
  %6332 = vmatpush2.msra.mxu0 0.0
  %6333 = vmatprep.subr.mxu0 0.0
  %6334 = vmatpush2.msra.mxu0 0.0
  %6335 = vmatprep.subr.mxu0 0.0
  %6336 = vmatpush2.msra.mxu0 0.0
  %6337 = vmatprep.subr.mxu0 0.0
  %6338 = vmatpush2.msra.mxu0 0.0
  %6339 = vmatprep.subr.mxu0 0.0
  %6340 = vmatpush2.msra.mxu0 0.0
  %6341 = vmatprep.subr.mxu0 0.0
  %6342 = vmatpush2.msra.mxu0 0.0
  %6343 = vmatprep.subr.mxu0 0.0
  %6344 = vmatpush2.msra.mxu0 0.0
  %6345 = vmatprep.subr.mxu0 0.0
  %6346 = vmatpush2.msra.mxu0 0.0
  %6347 = vmatprep.subr.mxu0 0.0
  %6348 = vmatpush2.msra.mxu0 0.0
  %6349 = vmatprep.subr.mxu0 0.0
  %6350 = vmatpush2.msra.mxu0 0.0
  %6351 = vmatprep.subr.mxu0 0.0
  %6352 = vmatpush2.msra.mxu0 0.0
  %6353 = vmatprep.subr.mxu0 0.0
  %6354 = vmatpush2.msra.mxu0 0.0
  %6355 = vmatprep.subr.mxu0 0.0
  %6356 = vmatpush2.msra.mxu0 0.0
  %6357 = vmatprep.subr.mxu0 0.0
  %6358 = vmatpush2.msra.mxu0 0.0
  %6359 = vmatprep.subr.mxu0 0.0
  %6360 = vmatpush2.msra.mxu0 0.0
  %6361 = vmatprep.mubr.f32.mxu0 0.0
  %6362 = vmatmul.mubr.f32.gmra.mxu0 %v6292
  %v6363 = vpop.f32.mrf.mxu0
  %v6364 = vadd.f32 0.0, %v6363
  %v6365 = vpop.f32.mrf.mxu0
  %v6366 = vadd.f32 0.0, %v6365
  %6367 = vdwg.mxu0
  %6368 = vmatprep.subr.mxu0 %v5944
  %6369 = vmatpush1.msra.mxu0 %v5943
  %6370 = vmatprep.subr.mxu0 %v5940
  %6371 = vmatpush1.msra.mxu0 %v5939
  %6372 = vmatprep.subr.mxu0 %v5936
  %6373 = vmatpush1.msra.mxu0 %v5935
  %6374 = vmatprep.subr.mxu0 %v5932
  %6375 = vmatpush1.msra.mxu0 %v5931
  %6376 = vmatprep.subr.mxu0 %v5928
  %6377 = vmatpush1.msra.mxu0 %v5927
  %6378 = vmatprep.subr.mxu0 %v5924
  %6379 = vmatpush1.msra.mxu0 %v5923
  %6380 = vmatprep.subr.mxu0 %v5920
  %6381 = vmatpush1.msra.mxu0 %v5919
  %6382 = vmatprep.subr.mxu0 %v5916
  %6383 = vmatpush1.msra.mxu0 %v5915
  %6384 = vmatprep.subr.mxu0 %v5912
  %6385 = vmatpush1.msra.mxu0 %v5911
  %6386 = vmatprep.subr.mxu0 %v5908
  %6387 = vmatpush1.msra.mxu0 %v5907
  %6388 = vmatprep.subr.mxu0 %v5904
  %6389 = vmatpush1.msra.mxu0 %v5903
  %6390 = vmatprep.subr.mxu0 %v5900
  %6391 = vmatpush1.msra.mxu0 %v5899
  %6392 = vmatprep.subr.mxu0 %v5896
  %6393 = vmatpush1.msra.mxu0 %v5895
  %6394 = vmatprep.subr.mxu0 %v5892
  %6395 = vmatpush1.msra.mxu0 %v5891
  %6396 = vmatprep.subr.mxu0 %v5888
  %6397 = vmatpush1.msra.mxu0 %v5887
  %6398 = vmatprep.subr.mxu0 %v5884
  %6399 = vmatpush1.msra.mxu0 %v5883
  %6400 = vmatprep.subr.mxu0 0.0
  %6401 = vmatpush2.msra.mxu0 0.0
  %6402 = vmatprep.subr.mxu0 0.0
  %6403 = vmatpush2.msra.mxu0 0.0
  %6404 = vmatprep.subr.mxu0 0.0
  %6405 = vmatpush2.msra.mxu0 0.0
  %6406 = vmatprep.subr.mxu0 0.0
  %6407 = vmatpush2.msra.mxu0 0.0
  %6408 = vmatprep.subr.mxu0 0.0
  %6409 = vmatpush2.msra.mxu0 0.0
  %6410 = vmatprep.subr.mxu0 0.0
  %6411 = vmatpush2.msra.mxu0 0.0
  %6412 = vmatprep.subr.mxu0 0.0
  %6413 = vmatpush2.msra.mxu0 0.0
  %6414 = vmatprep.subr.mxu0 0.0
  %6415 = vmatpush2.msra.mxu0 0.0
  %6416 = vmatprep.subr.mxu0 0.0
  %6417 = vmatpush2.msra.mxu0 0.0
  %6418 = vmatprep.subr.mxu0 0.0
  %6419 = vmatpush2.msra.mxu0 0.0
  %6420 = vmatprep.subr.mxu0 0.0
  %6421 = vmatpush2.msra.mxu0 0.0
  %6422 = vmatprep.subr.mxu0 0.0
  %6423 = vmatpush2.msra.mxu0 0.0
  %6424 = vmatprep.subr.mxu0 0.0
  %6425 = vmatpush2.msra.mxu0 0.0
  %6426 = vmatprep.subr.mxu0 0.0
  %6427 = vmatpush2.msra.mxu0 0.0
  %6428 = vmatprep.subr.mxu0 0.0
  %6429 = vmatpush2.msra.mxu0 0.0
  %6430 = vmatprep.subr.mxu0 0.0
  %6431 = vmatpush2.msra.mxu0 0.0
  %6432 = vmatprep.mubr.f32.mxu0 0.0
  %6433 = vmatmul.mubr.f32.gmra.mxu0 %v6292
  %v6434 = vpop.f32.mrf.mxu0
  %v6435 = vadd.f32 0.0, %v6434
  %v6436 = vpop.f32.mrf.mxu0
  %v6437 = vadd.f32 0.0, %v6436
  %6438 = vdwg.mxu0
  %v6439 = vadd.f32 %v6293, %v6364
  %v6440 = vadd.f32 %v6294, %v6366
  %v6441 = vadd.f32 %v6295, %v6435
  %v6442 = vadd.f32 %v6296, %v6437
  %v6443 = vxor.u32 %v6439, 2147483648
  %v6444 = vmul.f32 %v6443, 1.442695
  %v6445 = vpow.pop %v6444
  %v6446 = vadd.f32 %v6445, 1.0
  %v6447 = vrcp.pop %v6446
  %v6448 = vmul.f32 1.0, %v6447
  %v6449 = vxor.u32 %v6440, 2147483648
  %v6450 = vmul.f32 %v6449, 1.442695
  %v6451 = vpow.pop %v6450
  %v6452 = vadd.f32 %v6451, 1.0
  %v6453 = vrcp.pop %v6452
  %v6454 = vmul.f32 1.0, %v6453
  %v6455 = vtanh.pop %v6441
  %v6456 = vxor.u32 %v6442, 2147483648
  %v6457 = vmul.f32 %v6456, 1.442695
  %v6458 = vpow.pop %v6457
  %v6459 = vadd.f32 %v6458, 1.0
  %v6460 = vrcp.pop %v6459
  %v6461 = vmul.f32 1.0, %v6460
  %v6462 = vmul.f32 %v6454, %v6290
  %v6463 = vmul.f32 %v6448, %v6455
  %v6464 = vadd.f32 %v6462, %v6463
  %v6465 = vtanh.pop %v6464
  %v6466 = vmul.f32 %v6461, %v6465
  %v6467 = vld [vmem:[%s1004] sm:$0xff]
  %v6468 = vld [vmem:[%s1004 + $0x8] sm:$0xff]
  %v6469 = vld [vmem:[%s1004 + $0x10] sm:$0xff]
  %v6470 = vld [vmem:[%s1004 + $0x18] sm:$0xff]
  %6471 = vmatprep.subr.mxu0 %v5942
  %6472 = vmatpush1.msra.mxu0 %v5941
  %6473 = vmatprep.subr.mxu0 %v5938
  %6474 = vmatpush1.msra.mxu0 %v5937
  %6475 = vmatprep.subr.mxu0 %v5934
  %6476 = vmatpush1.msra.mxu0 %v5933
  %6477 = vmatprep.subr.mxu0 %v5930
  %6478 = vmatpush1.msra.mxu0 %v5929
  %6479 = vmatprep.subr.mxu0 %v5926
  %6480 = vmatpush1.msra.mxu0 %v5925
  %6481 = vmatprep.subr.mxu0 %v5922
  %6482 = vmatpush1.msra.mxu0 %v5921
  %6483 = vmatprep.subr.mxu0 %v5918
  %6484 = vmatpush1.msra.mxu0 %v5917
  %6485 = vmatprep.subr.mxu0 %v5914
  %6486 = vmatpush1.msra.mxu0 %v5913
  %6487 = vmatprep.subr.mxu0 %v5910
  %6488 = vmatpush1.msra.mxu0 %v5909
  %6489 = vmatprep.subr.mxu0 %v5906
  %6490 = vmatpush1.msra.mxu0 %v5905
  %6491 = vmatprep.subr.mxu0 %v5902
  %6492 = vmatpush1.msra.mxu0 %v5901
  %6493 = vmatprep.subr.mxu0 %v5898
  %6494 = vmatpush1.msra.mxu0 %v5897
  %6495 = vmatprep.subr.mxu0 %v5894
  %6496 = vmatpush1.msra.mxu0 %v5893
  %6497 = vmatprep.subr.mxu0 %v5890
  %6498 = vmatpush1.msra.mxu0 %v5889
  %6499 = vmatprep.subr.mxu0 %v5886
  %6500 = vmatpush1.msra.mxu0 %v5885
  %6501 = vmatprep.subr.mxu0 %v5882
  %6502 = vmatpush1.msra.mxu0 %v5881
  %6503 = vmatprep.subr.mxu0 0.0
  %6504 = vmatpush2.msra.mxu0 0.0
  %6505 = vmatprep.subr.mxu0 0.0
  %6506 = vmatpush2.msra.mxu0 0.0
  %6507 = vmatprep.subr.mxu0 0.0
  %6508 = vmatpush2.msra.mxu0 0.0
  %6509 = vmatprep.subr.mxu0 0.0
  %6510 = vmatpush2.msra.mxu0 0.0
  %6511 = vmatprep.subr.mxu0 0.0
  %6512 = vmatpush2.msra.mxu0 0.0
  %6513 = vmatprep.subr.mxu0 0.0
  %6514 = vmatpush2.msra.mxu0 0.0
  %6515 = vmatprep.subr.mxu0 0.0
  %6516 = vmatpush2.msra.mxu0 0.0
  %6517 = vmatprep.subr.mxu0 0.0
  %6518 = vmatpush2.msra.mxu0 0.0
  %6519 = vmatprep.subr.mxu0 0.0
  %6520 = vmatpush2.msra.mxu0 0.0
  %6521 = vmatprep.subr.mxu0 0.0
  %6522 = vmatpush2.msra.mxu0 0.0
  %6523 = vmatprep.subr.mxu0 0.0
  %6524 = vmatpush2.msra.mxu0 0.0
  %6525 = vmatprep.subr.mxu0 0.0
  %6526 = vmatpush2.msra.mxu0 0.0
  %6527 = vmatprep.subr.mxu0 0.0
  %6528 = vmatpush2.msra.mxu0 0.0
  %6529 = vmatprep.subr.mxu0 0.0
  %6530 = vmatpush2.msra.mxu0 0.0
  %6531 = vmatprep.subr.mxu0 0.0
  %6532 = vmatpush2.msra.mxu0 0.0
  %6533 = vmatprep.subr.mxu0 0.0
  %6534 = vmatpush2.msra.mxu0 0.0
  %6535 = vmatprep.mubr.f32.mxu0 0.0
  %6536 = vmatmul.mubr.f32.gmra.mxu0 %v6466
  %v6537 = vpop.f32.mrf.mxu0
  %v6538 = vadd.f32 0.0, %v6537
  %v6539 = vpop.f32.mrf.mxu0
  %v6540 = vadd.f32 0.0, %v6539
  %6541 = vdwg.mxu0
  %6542 = vmatprep.subr.mxu0 %v5944
  %6543 = vmatpush1.msra.mxu0 %v5943
  %6544 = vmatprep.subr.mxu0 %v5940
  %6545 = vmatpush1.msra.mxu0 %v5939
  %6546 = vmatprep.subr.mxu0 %v5936
  %6547 = vmatpush1.msra.mxu0 %v5935
  %6548 = vmatprep.subr.mxu0 %v5932
  %6549 = vmatpush1.msra.mxu0 %v5931
  %6550 = vmatprep.subr.mxu0 %v5928
  %6551 = vmatpush1.msra.mxu0 %v5927
  %6552 = vmatprep.subr.mxu0 %v5924
  %6553 = vmatpush1.msra.mxu0 %v5923
  %6554 = vmatprep.subr.mxu0 %v5920
  %6555 = vmatpush1.msra.mxu0 %v5919
  %6556 = vmatprep.subr.mxu0 %v5916
  %6557 = vmatpush1.msra.mxu0 %v5915
  %6558 = vmatprep.subr.mxu0 %v5912
  %6559 = vmatpush1.msra.mxu0 %v5911
  %6560 = vmatprep.subr.mxu0 %v5908
  %6561 = vmatpush1.msra.mxu0 %v5907
  %6562 = vmatprep.subr.mxu0 %v5904
  %6563 = vmatpush1.msra.mxu0 %v5903
  %6564 = vmatprep.subr.mxu0 %v5900
  %6565 = vmatpush1.msra.mxu0 %v5899
  %6566 = vmatprep.subr.mxu0 %v5896
  %6567 = vmatpush1.msra.mxu0 %v5895
  %6568 = vmatprep.subr.mxu0 %v5892
  %6569 = vmatpush1.msra.mxu0 %v5891
  %6570 = vmatprep.subr.mxu0 %v5888
  %6571 = vmatpush1.msra.mxu0 %v5887
  %6572 = vmatprep.subr.mxu0 %v5884
  %6573 = vmatpush1.msra.mxu0 %v5883
  %6574 = vmatprep.subr.mxu0 0.0
  %6575 = vmatpush2.msra.mxu0 0.0
  %6576 = vmatprep.subr.mxu0 0.0
  %6577 = vmatpush2.msra.mxu0 0.0
  %6578 = vmatprep.subr.mxu0 0.0
  %6579 = vmatpush2.msra.mxu0 0.0
  %6580 = vmatprep.subr.mxu0 0.0
  %6581 = vmatpush2.msra.mxu0 0.0
  %6582 = vmatprep.subr.mxu0 0.0
  %6583 = vmatpush2.msra.mxu0 0.0
  %6584 = vmatprep.subr.mxu0 0.0
  %6585 = vmatpush2.msra.mxu0 0.0
  %6586 = vmatprep.subr.mxu0 0.0
  %6587 = vmatpush2.msra.mxu0 0.0
  %6588 = vmatprep.subr.mxu0 0.0
  %6589 = vmatpush2.msra.mxu0 0.0
  %6590 = vmatprep.subr.mxu0 0.0
  %6591 = vmatpush2.msra.mxu0 0.0
  %6592 = vmatprep.subr.mxu0 0.0
  %6593 = vmatpush2.msra.mxu0 0.0
  %6594 = vmatprep.subr.mxu0 0.0
  %6595 = vmatpush2.msra.mxu0 0.0
  %6596 = vmatprep.subr.mxu0 0.0
  %6597 = vmatpush2.msra.mxu0 0.0
  %6598 = vmatprep.subr.mxu0 0.0
  %6599 = vmatpush2.msra.mxu0 0.0
  %6600 = vmatprep.subr.mxu0 0.0
  %6601 = vmatpush2.msra.mxu0 0.0
  %6602 = vmatprep.subr.mxu0 0.0
  %6603 = vmatpush2.msra.mxu0 0.0
  %6604 = vmatprep.subr.mxu0 0.0
  %6605 = vmatpush2.msra.mxu0 0.0
  %6606 = vmatprep.mubr.f32.mxu0 0.0
  %6607 = vmatmul.mubr.f32.gmra.mxu0 %v6466
  %v6608 = vpop.f32.mrf.mxu0
  %v6609 = vadd.f32 0.0, %v6608
  %v6610 = vpop.f32.mrf.mxu0
  %v6611 = vadd.f32 0.0, %v6610
  %6612 = vdwg.mxu0
  %v6613 = vadd.f32 %v6467, %v6538
  %v6614 = vadd.f32 %v6468, %v6540
  %v6615 = vadd.f32 %v6469, %v6609
  %v6616 = vadd.f32 %v6470, %v6611
  %v6617 = vxor.u32 %v6613, 2147483648
  %v6618 = vmul.f32 %v6617, 1.442695
  %v6619 = vpow.pop %v6618
  %v6620 = vadd.f32 %v6619, 1.0
  %v6621 = vrcp.pop %v6620
  %v6622 = vmul.f32 1.0, %v6621
  %v6623 = vxor.u32 %v6614, 2147483648
  %v6624 = vmul.f32 %v6623, 1.442695
  %v6625 = vpow.pop %v6624
  %v6626 = vadd.f32 %v6625, 1.0
  %v6627 = vrcp.pop %v6626
  %v6628 = vmul.f32 1.0, %v6627
  %v6629 = vtanh.pop %v6615
  %v6630 = vxor.u32 %v6616, 2147483648
  %v6631 = vmul.f32 %v6630, 1.442695
  %v6632 = vpow.pop %v6631
  %v6633 = vadd.f32 %v6632, 1.0
  %v6634 = vrcp.pop %v6633
  %v6635 = vmul.f32 1.0, %v6634
  %v6636 = vmul.f32 %v6628, %v6464
  %v6637 = vmul.f32 %v6622, %v6629
  %v6638 = vadd.f32 %v6636, %v6637
  %v6639 = vtanh.pop %v6638
  %v6640 = vmul.f32 %v6635, %v6639
  %v6641 = vld [vmem:[%s1183] sm:$0xff]
  %v6642 = vld [vmem:[%s1183 + $0x8] sm:$0xff]
  %v6643 = vld [vmem:[%s1183 + $0x10] sm:$0xff]
  %v6644 = vld [vmem:[%s1183 + $0x18] sm:$0xff]
  %6645 = vmatprep.subr.mxu0 %v5942
  %6646 = vmatpush1.msra.mxu0 %v5941
  %6647 = vmatprep.subr.mxu0 %v5938
  %6648 = vmatpush1.msra.mxu0 %v5937
  %6649 = vmatprep.subr.mxu0 %v5934
  %6650 = vmatpush1.msra.mxu0 %v5933
  %6651 = vmatprep.subr.mxu0 %v5930
  %6652 = vmatpush1.msra.mxu0 %v5929
  %6653 = vmatprep.subr.mxu0 %v5926
  %6654 = vmatpush1.msra.mxu0 %v5925
  %6655 = vmatprep.subr.mxu0 %v5922
  %6656 = vmatpush1.msra.mxu0 %v5921
  %6657 = vmatprep.subr.mxu0 %v5918
  %6658 = vmatpush1.msra.mxu0 %v5917
  %6659 = vmatprep.subr.mxu0 %v5914
  %6660 = vmatpush1.msra.mxu0 %v5913
  %6661 = vmatprep.subr.mxu0 %v5910
  %6662 = vmatpush1.msra.mxu0 %v5909
  %6663 = vmatprep.subr.mxu0 %v5906
  %6664 = vmatpush1.msra.mxu0 %v5905
  %6665 = vmatprep.subr.mxu0 %v5902
  %6666 = vmatpush1.msra.mxu0 %v5901
  %6667 = vmatprep.subr.mxu0 %v5898
  %6668 = vmatpush1.msra.mxu0 %v5897
  %6669 = vmatprep.subr.mxu0 %v5894
  %6670 = vmatpush1.msra.mxu0 %v5893
  %6671 = vmatprep.subr.mxu0 %v5890
  %6672 = vmatpush1.msra.mxu0 %v5889
  %6673 = vmatprep.subr.mxu0 %v5886
  %6674 = vmatpush1.msra.mxu0 %v5885
  %6675 = vmatprep.subr.mxu0 %v5882
  %6676 = vmatpush1.msra.mxu0 %v5881
  %6677 = vmatprep.subr.mxu0 0.0
  %6678 = vmatpush2.msra.mxu0 0.0
  %6679 = vmatprep.subr.mxu0 0.0
  %6680 = vmatpush2.msra.mxu0 0.0
  %6681 = vmatprep.subr.mxu0 0.0
  %6682 = vmatpush2.msra.mxu0 0.0
  %6683 = vmatprep.subr.mxu0 0.0
  %6684 = vmatpush2.msra.mxu0 0.0
  %6685 = vmatprep.subr.mxu0 0.0
  %6686 = vmatpush2.msra.mxu0 0.0
  %6687 = vmatprep.subr.mxu0 0.0
  %6688 = vmatpush2.msra.mxu0 0.0
  %6689 = vmatprep.subr.mxu0 0.0
  %6690 = vmatpush2.msra.mxu0 0.0
  %6691 = vmatprep.subr.mxu0 0.0
  %6692 = vmatpush2.msra.mxu0 0.0
  %6693 = vmatprep.subr.mxu0 0.0
  %6694 = vmatpush2.msra.mxu0 0.0
  %6695 = vmatprep.subr.mxu0 0.0
  %6696 = vmatpush2.msra.mxu0 0.0
  %6697 = vmatprep.subr.mxu0 0.0
  %6698 = vmatpush2.msra.mxu0 0.0
  %6699 = vmatprep.subr.mxu0 0.0
  %6700 = vmatpush2.msra.mxu0 0.0
  %6701 = vmatprep.subr.mxu0 0.0
  %6702 = vmatpush2.msra.mxu0 0.0
  %6703 = vmatprep.subr.mxu0 0.0
  %6704 = vmatpush2.msra.mxu0 0.0
  %6705 = vmatprep.subr.mxu0 0.0
  %6706 = vmatpush2.msra.mxu0 0.0
  %6707 = vmatprep.subr.mxu0 0.0
  %6708 = vmatpush2.msra.mxu0 0.0
  %6709 = vmatprep.mubr.f32.mxu0 0.0
  %6710 = vmatmul.mubr.f32.gmra.mxu0 %v6640
  %v6711 = vpop.f32.mrf.mxu0
  %v6712 = vadd.f32 0.0, %v6711
  %v6713 = vpop.f32.mrf.mxu0
  %v6714 = vadd.f32 0.0, %v6713
  %6715 = vdwg.mxu0
  %6716 = vmatprep.subr.mxu0 %v5944
  %6717 = vmatpush1.msra.mxu0 %v5943
  %6718 = vmatprep.subr.mxu0 %v5940
  %6719 = vmatpush1.msra.mxu0 %v5939
  %6720 = vmatprep.subr.mxu0 %v5936
  %6721 = vmatpush1.msra.mxu0 %v5935
  %6722 = vmatprep.subr.mxu0 %v5932
  %6723 = vmatpush1.msra.mxu0 %v5931
  %6724 = vmatprep.subr.mxu0 %v5928
  %6725 = vmatpush1.msra.mxu0 %v5927
  %6726 = vmatprep.subr.mxu0 %v5924
  %6727 = vmatpush1.msra.mxu0 %v5923
  %6728 = vmatprep.subr.mxu0 %v5920
  %6729 = vmatpush1.msra.mxu0 %v5919
  %6730 = vmatprep.subr.mxu0 %v5916
  %6731 = vmatpush1.msra.mxu0 %v5915
  %6732 = vmatprep.subr.mxu0 %v5912
  %6733 = vmatpush1.msra.mxu0 %v5911
  %6734 = vmatprep.subr.mxu0 %v5908
  %6735 = vmatpush1.msra.mxu0 %v5907
  %6736 = vmatprep.subr.mxu0 %v5904
  %6737 = vmatpush1.msra.mxu0 %v5903
  %6738 = vmatprep.subr.mxu0 %v5900
  %6739 = vmatpush1.msra.mxu0 %v5899
  %6740 = vmatprep.subr.mxu0 %v5896
  %6741 = vmatpush1.msra.mxu0 %v5895
  %6742 = vmatprep.subr.mxu0 %v5892
  %6743 = vmatpush1.msra.mxu0 %v5891
  %6744 = vmatprep.subr.mxu0 %v5888
  %6745 = vmatpush1.msra.mxu0 %v5887
  %6746 = vmatprep.subr.mxu0 %v5884
  %6747 = vmatpush1.msra.mxu0 %v5883
  %6748 = vmatprep.subr.mxu0 0.0
  %6749 = vmatpush2.msra.mxu0 0.0
  %6750 = vmatprep.subr.mxu0 0.0
  %6751 = vmatpush2.msra.mxu0 0.0
  %6752 = vmatprep.subr.mxu0 0.0
  %6753 = vmatpush2.msra.mxu0 0.0
  %6754 = vmatprep.subr.mxu0 0.0
  %6755 = vmatpush2.msra.mxu0 0.0
  %6756 = vmatprep.subr.mxu0 0.0
  %6757 = vmatpush2.msra.mxu0 0.0
  %6758 = vmatprep.subr.mxu0 0.0
  %6759 = vmatpush2.msra.mxu0 0.0
  %6760 = vmatprep.subr.mxu0 0.0
  %6761 = vmatpush2.msra.mxu0 0.0
  %6762 = vmatprep.subr.mxu0 0.0
  %6763 = vmatpush2.msra.mxu0 0.0
  %6764 = vmatprep.subr.mxu0 0.0
  %6765 = vmatpush2.msra.mxu0 0.0
  %6766 = vmatprep.subr.mxu0 0.0
  %6767 = vmatpush2.msra.mxu0 0.0
  %6768 = vmatprep.subr.mxu0 0.0
  %6769 = vmatpush2.msra.mxu0 0.0
  %6770 = vmatprep.subr.mxu0 0.0
  %6771 = vmatpush2.msra.mxu0 0.0
  %6772 = vmatprep.subr.mxu0 0.0
  %6773 = vmatpush2.msra.mxu0 0.0
  %6774 = vmatprep.subr.mxu0 0.0
  %6775 = vmatpush2.msra.mxu0 0.0
  %6776 = vmatprep.subr.mxu0 0.0
  %6777 = vmatpush2.msra.mxu0 0.0
  %6778 = vmatprep.subr.mxu0 0.0
  %6779 = vmatpush2.msra.mxu0 0.0
  %6780 = vmatprep.mubr.f32.mxu0 0.0
  %6781 = vmatmul.mubr.f32.gmra.mxu0 %v6640
  %v6782 = vpop.f32.mrf.mxu0
  %v6783 = vadd.f32 0.0, %v6782
  %v6784 = vpop.f32.mrf.mxu0
  %v6785 = vadd.f32 0.0, %v6784
  %6786 = vdwg.mxu0
  %v6787 = vadd.f32 %v6641, %v6712
  %v6788 = vadd.f32 %v6642, %v6714
  %v6789 = vadd.f32 %v6643, %v6783
  %v6790 = vadd.f32 %v6644, %v6785
  %v6791 = vxor.u32 %v6787, 2147483648
  %v6792 = vmul.f32 %v6791, 1.442695
  %v6793 = vpow.pop %v6792
  %v6794 = vadd.f32 %v6793, 1.0
  %v6795 = vrcp.pop %v6794
  %v6796 = vmul.f32 1.0, %v6795
  %v6797 = vxor.u32 %v6788, 2147483648
  %v6798 = vmul.f32 %v6797, 1.442695
  %v6799 = vpow.pop %v6798
  %v6800 = vadd.f32 %v6799, 1.0
  %v6801 = vrcp.pop %v6800
  %v6802 = vmul.f32 1.0, %v6801
  %v6803 = vtanh.pop %v6789
  %v6804 = vxor.u32 %v6790, 2147483648
  %v6805 = vmul.f32 %v6804, 1.442695
  %v6806 = vpow.pop %v6805
  %v6807 = vadd.f32 %v6806, 1.0
  %v6808 = vrcp.pop %v6807
  %v6809 = vmul.f32 1.0, %v6808
  %v6810 = vmul.f32 %v6802, %v6638
  %v6811 = vmul.f32 %v6796, %v6803
  %v6812 = vadd.f32 %v6810, %v6811
  %v6813 = vtanh.pop %v6812
  %v6814 = vmul.f32 %v6809, %v6813
  %v6815 = vld [vmem:[%s1362] sm:$0xff]
  %v6816 = vld [vmem:[%s1362 + $0x8] sm:$0xff]
  %v6817 = vld [vmem:[%s1362 + $0x10] sm:$0xff]
  %v6818 = vld [vmem:[%s1362 + $0x18] sm:$0xff]
  %6819 = vmatprep.subr.mxu0 %v5942
  %6820 = vmatpush1.msra.mxu0 %v5941
  %6821 = vmatprep.subr.mxu0 %v5938
  %6822 = vmatpush1.msra.mxu0 %v5937
  %6823 = vmatprep.subr.mxu0 %v5934
  %6824 = vmatpush1.msra.mxu0 %v5933
  %6825 = vmatprep.subr.mxu0 %v5930
  %6826 = vmatpush1.msra.mxu0 %v5929
  %6827 = vmatprep.subr.mxu0 %v5926
  %6828 = vmatpush1.msra.mxu0 %v5925
  %6829 = vmatprep.subr.mxu0 %v5922
  %6830 = vmatpush1.msra.mxu0 %v5921
  %6831 = vmatprep.subr.mxu0 %v5918
  %6832 = vmatpush1.msra.mxu0 %v5917
  %6833 = vmatprep.subr.mxu0 %v5914
  %6834 = vmatpush1.msra.mxu0 %v5913
  %6835 = vmatprep.subr.mxu0 %v5910
  %6836 = vmatpush1.msra.mxu0 %v5909
  %6837 = vmatprep.subr.mxu0 %v5906
  %6838 = vmatpush1.msra.mxu0 %v5905
  %6839 = vmatprep.subr.mxu0 %v5902
  %6840 = vmatpush1.msra.mxu0 %v5901
  %6841 = vmatprep.subr.mxu0 %v5898
  %6842 = vmatpush1.msra.mxu0 %v5897
  %6843 = vmatprep.subr.mxu0 %v5894
  %6844 = vmatpush1.msra.mxu0 %v5893
  %6845 = vmatprep.subr.mxu0 %v5890
  %6846 = vmatpush1.msra.mxu0 %v5889
  %6847 = vmatprep.subr.mxu0 %v5886
  %6848 = vmatpush1.msra.mxu0 %v5885
  %6849 = vmatprep.subr.mxu0 %v5882
  %6850 = vmatpush1.msra.mxu0 %v5881
  %6851 = vmatprep.subr.mxu0 0.0
  %6852 = vmatpush2.msra.mxu0 0.0
  %6853 = vmatprep.subr.mxu0 0.0
  %6854 = vmatpush2.msra.mxu0 0.0
  %6855 = vmatprep.subr.mxu0 0.0
  %6856 = vmatpush2.msra.mxu0 0.0
  %6857 = vmatprep.subr.mxu0 0.0
  %6858 = vmatpush2.msra.mxu0 0.0
  %6859 = vmatprep.subr.mxu0 0.0
  %6860 = vmatpush2.msra.mxu0 0.0
  %6861 = vmatprep.subr.mxu0 0.0
  %6862 = vmatpush2.msra.mxu0 0.0
  %6863 = vmatprep.subr.mxu0 0.0
  %6864 = vmatpush2.msra.mxu0 0.0
  %6865 = vmatprep.subr.mxu0 0.0
  %6866 = vmatpush2.msra.mxu0 0.0
  %6867 = vmatprep.subr.mxu0 0.0
  %6868 = vmatpush2.msra.mxu0 0.0
  %6869 = vmatprep.subr.mxu0 0.0
  %6870 = vmatpush2.msra.mxu0 0.0
  %6871 = vmatprep.subr.mxu0 0.0
  %6872 = vmatpush2.msra.mxu0 0.0
  %6873 = vmatprep.subr.mxu0 0.0
  %6874 = vmatpush2.msra.mxu0 0.0
  %6875 = vmatprep.subr.mxu0 0.0
  %6876 = vmatpush2.msra.mxu0 0.0
  %6877 = vmatprep.subr.mxu0 0.0
  %6878 = vmatpush2.msra.mxu0 0.0
  %6879 = vmatprep.subr.mxu0 0.0
  %6880 = vmatpush2.msra.mxu0 0.0
  %6881 = vmatprep.subr.mxu0 0.0
  %6882 = vmatpush2.msra.mxu0 0.0
  %6883 = vmatprep.mubr.f32.mxu0 0.0
  %6884 = vmatmul.mubr.f32.gmra.mxu0 %v6814
  %v6885 = vpop.f32.mrf.mxu0
  %v6886 = vadd.f32 0.0, %v6885
  %v6887 = vpop.f32.mrf.mxu0
  %v6888 = vadd.f32 0.0, %v6887
  %6889 = vdwg.mxu0
  %6890 = vmatprep.subr.mxu0 %v5944
  %6891 = vmatpush1.msra.mxu0 %v5943
  %6892 = vmatprep.subr.mxu0 %v5940
  %6893 = vmatpush1.msra.mxu0 %v5939
  %6894 = vmatprep.subr.mxu0 %v5936
  %6895 = vmatpush1.msra.mxu0 %v5935
  %6896 = vmatprep.subr.mxu0 %v5932
  %6897 = vmatpush1.msra.mxu0 %v5931
  %6898 = vmatprep.subr.mxu0 %v5928
  %6899 = vmatpush1.msra.mxu0 %v5927
  %6900 = vmatprep.subr.mxu0 %v5924
  %6901 = vmatpush1.msra.mxu0 %v5923
  %6902 = vmatprep.subr.mxu0 %v5920
  %6903 = vmatpush1.msra.mxu0 %v5919
  %6904 = vmatprep.subr.mxu0 %v5916
  %6905 = vmatpush1.msra.mxu0 %v5915
  %6906 = vmatprep.subr.mxu0 %v5912
  %6907 = vmatpush1.msra.mxu0 %v5911
  %6908 = vmatprep.subr.mxu0 %v5908
  %6909 = vmatpush1.msra.mxu0 %v5907
  %6910 = vmatprep.subr.mxu0 %v5904
  %6911 = vmatpush1.msra.mxu0 %v5903
  %6912 = vmatprep.subr.mxu0 %v5900
  %6913 = vmatpush1.msra.mxu0 %v5899
  %6914 = vmatprep.subr.mxu0 %v5896
  %6915 = vmatpush1.msra.mxu0 %v5895
  %6916 = vmatprep.subr.mxu0 %v5892
  %6917 = vmatpush1.msra.mxu0 %v5891
  %6918 = vmatprep.subr.mxu0 %v5888
  %6919 = vmatpush1.msra.mxu0 %v5887
  %6920 = vmatprep.subr.mxu0 %v5884
  %6921 = vmatpush1.msra.mxu0 %v5883
  %6922 = vmatprep.subr.mxu0 0.0
  %6923 = vmatpush2.msra.mxu0 0.0
  %6924 = vmatprep.subr.mxu0 0.0
  %6925 = vmatpush2.msra.mxu0 0.0
  %6926 = vmatprep.subr.mxu0 0.0
  %6927 = vmatpush2.msra.mxu0 0.0
  %6928 = vmatprep.subr.mxu0 0.0
  %6929 = vmatpush2.msra.mxu0 0.0
  %6930 = vmatprep.subr.mxu0 0.0
  %6931 = vmatpush2.msra.mxu0 0.0
  %6932 = vmatprep.subr.mxu0 0.0
  %6933 = vmatpush2.msra.mxu0 0.0
  %6934 = vmatprep.subr.mxu0 0.0
  %6935 = vmatpush2.msra.mxu0 0.0
  %6936 = vmatprep.subr.mxu0 0.0
  %6937 = vmatpush2.msra.mxu0 0.0
  %6938 = vmatprep.subr.mxu0 0.0
  %6939 = vmatpush2.msra.mxu0 0.0
  %6940 = vmatprep.subr.mxu0 0.0
  %6941 = vmatpush2.msra.mxu0 0.0
  %6942 = vmatprep.subr.mxu0 0.0
  %6943 = vmatpush2.msra.mxu0 0.0
  %6944 = vmatprep.subr.mxu0 0.0
  %6945 = vmatpush2.msra.mxu0 0.0
  %6946 = vmatprep.subr.mxu0 0.0
  %6947 = vmatpush2.msra.mxu0 0.0
  %6948 = vmatprep.subr.mxu0 0.0
  %6949 = vmatpush2.msra.mxu0 0.0
  %6950 = vmatprep.subr.mxu0 0.0
  %6951 = vmatpush2.msra.mxu0 0.0
  %6952 = vmatprep.subr.mxu0 0.0
  %6953 = vmatpush2.msra.mxu0 0.0
  %6954 = vmatprep.mubr.f32.mxu0 0.0
  %6955 = vmatmul.mubr.f32.gmra.mxu0 %v6814
  %v6956 = vpop.f32.mrf.mxu0
  %v6957 = vadd.f32 0.0, %v6956
  %v6958 = vpop.f32.mrf.mxu0
  %v6959 = vadd.f32 0.0, %v6958
  %6960 = vdwg.mxu0
  %v6961 = vadd.f32 %v6815, %v6886
  %v6962 = vadd.f32 %v6816, %v6888
  %v6963 = vadd.f32 %v6817, %v6957
  %v6964 = vadd.f32 %v6818, %v6959
  %v6965 = vxor.u32 %v6961, 2147483648
  %v6966 = vmul.f32 %v6965, 1.442695
  %v6967 = vpow.pop %v6966
  %v6968 = vadd.f32 %v6967, 1.0
  %v6969 = vrcp.pop %v6968
  %v6970 = vmul.f32 1.0, %v6969
  %v6971 = vxor.u32 %v6962, 2147483648
  %v6972 = vmul.f32 %v6971, 1.442695
  %v6973 = vpow.pop %v6972
  %v6974 = vadd.f32 %v6973, 1.0
  %v6975 = vrcp.pop %v6974
  %v6976 = vmul.f32 1.0, %v6975
  %v6977 = vtanh.pop %v6963
  %v6978 = vxor.u32 %v6964, 2147483648
  %v6979 = vmul.f32 %v6978, 1.442695
  %v6980 = vpow.pop %v6979
  %v6981 = vadd.f32 %v6980, 1.0
  %v6982 = vrcp.pop %v6981
  %v6983 = vmul.f32 1.0, %v6982
  %v6984 = vmul.f32 %v6976, %v6812
  %v6985 = vmul.f32 %v6970, %v6977
  %v6986 = vadd.f32 %v6984, %v6985
  %v6987 = vtanh.pop %v6986
  %v6988 = vmul.f32 %v6983, %v6987
  %v6989 = vld [vmem:[%s1541] sm:$0xff]
  %v6990 = vld [vmem:[%s1541 + $0x8] sm:$0xff]
  %v6991 = vld [vmem:[%s1541 + $0x10] sm:$0xff]
  %v6992 = vld [vmem:[%s1541 + $0x18] sm:$0xff]
  %6993 = vmatprep.subr.mxu0 %v5942
  %6994 = vmatpush1.msra.mxu0 %v5941
  %6995 = vmatprep.subr.mxu0 %v5938
  %6996 = vmatpush1.msra.mxu0 %v5937
  %6997 = vmatprep.subr.mxu0 %v5934
  %6998 = vmatpush1.msra.mxu0 %v5933
  %6999 = vmatprep.subr.mxu0 %v5930
  %7000 = vmatpush1.msra.mxu0 %v5929
  %7001 = vmatprep.subr.mxu0 %v5926
  %7002 = vmatpush1.msra.mxu0 %v5925
  %7003 = vmatprep.subr.mxu0 %v5922
  %7004 = vmatpush1.msra.mxu0 %v5921
  %7005 = vmatprep.subr.mxu0 %v5918
  %7006 = vmatpush1.msra.mxu0 %v5917
  %7007 = vmatprep.subr.mxu0 %v5914
  %7008 = vmatpush1.msra.mxu0 %v5913
  %7009 = vmatprep.subr.mxu0 %v5910
  %7010 = vmatpush1.msra.mxu0 %v5909
  %7011 = vmatprep.subr.mxu0 %v5906
  %7012 = vmatpush1.msra.mxu0 %v5905
  %7013 = vmatprep.subr.mxu0 %v5902
  %7014 = vmatpush1.msra.mxu0 %v5901
  %7015 = vmatprep.subr.mxu0 %v5898
  %7016 = vmatpush1.msra.mxu0 %v5897
  %7017 = vmatprep.subr.mxu0 %v5894
  %7018 = vmatpush1.msra.mxu0 %v5893
  %7019 = vmatprep.subr.mxu0 %v5890
  %7020 = vmatpush1.msra.mxu0 %v5889
  %7021 = vmatprep.subr.mxu0 %v5886
  %7022 = vmatpush1.msra.mxu0 %v5885
  %7023 = vmatprep.subr.mxu0 %v5882
  %7024 = vmatpush1.msra.mxu0 %v5881
  %7025 = vmatprep.subr.mxu0 0.0
  %7026 = vmatpush2.msra.mxu0 0.0
  %7027 = vmatprep.subr.mxu0 0.0
  %7028 = vmatpush2.msra.mxu0 0.0
  %7029 = vmatprep.subr.mxu0 0.0
  %7030 = vmatpush2.msra.mxu0 0.0
  %7031 = vmatprep.subr.mxu0 0.0
  %7032 = vmatpush2.msra.mxu0 0.0
  %7033 = vmatprep.subr.mxu0 0.0
  %7034 = vmatpush2.msra.mxu0 0.0
  %7035 = vmatprep.subr.mxu0 0.0
  %7036 = vmatpush2.msra.mxu0 0.0
  %7037 = vmatprep.subr.mxu0 0.0
  %7038 = vmatpush2.msra.mxu0 0.0
  %7039 = vmatprep.subr.mxu0 0.0
  %7040 = vmatpush2.msra.mxu0 0.0
  %7041 = vmatprep.subr.mxu0 0.0
  %7042 = vmatpush2.msra.mxu0 0.0
  %7043 = vmatprep.subr.mxu0 0.0
  %7044 = vmatpush2.msra.mxu0 0.0
  %7045 = vmatprep.subr.mxu0 0.0
  %7046 = vmatpush2.msra.mxu0 0.0
  %7047 = vmatprep.subr.mxu0 0.0
  %7048 = vmatpush2.msra.mxu0 0.0
  %7049 = vmatprep.subr.mxu0 0.0
  %7050 = vmatpush2.msra.mxu0 0.0
  %7051 = vmatprep.subr.mxu0 0.0
  %7052 = vmatpush2.msra.mxu0 0.0
  %7053 = vmatprep.subr.mxu0 0.0
  %7054 = vmatpush2.msra.mxu0 0.0
  %7055 = vmatprep.subr.mxu0 0.0
  %7056 = vmatpush2.msra.mxu0 0.0
  %7057 = vmatprep.mubr.f32.mxu0 0.0
  %7058 = vmatmul.mubr.f32.gmra.mxu0 %v6988
  %v7059 = vpop.f32.mrf.mxu0
  %v7060 = vadd.f32 0.0, %v7059
  %v7061 = vpop.f32.mrf.mxu0
  %v7062 = vadd.f32 0.0, %v7061
  %7063 = vdwg.mxu0
  %7064 = vmatprep.subr.mxu0 %v5944
  %7065 = vmatpush1.msra.mxu0 %v5943
  %7066 = vmatprep.subr.mxu0 %v5940
  %7067 = vmatpush1.msra.mxu0 %v5939
  %7068 = vmatprep.subr.mxu0 %v5936
  %7069 = vmatpush1.msra.mxu0 %v5935
  %7070 = vmatprep.subr.mxu0 %v5932
  %7071 = vmatpush1.msra.mxu0 %v5931
  %7072 = vmatprep.subr.mxu0 %v5928
  %7073 = vmatpush1.msra.mxu0 %v5927
  %7074 = vmatprep.subr.mxu0 %v5924
  %7075 = vmatpush1.msra.mxu0 %v5923
  %7076 = vmatprep.subr.mxu0 %v5920
  %7077 = vmatpush1.msra.mxu0 %v5919
  %7078 = vmatprep.subr.mxu0 %v5916
  %7079 = vmatpush1.msra.mxu0 %v5915
  %7080 = vmatprep.subr.mxu0 %v5912
  %7081 = vmatpush1.msra.mxu0 %v5911
  %7082 = vmatprep.subr.mxu0 %v5908
  %7083 = vmatpush1.msra.mxu0 %v5907
  %7084 = vmatprep.subr.mxu0 %v5904
  %7085 = vmatpush1.msra.mxu0 %v5903
  %7086 = vmatprep.subr.mxu0 %v5900
  %7087 = vmatpush1.msra.mxu0 %v5899
  %7088 = vmatprep.subr.mxu0 %v5896
  %7089 = vmatpush1.msra.mxu0 %v5895
  %7090 = vmatprep.subr.mxu0 %v5892
  %7091 = vmatpush1.msra.mxu0 %v5891
  %7092 = vmatprep.subr.mxu0 %v5888
  %7093 = vmatpush1.msra.mxu0 %v5887
  %7094 = vmatprep.subr.mxu0 %v5884
  %7095 = vmatpush1.msra.mxu0 %v5883
  %7096 = vmatprep.subr.mxu0 0.0
  %7097 = vmatpush2.msra.mxu0 0.0
  %7098 = vmatprep.subr.mxu0 0.0
  %7099 = vmatpush2.msra.mxu0 0.0
  %7100 = vmatprep.subr.mxu0 0.0
  %7101 = vmatpush2.msra.mxu0 0.0
  %7102 = vmatprep.subr.mxu0 0.0
  %7103 = vmatpush2.msra.mxu0 0.0
  %7104 = vmatprep.subr.mxu0 0.0
  %7105 = vmatpush2.msra.mxu0 0.0
  %7106 = vmatprep.subr.mxu0 0.0
  %7107 = vmatpush2.msra.mxu0 0.0
  %7108 = vmatprep.subr.mxu0 0.0
  %7109 = vmatpush2.msra.mxu0 0.0
  %7110 = vmatprep.subr.mxu0 0.0
  %7111 = vmatpush2.msra.mxu0 0.0
  %7112 = vmatprep.subr.mxu0 0.0
  %7113 = vmatpush2.msra.mxu0 0.0
  %7114 = vmatprep.subr.mxu0 0.0
  %7115 = vmatpush2.msra.mxu0 0.0
  %7116 = vmatprep.subr.mxu0 0.0
  %7117 = vmatpush2.msra.mxu0 0.0
  %7118 = vmatprep.subr.mxu0 0.0
  %7119 = vmatpush2.msra.mxu0 0.0
  %7120 = vmatprep.subr.mxu0 0.0
  %7121 = vmatpush2.msra.mxu0 0.0
  %7122 = vmatprep.subr.mxu0 0.0
  %7123 = vmatpush2.msra.mxu0 0.0
  %7124 = vmatprep.subr.mxu0 0.0
  %7125 = vmatpush2.msra.mxu0 0.0
  %7126 = vmatprep.subr.mxu0 0.0
  %7127 = vmatpush2.msra.mxu0 0.0
  %7128 = vmatprep.mubr.f32.mxu0 0.0
  %7129 = vmatmul.mubr.f32.gmra.mxu0 %v6988
  %v7130 = vpop.f32.mrf.mxu0
  %v7131 = vadd.f32 0.0, %v7130
  %v7132 = vpop.f32.mrf.mxu0
  %v7133 = vadd.f32 0.0, %v7132
  %7134 = vdwg.mxu0
  %v7135 = vadd.f32 %v6989, %v7060
  %v7136 = vadd.f32 %v6990, %v7062
  %v7137 = vadd.f32 %v6991, %v7131
  %v7138 = vadd.f32 %v6992, %v7133
  %v7139 = vxor.u32 %v7135, 2147483648
  %v7140 = vmul.f32 %v7139, 1.442695
  %v7141 = vpow.pop %v7140
  %v7142 = vadd.f32 %v7141, 1.0
  %v7143 = vrcp.pop %v7142
  %v7144 = vmul.f32 1.0, %v7143
  %v7145 = vxor.u32 %v7136, 2147483648
  %v7146 = vmul.f32 %v7145, 1.442695
  %v7147 = vpow.pop %v7146
  %v7148 = vadd.f32 %v7147, 1.0
  %v7149 = vrcp.pop %v7148
  %v7150 = vmul.f32 1.0, %v7149
  %v7151 = vtanh.pop %v7137
  %v7152 = vxor.u32 %v7138, 2147483648
  %v7153 = vmul.f32 %v7152, 1.442695
  %v7154 = vpow.pop %v7153
  %v7155 = vadd.f32 %v7154, 1.0
  %v7156 = vrcp.pop %v7155
  %v7157 = vmul.f32 1.0, %v7156
  %v7158 = vmul.f32 %v7150, %v6986
  %v7159 = vmul.f32 %v7144, %v7151
  %v7160 = vadd.f32 %v7158, %v7159
  %v7161 = vtanh.pop %v7160
  %v7162 = vmul.f32 %v7157, %v7161
  %v7163 = vld [vmem:[%s1720] sm:$0xff]
  %v7164 = vld [vmem:[%s1720 + $0x8] sm:$0xff]
  %v7165 = vld [vmem:[%s1720 + $0x10] sm:$0xff]
  %v7166 = vld [vmem:[%s1720 + $0x18] sm:$0xff]
  %7167 = vmatprep.subr.mxu0 %v5942
  %7168 = vmatpush1.msra.mxu0 %v5941
  %7169 = vmatprep.subr.mxu0 %v5938
  %7170 = vmatpush1.msra.mxu0 %v5937
  %7171 = vmatprep.subr.mxu0 %v5934
  %7172 = vmatpush1.msra.mxu0 %v5933
  %7173 = vmatprep.subr.mxu0 %v5930
  %7174 = vmatpush1.msra.mxu0 %v5929
  %7175 = vmatprep.subr.mxu0 %v5926
  %7176 = vmatpush1.msra.mxu0 %v5925
  %7177 = vmatprep.subr.mxu0 %v5922
  %7178 = vmatpush1.msra.mxu0 %v5921
  %7179 = vmatprep.subr.mxu0 %v5918
  %7180 = vmatpush1.msra.mxu0 %v5917
  %7181 = vmatprep.subr.mxu0 %v5914
  %7182 = vmatpush1.msra.mxu0 %v5913
  %7183 = vmatprep.subr.mxu0 %v5910
  %7184 = vmatpush1.msra.mxu0 %v5909
  %7185 = vmatprep.subr.mxu0 %v5906
  %7186 = vmatpush1.msra.mxu0 %v5905
  %7187 = vmatprep.subr.mxu0 %v5902
  %7188 = vmatpush1.msra.mxu0 %v5901
  %7189 = vmatprep.subr.mxu0 %v5898
  %7190 = vmatpush1.msra.mxu0 %v5897
  %7191 = vmatprep.subr.mxu0 %v5894
  %7192 = vmatpush1.msra.mxu0 %v5893
  %7193 = vmatprep.subr.mxu0 %v5890
  %7194 = vmatpush1.msra.mxu0 %v5889
  %7195 = vmatprep.subr.mxu0 %v5886
  %7196 = vmatpush1.msra.mxu0 %v5885
  %7197 = vmatprep.subr.mxu0 %v5882
  %7198 = vmatpush1.msra.mxu0 %v5881
  %7199 = vmatprep.subr.mxu0 0.0
  %7200 = vmatpush2.msra.mxu0 0.0
  %7201 = vmatprep.subr.mxu0 0.0
  %7202 = vmatpush2.msra.mxu0 0.0
  %7203 = vmatprep.subr.mxu0 0.0
  %7204 = vmatpush2.msra.mxu0 0.0
  %7205 = vmatprep.subr.mxu0 0.0
  %7206 = vmatpush2.msra.mxu0 0.0
  %7207 = vmatprep.subr.mxu0 0.0
  %7208 = vmatpush2.msra.mxu0 0.0
  %7209 = vmatprep.subr.mxu0 0.0
  %7210 = vmatpush2.msra.mxu0 0.0
  %7211 = vmatprep.subr.mxu0 0.0
  %7212 = vmatpush2.msra.mxu0 0.0
  %7213 = vmatprep.subr.mxu0 0.0
  %7214 = vmatpush2.msra.mxu0 0.0
  %7215 = vmatprep.subr.mxu0 0.0
  %7216 = vmatpush2.msra.mxu0 0.0
  %7217 = vmatprep.subr.mxu0 0.0
  %7218 = vmatpush2.msra.mxu0 0.0
  %7219 = vmatprep.subr.mxu0 0.0
  %7220 = vmatpush2.msra.mxu0 0.0
  %7221 = vmatprep.subr.mxu0 0.0
  %7222 = vmatpush2.msra.mxu0 0.0
  %7223 = vmatprep.subr.mxu0 0.0
  %7224 = vmatpush2.msra.mxu0 0.0
  %7225 = vmatprep.subr.mxu0 0.0
  %7226 = vmatpush2.msra.mxu0 0.0
  %7227 = vmatprep.subr.mxu0 0.0
  %7228 = vmatpush2.msra.mxu0 0.0
  %7229 = vmatprep.subr.mxu0 0.0
  %7230 = vmatpush2.msra.mxu0 0.0
  %7231 = vmatprep.mubr.f32.mxu0 0.0
  %7232 = vmatmul.mubr.f32.gmra.mxu0 %v7162
  %v7233 = vpop.f32.mrf.mxu0
  %v7234 = vadd.f32 0.0, %v7233
  %v7235 = vpop.f32.mrf.mxu0
  %v7236 = vadd.f32 0.0, %v7235
  %7237 = vdwg.mxu0
  %7238 = vmatprep.subr.mxu0 %v5944
  %7239 = vmatpush1.msra.mxu0 %v5943
  %7240 = vmatprep.subr.mxu0 %v5940
  %7241 = vmatpush1.msra.mxu0 %v5939
  %7242 = vmatprep.subr.mxu0 %v5936
  %7243 = vmatpush1.msra.mxu0 %v5935
  %7244 = vmatprep.subr.mxu0 %v5932
  %7245 = vmatpush1.msra.mxu0 %v5931
  %7246 = vmatprep.subr.mxu0 %v5928
  %7247 = vmatpush1.msra.mxu0 %v5927
  %7248 = vmatprep.subr.mxu0 %v5924
  %7249 = vmatpush1.msra.mxu0 %v5923
  %7250 = vmatprep.subr.mxu0 %v5920
  %7251 = vmatpush1.msra.mxu0 %v5919
  %7252 = vmatprep.subr.mxu0 %v5916
  %7253 = vmatpush1.msra.mxu0 %v5915
  %7254 = vmatprep.subr.mxu0 %v5912
  %7255 = vmatpush1.msra.mxu0 %v5911
  %7256 = vmatprep.subr.mxu0 %v5908
  %7257 = vmatpush1.msra.mxu0 %v5907
  %7258 = vmatprep.subr.mxu0 %v5904
  %7259 = vmatpush1.msra.mxu0 %v5903
  %7260 = vmatprep.subr.mxu0 %v5900
  %7261 = vmatpush1.msra.mxu0 %v5899
  %7262 = vmatprep.subr.mxu0 %v5896
  %7263 = vmatpush1.msra.mxu0 %v5895
  %7264 = vmatprep.subr.mxu0 %v5892
  %7265 = vmatpush1.msra.mxu0 %v5891
  %7266 = vmatprep.subr.mxu0 %v5888
  %7267 = vmatpush1.msra.mxu0 %v5887
  %7268 = vmatprep.subr.mxu0 %v5884
  %7269 = vmatpush1.msra.mxu0 %v5883
  %7270 = vmatprep.subr.mxu0 0.0
  %7271 = vmatpush2.msra.mxu0 0.0
  %7272 = vmatprep.subr.mxu0 0.0
  %7273 = vmatpush2.msra.mxu0 0.0
  %7274 = vmatprep.subr.mxu0 0.0
  %7275 = vmatpush2.msra.mxu0 0.0
  %7276 = vmatprep.subr.mxu0 0.0
  %7277 = vmatpush2.msra.mxu0 0.0
  %7278 = vmatprep.subr.mxu0 0.0
  %7279 = vmatpush2.msra.mxu0 0.0
  %7280 = vmatprep.subr.mxu0 0.0
  %7281 = vmatpush2.msra.mxu0 0.0
  %7282 = vmatprep.subr.mxu0 0.0
  %7283 = vmatpush2.msra.mxu0 0.0
  %7284 = vmatprep.subr.mxu0 0.0
  %7285 = vmatpush2.msra.mxu0 0.0
  %7286 = vmatprep.subr.mxu0 0.0
  %7287 = vmatpush2.msra.mxu0 0.0
  %7288 = vmatprep.subr.mxu0 0.0
  %7289 = vmatpush2.msra.mxu0 0.0
  %7290 = vmatprep.subr.mxu0 0.0
  %7291 = vmatpush2.msra.mxu0 0.0
  %7292 = vmatprep.subr.mxu0 0.0
  %7293 = vmatpush2.msra.mxu0 0.0
  %7294 = vmatprep.subr.mxu0 0.0
  %7295 = vmatpush2.msra.mxu0 0.0
  %7296 = vmatprep.subr.mxu0 0.0
  %7297 = vmatpush2.msra.mxu0 0.0
  %7298 = vmatprep.subr.mxu0 0.0
  %7299 = vmatpush2.msra.mxu0 0.0
  %7300 = vmatprep.subr.mxu0 0.0
  %7301 = vmatpush2.msra.mxu0 0.0
  %7302 = vmatprep.mubr.f32.mxu0 0.0
  %7303 = vmatmul.mubr.f32.gmra.mxu0 %v7162
  %v7304 = vpop.f32.mrf.mxu0
  %v7305 = vadd.f32 0.0, %v7304
  %v7306 = vpop.f32.mrf.mxu0
  %v7307 = vadd.f32 0.0, %v7306
  %7308 = vdwg.mxu0
  %v7309 = vadd.f32 %v7163, %v7234
  %v7310 = vadd.f32 %v7164, %v7236
  %v7311 = vadd.f32 %v7165, %v7305
  %v7312 = vadd.f32 %v7166, %v7307
  %v7313 = vxor.u32 %v7309, 2147483648
  %v7314 = vmul.f32 %v7313, 1.442695
  %v7315 = vpow.pop %v7314
  %v7316 = vadd.f32 %v7315, 1.0
  %v7317 = vrcp.pop %v7316
  %v7318 = vmul.f32 1.0, %v7317
  %v7319 = vxor.u32 %v7310, 2147483648
  %v7320 = vmul.f32 %v7319, 1.442695
  %v7321 = vpow.pop %v7320
  %v7322 = vadd.f32 %v7321, 1.0
  %v7323 = vrcp.pop %v7322
  %v7324 = vmul.f32 1.0, %v7323
  %v7325 = vtanh.pop %v7311
  %v7326 = vxor.u32 %v7312, 2147483648
  %v7327 = vmul.f32 %v7326, 1.442695
  %v7328 = vpow.pop %v7327
  %v7329 = vadd.f32 %v7328, 1.0
  %v7330 = vrcp.pop %v7329
  %v7331 = vmul.f32 1.0, %v7330
  %v7332 = vmul.f32 %v7324, %v7160
  %v7333 = vmul.f32 %v7318, %v7325
  %v7334 = vadd.f32 %v7332, %v7333
  %v7335 = vtanh.pop %v7334
  %v7336 = vmul.f32 %v7331, %v7335
  %v7337 = vld [vmem:[%s13] sm:$0xff]
  %v7338 = vld [vmem:[%s13 + $0x8] sm:$0xff]
  %v7339 = vld [vmem:[%s13 + $0x10] sm:$0xff]
  %v7340 = vld [vmem:[%s13 + $0x18] sm:$0xff]
  %v7341 = vld [vmem:[%s13 + $0x20] sm:$0xff]
  %v7342 = vld [vmem:[%s13 + $0x28] sm:$0xff]
  %v7343 = vld [vmem:[%s13 + $0x30] sm:$0xff]
  %v7344 = vld [vmem:[%s13 + $0x38] sm:$0xff]
  %v7345 = vld [vmem:[%s13 + $0x40] sm:$0xff]
  %v7346 = vld [vmem:[%s13 + $0x48] sm:$0xff]
  %v7347 = vld [vmem:[%s13 + $0x50] sm:$0xff]
  %v7348 = vld [vmem:[%s13 + $0x58] sm:$0xff]
  %v7349 = vld [vmem:[%s13 + $0x60] sm:$0xff]
  %v7350 = vld [vmem:[%s13 + $0x68] sm:$0xff]
  %v7351 = vld [vmem:[%s13 + $0x70] sm:$0xff]
  %v7352 = vld [vmem:[%s13 + $0x78] sm:$0xff]
  %v7353 = vld [vmem:[%s14] sm:$0x1]
  %v7355 = vlaneseq
  %v7356 = vshrl.u32 %v7355, 7
  %v7357 = vsub.s32 0, %v7356
  %v7358 = vrot.slane %v7353, %v7357
  %7360 = vmatprep.subr.mxu0 0.0
  %7361 = vmatpush1.msra.mxu0 %v7352
  %7362 = vmatprep.subr.mxu0 0.0
  %7363 = vmatpush1.msra.mxu0 %v7351
  %7364 = vmatprep.subr.mxu0 0.0
  %7365 = vmatpush1.msra.mxu0 %v7350
  %7366 = vmatprep.subr.mxu0 0.0
  %7367 = vmatpush1.msra.mxu0 %v7349
  %7368 = vmatprep.subr.mxu0 0.0
  %7369 = vmatpush1.msra.mxu0 %v7348
  %7370 = vmatprep.subr.mxu0 0.0
  %7371 = vmatpush1.msra.mxu0 %v7347
  %7372 = vmatprep.subr.mxu0 0.0
  %7373 = vmatpush1.msra.mxu0 %v7346
  %7374 = vmatprep.subr.mxu0 0.0
  %7375 = vmatpush1.msra.mxu0 %v7345
  %7376 = vmatprep.subr.mxu0 0.0
  %7377 = vmatpush1.msra.mxu0 %v7344
  %7378 = vmatprep.subr.mxu0 0.0
  %7379 = vmatpush1.msra.mxu0 %v7343
  %7380 = vmatprep.subr.mxu0 0.0
  %7381 = vmatpush1.msra.mxu0 %v7342
  %7382 = vmatprep.subr.mxu0 0.0
  %7383 = vmatpush1.msra.mxu0 %v7341
  %7384 = vmatprep.subr.mxu0 0.0
  %7385 = vmatpush1.msra.mxu0 %v7340
  %7386 = vmatprep.subr.mxu0 0.0
  %7387 = vmatpush1.msra.mxu0 %v7339
  %7388 = vmatprep.subr.mxu0 0.0
  %7389 = vmatpush1.msra.mxu0 %v7338
  %7390 = vmatprep.subr.mxu0 0.0
  %7391 = vmatpush1.msra.mxu0 %v7337
  %7392 = vmatprep.subr.mxu0 0.0
  %7393 = vmatpush2.msra.mxu0 0.0
  %7394 = vmatprep.subr.mxu0 0.0
  %7395 = vmatpush2.msra.mxu0 0.0
  %7396 = vmatprep.subr.mxu0 0.0
  %7397 = vmatpush2.msra.mxu0 0.0
  %7398 = vmatprep.subr.mxu0 0.0
  %7399 = vmatpush2.msra.mxu0 0.0
  %7400 = vmatprep.subr.mxu0 0.0
  %7401 = vmatpush2.msra.mxu0 0.0
  %7402 = vmatprep.subr.mxu0 0.0
  %7403 = vmatpush2.msra.mxu0 0.0
  %7404 = vmatprep.subr.mxu0 0.0
  %7405 = vmatpush2.msra.mxu0 0.0
  %7406 = vmatprep.subr.mxu0 0.0
  %7407 = vmatpush2.msra.mxu0 0.0
  %7408 = vmatprep.subr.mxu0 0.0
  %7409 = vmatpush2.msra.mxu0 0.0
  %7410 = vmatprep.subr.mxu0 0.0
  %7411 = vmatpush2.msra.mxu0 0.0
  %7412 = vmatprep.subr.mxu0 0.0
  %7413 = vmatpush2.msra.mxu0 0.0
  %7414 = vmatprep.subr.mxu0 0.0
  %7415 = vmatpush2.msra.mxu0 0.0
  %7416 = vmatprep.subr.mxu0 0.0
  %7417 = vmatpush2.msra.mxu0 0.0
  %7418 = vmatprep.subr.mxu0 0.0
  %7419 = vmatpush2.msra.mxu0 0.0
  %7420 = vmatprep.subr.mxu0 0.0
  %7421 = vmatpush2.msra.mxu0 0.0
  %7422 = vmatprep.subr.mxu0 0.0
  %7423 = vmatpush2.msra.mxu0 0.0
  %7424 = vmatprep.mubr.f32.mxu0 0.0
  %7425 = vmatmul.mubr.f32.gmra.mxu0 %v7336
  %v7426 = vpop.f32.mrf.mxu0
  %v7427 = vadd.f32 %v7358, %v7426
  %v7428 = vpop.f32.mrf.mxu0
  %7429 = vdwg.mxu0
  %v7430 = vxor.u32 %v7427, 2147483648
  %v7431 = vmul.f32 %v7430, 1.442695
  %v7432 = vpow.pop %v7431
  %v7433 = vadd.f32 %v7432, 1.0
  %v7434 = vrcp.pop %v7433
  %v7435 = vmul.f32 1.0, %v7434
  %7436 = vst [vmem:[%s15] sm:$0xff] %v7435
  // Predicated region
  $region62: #{lstm_model_forward.1} parent=0 // pred_check
    _
  $region63: #{lstm_model_forward.1} parent=0 // pred_check_branch
    %7438 = sbr.rel (0) target = $region65
  $region64: #{lstm_model_forward.1} parent=0 // pred_region
    _
  $region65: #{lstm_model_forward.1} parent=0 // pred_fallthru
    _
  // Predicated region
  $region66: #{lstm_model_forward.1} parent=0 // pred_check
    _
  $region67: #{lstm_model_forward.1} parent=0 // pred_check_branch
    %7440 = sbr.rel (0) target = $region69
  $region68: #{lstm_model_forward.1} parent=0 // pred_region
    _
  $region69: #{lstm_model_forward.1} parent=0 // pred_fallthru
    _

</llo_original>
